<compile_context>
chip_gen: v5e
topology: v5e:2x2
jax: 0.10.0
libtpu: 0.0.40
codegen_flags: <defaults>
</compile_context>

<pallas_src>
import functools
import numpy as np
import jax
import jax.numpy as jnp
from jax.experimental import pallas as pl
from jax.experimental.pallas import tpu as pltpu


# --------------------------------------------------------------------------- kernel
def _window_attn_kernel(x_ref, bias_ref, wqkv_ref, bqkv_ref, wproj_ref, bproj_ref,
                        o_ref, s_scr, o_scr, *, num_heads, head_dim, tb, seq, n_mask):
    """One grid step == a block of `tb` windows (tb % n_mask == 0).

    x_ref:    (tb*seq, C)            window-block rows (compute dtype)
    bias_ref: (H, n_mask*seq, seq)   rel-pos bias (+ window mask), f32, NOT tiled to tb
    wqkv_ref: (C, 3C)                pre-transposed; q-rows pre-scaled by `scale`
    bqkv_ref: (1, 3C)                f32, q-part pre-scaled
    wproj_ref:(C, C)                 pre-transposed
    bproj_ref:(1, C)                 f32
    o_ref:    (tb*seq, C)
    s_scr:    (H, tb, seq, seq)      f32 scratch for all-head scores
    o_scr:    (tb*seq, C)            compute-dtype scratch for merged head outputs
    """
    C = head_dim * num_heads
    x = x_ref[...]                       # keep compute dtype (bf16 stays bf16 on MXU)
    cdt = x.dtype

    # Fused qkv projection over the whole window block (one wide MXU pass).
    # f32 accumulate + bias, cast back immediately so the f32 temp's live range is short.
    # (For large C this could be split into three lane-sliced dots to bound it further.)
    qkv = jnp.dot(x, wqkv_ref[...], preferred_element_type=jnp.float32)
    qkv = (qkv + bqkv_ref[...]).astype(cdt)

    # Lane-sliced q/k/v; (tb*seq, C) -> (tb, seq, C) is layout-preserving because seq
    # is a multiple of the 8-sublane tile.
    # TODO(synk): for real Swin windows (seq=49) pad the sequence to 56/64 wrapper-side
    # (mask padded keys via the bias) so these reshapes stay free.
    q = qkv[:, 0 * C:1 * C].reshape(tb, seq, C)
    k = qkv[:, 1 * C:2 * C].reshape(tb, seq, C)
    v = qkv[:, 2 * C:3 * C].reshape(tb, seq, C)

    # ---- scores for every (window, head) pair, into one f32 scratch ----
    for h in range(num_heads):                       # static unroll; H is small
        sl = slice(h * head_dim, (h + 1) * head_dim)
        s_scr[h] = jnp.einsum('bnd,bmd->bnm', q[:, :, sl], k[:, :, sl],
                              preferred_element_type=jnp.float32)

    # ---- ONE fused bias-add + softmax over all heads & windows in the block ----
    # (H, tb, N, N) -> (H, tb//nW, nW*N, N) is a free regroup (seq % 8 == 0), so the
    # untiled (H, nW*N, N) bias broadcasts across window groups without replication.
    groups = tb // n_mask
    s = s_scr[...].reshape(num_heads, groups, n_mask * seq, seq)
    s = s + bias_ref[...][:, None]                   # rel-pos bias (+ mask), f32
    m = jnp.max(s, axis=-1, keepdims=True)
    e = jnp.exp(s - m)
    denom = jnp.sum(e, axis=-1, keepdims=True)
    p = (e * pl.reciprocal(denom, approx=True)).astype(cdt)   # reciprocal on the EUP
    p = p.reshape(num_heads, tb, seq, seq)

    # ---- attention @ v: heads written straight into lane slices of one scratch ----
    for h in range(num_heads):
        sl = slice(h * head_dim, (h + 1) * head_dim)
        oh = jnp.einsum('bnm,bmd->bnd', p[h], v[:, :, sl],
                        preferred_element_type=jnp.float32)
        o_scr[:, sl] = oh.astype(cdt).reshape(tb * seq, head_dim)

    # ---- output projection: one flattened matmul over the whole block ----
    y = jnp.dot(o_scr[...], wproj_ref[...], preferred_element_type=jnp.float32)
    y = y + bproj_ref[...]
    o_ref[...] = y.astype(o_ref.dtype)


# ------------------------------------------------------------------- block-size tuning
def _padded_bytes(shape, itemsize):
    """VMEM footprint with (8,128) trailing-tile padding."""
    shape = tuple(int(d) for d in shape)
    lead = 1
    for d in shape[:-2]:
        lead *= d
    sub = -(-shape[-2] // 8) * 8
    lane = -(-shape[-1] // 128) * 128
    return lead * sub * lane * itemsize


def _block_vmem_bytes(tb, N, C, H, nW, itemsize):
    rows = tb * N
    est = 0
    est += 2 * _padded_bytes((rows, C), itemsize)          # x block (double-buffered)
    est += 2 * _padded_bytes((rows, C), itemsize)          # out block (double-buffered)
    est += 2 * _padded_bytes((H, nW * N, N), 4)            # bias(+mask), f32
    est += 2 * (_padded_bytes((C, 3 * C), itemsize) + _padded_bytes((1, 3 * C), 4)
                + _padded_bytes((C, C), itemsize) + _padded_bytes((1, C), 4))
    est += _padded_bytes((H, tb, N, N), 4)                 # score scratch
    est += _padded_bytes((rows, C), itemsize)              # head-output scratch
    est += _padded_bytes((rows, 3 * C), 4)                 # f32 qkv temp
    est += 2 * _padded_bytes((H, tb, N, N), 4)             # exp / prob temporaries
    return int(est * 1.2)                                  # slack


def _device_tuning():
    kind = ""
    try:
        kind = jax.devices()[0].device_kind.lower()
    except Exception:
        pass
    if "v5 lite" in kind or "v5e" in kind or "v5litepod" in kind:
        # single TensorCore, 16 MiB scoped-VMEM default, 128-wide MXU
        return dict(target_rows=256, min_grid=1, prefer_even_grid=False,
                    vmem_budget=12 << 20, vmem_cap=100 << 20, scoped_default=16 << 20)
    if "v6" in kind:
        # single TensorCore, 128 MiB VMEM, 256-wide MXU -> larger blocks pay off
        return dict(target_rows=512, min_grid=1, prefer_even_grid=False,
                    vmem_budget=48 << 20, vmem_cap=100 << 20, scoped_default=32 << 20)
    if "v7" in kind:
        # two TensorCores share the grid (keep it even) and only 64 MiB VMEM
        return dict(target_rows=256, min_grid=2, prefer_even_grid=True,
                    vmem_budget=20 << 20, vmem_cap=44 << 20, scoped_default=32 << 20)
    return dict(target_rows=256, min_grid=1, prefer_even_grid=False,
                vmem_budget=12 << 20, vmem_cap=64 << 20, scoped_default=16 << 20)


def _choose_block_windows(B_, N, nW, C, H, itemsize, tune):
    """Pick TB (windows per grid step): a multiple of nW dividing B_, VMEM-bounded."""
    cands = [tb for tb in range(nW, B_ + 1, nW) if B_ % tb == 0]
    fits = [tb for tb in cands
            if _block_vmem_bytes(tb, N, C, H, nW, itemsize) <= tune["vmem_budget"]]
    if fits:
        cands = fits

    def grid_ok(tb):
        g = B_ // tb
        if g < tune["min_grid"]:
            return False
        if tune["prefer_even_grid"] and g > 1 and g % 2 != 0:
            return False
        return True

    pool = [tb for tb in cands if grid_ok(tb)] or cands
    big = [tb for tb in pool if tb * N >= tune["target_rows"]]
    return min(big) if big else max(pool)


# --------------------------------------------------------------------------- wrapper
def window_attention_pallas(x, wqkv, bqkv, rel_bias, wproj, bproj,
                            num_heads, scale, mask=None, block_windows=None,
                            compute_dtype=None):
    """x: (B_, N, C); rel_bias: (H, N, N); mask: (nW, N, N) or None."""
    B_, N, C = x.shape
    head_dim = C // num_heads
    out_dtype = x.dtype
    cdt = jnp.dtype(compute_dtype) if compute_dtype is not None else jnp.dtype(x.dtype)

    # ---- combine relative-position bias and window mask (wrapper-side, f32) ----
    # Shipped UNtiled as (H, nW*N, N); the kernel broadcasts it over window groups.
    if mask is None:
        nW = 1
        bias = rel_bias.astype(jnp.float32).reshape(num_heads, N, N)
    else:
        nW = mask.shape[0]
        bias = (rel_bias[:, None].astype(jnp.float32)
                + mask[None].astype(jnp.float32))                   # (H, nW, N, N)
        bias = bias.reshape(num_heads, nW * N, N)
    assert B_ % nW == 0, "B_ must be a multiple of the number of masked windows"

    tune = _device_tuning()
    itemsize = jnp.dtype(cdt).itemsize
    tb = (block_windows if block_windows is not None
          else _choose_block_windows(B_, N, nW, C, num_heads, itemsize, tune))
    assert B_ % tb == 0 and tb % nW == 0

    # ---- weight prep: transpose once, fold softmax scale into the q rows ----
    row_scale = jnp.concatenate([jnp.full((C,), scale, dtype=jnp.float32),
                                 jnp.ones((2 * C,), dtype=jnp.float32)])
    wqkv_t = (wqkv.astype(jnp.float32) * row_scale[:, None]).T.astype(cdt)   # (C, 3C)
    bqkv_s = (bqkv.astype(jnp.float32) * row_scale).reshape(1, 3 * C)        # f32
    wproj_t = wproj.T.astype(cdt)                                            # (C, C)
    bproj_2 = bproj.astype(jnp.float32).reshape(1, C)                        # f32

    x_flat = x.reshape(B_ * N, C).astype(cdt)

    kernel = functools.partial(_window_attn_kernel, num_heads=num_heads,
                               head_dim=head_dim, tb=tb, seq=N, n_mask=nW)

    # Only raise the scoped-VMEM limit when the per-block estimate needs it.
    vmem_est = _block_vmem_bytes(tb, N, C, num_heads, nW, itemsize)
    vmem_limit = None
    if vmem_est > (tune["scoped_default"] * 3) // 4:
        vmem_limit = int(min(tune["vmem_cap"],
                             max(vmem_est * 3 // 2, tune["scoped_default"])))

    out_flat = pl.pallas_call(
        kernel,
        out_shape=jax.ShapeDtypeStruct((B_ * N, C), out_dtype),
        grid_spec=pltpu.PrefetchScalarGridSpec(
            num_scalar_prefetch=0,
            grid=(B_ // tb,),
            in_specs=[
                pl.BlockSpec((tb * N, C), lambda b: (b, 0)),                   # x rows
                pl.BlockSpec((num_heads, nW * N, N), lambda b: (0, 0, 0)),     # bias(+mask)
                pl.BlockSpec((C, 3 * C), lambda b: (0, 0)),                    # qkv W^T
                pl.BlockSpec((1, 3 * C), lambda b: (0, 0)),                    # qkv bias
                pl.BlockSpec((C, C), lambda b: (0, 0)),                        # proj W^T
                pl.BlockSpec((1, C), lambda b: (0, 0)),                        # proj bias
            ],
            # TODO(synk): with C < 128 these stores are masked (vst.msk); for real Swin
            # sizes consider repacking x/out HBM slabs to lane-dense (rows, 128) and
            # benchmarking the in-kernel relayout against the masked-store cost.
            out_specs=pl.BlockSpec((tb * N, C), lambda b: (b, 0)),
            scratch_shapes=[pltpu.VMEM((num_heads, tb, N, N), jnp.float32),
                            pltpu.VMEM((tb * N, C), cdt)],
        ),
        compiler_params=pltpu.CompilerParams(dimension_semantics=("parallel",),
                                             vmem_limit_bytes=vmem_limit),
    )(x_flat, bias, wqkv_t, bqkv_s, wproj_t, bproj_2)

    return out_flat.reshape(B_, N, C).astype(out_dtype)


# ------------------------------------------------------------------- reference / glue
def make_relative_position_index(window_size):
    """Same construction as the PyTorch module (pure numpy glue)."""
    Wh, Ww = window_size
    coords = np.stack(np.meshgrid(np.arange(Wh), np.arange(Ww), indexing='ij'))
    coords_flatten = coords.reshape(2, -1)
    relative_coords = coords_flatten[:, :, None] - coords_flatten[:, None, :]
    relative_coords = relative_coords.transpose(1, 2, 0).copy()
    relative_coords[:, :, 0] += Wh - 1
    relative_coords[:, :, 1] += Ww - 1
    relative_coords[:, :, 0] *= 2 * Ww - 1
    return relative_coords.sum(-1)                                      # (N, N)


def reference_window_attention(x, wqkv, bqkv, rel_bias, wproj, bproj,
                               num_heads, scale, mask=None):
    B_, N, C = x.shape
    hd = C // num_heads
    qkv = x @ wqkv.T + bqkv
    qkv = qkv.reshape(B_, N, 3, num_heads, hd).transpose(2, 0, 3, 1, 4)
    q, k, v = qkv[0] * scale, qkv[1], qkv[2]
    attn = jnp.einsum('bhnd,bhmd->bhnm', q, k)
    attn = attn + rel_bias[None]
    if mask is not None:
        nW = mask.shape[0]
        attn = attn.reshape(B_ // nW, nW, num_heads, N, N) + mask[None, :, None]
        attn = attn.reshape(B_, num_heads, N, N)
    attn = jax.nn.softmax(attn, axis=-1)
    out = jnp.einsum('bhnm,bhmd->bhnd', attn, v).transpose(0, 2, 1, 3).reshape(B_, N, C)
    return out @ wproj.T + bproj


if __name__ == "__main__":
    # Small shapes: dim=32, window 4x4 -> N=16, 4 heads, 4 batches x 4 windows -> B_=16
    dim = 32
    window_size = (4, 4)
    num_heads = 4
    head_dim = dim // num_heads
    scale = head_dim ** (-0.5)
    N = window_size[0] * window_size[1]
    batch = 4
    nW = 4
    B_ = batch * nW

    key = jax.random.PRNGKey(0)
    k_x, k_tab, k_wqkv, k_bqkv, k_wproj, k_bproj, k_mask = jax.random.split(key, 7)

    x = jax.random.normal(k_x, (B_, N, dim), jnp.float32)

    # Parameters (deterministic synthetic init, shapes per module __init__)
    table_size = (2 * window_size[0] - 1) * (2 * window_size[1] - 1)
    rel_pos_table = 0.02 * jax.random.normal(k_tab, (table_size, num_heads), jnp.float32)
    wqkv = 0.05 * jax.random.normal(k_wqkv, (3 * dim, dim), jnp.float32)
    bqkv = 0.01 * jax.random.normal(k_bqkv, (3 * dim,), jnp.float32)
    wproj = 0.05 * jax.random.normal(k_wproj, (dim, dim), jnp.float32)
    bproj = 0.01 * jax.random.normal(k_bproj, (dim,), jnp.float32)

    # Gather relative position bias -> (H, N, N)  (plain-JAX glue, same as module buffer)
    rel_index = jnp.asarray(make_relative_position_index(window_size))        # (N, N)
    rel_bias = rel_pos_table[rel_index.reshape(-1)].reshape(N, N, num_heads)
    rel_bias = jnp.transpose(rel_bias, (2, 0, 1))                             # (H, N, N)

    # Shifted-window style mask: 0 / -inf pattern, deterministic
    mask_bits = (jax.random.uniform(k_mask, (nW, N, N)) > 0.8)
    mask = jnp.where(mask_bits, -1e9, 0.0).astype(jnp.float32)

    # 1) masked, f32 compute
    out = window_attention_pallas(x, wqkv, bqkv, rel_bias, wproj, bproj,
                                  num_heads, scale, mask=mask)
    out = jax.block_until_ready(out)
    ref = reference_window_attention(x, wqkv, bqkv, rel_bias, wproj, bproj,
                                     num_heads, scale, mask=mask)
    assert out.shape == (B_, N, dim)
    # Tolerance accounts for the approximate (EUP) reciprocal in the softmax.
    np.testing.assert_allclose(np.asarray(out), np.asarray(ref), rtol=2e-3, atol=2e-3)

    # 2) mask=None path, f32 compute
    out2 = jax.block_until_ready(
        window_attention_pallas(x, wqkv, bqkv, rel_bias, wproj, bproj,
                                num_heads, scale, mask=None))
    ref2 = reference_window_attention(x, wqkv, bqkv, rel_bias, wproj, bproj,
                                      num_heads, scale, mask=None)
    np.testing.assert_allclose(np.asarray(out2), np.asarray(ref2), rtol=2e-3, atol=2e-3)

    # 3) masked, bf16 compute path (halves MXU/DMA bytes; f32 accumulation & softmax)
    out3 = jax.block_until_ready(
        window_attention_pallas(x, wqkv, bqkv, rel_bias, wproj, bproj,
                                num_heads, scale, mask=mask,
                                compute_dtype=jnp.bfloat16))
    np.testing.assert_allclose(np.asarray(out3), np.asarray(ref), rtol=2e-2, atol=1e-2)

    print("KERNEL_OK")
</pallas_src>

<mosaic_0001>
module attributes {stable_mosaic.version = 11 : i64} {
  func.func @_window_attn_kernel(%arg0: i32, %arg1: memref<256x32xf32, #tpu.memory_space<vmem>>, %arg2: memref<4x64x16xf32, #tpu.memory_space<vmem>>, %arg3: memref<32x96xf32, #tpu.memory_space<vmem>>, %arg4: memref<1x96xf32, #tpu.memory_space<vmem>>, %arg5: memref<32x32xf32, #tpu.memory_space<vmem>>, %arg6: memref<1x32xf32, #tpu.memory_space<vmem>>, %arg7: memref<256x32xf32, #tpu.memory_space<vmem>>, %arg8: memref<4x16x16x16xf32, #tpu.memory_space<vmem>>, %arg9: memref<256x32xf32, #tpu.memory_space<vmem>>) attributes {dimension_semantics = [#tpu.dimension_semantics<parallel>], iteration_bounds = array<i64: 1>, scalar_prefetch = 0 : i64, scratch_operands = 2 : i64, tpu.core_type = #tpu.core_type<tc>, window_params = [{transform_indices = @transform_0, window_bounds = array<i64: 256, 32>}, {pipeline_mode = #tpu.pipeline_mode<synchronous>, transform_indices = @transform_1, window_bounds = array<i64: 4, 64, 16>}, {pipeline_mode = #tpu.pipeline_mode<synchronous>, transform_indices = @transform_2, window_bounds = array<i64: 32, 96>}, {pipeline_mode = #tpu.pipeline_mode<synchronous>, transform_indices = @transform_3, window_bounds = array<i64: 1, 96>}, {pipeline_mode = #tpu.pipeline_mode<synchronous>, transform_indices = @transform_4, window_bounds = array<i64: 32, 32>}, {pipeline_mode = #tpu.pipeline_mode<synchronous>, transform_indices = @transform_5, window_bounds = array<i64: 1, 32>}, {transform_indices = @transform_6, window_bounds = array<i64: 256, 32>}]} {
    %c0 = arith.constant 0 : index
    %c0_0 = arith.constant 0 : index
    %0 = vector.load %arg1[%c0, %c0_0] : memref<256x32xf32, #tpu.memory_space<vmem>>, vector<256x32xf32>
    %c0_1 = arith.constant 0 : index
    %c0_2 = arith.constant 0 : index
    %1 = vector.load %arg3[%c0_1, %c0_2] : memref<32x96xf32, #tpu.memory_space<vmem>>, vector<32x96xf32>
    %cst = arith.constant dense<0.000000e+00> : vector<256x96xf32>
    %2 = tpu.matmul %0, %1, %cst {dimension_numbers = #tpu.dot_dimension_numbers<[1], [0], [0], [1], [0, 0, 1, 1], [], []>} : vector<256x32xf32>, vector<32x96xf32>, vector<256x96xf32> -> vector<256x96xf32>
    %c0_3 = arith.constant 0 : index
    %c0_4 = arith.constant 0 : index
    %3 = vector.load %arg4[%c0_3, %c0_4] : memref<1x96xf32, #tpu.memory_space<vmem>>, vector<1x96xf32>
    %4 = vector.broadcast %3 : vector<1x96xf32> to vector<256x96xf32>
    %5 = arith.addf %2, %4 : vector<256x96xf32>
    %6 = vector.extract_strided_slice %5 {offsets = [0, 0], sizes = [256, 32], strides = [1, 1]} : vector<256x96xf32> to vector<256x32xf32>
    %7 = vector.shape_cast %6 : vector<256x32xf32> to vector<16x16x32xf32>
    %8 = vector.extract_strided_slice %5 {offsets = [0, 32], sizes = [256, 32], strides = [1, 1]} : vector<256x96xf32> to vector<256x32xf32>
    %9 = vector.shape_cast %8 : vector<256x32xf32> to vector<16x16x32xf32>
    %10 = vector.extract_strided_slice %5 {offsets = [0, 64], sizes = [256, 32], strides = [1, 1]} : vector<256x96xf32> to vector<256x32xf32>
    %11 = vector.shape_cast %10 : vector<256x32xf32> to vector<16x16x32xf32>
    %12 = vector.extract_strided_slice %7 {offsets = [0, 0, 0], sizes = [16, 16, 8], strides = [1, 1, 1]} : vector<16x16x32xf32> to vector<16x16x8xf32>
    %13 = vector.extract_strided_slice %9 {offsets = [0, 0, 0], sizes = [16, 16, 8], strides = [1, 1, 1]} : vector<16x16x32xf32> to vector<16x16x8xf32>
    "tpu.trace_start"() <{level = 10 : i32, message = "bnd,bmd->bnm"}> : () -> ()
    %cst_5 = arith.constant dense<0.000000e+00> : vector<16x16x16xf32>
    %14 = tpu.matmul %12, %13, %cst_5 {dimension_numbers = #tpu.dot_dimension_numbers<[2], [2], [1], [1], [0, 0, 0, 1, 1, 1], [0], [0]>} : vector<16x16x8xf32>, vector<16x16x8xf32>, vector<16x16x16xf32> -> vector<16x16x16xf32>
    "tpu.trace_stop"() : () -> ()
    %c0_6 = arith.constant 0 : index
    %c0_7 = arith.constant 0 : index
    %c0_8 = arith.constant 0 : index
    %c0_9 = arith.constant 0 : index
    %15 = vector.load %arg8[%c0_6, %c0_7, %c0_8, %c0_9] : memref<4x16x16x16xf32, #tpu.memory_space<vmem>>, vector<1x16x16x16xf32>
    %16 = vector.shape_cast %15 : vector<1x16x16x16xf32> to vector<16x16x16xf32>
    %17 = vector.shape_cast %14 : vector<16x16x16xf32> to vector<1x16x16x16xf32>
    tpu.vector_store %arg8[%c0_6, %c0_7, %c0_8, %c0_9], %17 {strides = array<i32>} : memref<4x16x16x16xf32, #tpu.memory_space<vmem>>, vector<1x16x16x16xf32>,
    %18 = vector.extract_strided_slice %7 {offsets = [0, 0, 8], sizes = [16, 16, 8], strides = [1, 1, 1]} : vector<16x16x32xf32> to vector<16x16x8xf32>
    %19 = vector.extract_strided_slice %9 {offsets = [0, 0, 8], sizes = [16, 16, 8], strides = [1, 1, 1]} : vector<16x16x32xf32> to vector<16x16x8xf32>
    "tpu.trace_start"() <{level = 10 : i32, message = "bnd,bmd->bnm"}> : () -> ()
    %cst_10 = arith.constant dense<0.000000e+00> : vector<16x16x16xf32>
    %20 = tpu.matmul %18, %19, %cst_10 {dimension_numbers = #tpu.dot_dimension_numbers<[2], [2], [1], [1], [0, 0, 0, 1, 1, 1], [0], [0]>} : vector<16x16x8xf32>, vector<16x16x8xf32>, vector<16x16x16xf32> -> vector<16x16x16xf32>
    "tpu.trace_stop"() : () -> ()
    %c1 = arith.constant 1 : index
    %c0_11 = arith.constant 0 : index
    %c0_12 = arith.constant 0 : index
    %c0_13 = arith.constant 0 : index
    %21 = vector.load %arg8[%c1, %c0_11, %c0_12, %c0_13] : memref<4x16x16x16xf32, #tpu.memory_space<vmem>>, vector<1x16x16x16xf32>
    %22 = vector.shape_cast %21 : vector<1x16x16x16xf32> to vector<16x16x16xf32>
    %23 = vector.shape_cast %20 : vector<16x16x16xf32> to vector<1x16x16x16xf32>
    tpu.vector_store %arg8[%c1, %c0_11, %c0_12, %c0_13], %23 {strides = array<i32>} : memref<4x16x16x16xf32, #tpu.memory_space<vmem>>, vector<1x16x16x16xf32>,
    %24 = vector.extract_strided_slice %7 {offsets = [0, 0, 16], sizes = [16, 16, 8], strides = [1, 1, 1]} : vector<16x16x32xf32> to vector<16x16x8xf32>
    %25 = vector.extract_strided_slice %9 {offsets = [0, 0, 16], sizes = [16, 16, 8], strides = [1, 1, 1]} : vector<16x16x32xf32> to vector<16x16x8xf32>
    "tpu.trace_start"() <{level = 10 : i32, message = "bnd,bmd->bnm"}> : () -> ()
    %cst_14 = arith.constant dense<0.000000e+00> : vector<16x16x16xf32>
    %26 = tpu.matmul %24, %25, %cst_14 {dimension_numbers = #tpu.dot_dimension_numbers<[2], [2], [1], [1], [0, 0, 0, 1, 1, 1], [0], [0]>} : vector<16x16x8xf32>, vector<16x16x8xf32>, vector<16x16x16xf32> -> vector<16x16x16xf32>
    "tpu.trace_stop"() : () -> ()
    %c2 = arith.constant 2 : index
    %c0_15 = arith.constant 0 : index
    %c0_16 = arith.constant 0 : index
    %c0_17 = arith.constant 0 : index
    %27 = vector.load %arg8[%c2, %c0_15, %c0_16, %c0_17] : memref<4x16x16x16xf32, #tpu.memory_space<vmem>>, vector<1x16x16x16xf32>
    %28 = vector.shape_cast %27 : vector<1x16x16x16xf32> to vector<16x16x16xf32>
    %29 = vector.shape_cast %26 : vector<16x16x16xf32> to vector<1x16x16x16xf32>
    tpu.vector_store %arg8[%c2, %c0_15, %c0_16, %c0_17], %29 {strides = array<i32>} : memref<4x16x16x16xf32, #tpu.memory_space<vmem>>, vector<1x16x16x16xf32>,
    %30 = vector.extract_strided_slice %7 {offsets = [0, 0, 24], sizes = [16, 16, 8], strides = [1, 1, 1]} : vector<16x16x32xf32> to vector<16x16x8xf32>
    %31 = vector.extract_strided_slice %9 {offsets = [0, 0, 24], sizes = [16, 16, 8], strides = [1, 1, 1]} : vector<16x16x32xf32> to vector<16x16x8xf32>
    "tpu.trace_start"() <{level = 10 : i32, message = "bnd,bmd->bnm"}> : () -> ()
    %cst_18 = arith.constant dense<0.000000e+00> : vector<16x16x16xf32>
    %32 = tpu.matmul %30, %31, %cst_18 {dimension_numbers = #tpu.dot_dimension_numbers<[2], [2], [1], [1], [0, 0, 0, 1, 1, 1], [0], [0]>} : vector<16x16x8xf32>, vector<16x16x8xf32>, vector<16x16x16xf32> -> vector<16x16x16xf32>
    "tpu.trace_stop"() : () -> ()
    %c3 = arith.constant 3 : index
    %c0_19 = arith.constant 0 : index
    %c0_20 = arith.constant 0 : index
    %c0_21 = arith.constant 0 : index
    %33 = vector.load %arg8[%c3, %c0_19, %c0_20, %c0_21] : memref<4x16x16x16xf32, #tpu.memory_space<vmem>>, vector<1x16x16x16xf32>
    %34 = vector.shape_cast %33 : vector<1x16x16x16xf32> to vector<16x16x16xf32>
    %35 = vector.shape_cast %32 : vector<16x16x16xf32> to vector<1x16x16x16xf32>
    tpu.vector_store %arg8[%c3, %c0_19, %c0_20, %c0_21], %35 {strides = array<i32>} : memref<4x16x16x16xf32, #tpu.memory_space<vmem>>, vector<1x16x16x16xf32>,
    %c0_22 = arith.constant 0 : index
    %c0_23 = arith.constant 0 : index
    %c0_24 = arith.constant 0 : index
    %c0_25 = arith.constant 0 : index
    %36 = vector.load %arg8[%c0_22, %c0_23, %c0_24, %c0_25] : memref<4x16x16x16xf32, #tpu.memory_space<vmem>>, vector<4x16x16x16xf32>
    %37 = vector.shape_cast %36 : vector<4x16x16x16xf32> to vector<4x4x64x16xf32>
    %c0_26 = arith.constant 0 : index
    %c0_27 = arith.constant 0 : index
    %c0_28 = arith.constant 0 : index
    %38 = vector.load %arg2[%c0_26, %c0_27, %c0_28] : memref<4x64x16xf32, #tpu.memory_space<vmem>>, vector<4x64x16xf32>
    %39 = vector.shape_cast %38 : vector<4x64x16xf32> to vector<4x1x64x16xf32>
    %40 = vector.broadcast %39 : vector<4x1x64x16xf32> to vector<4x4x64x16xf32>
    %41 = arith.addf %37, %40 : vector<4x4x64x16xf32>
    %cst_29 = arith.constant dense<0xFF800000> : vector<4x4x64xf32>
    %42 = vector.multi_reduction <maximumf>, %41, %cst_29 [3] : vector<4x4x64x16xf32> to vector<4x4x64xf32>
    %43 = vector.shape_cast %42 : vector<4x4x64xf32> to vector<4x4x64x1xf32>
    %44 = vector.broadcast %43 : vector<4x4x64x1xf32> to vector<4x4x64x16xf32>
    %45 = arith.subf %41, %44 : vector<4x4x64x16xf32>
    %46 = math.exp %45 : vector<4x4x64x16xf32>
    %cst_30 = arith.constant dense<0.000000e+00> : vector<4x4x64xf32>
    %47 = vector.multi_reduction <add>, %46, %cst_30 [3] : vector<4x4x64x16xf32> to vector<4x4x64xf32>
    %48 = vector.shape_cast %47 : vector<4x4x64xf32> to vector<4x4x64x1xf32>
    %49 = tpu.reciprocal %48 {approx = true} : vector<4x4x64x1xf32> -> vector<4x4x64x1xf32>
    %50 = vector.broadcast %49 : vector<4x4x64x1xf32> to vector<4x4x64x16xf32>
    %51 = arith.mulf %46, %50 : vector<4x4x64x16xf32>
    %52 = vector.shape_cast %51 : vector<4x4x64x16xf32> to vector<4x16x16x16xf32>
    %53 = vector.extract_strided_slice %52 {offsets = [0, 0, 0, 0], sizes = [1, 16, 16, 16], strides = [1, 1, 1, 1]} : vector<4x16x16x16xf32> to vector<1x16x16x16xf32>
    %54 = vector.shape_cast %53 : vector<1x16x16x16xf32> to vector<16x16x16xf32>
    %55 = vector.extract_strided_slice %11 {offsets = [0, 0, 0], sizes = [16, 16, 8], strides = [1, 1, 1]} : vector<16x16x32xf32> to vector<16x16x8xf32>
    "tpu.trace_start"() <{level = 10 : i32, message = "bnm,bmd->bnd"}> : () -> ()
    %cst_31 = arith.constant dense<0.000000e+00> : vector<16x16x8xf32>
    %56 = tpu.matmul %54, %55, %cst_31 {dimension_numbers = #tpu.dot_dimension_numbers<[2], [1], [1], [2], [0, 0, 0, 1, 1, 2], [0], [0]>} : vector<16x16x16xf32>, vector<16x16x8xf32>, vector<16x16x8xf32> -> vector<16x16x8xf32>
    "tpu.trace_stop"() : () -> ()
    %57 = vector.shape_cast %56 : vector<16x16x8xf32> to vector<256x8xf32>
    %c0_32 = arith.constant 0 : index
    %c0_33 = arith.constant 0 : index
    %58 = vector.load %arg9[%c0_32, %c0_33] : memref<256x32xf32, #tpu.memory_space<vmem>>, vector<256x8xf32>
    tpu.vector_store %arg9[%c0_32, %c0_33], %57 {strides = array<i32>} : memref<256x32xf32, #tpu.memory_space<vmem>>, vector<256x8xf32>,
    %59 = vector.extract_strided_slice %52 {offsets = [1, 0, 0, 0], sizes = [1, 16, 16, 16], strides = [1, 1, 1, 1]} : vector<4x16x16x16xf32> to vector<1x16x16x16xf32>
    %60 = vector.shape_cast %59 : vector<1x16x16x16xf32> to vector<16x16x16xf32>
    %61 = vector.extract_strided_slice %11 {offsets = [0, 0, 8], sizes = [16, 16, 8], strides = [1, 1, 1]} : vector<16x16x32xf32> to vector<16x16x8xf32>
    "tpu.trace_start"() <{level = 10 : i32, message = "bnm,bmd->bnd"}> : () -> ()
    %cst_34 = arith.constant dense<0.000000e+00> : vector<16x16x8xf32>
    %62 = tpu.matmul %60, %61, %cst_34 {dimension_numbers = #tpu.dot_dimension_numbers<[2], [1], [1], [2], [0, 0, 0, 1, 1, 2], [0], [0]>} : vector<16x16x16xf32>, vector<16x16x8xf32>, vector<16x16x8xf32> -> vector<16x16x8xf32>
    "tpu.trace_stop"() : () -> ()
    %63 = vector.shape_cast %62 : vector<16x16x8xf32> to vector<256x8xf32>
    %c0_35 = arith.constant 0 : index
    %c8 = arith.constant 8 : index
    %64 = vector.load %arg9[%c0_35, %c8] : memref<256x32xf32, #tpu.memory_space<vmem>>, vector<256x8xf32>
    tpu.vector_store %arg9[%c0_35, %c8], %63 {strides = array<i32>} : memref<256x32xf32, #tpu.memory_space<vmem>>, vector<256x8xf32>,
    %65 = vector.extract_strided_slice %52 {offsets = [2, 0, 0, 0], sizes = [1, 16, 16, 16], strides = [1, 1, 1, 1]} : vector<4x16x16x16xf32> to vector<1x16x16x16xf32>
    %66 = vector.shape_cast %65 : vector<1x16x16x16xf32> to vector<16x16x16xf32>
    %67 = vector.extract_strided_slice %11 {offsets = [0, 0, 16], sizes = [16, 16, 8], strides = [1, 1, 1]} : vector<16x16x32xf32> to vector<16x16x8xf32>
    "tpu.trace_start"() <{level = 10 : i32, message = "bnm,bmd->bnd"}> : () -> ()
    %cst_36 = arith.constant dense<0.000000e+00> : vector<16x16x8xf32>
    %68 = tpu.matmul %66, %67, %cst_36 {dimension_numbers = #tpu.dot_dimension_numbers<[2], [1], [1], [2], [0, 0, 0, 1, 1, 2], [0], [0]>} : vector<16x16x16xf32>, vector<16x16x8xf32>, vector<16x16x8xf32> -> vector<16x16x8xf32>
    "tpu.trace_stop"() : () -> ()
    %69 = vector.shape_cast %68 : vector<16x16x8xf32> to vector<256x8xf32>
    %c0_37 = arith.constant 0 : index
    %c16 = arith.constant 16 : index
    %70 = vector.load %arg9[%c0_37, %c16] : memref<256x32xf32, #tpu.memory_space<vmem>>, vector<256x8xf32>
    tpu.vector_store %arg9[%c0_37, %c16], %69 {strides = array<i32>} : memref<256x32xf32, #tpu.memory_space<vmem>>, vector<256x8xf32>,
    %71 = vector.extract_strided_slice %52 {offsets = [3, 0, 0, 0], sizes = [1, 16, 16, 16], strides = [1, 1, 1, 1]} : vector<4x16x16x16xf32> to vector<1x16x16x16xf32>
    %72 = vector.shape_cast %71 : vector<1x16x16x16xf32> to vector<16x16x16xf32>
    %73 = vector.extract_strided_slice %11 {offsets = [0, 0, 24], sizes = [16, 16, 8], strides = [1, 1, 1]} : vector<16x16x32xf32> to vector<16x16x8xf32>
    "tpu.trace_start"() <{level = 10 : i32, message = "bnm,bmd->bnd"}> : () -> ()
    %cst_38 = arith.constant dense<0.000000e+00> : vector<16x16x8xf32>
    %74 = tpu.matmul %72, %73, %cst_38 {dimension_numbers = #tpu.dot_dimension_numbers<[2], [1], [1], [2], [0, 0, 0, 1, 1, 2], [0], [0]>} : vector<16x16x16xf32>, vector<16x16x8xf32>, vector<16x16x8xf32> -> vector<16x16x8xf32>
    "tpu.trace_stop"() : () -> ()
    %75 = vector.shape_cast %74 : vector<16x16x8xf32> to vector<256x8xf32>
    %c0_39 = arith.constant 0 : index
    %c24 = arith.constant 24 : index
    %76 = vector.load %arg9[%c0_39, %c24] : memref<256x32xf32, #tpu.memory_space<vmem>>, vector<256x8xf32>
    tpu.vector_store %arg9[%c0_39, %c24], %75 {strides = array<i32>} : memref<256x32xf32, #tpu.memory_space<vmem>>, vector<256x8xf32>,
    %c0_40 = arith.constant 0 : index
    %c0_41 = arith.constant 0 : index
    %77 = vector.load %arg9[%c0_40, %c0_41] : memref<256x32xf32, #tpu.memory_space<vmem>>, vector<256x32xf32>
    %c0_42 = arith.constant 0 : index
    %c0_43 = arith.constant 0 : index
    %78 = vector.load %arg5[%c0_42, %c0_43] : memref<32x32xf32, #tpu.memory_space<vmem>>, vector<32x32xf32>
    %cst_44 = arith.constant dense<0.000000e+00> : vector<256x32xf32>
    %79 = tpu.matmul %77, %78, %cst_44 {dimension_numbers = #tpu.dot_dimension_numbers<[1], [0], [0], [1], [0, 0, 1, 1], [], []>} : vector<256x32xf32>, vector<32x32xf32>, vector<256x32xf32> -> vector<256x32xf32>
    %c0_45 = arith.constant 0 : index
    %c0_46 = arith.constant 0 : index
    %80 = vector.load %arg6[%c0_45, %c0_46] : memref<1x32xf32, #tpu.memory_space<vmem>>, vector<1x32xf32>
    %81 = vector.broadcast %80 : vector<1x32xf32> to vector<256x32xf32>
    %82 = arith.addf %79, %81 : vector<256x32xf32>
    %c0_47 = arith.constant 0 : index
    %c0_48 = arith.constant 0 : index
    %83 = vector.load %arg7[%c0_47, %c0_48] : memref<256x32xf32, #tpu.memory_space<vmem>>, vector<256x32xf32>
    tpu.vector_store %arg7[%c0_47, %c0_48], %82 {strides = array<i32>} : memref<256x32xf32, #tpu.memory_space<vmem>>, vector<256x32xf32>,
    return
  }
  func.func @transform_0(%arg0: i32) -> (i32, i32) {
    %c0_i32 = arith.constant 0 : i32
    %c0_i32_0 = arith.constant 0 : i32
    return %arg0, %c0_i32 : i32, i32
  }
  func.func @transform_1(%arg0: i32) -> (i32, i32, i32) {
    %c0_i32 = arith.constant 0 : i32
    %c0_i32_0 = arith.constant 0 : i32
    %c0_i32_1 = arith.constant 0 : i32
    %c0_i32_2 = arith.constant 0 : i32
    return %c0_i32, %c0_i32_0, %c0_i32_1 : i32, i32, i32
  }
  func.func @transform_2(%arg0: i32) -> (i32, i32) {
    %c0_i32 = arith.constant 0 : i32
    %c0_i32_0 = arith.constant 0 : i32
    %c0_i32_1 = arith.constant 0 : i32
    return %c0_i32, %c0_i32_0 : i32, i32
  }
  func.func @transform_3(%arg0: i32) -> (i32, i32) {
    %c0_i32 = arith.constant 0 : i32
    %c0_i32_0 = arith.constant 0 : i32
    %c0_i32_1 = arith.constant 0 : i32
    return %c0_i32, %c0_i32_0 : i32, i32
  }
  func.func @transform_4(%arg0: i32) -> (i32, i32) {
    %c0_i32 = arith.constant 0 : i32
    %c0_i32_0 = arith.constant 0 : i32
    %c0_i32_1 = arith.constant 0 : i32
    return %c0_i32, %c0_i32_0 : i32, i32
  }
  func.func @transform_5(%arg0: i32) -> (i32, i32) {
    %c0_i32 = arith.constant 0 : i32
    %c0_i32_0 = arith.constant 0 : i32
    %c0_i32_1 = arith.constant 0 : i32
    return %c0_i32, %c0_i32_0 : i32, i32
  }
  func.func @transform_6(%arg0: i32) -> (i32, i32) {
    %c0_i32 = arith.constant 0 : i32
    %c0_i32_0 = arith.constant 0 : i32
    return %arg0, %c0_i32 : i32, i32
  }
}

</mosaic_0001>

<llo_original>
// kernel: tpu_custom_call.1
$region0: #{tpu_custom_call.1}
  #allocation0 [shape = 'u32[]', space=smem, size = 0x4, offset = 0x4, fixed_abs, tag = 'smem constant byte address 0x4 - core index']
  #allocation1 [shape = 'u32[72,128]{1,0:T(1,128)}', space=vmem, size = 0x9000, scoped, tag = 'internal scratch']
  #allocation2 [shape = 'f32[4,16,16,16]{3,2,1,0:T(8,128)}', space=vmem, size = 0x80000, scoped, tag = 'scratch operand']
  #allocation3 [shape = 'f32[256,32]{1,0:T(8,128)}', space=vmem, size = 0x20000, scoped, tag = 'scratch operand']
  %s0 = inlined_call_operand.vmem [shape: f32[256,32], index: 0, kind: input, shape index: {}]
  %s1 = inlined_call_operand.vmem [shape: f32[4,64,16], index: 1, kind: input, shape index: {}]
  %s2 = inlined_call_operand.vmem [shape: f32[32,96], index: 2, kind: input, shape index: {}]
  %s3 = inlined_call_operand.vmem [shape: f32[1,96], index: 3, kind: input, shape index: {}]
  %s4 = inlined_call_operand.vmem [shape: f32[32,32], index: 4, kind: input, shape index: {}]
  %s5 = inlined_call_operand.vmem [shape: f32[1,32], index: 5, kind: input, shape index: {}]
  %s6 = inlined_call_operand.vmem [shape: f32[256,32], index: 6, kind: output, shape index: {}]
  %s7 = sld [smem:[#allocation0]]
  $region34: #{tpu_custom_call.1} parent=0
    _
  %s9 = ssub.s32 1, %s7
  %s10 = scalar_select 0, %s9, %s7
  // Predicated region
  $region2: #{tpu_custom_call.1} parent=0 // pred_check
    _
  $region3: #{tpu_custom_call.1} parent=0 // pred_check_branch
    %12 = sbr.rel (0) target = $region5
  $region4: #{tpu_custom_call.1} parent=0 // pred_region
    _
  $region5: #{tpu_custom_call.1} parent=0 // pred_fallthru
    _
  // Predicated region
  $region6: #{tpu_custom_call.1} parent=0 // pred_check
    _
  $region7: #{tpu_custom_call.1} parent=0 // pred_check_branch
    %14 = sbr.rel (0) target = $region9
  $region8: #{tpu_custom_call.1} parent=0 // pred_region
    _
  $region9: #{tpu_custom_call.1} parent=0 // pred_fallthru
    _
  // Predicated region
  $region10: #{tpu_custom_call.1} parent=0 // pred_check
    _
  $region11: #{tpu_custom_call.1} parent=0 // pred_check_branch
    %16 = sbr.rel (0) target = $region13
  $region12: #{tpu_custom_call.1} parent=0 // pred_region
    _
  $region13: #{tpu_custom_call.1} parent=0 // pred_fallthru
    _
  // Predicated region
  $region14: #{tpu_custom_call.1} parent=0 // pred_check
    _
  $region15: #{tpu_custom_call.1} parent=0 // pred_check_branch
    %18 = sbr.rel (0) target = $region17
  $region16: #{tpu_custom_call.1} parent=0 // pred_region
    _
  $region17: #{tpu_custom_call.1} parent=0 // pred_fallthru
    _
  // Predicated region
  $region18: #{tpu_custom_call.1} parent=0 // pred_check
    _
  $region19: #{tpu_custom_call.1} parent=0 // pred_check_branch
    %20 = sbr.rel (0) target = $region21
  $region20: #{tpu_custom_call.1} parent=0 // pred_region
    _
  $region21: #{tpu_custom_call.1} parent=0 // pred_fallthru
    _
  // Predicated region
  $region22: #{tpu_custom_call.1} parent=0 // pred_check
    _
  $region23: #{tpu_custom_call.1} parent=0 // pred_check_branch
    %22 = sbr.rel (0) target = $region25
  $region24: #{tpu_custom_call.1} parent=0 // pred_region
    _
  $region25: #{tpu_custom_call.1} parent=0 // pred_fallthru
    _
  %v23 = vld [vmem:[%s0] sm:$0xff]
  %v24 = vld [vmem:[%s0 + $0x8] sm:$0xff]
  %v25 = vld [vmem:[%s0 + $0x10] sm:$0xff]
  %v26 = vld [vmem:[%s0 + $0x18] sm:$0xff]
  %v27 = vld [vmem:[%s0 + $0x20] sm:$0xff]
  %v28 = vld [vmem:[%s0 + $0x28] sm:$0xff]
  %v29 = vld [vmem:[%s0 + $0x30] sm:$0xff]
  %v30 = vld [vmem:[%s0 + $0x38] sm:$0xff]
  %v31 = vld [vmem:[%s0 + $0x40] sm:$0xff]
  %v32 = vld [vmem:[%s0 + $0x48] sm:$0xff]
  %v33 = vld [vmem:[%s0 + $0x50] sm:$0xff]
  %v34 = vld [vmem:[%s0 + $0x58] sm:$0xff]
  %v35 = vld [vmem:[%s0 + $0x60] sm:$0xff]
  %v36 = vld [vmem:[%s0 + $0x68] sm:$0xff]
  %v37 = vld [vmem:[%s0 + $0x70] sm:$0xff]
  %v38 = vld [vmem:[%s0 + $0x78] sm:$0xff]
  %v39 = vld [vmem:[%s0 + $0x80] sm:$0xff]
  %v40 = vld [vmem:[%s0 + $0x88] sm:$0xff]
  %v41 = vld [vmem:[%s0 + $0x90] sm:$0xff]
  %v42 = vld [vmem:[%s0 + $0x98] sm:$0xff]
  %v43 = vld [vmem:[%s0 + $0xa0] sm:$0xff]
  %v44 = vld [vmem:[%s0 + $0xa8] sm:$0xff]
  %v45 = vld [vmem:[%s0 + $0xb0] sm:$0xff]
  %v46 = vld [vmem:[%s0 + $0xb8] sm:$0xff]
  %v47 = vld [vmem:[%s0 + $0xc0] sm:$0xff]
  %v48 = vld [vmem:[%s0 + $0xc8] sm:$0xff]
  %v49 = vld [vmem:[%s0 + $0xd0] sm:$0xff]
  %v50 = vld [vmem:[%s0 + $0xd8] sm:$0xff]
  %v51 = vld [vmem:[%s0 + $0xe0] sm:$0xff]
  %v52 = vld [vmem:[%s0 + $0xe8] sm:$0xff]
  %v53 = vld [vmem:[%s0 + $0xf0] sm:$0xff]
  %v54 = vld [vmem:[%s0 + $0xf8] sm:$0xff]
  %v55 = vld [vmem:[%s2] sm:$0xff]
  %v56 = vld [vmem:[%s2 + $0x8] sm:$0xff]
  %v57 = vld [vmem:[%s2 + $0x10] sm:$0xff]
  %v58 = vld [vmem:[%s2 + $0x18] sm:$0xff]
  %v59 = vld [vmem:[%s3] sm:$0x1]
  %v61 = vperm.slane %v59, 0
  %vm63 = vcmask 261120
  %v65 = vsel %vm63, %v23, 0
  %v68 = vsel %vm63, %v24, 0
  %v71 = vsel %vm63, %v25, 0
  %v74 = vsel %vm63, %v26, 0
  %v77 = vsel %vm63, %v27, 0
  %v80 = vsel %vm63, %v28, 0
  %v83 = vsel %vm63, %v29, 0
  %v86 = vsel %vm63, %v30, 0
  %v89 = vsel %vm63, %v31, 0
  %v92 = vsel %vm63, %v32, 0
  %v95 = vsel %vm63, %v33, 0
  %v98 = vsel %vm63, %v34, 0
  %v101 = vsel %vm63, %v35, 0
  %v104 = vsel %vm63, %v36, 0
  %v107 = vsel %vm63, %v37, 0
  %v110 = vsel %vm63, %v38, 0
  %v113 = vsel %vm63, %v39, 0
  %v116 = vsel %vm63, %v40, 0
  %v119 = vsel %vm63, %v41, 0
  %v122 = vsel %vm63, %v42, 0
  %v125 = vsel %vm63, %v43, 0
  %v128 = vsel %vm63, %v44, 0
  %v131 = vsel %vm63, %v45, 0
  %v134 = vsel %vm63, %v46, 0
  %v137 = vsel %vm63, %v47, 0
  %v140 = vsel %vm63, %v48, 0
  %v143 = vsel %vm63, %v49, 0
  %v146 = vsel %vm63, %v50, 0
  %v149 = vsel %vm63, %v51, 0
  %v152 = vsel %vm63, %v52, 0
  %v155 = vsel %vm63, %v53, 0
  %v158 = vsel %vm63, %v54, 0
  %160 = vmatpush.msra.mxu0 0.0
  %161 = vmatpush.msra.mxu0 0.0
  %162 = vmatpush.msra.mxu0 0.0
  %163 = vmatpush.msra.mxu0 0.0
  %164 = vmatpush.msra.mxu0 0.0
  %165 = vmatpush.msra.mxu0 0.0
  %166 = vmatpush.msra.mxu0 0.0
  %167 = vmatpush.msra.mxu0 0.0
  %168 = vmatpush.msra.mxu0 0.0
  %169 = vmatpush.msra.mxu0 0.0
  %170 = vmatpush.msra.mxu0 0.0
  %171 = vmatpush.msra.mxu0 0.0
  %172 = vmatpush.msra.mxu0 %v58
  %173 = vmatpush.msra.mxu0 %v57
  %174 = vmatpush.msra.mxu0 %v56
  %175 = vmatpush.msra.mxu0 %v55
  %176 = vmatmul.f32.gmra.mxu0 %v65
  %v177 = vpop.f32.mrf.mxu0
  %v178 = vadd.f32 %v61, %v177
  %179 = vmatmul.f32.gmra.mxu0 %v68
  %v180 = vpop.f32.mrf.mxu0
  %v181 = vadd.f32 %v61, %v180
  %182 = vmatmul.f32.gmra.mxu0 %v71
  %v183 = vpop.f32.mrf.mxu0
  %v184 = vadd.f32 %v61, %v183
  %185 = vmatmul.f32.gmra.mxu0 %v74
  %v186 = vpop.f32.mrf.mxu0
  %v187 = vadd.f32 %v61, %v186
  %188 = vmatmul.f32.gmra.mxu0 %v77
  %v189 = vpop.f32.mrf.mxu0
  %v190 = vadd.f32 %v61, %v189
  %191 = vmatmul.f32.gmra.mxu0 %v80
  %v192 = vpop.f32.mrf.mxu0
  %v193 = vadd.f32 %v61, %v192
  %194 = vmatmul.f32.gmra.mxu0 %v83
  %v195 = vpop.f32.mrf.mxu0
  %v196 = vadd.f32 %v61, %v195
  %197 = vmatmul.f32.gmra.mxu0 %v86
  %v198 = vpop.f32.mrf.mxu0
  %v199 = vadd.f32 %v61, %v198
  %200 = vmatmul.f32.gmra.mxu0 %v89
  %v201 = vpop.f32.mrf.mxu0
  %v202 = vadd.f32 %v61, %v201
  %203 = vmatmul.f32.gmra.mxu0 %v92
  %v204 = vpop.f32.mrf.mxu0
  %v205 = vadd.f32 %v61, %v204
  %206 = vmatmul.f32.gmra.mxu0 %v95
  %v207 = vpop.f32.mrf.mxu0
  %v208 = vadd.f32 %v61, %v207
  %209 = vmatmul.f32.gmra.mxu0 %v98
  %v210 = vpop.f32.mrf.mxu0
  %v211 = vadd.f32 %v61, %v210
  %212 = vmatmul.f32.gmra.mxu0 %v101
  %v213 = vpop.f32.mrf.mxu0
  %v214 = vadd.f32 %v61, %v213
  %215 = vmatmul.f32.gmra.mxu0 %v104
  %v216 = vpop.f32.mrf.mxu0
  %v217 = vadd.f32 %v61, %v216
  %218 = vmatmul.f32.gmra.mxu0 %v107
  %v219 = vpop.f32.mrf.mxu0
  %v220 = vadd.f32 %v61, %v219
  %221 = vmatmul.f32.gmra.mxu0 %v110
  %v222 = vpop.f32.mrf.mxu0
  %v223 = vadd.f32 %v61, %v222
  %224 = vmatmul.f32.gmra.mxu0 %v113
  %v225 = vpop.f32.mrf.mxu0
  %v226 = vadd.f32 %v61, %v225
  %227 = vmatmul.f32.gmra.mxu0 %v116
  %v228 = vpop.f32.mrf.mxu0
  %v229 = vadd.f32 %v61, %v228
  %230 = vmatmul.f32.gmra.mxu0 %v119
  %v231 = vpop.f32.mrf.mxu0
  %v232 = vadd.f32 %v61, %v231
  %233 = vmatmul.f32.gmra.mxu0 %v122
  %v234 = vpop.f32.mrf.mxu0
  %v235 = vadd.f32 %v61, %v234
  %236 = vmatmul.f32.gmra.mxu0 %v125
  %v237 = vpop.f32.mrf.mxu0
  %v238 = vadd.f32 %v61, %v237
  %239 = vmatmul.f32.gmra.mxu0 %v128
  %v240 = vpop.f32.mrf.mxu0
  %v241 = vadd.f32 %v61, %v240
  %242 = vmatmul.f32.gmra.mxu0 %v131
  %v243 = vpop.f32.mrf.mxu0
  %v244 = vadd.f32 %v61, %v243
  %245 = vmatmul.f32.gmra.mxu0 %v134
  %v246 = vpop.f32.mrf.mxu0
  %v247 = vadd.f32 %v61, %v246
  %248 = vmatmul.f32.gmra.mxu0 %v137
  %v249 = vpop.f32.mrf.mxu0
  %v250 = vadd.f32 %v61, %v249
  %251 = vmatmul.f32.gmra.mxu0 %v140
  %v252 = vpop.f32.mrf.mxu0
  %v253 = vadd.f32 %v61, %v252
  %254 = vmatmul.f32.gmra.mxu0 %v143
  %v255 = vpop.f32.mrf.mxu0
  %v256 = vadd.f32 %v61, %v255
  %257 = vmatmul.f32.gmra.mxu0 %v146
  %v258 = vpop.f32.mrf.mxu0
  %v259 = vadd.f32 %v61, %v258
  %260 = vmatmul.f32.gmra.mxu0 %v149
  %v261 = vpop.f32.mrf.mxu0
  %v262 = vadd.f32 %v61, %v261
  %263 = vmatmul.f32.gmra.mxu0 %v152
  %v264 = vpop.f32.mrf.mxu0
  %v265 = vadd.f32 %v61, %v264
  %266 = vmatmul.f32.gmra.mxu0 %v155
  %v267 = vpop.f32.mrf.mxu0
  %v268 = vadd.f32 %v61, %v267
  %269 = vmatmul.f32.gmra.mxu0 %v158
  %v270 = vpop.f32.mrf.mxu0
  %v271 = vadd.f32 %v61, %v270
  %272 = vdwg.mxu0
  %275 = vrot.lane.b32.xlu0 %v178, 96
  %v276 = vpop.permute.xlu0 %275
  %277 = vrot.lane.b32.xlu0 %v181, 96
  %v278 = vpop.permute.xlu0 %277
  %vm279 = vcmask 64512
  %v280 = vsel %vm279, %v178, 0
  %v282 = vsel %vm279, %v181, 0
  %v284 = vsel %vm279, %v276, 0
  %v286 = vsel %vm279, %v278, 0
  %288 = vmatpush.xpose.msra.mxu0 0.0
  %289 = vmatpush.xpose.msra.mxu0 0.0
  %290 = vmatpush.xpose.msra.mxu0 0.0
  %291 = vmatpush.xpose.msra.mxu0 0.0
  %292 = vmatpush.xpose.msra.mxu0 0.0
  %293 = vmatpush.xpose.msra.mxu0 0.0
  %294 = vmatpush.xpose.msra.mxu0 0.0
  %295 = vmatpush.xpose.msra.mxu0 0.0
  %296 = vmatpush.xpose.msra.mxu0 0.0
  %297 = vmatpush.xpose.msra.mxu0 0.0
  %298 = vmatpush.xpose.msra.mxu0 0.0
  %299 = vmatpush.xpose.msra.mxu0 0.0
  %300 = vmatpush.xpose.msra.mxu0 0.0
  %301 = vmatpush.xpose.msra.mxu0 0.0
  %302 = vmatpush.xpose.msra.mxu0 %v286
  %303 = vmatpush.xpose.msra.mxu0 %v284
  %304 = vmatmul.f32.gmra.mxu0 %v280
  %v305 = vpop.f32.mrf.mxu0
  %v306 = vadd.f32 0.0, %v305
  %307 = vmatmul.f32.gmra.mxu0 %v282
  %v308 = vpop.f32.mrf.mxu0
  %v309 = vadd.f32 0.0, %v308
  %310 = vdwg.mxu0
  %313 = vrot.lane.b32.xlu0 %v184, 96
  %v314 = vpop.permute.xlu0 %313
  %315 = vrot.lane.b32.xlu0 %v187, 96
  %v316 = vpop.permute.xlu0 %315
  %v317 = vsel %vm279, %v184, 0
  %v319 = vsel %vm279, %v187, 0
  %v321 = vsel %vm279, %v314, 0
  %v323 = vsel %vm279, %v316, 0
  %325 = vmatpush.xpose.msra.mxu0 0.0
  %326 = vmatpush.xpose.msra.mxu0 0.0
  %327 = vmatpush.xpose.msra.mxu0 0.0
  %328 = vmatpush.xpose.msra.mxu0 0.0
  %329 = vmatpush.xpose.msra.mxu0 0.0
  %330 = vmatpush.xpose.msra.mxu0 0.0
  %331 = vmatpush.xpose.msra.mxu0 0.0
  %332 = vmatpush.xpose.msra.mxu0 0.0
  %333 = vmatpush.xpose.msra.mxu0 0.0
  %334 = vmatpush.xpose.msra.mxu0 0.0
  %335 = vmatpush.xpose.msra.mxu0 0.0
  %336 = vmatpush.xpose.msra.mxu0 0.0
  %337 = vmatpush.xpose.msra.mxu0 0.0
  %338 = vmatpush.xpose.msra.mxu0 0.0
  %339 = vmatpush.xpose.msra.mxu0 %v323
  %340 = vmatpush.xpose.msra.mxu0 %v321
  %341 = vmatmul.f32.gmra.mxu0 %v317
  %v342 = vpop.f32.mrf.mxu0
  %v343 = vadd.f32 0.0, %v342
  %344 = vmatmul.f32.gmra.mxu0 %v319
  %v345 = vpop.f32.mrf.mxu0
  %v346 = vadd.f32 0.0, %v345
  %347 = vdwg.mxu0
  %350 = vrot.lane.b32.xlu0 %v190, 96
  %v351 = vpop.permute.xlu0 %350
  %352 = vrot.lane.b32.xlu0 %v193, 96
  %v353 = vpop.permute.xlu0 %352
  %v354 = vsel %vm279, %v190, 0
  %v356 = vsel %vm279, %v193, 0
  %v358 = vsel %vm279, %v351, 0
  %v360 = vsel %vm279, %v353, 0
  %362 = vmatpush.xpose.msra.mxu0 0.0
  %363 = vmatpush.xpose.msra.mxu0 0.0
  %364 = vmatpush.xpose.msra.mxu0 0.0
  %365 = vmatpush.xpose.msra.mxu0 0.0
  %366 = vmatpush.xpose.msra.mxu0 0.0
  %367 = vmatpush.xpose.msra.mxu0 0.0
  %368 = vmatpush.xpose.msra.mxu0 0.0
  %369 = vmatpush.xpose.msra.mxu0 0.0
  %370 = vmatpush.xpose.msra.mxu0 0.0
  %371 = vmatpush.xpose.msra.mxu0 0.0
  %372 = vmatpush.xpose.msra.mxu0 0.0
  %373 = vmatpush.xpose.msra.mxu0 0.0
  %374 = vmatpush.xpose.msra.mxu0 0.0
  %375 = vmatpush.xpose.msra.mxu0 0.0
  %376 = vmatpush.xpose.msra.mxu0 %v360
  %377 = vmatpush.xpose.msra.mxu0 %v358
  %378 = vmatmul.f32.gmra.mxu0 %v354
  %v379 = vpop.f32.mrf.mxu0
  %v380 = vadd.f32 0.0, %v379
  %381 = vmatmul.f32.gmra.mxu0 %v356
  %v382 = vpop.f32.mrf.mxu0
  %v383 = vadd.f32 0.0, %v382
  %384 = vdwg.mxu0
  %387 = vrot.lane.b32.xlu0 %v196, 96
  %v388 = vpop.permute.xlu0 %387
  %389 = vrot.lane.b32.xlu0 %v199, 96
  %v390 = vpop.permute.xlu0 %389
  %v391 = vsel %vm279, %v196, 0
  %v393 = vsel %vm279, %v199, 0
  %v395 = vsel %vm279, %v388, 0
  %v397 = vsel %vm279, %v390, 0
  %399 = vmatpush.xpose.msra.mxu0 0.0
  %400 = vmatpush.xpose.msra.mxu0 0.0
  %401 = vmatpush.xpose.msra.mxu0 0.0
  %402 = vmatpush.xpose.msra.mxu0 0.0
  %403 = vmatpush.xpose.msra.mxu0 0.0
  %404 = vmatpush.xpose.msra.mxu0 0.0
  %405 = vmatpush.xpose.msra.mxu0 0.0
  %406 = vmatpush.xpose.msra.mxu0 0.0
  %407 = vmatpush.xpose.msra.mxu0 0.0
  %408 = vmatpush.xpose.msra.mxu0 0.0
  %409 = vmatpush.xpose.msra.mxu0 0.0
  %410 = vmatpush.xpose.msra.mxu0 0.0
  %411 = vmatpush.xpose.msra.mxu0 0.0
  %412 = vmatpush.xpose.msra.mxu0 0.0
  %413 = vmatpush.xpose.msra.mxu0 %v397
  %414 = vmatpush.xpose.msra.mxu0 %v395
  %415 = vmatmul.f32.gmra.mxu0 %v391
  %v416 = vpop.f32.mrf.mxu0
  %v417 = vadd.f32 0.0, %v416
  %418 = vmatmul.f32.gmra.mxu0 %v393
  %v419 = vpop.f32.mrf.mxu0
  %v420 = vadd.f32 0.0, %v419
  %421 = vdwg.mxu0
  %424 = vrot.lane.b32.xlu0 %v202, 96
  %v425 = vpop.permute.xlu0 %424
  %426 = vrot.lane.b32.xlu0 %v205, 96
  %v427 = vpop.permute.xlu0 %426
  %v428 = vsel %vm279, %v202, 0
  %v430 = vsel %vm279, %v205, 0
  %v432 = vsel %vm279, %v425, 0
  %v434 = vsel %vm279, %v427, 0
  %436 = vmatpush.xpose.msra.mxu0 0.0
  %437 = vmatpush.xpose.msra.mxu0 0.0
  %438 = vmatpush.xpose.msra.mxu0 0.0
  %439 = vmatpush.xpose.msra.mxu0 0.0
  %440 = vmatpush.xpose.msra.mxu0 0.0
  %441 = vmatpush.xpose.msra.mxu0 0.0
  %442 = vmatpush.xpose.msra.mxu0 0.0
  %443 = vmatpush.xpose.msra.mxu0 0.0
  %444 = vmatpush.xpose.msra.mxu0 0.0
  %445 = vmatpush.xpose.msra.mxu0 0.0
  %446 = vmatpush.xpose.msra.mxu0 0.0
  %447 = vmatpush.xpose.msra.mxu0 0.0
  %448 = vmatpush.xpose.msra.mxu0 0.0
  %449 = vmatpush.xpose.msra.mxu0 0.0
  %450 = vmatpush.xpose.msra.mxu0 %v434
  %451 = vmatpush.xpose.msra.mxu0 %v432
  %452 = vmatmul.f32.gmra.mxu0 %v428
  %v453 = vpop.f32.mrf.mxu0
  %v454 = vadd.f32 0.0, %v453
  %455 = vmatmul.f32.gmra.mxu0 %v430
  %v456 = vpop.f32.mrf.mxu0
  %v457 = vadd.f32 0.0, %v456
  %458 = vdwg.mxu0
  %461 = vrot.lane.b32.xlu0 %v208, 96
  %v462 = vpop.permute.xlu0 %461
  %463 = vrot.lane.b32.xlu0 %v211, 96
  %v464 = vpop.permute.xlu0 %463
  %v465 = vsel %vm279, %v208, 0
  %v467 = vsel %vm279, %v211, 0
  %v469 = vsel %vm279, %v462, 0
  %v471 = vsel %vm279, %v464, 0
  %473 = vmatpush.xpose.msra.mxu0 0.0
  %474 = vmatpush.xpose.msra.mxu0 0.0
  %475 = vmatpush.xpose.msra.mxu0 0.0
  %476 = vmatpush.xpose.msra.mxu0 0.0
  %477 = vmatpush.xpose.msra.mxu0 0.0
  %478 = vmatpush.xpose.msra.mxu0 0.0
  %479 = vmatpush.xpose.msra.mxu0 0.0
  %480 = vmatpush.xpose.msra.mxu0 0.0
  %481 = vmatpush.xpose.msra.mxu0 0.0
  %482 = vmatpush.xpose.msra.mxu0 0.0
  %483 = vmatpush.xpose.msra.mxu0 0.0
  %484 = vmatpush.xpose.msra.mxu0 0.0
  %485 = vmatpush.xpose.msra.mxu0 0.0
  %486 = vmatpush.xpose.msra.mxu0 0.0
  %487 = vmatpush.xpose.msra.mxu0 %v471
  %488 = vmatpush.xpose.msra.mxu0 %v469
  %489 = vmatmul.f32.gmra.mxu0 %v465
  %v490 = vpop.f32.mrf.mxu0
  %v491 = vadd.f32 0.0, %v490
  %492 = vmatmul.f32.gmra.mxu0 %v467
  %v493 = vpop.f32.mrf.mxu0
  %v494 = vadd.f32 0.0, %v493
  %495 = vdwg.mxu0
  %498 = vrot.lane.b32.xlu0 %v214, 96
  %v499 = vpop.permute.xlu0 %498
  %500 = vrot.lane.b32.xlu0 %v217, 96
  %v501 = vpop.permute.xlu0 %500
  %v502 = vsel %vm279, %v214, 0
  %v504 = vsel %vm279, %v217, 0
  %v506 = vsel %vm279, %v499, 0
  %v508 = vsel %vm279, %v501, 0
  %510 = vmatpush.xpose.msra.mxu0 0.0
  %511 = vmatpush.xpose.msra.mxu0 0.0
  %512 = vmatpush.xpose.msra.mxu0 0.0
  %513 = vmatpush.xpose.msra.mxu0 0.0
  %514 = vmatpush.xpose.msra.mxu0 0.0
  %515 = vmatpush.xpose.msra.mxu0 0.0
  %516 = vmatpush.xpose.msra.mxu0 0.0
  %517 = vmatpush.xpose.msra.mxu0 0.0
  %518 = vmatpush.xpose.msra.mxu0 0.0
  %519 = vmatpush.xpose.msra.mxu0 0.0
  %520 = vmatpush.xpose.msra.mxu0 0.0
  %521 = vmatpush.xpose.msra.mxu0 0.0
  %522 = vmatpush.xpose.msra.mxu0 0.0
  %523 = vmatpush.xpose.msra.mxu0 0.0
  %524 = vmatpush.xpose.msra.mxu0 %v508
  %525 = vmatpush.xpose.msra.mxu0 %v506
  %526 = vmatmul.f32.gmra.mxu0 %v502
  %v527 = vpop.f32.mrf.mxu0
  %v528 = vadd.f32 0.0, %v527
  %529 = vmatmul.f32.gmra.mxu0 %v504
  %v530 = vpop.f32.mrf.mxu0
  %v531 = vadd.f32 0.0, %v530
  %532 = vdwg.mxu0
  %535 = vrot.lane.b32.xlu0 %v220, 96
  %v536 = vpop.permute.xlu0 %535
  %537 = vrot.lane.b32.xlu0 %v223, 96
  %v538 = vpop.permute.xlu0 %537
  %v539 = vsel %vm279, %v220, 0
  %v541 = vsel %vm279, %v223, 0
  %v543 = vsel %vm279, %v536, 0
  %v545 = vsel %vm279, %v538, 0
  %547 = vmatpush.xpose.msra.mxu0 0.0
  %548 = vmatpush.xpose.msra.mxu0 0.0
  %549 = vmatpush.xpose.msra.mxu0 0.0
  %550 = vmatpush.xpose.msra.mxu0 0.0
  %551 = vmatpush.xpose.msra.mxu0 0.0
  %552 = vmatpush.xpose.msra.mxu0 0.0
  %553 = vmatpush.xpose.msra.mxu0 0.0
  %554 = vmatpush.xpose.msra.mxu0 0.0
  %555 = vmatpush.xpose.msra.mxu0 0.0
  %556 = vmatpush.xpose.msra.mxu0 0.0
  %557 = vmatpush.xpose.msra.mxu0 0.0
  %558 = vmatpush.xpose.msra.mxu0 0.0
  %559 = vmatpush.xpose.msra.mxu0 0.0
  %560 = vmatpush.xpose.msra.mxu0 0.0
  %561 = vmatpush.xpose.msra.mxu0 %v545
  %562 = vmatpush.xpose.msra.mxu0 %v543
  %563 = vmatmul.f32.gmra.mxu0 %v539
  %v564 = vpop.f32.mrf.mxu0
  %v565 = vadd.f32 0.0, %v564
  %566 = vmatmul.f32.gmra.mxu0 %v541
  %v567 = vpop.f32.mrf.mxu0
  %v568 = vadd.f32 0.0, %v567
  %569 = vdwg.mxu0
  %572 = vrot.lane.b32.xlu0 %v226, 96
  %v573 = vpop.permute.xlu0 %572
  %574 = vrot.lane.b32.xlu0 %v229, 96
  %v575 = vpop.permute.xlu0 %574
  %v576 = vsel %vm279, %v226, 0
  %v578 = vsel %vm279, %v229, 0
  %v580 = vsel %vm279, %v573, 0
  %v582 = vsel %vm279, %v575, 0
  %584 = vmatpush.xpose.msra.mxu0 0.0
  %585 = vmatpush.xpose.msra.mxu0 0.0
  %586 = vmatpush.xpose.msra.mxu0 0.0
  %587 = vmatpush.xpose.msra.mxu0 0.0
  %588 = vmatpush.xpose.msra.mxu0 0.0
  %589 = vmatpush.xpose.msra.mxu0 0.0
  %590 = vmatpush.xpose.msra.mxu0 0.0
  %591 = vmatpush.xpose.msra.mxu0 0.0
  %592 = vmatpush.xpose.msra.mxu0 0.0
  %593 = vmatpush.xpose.msra.mxu0 0.0
  %594 = vmatpush.xpose.msra.mxu0 0.0
  %595 = vmatpush.xpose.msra.mxu0 0.0
  %596 = vmatpush.xpose.msra.mxu0 0.0
  %597 = vmatpush.xpose.msra.mxu0 0.0
  %598 = vmatpush.xpose.msra.mxu0 %v582
  %599 = vmatpush.xpose.msra.mxu0 %v580
  %600 = vmatmul.f32.gmra.mxu0 %v576
  %v601 = vpop.f32.mrf.mxu0
  %v602 = vadd.f32 0.0, %v601
  %603 = vmatmul.f32.gmra.mxu0 %v578
  %v604 = vpop.f32.mrf.mxu0
  %v605 = vadd.f32 0.0, %v604
  %606 = vdwg.mxu0
  %609 = vrot.lane.b32.xlu0 %v232, 96
  %v610 = vpop.permute.xlu0 %609
  %611 = vrot.lane.b32.xlu0 %v235, 96
  %v612 = vpop.permute.xlu0 %611
  %v613 = vsel %vm279, %v232, 0
  %v615 = vsel %vm279, %v235, 0
  %v617 = vsel %vm279, %v610, 0
  %v619 = vsel %vm279, %v612, 0
  %621 = vmatpush.xpose.msra.mxu0 0.0
  %622 = vmatpush.xpose.msra.mxu0 0.0
  %623 = vmatpush.xpose.msra.mxu0 0.0
  %624 = vmatpush.xpose.msra.mxu0 0.0
  %625 = vmatpush.xpose.msra.mxu0 0.0
  %626 = vmatpush.xpose.msra.mxu0 0.0
  %627 = vmatpush.xpose.msra.mxu0 0.0
  %628 = vmatpush.xpose.msra.mxu0 0.0
  %629 = vmatpush.xpose.msra.mxu0 0.0
  %630 = vmatpush.xpose.msra.mxu0 0.0
  %631 = vmatpush.xpose.msra.mxu0 0.0
  %632 = vmatpush.xpose.msra.mxu0 0.0
  %633 = vmatpush.xpose.msra.mxu0 0.0
  %634 = vmatpush.xpose.msra.mxu0 0.0
  %635 = vmatpush.xpose.msra.mxu0 %v619
  %636 = vmatpush.xpose.msra.mxu0 %v617
  %637 = vmatmul.f32.gmra.mxu0 %v613
  %v638 = vpop.f32.mrf.mxu0
  %v639 = vadd.f32 0.0, %v638
  %640 = vmatmul.f32.gmra.mxu0 %v615
  %v641 = vpop.f32.mrf.mxu0
  %v642 = vadd.f32 0.0, %v641
  %643 = vdwg.mxu0
  %646 = vrot.lane.b32.xlu0 %v238, 96
  %v647 = vpop.permute.xlu0 %646
  %648 = vrot.lane.b32.xlu0 %v241, 96
  %v649 = vpop.permute.xlu0 %648
  %v650 = vsel %vm279, %v238, 0
  %v652 = vsel %vm279, %v241, 0
  %v654 = vsel %vm279, %v647, 0
  %v656 = vsel %vm279, %v649, 0
  %658 = vmatpush.xpose.msra.mxu0 0.0
  %659 = vmatpush.xpose.msra.mxu0 0.0
  %660 = vmatpush.xpose.msra.mxu0 0.0
  %661 = vmatpush.xpose.msra.mxu0 0.0
  %662 = vmatpush.xpose.msra.mxu0 0.0
  %663 = vmatpush.xpose.msra.mxu0 0.0
  %664 = vmatpush.xpose.msra.mxu0 0.0
  %665 = vmatpush.xpose.msra.mxu0 0.0
  %666 = vmatpush.xpose.msra.mxu0 0.0
  %667 = vmatpush.xpose.msra.mxu0 0.0
  %668 = vmatpush.xpose.msra.mxu0 0.0
  %669 = vmatpush.xpose.msra.mxu0 0.0
  %670 = vmatpush.xpose.msra.mxu0 0.0
  %671 = vmatpush.xpose.msra.mxu0 0.0
  %672 = vmatpush.xpose.msra.mxu0 %v656
  %673 = vmatpush.xpose.msra.mxu0 %v654
  %674 = vmatmul.f32.gmra.mxu0 %v650
  %v675 = vpop.f32.mrf.mxu0
  %v676 = vadd.f32 0.0, %v675
  %677 = vmatmul.f32.gmra.mxu0 %v652
  %v678 = vpop.f32.mrf.mxu0
  %v679 = vadd.f32 0.0, %v678
  %680 = vdwg.mxu0
  %683 = vrot.lane.b32.xlu0 %v244, 96
  %v684 = vpop.permute.xlu0 %683
  %685 = vrot.lane.b32.xlu0 %v247, 96
  %v686 = vpop.permute.xlu0 %685
  %v687 = vsel %vm279, %v244, 0
  %v689 = vsel %vm279, %v247, 0
  %v691 = vsel %vm279, %v684, 0
  %v693 = vsel %vm279, %v686, 0
  %695 = vmatpush.xpose.msra.mxu0 0.0
  %696 = vmatpush.xpose.msra.mxu0 0.0
  %697 = vmatpush.xpose.msra.mxu0 0.0
  %698 = vmatpush.xpose.msra.mxu0 0.0
  %699 = vmatpush.xpose.msra.mxu0 0.0
  %700 = vmatpush.xpose.msra.mxu0 0.0
  %701 = vmatpush.xpose.msra.mxu0 0.0
  %702 = vmatpush.xpose.msra.mxu0 0.0
  %703 = vmatpush.xpose.msra.mxu0 0.0
  %704 = vmatpush.xpose.msra.mxu0 0.0
  %705 = vmatpush.xpose.msra.mxu0 0.0
  %706 = vmatpush.xpose.msra.mxu0 0.0
  %707 = vmatpush.xpose.msra.mxu0 0.0
  %708 = vmatpush.xpose.msra.mxu0 0.0
  %709 = vmatpush.xpose.msra.mxu0 %v693
  %710 = vmatpush.xpose.msra.mxu0 %v691
  %711 = vmatmul.f32.gmra.mxu0 %v687
  %v712 = vpop.f32.mrf.mxu0
  %v713 = vadd.f32 0.0, %v712
  %714 = vmatmul.f32.gmra.mxu0 %v689
  %v715 = vpop.f32.mrf.mxu0
  %v716 = vadd.f32 0.0, %v715
  %717 = vdwg.mxu0
  %720 = vrot.lane.b32.xlu0 %v250, 96
  %v721 = vpop.permute.xlu0 %720
  %722 = vrot.lane.b32.xlu0 %v253, 96
  %v723 = vpop.permute.xlu0 %722
  %v724 = vsel %vm279, %v250, 0
  %v726 = vsel %vm279, %v253, 0
  %v728 = vsel %vm279, %v721, 0
  %v730 = vsel %vm279, %v723, 0
  %732 = vmatpush.xpose.msra.mxu0 0.0
  %733 = vmatpush.xpose.msra.mxu0 0.0
  %734 = vmatpush.xpose.msra.mxu0 0.0
  %735 = vmatpush.xpose.msra.mxu0 0.0
  %736 = vmatpush.xpose.msra.mxu0 0.0
  %737 = vmatpush.xpose.msra.mxu0 0.0
  %738 = vmatpush.xpose.msra.mxu0 0.0
  %739 = vmatpush.xpose.msra.mxu0 0.0
  %740 = vmatpush.xpose.msra.mxu0 0.0
  %741 = vmatpush.xpose.msra.mxu0 0.0
  %742 = vmatpush.xpose.msra.mxu0 0.0
  %743 = vmatpush.xpose.msra.mxu0 0.0
  %744 = vmatpush.xpose.msra.mxu0 0.0
  %745 = vmatpush.xpose.msra.mxu0 0.0
  %746 = vmatpush.xpose.msra.mxu0 %v730
  %747 = vmatpush.xpose.msra.mxu0 %v728
  %748 = vmatmul.f32.gmra.mxu0 %v724
  %v749 = vpop.f32.mrf.mxu0
  %v750 = vadd.f32 0.0, %v749
  %751 = vmatmul.f32.gmra.mxu0 %v726
  %v752 = vpop.f32.mrf.mxu0
  %v753 = vadd.f32 0.0, %v752
  %754 = vdwg.mxu0
  %757 = vrot.lane.b32.xlu0 %v256, 96
  %v758 = vpop.permute.xlu0 %757
  %759 = vrot.lane.b32.xlu0 %v259, 96
  %v760 = vpop.permute.xlu0 %759
  %v761 = vsel %vm279, %v256, 0
  %v763 = vsel %vm279, %v259, 0
  %v765 = vsel %vm279, %v758, 0
  %v767 = vsel %vm279, %v760, 0
  %769 = vmatpush.xpose.msra.mxu0 0.0
  %770 = vmatpush.xpose.msra.mxu0 0.0
  %771 = vmatpush.xpose.msra.mxu0 0.0
  %772 = vmatpush.xpose.msra.mxu0 0.0
  %773 = vmatpush.xpose.msra.mxu0 0.0
  %774 = vmatpush.xpose.msra.mxu0 0.0
  %775 = vmatpush.xpose.msra.mxu0 0.0
  %776 = vmatpush.xpose.msra.mxu0 0.0
  %777 = vmatpush.xpose.msra.mxu0 0.0
  %778 = vmatpush.xpose.msra.mxu0 0.0
  %779 = vmatpush.xpose.msra.mxu0 0.0
  %780 = vmatpush.xpose.msra.mxu0 0.0
  %781 = vmatpush.xpose.msra.mxu0 0.0
  %782 = vmatpush.xpose.msra.mxu0 0.0
  %783 = vmatpush.xpose.msra.mxu0 %v767
  %784 = vmatpush.xpose.msra.mxu0 %v765
  %785 = vmatmul.f32.gmra.mxu0 %v761
  %v786 = vpop.f32.mrf.mxu0
  %v787 = vadd.f32 0.0, %v786
  %788 = vmatmul.f32.gmra.mxu0 %v763
  %v789 = vpop.f32.mrf.mxu0
  %v790 = vadd.f32 0.0, %v789
  %791 = vdwg.mxu0
  %794 = vrot.lane.b32.xlu0 %v262, 96
  %v795 = vpop.permute.xlu0 %794
  %796 = vrot.lane.b32.xlu0 %v265, 96
  %v797 = vpop.permute.xlu0 %796
  %v798 = vsel %vm279, %v262, 0
  %v800 = vsel %vm279, %v265, 0
  %v802 = vsel %vm279, %v795, 0
  %v804 = vsel %vm279, %v797, 0
  %806 = vmatpush.xpose.msra.mxu0 0.0
  %807 = vmatpush.xpose.msra.mxu0 0.0
  %808 = vmatpush.xpose.msra.mxu0 0.0
  %809 = vmatpush.xpose.msra.mxu0 0.0
  %810 = vmatpush.xpose.msra.mxu0 0.0
  %811 = vmatpush.xpose.msra.mxu0 0.0
  %812 = vmatpush.xpose.msra.mxu0 0.0
  %813 = vmatpush.xpose.msra.mxu0 0.0
  %814 = vmatpush.xpose.msra.mxu0 0.0
  %815 = vmatpush.xpose.msra.mxu0 0.0
  %816 = vmatpush.xpose.msra.mxu0 0.0
  %817 = vmatpush.xpose.msra.mxu0 0.0
  %818 = vmatpush.xpose.msra.mxu0 0.0
  %819 = vmatpush.xpose.msra.mxu0 0.0
  %820 = vmatpush.xpose.msra.mxu0 %v804
  %821 = vmatpush.xpose.msra.mxu0 %v802
  %822 = vmatmul.f32.gmra.mxu0 %v798
  %v823 = vpop.f32.mrf.mxu0
  %v824 = vadd.f32 0.0, %v823
  %825 = vmatmul.f32.gmra.mxu0 %v800
  %v826 = vpop.f32.mrf.mxu0
  %v827 = vadd.f32 0.0, %v826
  %828 = vdwg.mxu0
  %831 = vrot.lane.b32.xlu0 %v268, 96
  %v832 = vpop.permute.xlu0 %831
  %833 = vrot.lane.b32.xlu0 %v271, 96
  %v834 = vpop.permute.xlu0 %833
  %v835 = vsel %vm279, %v268, 0
  %v837 = vsel %vm279, %v271, 0
  %v839 = vsel %vm279, %v832, 0
  %v841 = vsel %vm279, %v834, 0
  %843 = vmatpush.xpose.msra.mxu0 0.0
  %844 = vmatpush.xpose.msra.mxu0 0.0
  %845 = vmatpush.xpose.msra.mxu0 0.0
  %846 = vmatpush.xpose.msra.mxu0 0.0
  %847 = vmatpush.xpose.msra.mxu0 0.0
  %848 = vmatpush.xpose.msra.mxu0 0.0
  %849 = vmatpush.xpose.msra.mxu0 0.0
  %850 = vmatpush.xpose.msra.mxu0 0.0
  %851 = vmatpush.xpose.msra.mxu0 0.0
  %852 = vmatpush.xpose.msra.mxu0 0.0
  %853 = vmatpush.xpose.msra.mxu0 0.0
  %854 = vmatpush.xpose.msra.mxu0 0.0
  %855 = vmatpush.xpose.msra.mxu0 0.0
  %856 = vmatpush.xpose.msra.mxu0 0.0
  %857 = vmatpush.xpose.msra.mxu0 %v841
  %858 = vmatpush.xpose.msra.mxu0 %v839
  %859 = vmatmul.f32.gmra.mxu0 %v835
  %v860 = vpop.f32.mrf.mxu0
  %v861 = vadd.f32 0.0, %v860
  %862 = vmatmul.f32.gmra.mxu0 %v837
  %v863 = vpop.f32.mrf.mxu0
  %v864 = vadd.f32 0.0, %v863
  %865 = vdwg.mxu0
  %vm866 = vcmask 130048
  %867 = vst.msk [vmem:[#allocation2] sm:$0xff] %vm866, %v306
  %868 = vst.msk [vmem:[#allocation2 + $0x8] sm:$0xff] %vm866, %v309
  %869 = vst.msk [vmem:[#allocation2 + $0x10] sm:$0xff] %vm866, %v343
  %870 = vst.msk [vmem:[#allocation2 + $0x18] sm:$0xff] %vm866, %v346
  %871 = vst.msk [vmem:[#allocation2 + $0x20] sm:$0xff] %vm866, %v380
  %872 = vst.msk [vmem:[#allocation2 + $0x28] sm:$0xff] %vm866, %v383
  %873 = vst.msk [vmem:[#allocation2 + $0x30] sm:$0xff] %vm866, %v417
  %874 = vst.msk [vmem:[#allocation2 + $0x38] sm:$0xff] %vm866, %v420
  %875 = vst.msk [vmem:[#allocation2 + $0x40] sm:$0xff] %vm866, %v454
  %876 = vst.msk [vmem:[#allocation2 + $0x48] sm:$0xff] %vm866, %v457
  %877 = vst.msk [vmem:[#allocation2 + $0x50] sm:$0xff] %vm866, %v491
  %878 = vst.msk [vmem:[#allocation2 + $0x58] sm:$0xff] %vm866, %v494
  %879 = vst.msk [vmem:[#allocation2 + $0x60] sm:$0xff] %vm866, %v528
  %880 = vst.msk [vmem:[#allocation2 + $0x68] sm:$0xff] %vm866, %v531
  %881 = vst.msk [vmem:[#allocation2 + $0x70] sm:$0xff] %vm866, %v565
  %882 = vst.msk [vmem:[#allocation2 + $0x78] sm:$0xff] %vm866, %v568
  %883 = vst.msk [vmem:[#allocation2 + $0x80] sm:$0xff] %vm866, %v602
  %884 = vst.msk [vmem:[#allocation2 + $0x88] sm:$0xff] %vm866, %v605
  %885 = vst.msk [vmem:[#allocation2 + $0x90] sm:$0xff] %vm866, %v639
  %886 = vst.msk [vmem:[#allocation2 + $0x98] sm:$0xff] %vm866, %v642
  %887 = vst.msk [vmem:[#allocation2 + $0xa0] sm:$0xff] %vm866, %v676
  %888 = vst.msk [vmem:[#allocation2 + $0xa8] sm:$0xff] %vm866, %v679
  %889 = vst.msk [vmem:[#allocation2 + $0xb0] sm:$0xff] %vm866, %v713
  %890 = vst.msk [vmem:[#allocation2 + $0xb8] sm:$0xff] %vm866, %v716
  %891 = vst.msk [vmem:[#allocation2 + $0xc0] sm:$0xff] %vm866, %v750
  %892 = vst.msk [vmem:[#allocation2 + $0xc8] sm:$0xff] %vm866, %v753
  %893 = vst.msk [vmem:[#allocation2 + $0xd0] sm:$0xff] %vm866, %v787
  %894 = vst.msk [vmem:[#allocation2 + $0xd8] sm:$0xff] %vm866, %v790
  %895 = vst.msk [vmem:[#allocation2 + $0xe0] sm:$0xff] %vm866, %v824
  %896 = vst.msk [vmem:[#allocation2 + $0xe8] sm:$0xff] %vm866, %v827
  %897 = vst.msk [vmem:[#allocation2 + $0xf0] sm:$0xff] %vm866, %v861
  %898 = vst.msk [vmem:[#allocation2 + $0xf8] sm:$0xff] %vm866, %v864
  %899 = vrot.lane.b32.xlu0 %v178, 120
  %v900 = vpop.permute.xlu0 %899
  %901 = vrot.lane.b32.xlu0 %v181, 120
  %v902 = vpop.permute.xlu0 %901
  %903 = vrot.lane.b32.xlu0 %v178, 88
  %v904 = vpop.permute.xlu0 %903
  %905 = vrot.lane.b32.xlu0 %v181, 88
  %v906 = vpop.permute.xlu0 %905
  %v907 = vsel %vm279, %v900, 0
  %v909 = vsel %vm279, %v902, 0
  %v911 = vsel %vm279, %v904, 0
  %v913 = vsel %vm279, %v906, 0
  %915 = vmatpush.xpose.msra.mxu0 0.0
  %916 = vmatpush.xpose.msra.mxu0 0.0
  %917 = vmatpush.xpose.msra.mxu0 0.0
  %918 = vmatpush.xpose.msra.mxu0 0.0
  %919 = vmatpush.xpose.msra.mxu0 0.0
  %920 = vmatpush.xpose.msra.mxu0 0.0
  %921 = vmatpush.xpose.msra.mxu0 0.0
  %922 = vmatpush.xpose.msra.mxu0 0.0
  %923 = vmatpush.xpose.msra.mxu0 0.0
  %924 = vmatpush.xpose.msra.mxu0 0.0
  %925 = vmatpush.xpose.msra.mxu0 0.0
  %926 = vmatpush.xpose.msra.mxu0 0.0
  %927 = vmatpush.xpose.msra.mxu0 0.0
  %928 = vmatpush.xpose.msra.mxu0 0.0
  %929 = vmatpush.xpose.msra.mxu0 %v913
  %930 = vmatpush.xpose.msra.mxu0 %v911
  %931 = vmatmul.f32.gmra.mxu0 %v907
  %v932 = vpop.f32.mrf.mxu0
  %v933 = vadd.f32 0.0, %v932
  %934 = vmatmul.f32.gmra.mxu0 %v909
  %v935 = vpop.f32.mrf.mxu0
  %v936 = vadd.f32 0.0, %v935
  %937 = vdwg.mxu0
  %938 = vrot.lane.b32.xlu0 %v184, 120
  %v939 = vpop.permute.xlu0 %938
  %940 = vrot.lane.b32.xlu0 %v187, 120
  %v941 = vpop.permute.xlu0 %940
  %942 = vrot.lane.b32.xlu0 %v184, 88
  %v943 = vpop.permute.xlu0 %942
  %944 = vrot.lane.b32.xlu0 %v187, 88
  %v945 = vpop.permute.xlu0 %944
  %v946 = vsel %vm279, %v939, 0
  %v948 = vsel %vm279, %v941, 0
  %v950 = vsel %vm279, %v943, 0
  %v952 = vsel %vm279, %v945, 0
  %954 = vmatpush.xpose.msra.mxu0 0.0
  %955 = vmatpush.xpose.msra.mxu0 0.0
  %956 = vmatpush.xpose.msra.mxu0 0.0
  %957 = vmatpush.xpose.msra.mxu0 0.0
  %958 = vmatpush.xpose.msra.mxu0 0.0
  %959 = vmatpush.xpose.msra.mxu0 0.0
  %960 = vmatpush.xpose.msra.mxu0 0.0
  %961 = vmatpush.xpose.msra.mxu0 0.0
  %962 = vmatpush.xpose.msra.mxu0 0.0
  %963 = vmatpush.xpose.msra.mxu0 0.0
  %964 = vmatpush.xpose.msra.mxu0 0.0
  %965 = vmatpush.xpose.msra.mxu0 0.0
  %966 = vmatpush.xpose.msra.mxu0 0.0
  %967 = vmatpush.xpose.msra.mxu0 0.0
  %968 = vmatpush.xpose.msra.mxu0 %v952
  %969 = vmatpush.xpose.msra.mxu0 %v950
  %970 = vmatmul.f32.gmra.mxu0 %v946
  %v971 = vpop.f32.mrf.mxu0
  %v972 = vadd.f32 0.0, %v971
  %973 = vmatmul.f32.gmra.mxu0 %v948
  %v974 = vpop.f32.mrf.mxu0
  %v975 = vadd.f32 0.0, %v974
  %976 = vdwg.mxu0
  %977 = vrot.lane.b32.xlu0 %v190, 120
  %v978 = vpop.permute.xlu0 %977
  %979 = vrot.lane.b32.xlu0 %v193, 120
  %v980 = vpop.permute.xlu0 %979
  %981 = vrot.lane.b32.xlu0 %v190, 88
  %v982 = vpop.permute.xlu0 %981
  %983 = vrot.lane.b32.xlu0 %v193, 88
  %v984 = vpop.permute.xlu0 %983
  %v985 = vsel %vm279, %v978, 0
  %v987 = vsel %vm279, %v980, 0
  %v989 = vsel %vm279, %v982, 0
  %v991 = vsel %vm279, %v984, 0
  %993 = vmatpush.xpose.msra.mxu0 0.0
  %994 = vmatpush.xpose.msra.mxu0 0.0
  %995 = vmatpush.xpose.msra.mxu0 0.0
  %996 = vmatpush.xpose.msra.mxu0 0.0
  %997 = vmatpush.xpose.msra.mxu0 0.0
  %998 = vmatpush.xpose.msra.mxu0 0.0
  %999 = vmatpush.xpose.msra.mxu0 0.0
  %1000 = vmatpush.xpose.msra.mxu0 0.0
  %1001 = vmatpush.xpose.msra.mxu0 0.0
  %1002 = vmatpush.xpose.msra.mxu0 0.0
  %1003 = vmatpush.xpose.msra.mxu0 0.0
  %1004 = vmatpush.xpose.msra.mxu0 0.0
  %1005 = vmatpush.xpose.msra.mxu0 0.0
  %1006 = vmatpush.xpose.msra.mxu0 0.0
  %1007 = vmatpush.xpose.msra.mxu0 %v991
  %1008 = vmatpush.xpose.msra.mxu0 %v989
  %1009 = vmatmul.f32.gmra.mxu0 %v985
  %v1010 = vpop.f32.mrf.mxu0
  %v1011 = vadd.f32 0.0, %v1010
  %1012 = vmatmul.f32.gmra.mxu0 %v987
  %v1013 = vpop.f32.mrf.mxu0
  %v1014 = vadd.f32 0.0, %v1013
  %1015 = vdwg.mxu0
  %1016 = vrot.lane.b32.xlu0 %v196, 120
  %v1017 = vpop.permute.xlu0 %1016
  %1018 = vrot.lane.b32.xlu0 %v199, 120
  %v1019 = vpop.permute.xlu0 %1018
  %1020 = vrot.lane.b32.xlu0 %v196, 88
  %v1021 = vpop.permute.xlu0 %1020
  %1022 = vrot.lane.b32.xlu0 %v199, 88
  %v1023 = vpop.permute.xlu0 %1022
  %v1024 = vsel %vm279, %v1017, 0
  %v1026 = vsel %vm279, %v1019, 0
  %v1028 = vsel %vm279, %v1021, 0
  %v1030 = vsel %vm279, %v1023, 0
  %1032 = vmatpush.xpose.msra.mxu0 0.0
  %1033 = vmatpush.xpose.msra.mxu0 0.0
  %1034 = vmatpush.xpose.msra.mxu0 0.0
  %1035 = vmatpush.xpose.msra.mxu0 0.0
  %1036 = vmatpush.xpose.msra.mxu0 0.0
  %1037 = vmatpush.xpose.msra.mxu0 0.0
  %1038 = vmatpush.xpose.msra.mxu0 0.0
  %1039 = vmatpush.xpose.msra.mxu0 0.0
  %1040 = vmatpush.xpose.msra.mxu0 0.0
  %1041 = vmatpush.xpose.msra.mxu0 0.0
  %1042 = vmatpush.xpose.msra.mxu0 0.0
  %1043 = vmatpush.xpose.msra.mxu0 0.0
  %1044 = vmatpush.xpose.msra.mxu0 0.0
  %1045 = vmatpush.xpose.msra.mxu0 0.0
  %1046 = vmatpush.xpose.msra.mxu0 %v1030
  %1047 = vmatpush.xpose.msra.mxu0 %v1028
  %1048 = vmatmul.f32.gmra.mxu0 %v1024
  %v1049 = vpop.f32.mrf.mxu0
  %v1050 = vadd.f32 0.0, %v1049
  %1051 = vmatmul.f32.gmra.mxu0 %v1026
  %v1052 = vpop.f32.mrf.mxu0
  %v1053 = vadd.f32 0.0, %v1052
  %1054 = vdwg.mxu0
  %1055 = vrot.lane.b32.xlu0 %v202, 120
  %v1056 = vpop.permute.xlu0 %1055
  %1057 = vrot.lane.b32.xlu0 %v205, 120
  %v1058 = vpop.permute.xlu0 %1057
  %1059 = vrot.lane.b32.xlu0 %v202, 88
  %v1060 = vpop.permute.xlu0 %1059
  %1061 = vrot.lane.b32.xlu0 %v205, 88
  %v1062 = vpop.permute.xlu0 %1061
  %v1063 = vsel %vm279, %v1056, 0
  %v1065 = vsel %vm279, %v1058, 0
  %v1067 = vsel %vm279, %v1060, 0
  %v1069 = vsel %vm279, %v1062, 0
  %1071 = vmatpush.xpose.msra.mxu0 0.0
  %1072 = vmatpush.xpose.msra.mxu0 0.0
  %1073 = vmatpush.xpose.msra.mxu0 0.0
  %1074 = vmatpush.xpose.msra.mxu0 0.0
  %1075 = vmatpush.xpose.msra.mxu0 0.0
  %1076 = vmatpush.xpose.msra.mxu0 0.0
  %1077 = vmatpush.xpose.msra.mxu0 0.0
  %1078 = vmatpush.xpose.msra.mxu0 0.0
  %1079 = vmatpush.xpose.msra.mxu0 0.0
  %1080 = vmatpush.xpose.msra.mxu0 0.0
  %1081 = vmatpush.xpose.msra.mxu0 0.0
  %1082 = vmatpush.xpose.msra.mxu0 0.0
  %1083 = vmatpush.xpose.msra.mxu0 0.0
  %1084 = vmatpush.xpose.msra.mxu0 0.0
  %1085 = vmatpush.xpose.msra.mxu0 %v1069
  %1086 = vmatpush.xpose.msra.mxu0 %v1067
  %1087 = vmatmul.f32.gmra.mxu0 %v1063
  %v1088 = vpop.f32.mrf.mxu0
  %v1089 = vadd.f32 0.0, %v1088
  %1090 = vmatmul.f32.gmra.mxu0 %v1065
  %v1091 = vpop.f32.mrf.mxu0
  %v1092 = vadd.f32 0.0, %v1091
  %1093 = vdwg.mxu0
  %1094 = vrot.lane.b32.xlu0 %v208, 120
  %v1095 = vpop.permute.xlu0 %1094
  %1096 = vrot.lane.b32.xlu0 %v211, 120
  %v1097 = vpop.permute.xlu0 %1096
  %1098 = vrot.lane.b32.xlu0 %v208, 88
  %v1099 = vpop.permute.xlu0 %1098
  %1100 = vrot.lane.b32.xlu0 %v211, 88
  %v1101 = vpop.permute.xlu0 %1100
  %v1102 = vsel %vm279, %v1095, 0
  %v1104 = vsel %vm279, %v1097, 0
  %v1106 = vsel %vm279, %v1099, 0
  %v1108 = vsel %vm279, %v1101, 0
  %1110 = vmatpush.xpose.msra.mxu0 0.0
  %1111 = vmatpush.xpose.msra.mxu0 0.0
  %1112 = vmatpush.xpose.msra.mxu0 0.0
  %1113 = vmatpush.xpose.msra.mxu0 0.0
  %1114 = vmatpush.xpose.msra.mxu0 0.0
  %1115 = vmatpush.xpose.msra.mxu0 0.0
  %1116 = vmatpush.xpose.msra.mxu0 0.0
  %1117 = vmatpush.xpose.msra.mxu0 0.0
  %1118 = vmatpush.xpose.msra.mxu0 0.0
  %1119 = vmatpush.xpose.msra.mxu0 0.0
  %1120 = vmatpush.xpose.msra.mxu0 0.0
  %1121 = vmatpush.xpose.msra.mxu0 0.0
  %1122 = vmatpush.xpose.msra.mxu0 0.0
  %1123 = vmatpush.xpose.msra.mxu0 0.0
  %1124 = vmatpush.xpose.msra.mxu0 %v1108
  %1125 = vmatpush.xpose.msra.mxu0 %v1106
  %1126 = vmatmul.f32.gmra.mxu0 %v1102
  %v1127 = vpop.f32.mrf.mxu0
  %v1128 = vadd.f32 0.0, %v1127
  %1129 = vmatmul.f32.gmra.mxu0 %v1104
  %v1130 = vpop.f32.mrf.mxu0
  %v1131 = vadd.f32 0.0, %v1130
  %1132 = vdwg.mxu0
  %1133 = vrot.lane.b32.xlu0 %v214, 120
  %v1134 = vpop.permute.xlu0 %1133
  %1135 = vrot.lane.b32.xlu0 %v217, 120
  %v1136 = vpop.permute.xlu0 %1135
  %1137 = vrot.lane.b32.xlu0 %v214, 88
  %v1138 = vpop.permute.xlu0 %1137
  %1139 = vrot.lane.b32.xlu0 %v217, 88
  %v1140 = vpop.permute.xlu0 %1139
  %v1141 = vsel %vm279, %v1134, 0
  %v1143 = vsel %vm279, %v1136, 0
  %v1145 = vsel %vm279, %v1138, 0
  %v1147 = vsel %vm279, %v1140, 0
  %1149 = vmatpush.xpose.msra.mxu0 0.0
  %1150 = vmatpush.xpose.msra.mxu0 0.0
  %1151 = vmatpush.xpose.msra.mxu0 0.0
  %1152 = vmatpush.xpose.msra.mxu0 0.0
  %1153 = vmatpush.xpose.msra.mxu0 0.0
  %1154 = vmatpush.xpose.msra.mxu0 0.0
  %1155 = vmatpush.xpose.msra.mxu0 0.0
  %1156 = vmatpush.xpose.msra.mxu0 0.0
  %1157 = vmatpush.xpose.msra.mxu0 0.0
  %1158 = vmatpush.xpose.msra.mxu0 0.0
  %1159 = vmatpush.xpose.msra.mxu0 0.0
  %1160 = vmatpush.xpose.msra.mxu0 0.0
  %1161 = vmatpush.xpose.msra.mxu0 0.0
  %1162 = vmatpush.xpose.msra.mxu0 0.0
  %1163 = vmatpush.xpose.msra.mxu0 %v1147
  %1164 = vmatpush.xpose.msra.mxu0 %v1145
  %1165 = vmatmul.f32.gmra.mxu0 %v1141
  %v1166 = vpop.f32.mrf.mxu0
  %v1167 = vadd.f32 0.0, %v1166
  %1168 = vmatmul.f32.gmra.mxu0 %v1143
  %v1169 = vpop.f32.mrf.mxu0
  %v1170 = vadd.f32 0.0, %v1169
  %1171 = vdwg.mxu0
  %1172 = vrot.lane.b32.xlu0 %v220, 120
  %v1173 = vpop.permute.xlu0 %1172
  %1174 = vrot.lane.b32.xlu0 %v223, 120
  %v1175 = vpop.permute.xlu0 %1174
  %1176 = vrot.lane.b32.xlu0 %v220, 88
  %v1177 = vpop.permute.xlu0 %1176
  %1178 = vrot.lane.b32.xlu0 %v223, 88
  %v1179 = vpop.permute.xlu0 %1178
  %v1180 = vsel %vm279, %v1173, 0
  %v1182 = vsel %vm279, %v1175, 0
  %v1184 = vsel %vm279, %v1177, 0
  %v1186 = vsel %vm279, %v1179, 0
  %1188 = vmatpush.xpose.msra.mxu0 0.0
  %1189 = vmatpush.xpose.msra.mxu0 0.0
  %1190 = vmatpush.xpose.msra.mxu0 0.0
  %1191 = vmatpush.xpose.msra.mxu0 0.0
  %1192 = vmatpush.xpose.msra.mxu0 0.0
  %1193 = vmatpush.xpose.msra.mxu0 0.0
  %1194 = vmatpush.xpose.msra.mxu0 0.0
  %1195 = vmatpush.xpose.msra.mxu0 0.0
  %1196 = vmatpush.xpose.msra.mxu0 0.0
  %1197 = vmatpush.xpose.msra.mxu0 0.0
  %1198 = vmatpush.xpose.msra.mxu0 0.0
  %1199 = vmatpush.xpose.msra.mxu0 0.0
  %1200 = vmatpush.xpose.msra.mxu0 0.0
  %1201 = vmatpush.xpose.msra.mxu0 0.0
  %1202 = vmatpush.xpose.msra.mxu0 %v1186
  %1203 = vmatpush.xpose.msra.mxu0 %v1184
  %1204 = vmatmul.f32.gmra.mxu0 %v1180
  %v1205 = vpop.f32.mrf.mxu0
  %v1206 = vadd.f32 0.0, %v1205
  %1207 = vmatmul.f32.gmra.mxu0 %v1182
  %v1208 = vpop.f32.mrf.mxu0
  %v1209 = vadd.f32 0.0, %v1208
  %1210 = vdwg.mxu0
  %1211 = vrot.lane.b32.xlu0 %v226, 120
  %v1212 = vpop.permute.xlu0 %1211
  %1213 = vrot.lane.b32.xlu0 %v229, 120
  %v1214 = vpop.permute.xlu0 %1213
  %1215 = vrot.lane.b32.xlu0 %v226, 88
  %v1216 = vpop.permute.xlu0 %1215
  %1217 = vrot.lane.b32.xlu0 %v229, 88
  %v1218 = vpop.permute.xlu0 %1217
  %v1219 = vsel %vm279, %v1212, 0
  %v1221 = vsel %vm279, %v1214, 0
  %v1223 = vsel %vm279, %v1216, 0
  %v1225 = vsel %vm279, %v1218, 0
  %1227 = vmatpush.xpose.msra.mxu0 0.0
  %1228 = vmatpush.xpose.msra.mxu0 0.0
  %1229 = vmatpush.xpose.msra.mxu0 0.0
  %1230 = vmatpush.xpose.msra.mxu0 0.0
  %1231 = vmatpush.xpose.msra.mxu0 0.0
  %1232 = vmatpush.xpose.msra.mxu0 0.0
  %1233 = vmatpush.xpose.msra.mxu0 0.0
  %1234 = vmatpush.xpose.msra.mxu0 0.0
  %1235 = vmatpush.xpose.msra.mxu0 0.0
  %1236 = vmatpush.xpose.msra.mxu0 0.0
  %1237 = vmatpush.xpose.msra.mxu0 0.0
  %1238 = vmatpush.xpose.msra.mxu0 0.0
  %1239 = vmatpush.xpose.msra.mxu0 0.0
  %1240 = vmatpush.xpose.msra.mxu0 0.0
  %1241 = vmatpush.xpose.msra.mxu0 %v1225
  %1242 = vmatpush.xpose.msra.mxu0 %v1223
  %1243 = vmatmul.f32.gmra.mxu0 %v1219
  %v1244 = vpop.f32.mrf.mxu0
  %v1245 = vadd.f32 0.0, %v1244
  %1246 = vmatmul.f32.gmra.mxu0 %v1221
  %v1247 = vpop.f32.mrf.mxu0
  %v1248 = vadd.f32 0.0, %v1247
  %1249 = vdwg.mxu0
  %1250 = vrot.lane.b32.xlu0 %v232, 120
  %v1251 = vpop.permute.xlu0 %1250
  %1252 = vrot.lane.b32.xlu0 %v235, 120
  %v1253 = vpop.permute.xlu0 %1252
  %1254 = vrot.lane.b32.xlu0 %v232, 88
  %v1255 = vpop.permute.xlu0 %1254
  %1256 = vrot.lane.b32.xlu0 %v235, 88
  %v1257 = vpop.permute.xlu0 %1256
  %v1258 = vsel %vm279, %v1251, 0
  %v1260 = vsel %vm279, %v1253, 0
  %v1262 = vsel %vm279, %v1255, 0
  %v1264 = vsel %vm279, %v1257, 0
  %1266 = vmatpush.xpose.msra.mxu0 0.0
  %1267 = vmatpush.xpose.msra.mxu0 0.0
  %1268 = vmatpush.xpose.msra.mxu0 0.0
  %1269 = vmatpush.xpose.msra.mxu0 0.0
  %1270 = vmatpush.xpose.msra.mxu0 0.0
  %1271 = vmatpush.xpose.msra.mxu0 0.0
  %1272 = vmatpush.xpose.msra.mxu0 0.0
  %1273 = vmatpush.xpose.msra.mxu0 0.0
  %1274 = vmatpush.xpose.msra.mxu0 0.0
  %1275 = vmatpush.xpose.msra.mxu0 0.0
  %1276 = vmatpush.xpose.msra.mxu0 0.0
  %1277 = vmatpush.xpose.msra.mxu0 0.0
  %1278 = vmatpush.xpose.msra.mxu0 0.0
  %1279 = vmatpush.xpose.msra.mxu0 0.0
  %1280 = vmatpush.xpose.msra.mxu0 %v1264
  %1281 = vmatpush.xpose.msra.mxu0 %v1262
  %1282 = vmatmul.f32.gmra.mxu0 %v1258
  %v1283 = vpop.f32.mrf.mxu0
  %v1284 = vadd.f32 0.0, %v1283
  %1285 = vmatmul.f32.gmra.mxu0 %v1260
  %v1286 = vpop.f32.mrf.mxu0
  %v1287 = vadd.f32 0.0, %v1286
  %1288 = vdwg.mxu0
  %1289 = vrot.lane.b32.xlu0 %v238, 120
  %v1290 = vpop.permute.xlu0 %1289
  %1291 = vrot.lane.b32.xlu0 %v241, 120
  %v1292 = vpop.permute.xlu0 %1291
  %1293 = vrot.lane.b32.xlu0 %v238, 88
  %v1294 = vpop.permute.xlu0 %1293
  %1295 = vrot.lane.b32.xlu0 %v241, 88
  %v1296 = vpop.permute.xlu0 %1295
  %v1297 = vsel %vm279, %v1290, 0
  %v1299 = vsel %vm279, %v1292, 0
  %v1301 = vsel %vm279, %v1294, 0
  %v1303 = vsel %vm279, %v1296, 0
  %1305 = vmatpush.xpose.msra.mxu0 0.0
  %1306 = vmatpush.xpose.msra.mxu0 0.0
  %1307 = vmatpush.xpose.msra.mxu0 0.0
  %1308 = vmatpush.xpose.msra.mxu0 0.0
  %1309 = vmatpush.xpose.msra.mxu0 0.0
  %1310 = vmatpush.xpose.msra.mxu0 0.0
  %1311 = vmatpush.xpose.msra.mxu0 0.0
  %1312 = vmatpush.xpose.msra.mxu0 0.0
  %1313 = vmatpush.xpose.msra.mxu0 0.0
  %1314 = vmatpush.xpose.msra.mxu0 0.0
  %1315 = vmatpush.xpose.msra.mxu0 0.0
  %1316 = vmatpush.xpose.msra.mxu0 0.0
  %1317 = vmatpush.xpose.msra.mxu0 0.0
  %1318 = vmatpush.xpose.msra.mxu0 0.0
  %1319 = vmatpush.xpose.msra.mxu0 %v1303
  %1320 = vmatpush.xpose.msra.mxu0 %v1301
  %1321 = vmatmul.f32.gmra.mxu0 %v1297
  %v1322 = vpop.f32.mrf.mxu0
  %v1323 = vadd.f32 0.0, %v1322
  %1324 = vmatmul.f32.gmra.mxu0 %v1299
  %v1325 = vpop.f32.mrf.mxu0
  %v1326 = vadd.f32 0.0, %v1325
  %1327 = vdwg.mxu0
  %1328 = vrot.lane.b32.xlu0 %v244, 120
  %v1329 = vpop.permute.xlu0 %1328
  %1330 = vrot.lane.b32.xlu0 %v247, 120
  %v1331 = vpop.permute.xlu0 %1330
  %1332 = vrot.lane.b32.xlu0 %v244, 88
  %v1333 = vpop.permute.xlu0 %1332
  %1334 = vrot.lane.b32.xlu0 %v247, 88
  %v1335 = vpop.permute.xlu0 %1334
  %v1336 = vsel %vm279, %v1329, 0
  %v1338 = vsel %vm279, %v1331, 0
  %v1340 = vsel %vm279, %v1333, 0
  %v1342 = vsel %vm279, %v1335, 0
  %1344 = vmatpush.xpose.msra.mxu0 0.0
  %1345 = vmatpush.xpose.msra.mxu0 0.0
  %1346 = vmatpush.xpose.msra.mxu0 0.0
  %1347 = vmatpush.xpose.msra.mxu0 0.0
  %1348 = vmatpush.xpose.msra.mxu0 0.0
  %1349 = vmatpush.xpose.msra.mxu0 0.0
  %1350 = vmatpush.xpose.msra.mxu0 0.0
  %1351 = vmatpush.xpose.msra.mxu0 0.0
  %1352 = vmatpush.xpose.msra.mxu0 0.0
  %1353 = vmatpush.xpose.msra.mxu0 0.0
  %1354 = vmatpush.xpose.msra.mxu0 0.0
  %1355 = vmatpush.xpose.msra.mxu0 0.0
  %1356 = vmatpush.xpose.msra.mxu0 0.0
  %1357 = vmatpush.xpose.msra.mxu0 0.0
  %1358 = vmatpush.xpose.msra.mxu0 %v1342
  %1359 = vmatpush.xpose.msra.mxu0 %v1340
  %1360 = vmatmul.f32.gmra.mxu0 %v1336
  %v1361 = vpop.f32.mrf.mxu0
  %v1362 = vadd.f32 0.0, %v1361
  %1363 = vmatmul.f32.gmra.mxu0 %v1338
  %v1364 = vpop.f32.mrf.mxu0
  %v1365 = vadd.f32 0.0, %v1364
  %1366 = vdwg.mxu0
  %1367 = vrot.lane.b32.xlu0 %v250, 120
  %v1368 = vpop.permute.xlu0 %1367
  %1369 = vrot.lane.b32.xlu0 %v253, 120
  %v1370 = vpop.permute.xlu0 %1369
  %1371 = vrot.lane.b32.xlu0 %v250, 88
  %v1372 = vpop.permute.xlu0 %1371
  %1373 = vrot.lane.b32.xlu0 %v253, 88
  %v1374 = vpop.permute.xlu0 %1373
  %v1375 = vsel %vm279, %v1368, 0
  %v1377 = vsel %vm279, %v1370, 0
  %v1379 = vsel %vm279, %v1372, 0
  %v1381 = vsel %vm279, %v1374, 0
  %1383 = vmatpush.xpose.msra.mxu0 0.0
  %1384 = vmatpush.xpose.msra.mxu0 0.0
  %1385 = vmatpush.xpose.msra.mxu0 0.0
  %1386 = vmatpush.xpose.msra.mxu0 0.0
  %1387 = vmatpush.xpose.msra.mxu0 0.0
  %1388 = vmatpush.xpose.msra.mxu0 0.0
  %1389 = vmatpush.xpose.msra.mxu0 0.0
  %1390 = vmatpush.xpose.msra.mxu0 0.0
  %1391 = vmatpush.xpose.msra.mxu0 0.0
  %1392 = vmatpush.xpose.msra.mxu0 0.0
  %1393 = vmatpush.xpose.msra.mxu0 0.0
  %1394 = vmatpush.xpose.msra.mxu0 0.0
  %1395 = vmatpush.xpose.msra.mxu0 0.0
  %1396 = vmatpush.xpose.msra.mxu0 0.0
  %1397 = vmatpush.xpose.msra.mxu0 %v1381
  %1398 = vmatpush.xpose.msra.mxu0 %v1379
  %1399 = vmatmul.f32.gmra.mxu0 %v1375
  %v1400 = vpop.f32.mrf.mxu0
  %v1401 = vadd.f32 0.0, %v1400
  %1402 = vmatmul.f32.gmra.mxu0 %v1377
  %v1403 = vpop.f32.mrf.mxu0
  %v1404 = vadd.f32 0.0, %v1403
  %1405 = vdwg.mxu0
  %1406 = vrot.lane.b32.xlu0 %v256, 120
  %v1407 = vpop.permute.xlu0 %1406
  %1408 = vrot.lane.b32.xlu0 %v259, 120
  %v1409 = vpop.permute.xlu0 %1408
  %1410 = vrot.lane.b32.xlu0 %v256, 88
  %v1411 = vpop.permute.xlu0 %1410
  %1412 = vrot.lane.b32.xlu0 %v259, 88
  %v1413 = vpop.permute.xlu0 %1412
  %v1414 = vsel %vm279, %v1407, 0
  %v1416 = vsel %vm279, %v1409, 0
  %v1418 = vsel %vm279, %v1411, 0
  %v1420 = vsel %vm279, %v1413, 0
  %1422 = vmatpush.xpose.msra.mxu0 0.0
  %1423 = vmatpush.xpose.msra.mxu0 0.0
  %1424 = vmatpush.xpose.msra.mxu0 0.0
  %1425 = vmatpush.xpose.msra.mxu0 0.0
  %1426 = vmatpush.xpose.msra.mxu0 0.0
  %1427 = vmatpush.xpose.msra.mxu0 0.0
  %1428 = vmatpush.xpose.msra.mxu0 0.0
  %1429 = vmatpush.xpose.msra.mxu0 0.0
  %1430 = vmatpush.xpose.msra.mxu0 0.0
  %1431 = vmatpush.xpose.msra.mxu0 0.0
  %1432 = vmatpush.xpose.msra.mxu0 0.0
  %1433 = vmatpush.xpose.msra.mxu0 0.0
  %1434 = vmatpush.xpose.msra.mxu0 0.0
  %1435 = vmatpush.xpose.msra.mxu0 0.0
  %1436 = vmatpush.xpose.msra.mxu0 %v1420
  %1437 = vmatpush.xpose.msra.mxu0 %v1418
  %1438 = vmatmul.f32.gmra.mxu0 %v1414
  %v1439 = vpop.f32.mrf.mxu0
  %v1440 = vadd.f32 0.0, %v1439
  %1441 = vmatmul.f32.gmra.mxu0 %v1416
  %v1442 = vpop.f32.mrf.mxu0
  %v1443 = vadd.f32 0.0, %v1442
  %1444 = vdwg.mxu0
  %1445 = vrot.lane.b32.xlu0 %v262, 120
  %v1446 = vpop.permute.xlu0 %1445
  %1447 = vrot.lane.b32.xlu0 %v265, 120
  %v1448 = vpop.permute.xlu0 %1447
  %1449 = vrot.lane.b32.xlu0 %v262, 88
  %v1450 = vpop.permute.xlu0 %1449
  %1451 = vrot.lane.b32.xlu0 %v265, 88
  %v1452 = vpop.permute.xlu0 %1451
  %v1453 = vsel %vm279, %v1446, 0
  %v1455 = vsel %vm279, %v1448, 0
  %v1457 = vsel %vm279, %v1450, 0
  %v1459 = vsel %vm279, %v1452, 0
  %1461 = vmatpush.xpose.msra.mxu0 0.0
  %1462 = vmatpush.xpose.msra.mxu0 0.0
  %1463 = vmatpush.xpose.msra.mxu0 0.0
  %1464 = vmatpush.xpose.msra.mxu0 0.0
  %1465 = vmatpush.xpose.msra.mxu0 0.0
  %1466 = vmatpush.xpose.msra.mxu0 0.0
  %1467 = vmatpush.xpose.msra.mxu0 0.0
  %1468 = vmatpush.xpose.msra.mxu0 0.0
  %1469 = vmatpush.xpose.msra.mxu0 0.0
  %1470 = vmatpush.xpose.msra.mxu0 0.0
  %1471 = vmatpush.xpose.msra.mxu0 0.0
  %1472 = vmatpush.xpose.msra.mxu0 0.0
  %1473 = vmatpush.xpose.msra.mxu0 0.0
  %1474 = vmatpush.xpose.msra.mxu0 0.0
  %1475 = vmatpush.xpose.msra.mxu0 %v1459
  %1476 = vmatpush.xpose.msra.mxu0 %v1457
  %1477 = vmatmul.f32.gmra.mxu0 %v1453
  %v1478 = vpop.f32.mrf.mxu0
  %v1479 = vadd.f32 0.0, %v1478
  %1480 = vmatmul.f32.gmra.mxu0 %v1455
  %v1481 = vpop.f32.mrf.mxu0
  %v1482 = vadd.f32 0.0, %v1481
  %1483 = vdwg.mxu0
  %1484 = vrot.lane.b32.xlu0 %v268, 120
  %v1485 = vpop.permute.xlu0 %1484
  %1486 = vrot.lane.b32.xlu0 %v271, 120
  %v1487 = vpop.permute.xlu0 %1486
  %1488 = vrot.lane.b32.xlu0 %v268, 88
  %v1489 = vpop.permute.xlu0 %1488
  %1490 = vrot.lane.b32.xlu0 %v271, 88
  %v1491 = vpop.permute.xlu0 %1490
  %v1492 = vsel %vm279, %v1485, 0
  %v1494 = vsel %vm279, %v1487, 0
  %v1496 = vsel %vm279, %v1489, 0
  %v1498 = vsel %vm279, %v1491, 0
  %1500 = vmatpush.xpose.msra.mxu0 0.0
  %1501 = vmatpush.xpose.msra.mxu0 0.0
  %1502 = vmatpush.xpose.msra.mxu0 0.0
  %1503 = vmatpush.xpose.msra.mxu0 0.0
  %1504 = vmatpush.xpose.msra.mxu0 0.0
  %1505 = vmatpush.xpose.msra.mxu0 0.0
  %1506 = vmatpush.xpose.msra.mxu0 0.0
  %1507 = vmatpush.xpose.msra.mxu0 0.0
  %1508 = vmatpush.xpose.msra.mxu0 0.0
  %1509 = vmatpush.xpose.msra.mxu0 0.0
  %1510 = vmatpush.xpose.msra.mxu0 0.0
  %1511 = vmatpush.xpose.msra.mxu0 0.0
  %1512 = vmatpush.xpose.msra.mxu0 0.0
  %1513 = vmatpush.xpose.msra.mxu0 0.0
  %1514 = vmatpush.xpose.msra.mxu0 %v1498
  %1515 = vmatpush.xpose.msra.mxu0 %v1496
  %1516 = vmatmul.f32.gmra.mxu0 %v1492
  %v1517 = vpop.f32.mrf.mxu0
  %v1518 = vadd.f32 0.0, %v1517
  %1519 = vmatmul.f32.gmra.mxu0 %v1494
  %v1520 = vpop.f32.mrf.mxu0
  %v1521 = vadd.f32 0.0, %v1520
  %1522 = vdwg.mxu0
  %s1523 = scalar_lea.vmem [#allocation2], 256
  %1524 = vst.msk [vmem:[%s1523] sm:$0xff] %vm866, %v933
  %1525 = vst.msk [vmem:[%s1523 + $0x8] sm:$0xff] %vm866, %v936
  %1526 = vst.msk [vmem:[%s1523 + $0x10] sm:$0xff] %vm866, %v972
  %1527 = vst.msk [vmem:[%s1523 + $0x18] sm:$0xff] %vm866, %v975
  %1528 = vst.msk [vmem:[%s1523 + $0x20] sm:$0xff] %vm866, %v1011
  %1529 = vst.msk [vmem:[%s1523 + $0x28] sm:$0xff] %vm866, %v1014
  %1530 = vst.msk [vmem:[%s1523 + $0x30] sm:$0xff] %vm866, %v1050
  %1531 = vst.msk [vmem:[%s1523 + $0x38] sm:$0xff] %vm866, %v1053
  %1532 = vst.msk [vmem:[%s1523 + $0x40] sm:$0xff] %vm866, %v1089
  %1533 = vst.msk [vmem:[%s1523 + $0x48] sm:$0xff] %vm866, %v1092
  %1534 = vst.msk [vmem:[%s1523 + $0x50] sm:$0xff] %vm866, %v1128
  %1535 = vst.msk [vmem:[%s1523 + $0x58] sm:$0xff] %vm866, %v1131
  %1536 = vst.msk [vmem:[%s1523 + $0x60] sm:$0xff] %vm866, %v1167
  %1537 = vst.msk [vmem:[%s1523 + $0x68] sm:$0xff] %vm866, %v1170
  %1538 = vst.msk [vmem:[%s1523 + $0x70] sm:$0xff] %vm866, %v1206
  %1539 = vst.msk [vmem:[%s1523 + $0x78] sm:$0xff] %vm866, %v1209
  %1540 = vst.msk [vmem:[%s1523 + $0x80] sm:$0xff] %vm866, %v1245
  %1541 = vst.msk [vmem:[%s1523 + $0x88] sm:$0xff] %vm866, %v1248
  %1542 = vst.msk [vmem:[%s1523 + $0x90] sm:$0xff] %vm866, %v1284
  %1543 = vst.msk [vmem:[%s1523 + $0x98] sm:$0xff] %vm866, %v1287
  %1544 = vst.msk [vmem:[%s1523 + $0xa0] sm:$0xff] %vm866, %v1323
  %1545 = vst.msk [vmem:[%s1523 + $0xa8] sm:$0xff] %vm866, %v1326
  %1546 = vst.msk [vmem:[%s1523 + $0xb0] sm:$0xff] %vm866, %v1362
  %1547 = vst.msk [vmem:[%s1523 + $0xb8] sm:$0xff] %vm866, %v1365
  %1548 = vst.msk [vmem:[%s1523 + $0xc0] sm:$0xff] %vm866, %v1401
  %1549 = vst.msk [vmem:[%s1523 + $0xc8] sm:$0xff] %vm866, %v1404
  %1550 = vst.msk [vmem:[%s1523 + $0xd0] sm:$0xff] %vm866, %v1440
  %1551 = vst.msk [vmem:[%s1523 + $0xd8] sm:$0xff] %vm866, %v1443
  %1552 = vst.msk [vmem:[%s1523 + $0xe0] sm:$0xff] %vm866, %v1479
  %1553 = vst.msk [vmem:[%s1523 + $0xe8] sm:$0xff] %vm866, %v1482
  %1554 = vst.msk [vmem:[%s1523 + $0xf0] sm:$0xff] %vm866, %v1518
  %1555 = vst.msk [vmem:[%s1523 + $0xf8] sm:$0xff] %vm866, %v1521
  %1556 = vrot.lane.b32.xlu0 %v178, 112
  %v1557 = vpop.permute.xlu0 %1556
  %1558 = vrot.lane.b32.xlu0 %v181, 112
  %v1559 = vpop.permute.xlu0 %1558
  %1560 = vrot.lane.b32.xlu0 %v178, 80
  %v1561 = vpop.permute.xlu0 %1560
  %1562 = vrot.lane.b32.xlu0 %v181, 80
  %v1563 = vpop.permute.xlu0 %1562
  %v1564 = vsel %vm279, %v1557, 0
  %v1566 = vsel %vm279, %v1559, 0
  %v1568 = vsel %vm279, %v1561, 0
  %v1570 = vsel %vm279, %v1563, 0
  %1572 = vmatpush.xpose.msra.mxu0 0.0
  %1573 = vmatpush.xpose.msra.mxu0 0.0
  %1574 = vmatpush.xpose.msra.mxu0 0.0
  %1575 = vmatpush.xpose.msra.mxu0 0.0
  %1576 = vmatpush.xpose.msra.mxu0 0.0
  %1577 = vmatpush.xpose.msra.mxu0 0.0
  %1578 = vmatpush.xpose.msra.mxu0 0.0
  %1579 = vmatpush.xpose.msra.mxu0 0.0
  %1580 = vmatpush.xpose.msra.mxu0 0.0
  %1581 = vmatpush.xpose.msra.mxu0 0.0
  %1582 = vmatpush.xpose.msra.mxu0 0.0
  %1583 = vmatpush.xpose.msra.mxu0 0.0
  %1584 = vmatpush.xpose.msra.mxu0 0.0
  %1585 = vmatpush.xpose.msra.mxu0 0.0
  %1586 = vmatpush.xpose.msra.mxu0 %v1570
  %1587 = vmatpush.xpose.msra.mxu0 %v1568
  %1588 = vmatmul.f32.gmra.mxu0 %v1564
  %v1589 = vpop.f32.mrf.mxu0
  %v1590 = vadd.f32 0.0, %v1589
  %1591 = vmatmul.f32.gmra.mxu0 %v1566
  %v1592 = vpop.f32.mrf.mxu0
  %v1593 = vadd.f32 0.0, %v1592
  %1594 = vdwg.mxu0
  %1595 = vrot.lane.b32.xlu0 %v184, 112
  %v1596 = vpop.permute.xlu0 %1595
  %1597 = vrot.lane.b32.xlu0 %v187, 112
  %v1598 = vpop.permute.xlu0 %1597
  %1599 = vrot.lane.b32.xlu0 %v184, 80
  %v1600 = vpop.permute.xlu0 %1599
  %1601 = vrot.lane.b32.xlu0 %v187, 80
  %v1602 = vpop.permute.xlu0 %1601
  %v1603 = vsel %vm279, %v1596, 0
  %v1605 = vsel %vm279, %v1598, 0
  %v1607 = vsel %vm279, %v1600, 0
  %v1609 = vsel %vm279, %v1602, 0
  %1611 = vmatpush.xpose.msra.mxu0 0.0
  %1612 = vmatpush.xpose.msra.mxu0 0.0
  %1613 = vmatpush.xpose.msra.mxu0 0.0
  %1614 = vmatpush.xpose.msra.mxu0 0.0
  %1615 = vmatpush.xpose.msra.mxu0 0.0
  %1616 = vmatpush.xpose.msra.mxu0 0.0
  %1617 = vmatpush.xpose.msra.mxu0 0.0
  %1618 = vmatpush.xpose.msra.mxu0 0.0
  %1619 = vmatpush.xpose.msra.mxu0 0.0
  %1620 = vmatpush.xpose.msra.mxu0 0.0
  %1621 = vmatpush.xpose.msra.mxu0 0.0
  %1622 = vmatpush.xpose.msra.mxu0 0.0
  %1623 = vmatpush.xpose.msra.mxu0 0.0
  %1624 = vmatpush.xpose.msra.mxu0 0.0
  %1625 = vmatpush.xpose.msra.mxu0 %v1609
  %1626 = vmatpush.xpose.msra.mxu0 %v1607
  %1627 = vmatmul.f32.gmra.mxu0 %v1603
  %v1628 = vpop.f32.mrf.mxu0
  %v1629 = vadd.f32 0.0, %v1628
  %1630 = vmatmul.f32.gmra.mxu0 %v1605
  %v1631 = vpop.f32.mrf.mxu0
  %v1632 = vadd.f32 0.0, %v1631
  %1633 = vdwg.mxu0
  %1634 = vrot.lane.b32.xlu0 %v190, 112
  %v1635 = vpop.permute.xlu0 %1634
  %1636 = vrot.lane.b32.xlu0 %v193, 112
  %v1637 = vpop.permute.xlu0 %1636
  %1638 = vrot.lane.b32.xlu0 %v190, 80
  %v1639 = vpop.permute.xlu0 %1638
  %1640 = vrot.lane.b32.xlu0 %v193, 80
  %v1641 = vpop.permute.xlu0 %1640
  %v1642 = vsel %vm279, %v1635, 0
  %v1644 = vsel %vm279, %v1637, 0
  %v1646 = vsel %vm279, %v1639, 0
  %v1648 = vsel %vm279, %v1641, 0
  %1650 = vmatpush.xpose.msra.mxu0 0.0
  %1651 = vmatpush.xpose.msra.mxu0 0.0
  %1652 = vmatpush.xpose.msra.mxu0 0.0
  %1653 = vmatpush.xpose.msra.mxu0 0.0
  %1654 = vmatpush.xpose.msra.mxu0 0.0
  %1655 = vmatpush.xpose.msra.mxu0 0.0
  %1656 = vmatpush.xpose.msra.mxu0 0.0
  %1657 = vmatpush.xpose.msra.mxu0 0.0
  %1658 = vmatpush.xpose.msra.mxu0 0.0
  %1659 = vmatpush.xpose.msra.mxu0 0.0
  %1660 = vmatpush.xpose.msra.mxu0 0.0
  %1661 = vmatpush.xpose.msra.mxu0 0.0
  %1662 = vmatpush.xpose.msra.mxu0 0.0
  %1663 = vmatpush.xpose.msra.mxu0 0.0
  %1664 = vmatpush.xpose.msra.mxu0 %v1648
  %1665 = vmatpush.xpose.msra.mxu0 %v1646
  %1666 = vmatmul.f32.gmra.mxu0 %v1642
  %v1667 = vpop.f32.mrf.mxu0
  %v1668 = vadd.f32 0.0, %v1667
  %1669 = vmatmul.f32.gmra.mxu0 %v1644
  %v1670 = vpop.f32.mrf.mxu0
  %v1671 = vadd.f32 0.0, %v1670
  %1672 = vdwg.mxu0
  %1673 = vrot.lane.b32.xlu0 %v196, 112
  %v1674 = vpop.permute.xlu0 %1673
  %1675 = vrot.lane.b32.xlu0 %v199, 112
  %v1676 = vpop.permute.xlu0 %1675
  %1677 = vrot.lane.b32.xlu0 %v196, 80
  %v1678 = vpop.permute.xlu0 %1677
  %1679 = vrot.lane.b32.xlu0 %v199, 80
  %v1680 = vpop.permute.xlu0 %1679
  %v1681 = vsel %vm279, %v1674, 0
  %v1683 = vsel %vm279, %v1676, 0
  %v1685 = vsel %vm279, %v1678, 0
  %v1687 = vsel %vm279, %v1680, 0
  %1689 = vmatpush.xpose.msra.mxu0 0.0
  %1690 = vmatpush.xpose.msra.mxu0 0.0
  %1691 = vmatpush.xpose.msra.mxu0 0.0
  %1692 = vmatpush.xpose.msra.mxu0 0.0
  %1693 = vmatpush.xpose.msra.mxu0 0.0
  %1694 = vmatpush.xpose.msra.mxu0 0.0
  %1695 = vmatpush.xpose.msra.mxu0 0.0
  %1696 = vmatpush.xpose.msra.mxu0 0.0
  %1697 = vmatpush.xpose.msra.mxu0 0.0
  %1698 = vmatpush.xpose.msra.mxu0 0.0
  %1699 = vmatpush.xpose.msra.mxu0 0.0
  %1700 = vmatpush.xpose.msra.mxu0 0.0
  %1701 = vmatpush.xpose.msra.mxu0 0.0
  %1702 = vmatpush.xpose.msra.mxu0 0.0
  %1703 = vmatpush.xpose.msra.mxu0 %v1687
  %1704 = vmatpush.xpose.msra.mxu0 %v1685
  %1705 = vmatmul.f32.gmra.mxu0 %v1681
  %v1706 = vpop.f32.mrf.mxu0
  %v1707 = vadd.f32 0.0, %v1706
  %1708 = vmatmul.f32.gmra.mxu0 %v1683
  %v1709 = vpop.f32.mrf.mxu0
  %v1710 = vadd.f32 0.0, %v1709
  %1711 = vdwg.mxu0
  %1712 = vrot.lane.b32.xlu0 %v202, 112
  %v1713 = vpop.permute.xlu0 %1712
  %1714 = vrot.lane.b32.xlu0 %v205, 112
  %v1715 = vpop.permute.xlu0 %1714
  %1716 = vrot.lane.b32.xlu0 %v202, 80
  %v1717 = vpop.permute.xlu0 %1716
  %1718 = vrot.lane.b32.xlu0 %v205, 80
  %v1719 = vpop.permute.xlu0 %1718
  %v1720 = vsel %vm279, %v1713, 0
  %v1722 = vsel %vm279, %v1715, 0
  %v1724 = vsel %vm279, %v1717, 0
  %v1726 = vsel %vm279, %v1719, 0
  %1728 = vmatpush.xpose.msra.mxu0 0.0
  %1729 = vmatpush.xpose.msra.mxu0 0.0
  %1730 = vmatpush.xpose.msra.mxu0 0.0
  %1731 = vmatpush.xpose.msra.mxu0 0.0
  %1732 = vmatpush.xpose.msra.mxu0 0.0
  %1733 = vmatpush.xpose.msra.mxu0 0.0
  %1734 = vmatpush.xpose.msra.mxu0 0.0
  %1735 = vmatpush.xpose.msra.mxu0 0.0
  %1736 = vmatpush.xpose.msra.mxu0 0.0
  %1737 = vmatpush.xpose.msra.mxu0 0.0
  %1738 = vmatpush.xpose.msra.mxu0 0.0
  %1739 = vmatpush.xpose.msra.mxu0 0.0
  %1740 = vmatpush.xpose.msra.mxu0 0.0
  %1741 = vmatpush.xpose.msra.mxu0 0.0
  %1742 = vmatpush.xpose.msra.mxu0 %v1726
  %1743 = vmatpush.xpose.msra.mxu0 %v1724
  %1744 = vmatmul.f32.gmra.mxu0 %v1720
  %v1745 = vpop.f32.mrf.mxu0
  %v1746 = vadd.f32 0.0, %v1745
  %1747 = vmatmul.f32.gmra.mxu0 %v1722
  %v1748 = vpop.f32.mrf.mxu0
  %v1749 = vadd.f32 0.0, %v1748
  %1750 = vdwg.mxu0
  %1751 = vrot.lane.b32.xlu0 %v208, 112
  %v1752 = vpop.permute.xlu0 %1751
  %1753 = vrot.lane.b32.xlu0 %v211, 112
  %v1754 = vpop.permute.xlu0 %1753
  %1755 = vrot.lane.b32.xlu0 %v208, 80
  %v1756 = vpop.permute.xlu0 %1755
  %1757 = vrot.lane.b32.xlu0 %v211, 80
  %v1758 = vpop.permute.xlu0 %1757
  %v1759 = vsel %vm279, %v1752, 0
  %v1761 = vsel %vm279, %v1754, 0
  %v1763 = vsel %vm279, %v1756, 0
  %v1765 = vsel %vm279, %v1758, 0
  %1767 = vmatpush.xpose.msra.mxu0 0.0
  %1768 = vmatpush.xpose.msra.mxu0 0.0
  %1769 = vmatpush.xpose.msra.mxu0 0.0
  %1770 = vmatpush.xpose.msra.mxu0 0.0
  %1771 = vmatpush.xpose.msra.mxu0 0.0
  %1772 = vmatpush.xpose.msra.mxu0 0.0
  %1773 = vmatpush.xpose.msra.mxu0 0.0
  %1774 = vmatpush.xpose.msra.mxu0 0.0
  %1775 = vmatpush.xpose.msra.mxu0 0.0
  %1776 = vmatpush.xpose.msra.mxu0 0.0
  %1777 = vmatpush.xpose.msra.mxu0 0.0
  %1778 = vmatpush.xpose.msra.mxu0 0.0
  %1779 = vmatpush.xpose.msra.mxu0 0.0
  %1780 = vmatpush.xpose.msra.mxu0 0.0
  %1781 = vmatpush.xpose.msra.mxu0 %v1765
  %1782 = vmatpush.xpose.msra.mxu0 %v1763
  %1783 = vmatmul.f32.gmra.mxu0 %v1759
  %v1784 = vpop.f32.mrf.mxu0
  %v1785 = vadd.f32 0.0, %v1784
  %1786 = vmatmul.f32.gmra.mxu0 %v1761
  %v1787 = vpop.f32.mrf.mxu0
  %v1788 = vadd.f32 0.0, %v1787
  %1789 = vdwg.mxu0
  %1790 = vrot.lane.b32.xlu0 %v214, 112
  %v1791 = vpop.permute.xlu0 %1790
  %1792 = vrot.lane.b32.xlu0 %v217, 112
  %v1793 = vpop.permute.xlu0 %1792
  %1794 = vrot.lane.b32.xlu0 %v214, 80
  %v1795 = vpop.permute.xlu0 %1794
  %1796 = vrot.lane.b32.xlu0 %v217, 80
  %v1797 = vpop.permute.xlu0 %1796
  %v1798 = vsel %vm279, %v1791, 0
  %v1800 = vsel %vm279, %v1793, 0
  %v1802 = vsel %vm279, %v1795, 0
  %v1804 = vsel %vm279, %v1797, 0
  %1806 = vmatpush.xpose.msra.mxu0 0.0
  %1807 = vmatpush.xpose.msra.mxu0 0.0
  %1808 = vmatpush.xpose.msra.mxu0 0.0
  %1809 = vmatpush.xpose.msra.mxu0 0.0
  %1810 = vmatpush.xpose.msra.mxu0 0.0
  %1811 = vmatpush.xpose.msra.mxu0 0.0
  %1812 = vmatpush.xpose.msra.mxu0 0.0
  %1813 = vmatpush.xpose.msra.mxu0 0.0
  %1814 = vmatpush.xpose.msra.mxu0 0.0
  %1815 = vmatpush.xpose.msra.mxu0 0.0
  %1816 = vmatpush.xpose.msra.mxu0 0.0
  %1817 = vmatpush.xpose.msra.mxu0 0.0
  %1818 = vmatpush.xpose.msra.mxu0 0.0
  %1819 = vmatpush.xpose.msra.mxu0 0.0
  %1820 = vmatpush.xpose.msra.mxu0 %v1804
  %1821 = vmatpush.xpose.msra.mxu0 %v1802
  %1822 = vmatmul.f32.gmra.mxu0 %v1798
  %v1823 = vpop.f32.mrf.mxu0
  %v1824 = vadd.f32 0.0, %v1823
  %1825 = vmatmul.f32.gmra.mxu0 %v1800
  %v1826 = vpop.f32.mrf.mxu0
  %v1827 = vadd.f32 0.0, %v1826
  %1828 = vdwg.mxu0
  %1829 = vrot.lane.b32.xlu0 %v220, 112
  %v1830 = vpop.permute.xlu0 %1829
  %1831 = vrot.lane.b32.xlu0 %v223, 112
  %v1832 = vpop.permute.xlu0 %1831
  %1833 = vrot.lane.b32.xlu0 %v220, 80
  %v1834 = vpop.permute.xlu0 %1833
  %1835 = vrot.lane.b32.xlu0 %v223, 80
  %v1836 = vpop.permute.xlu0 %1835
  %v1837 = vsel %vm279, %v1830, 0
  %v1839 = vsel %vm279, %v1832, 0
  %v1841 = vsel %vm279, %v1834, 0
  %v1843 = vsel %vm279, %v1836, 0
  %1845 = vmatpush.xpose.msra.mxu0 0.0
  %1846 = vmatpush.xpose.msra.mxu0 0.0
  %1847 = vmatpush.xpose.msra.mxu0 0.0
  %1848 = vmatpush.xpose.msra.mxu0 0.0
  %1849 = vmatpush.xpose.msra.mxu0 0.0
  %1850 = vmatpush.xpose.msra.mxu0 0.0
  %1851 = vmatpush.xpose.msra.mxu0 0.0
  %1852 = vmatpush.xpose.msra.mxu0 0.0
  %1853 = vmatpush.xpose.msra.mxu0 0.0
  %1854 = vmatpush.xpose.msra.mxu0 0.0
  %1855 = vmatpush.xpose.msra.mxu0 0.0
  %1856 = vmatpush.xpose.msra.mxu0 0.0
  %1857 = vmatpush.xpose.msra.mxu0 0.0
  %1858 = vmatpush.xpose.msra.mxu0 0.0
  %1859 = vmatpush.xpose.msra.mxu0 %v1843
  %1860 = vmatpush.xpose.msra.mxu0 %v1841
  %1861 = vmatmul.f32.gmra.mxu0 %v1837
  %v1862 = vpop.f32.mrf.mxu0
  %v1863 = vadd.f32 0.0, %v1862
  %1864 = vmatmul.f32.gmra.mxu0 %v1839
  %v1865 = vpop.f32.mrf.mxu0
  %v1866 = vadd.f32 0.0, %v1865
  %1867 = vdwg.mxu0
  %1868 = vrot.lane.b32.xlu0 %v226, 112
  %v1869 = vpop.permute.xlu0 %1868
  %1870 = vrot.lane.b32.xlu0 %v229, 112
  %v1871 = vpop.permute.xlu0 %1870
  %1872 = vrot.lane.b32.xlu0 %v226, 80
  %v1873 = vpop.permute.xlu0 %1872
  %1874 = vrot.lane.b32.xlu0 %v229, 80
  %v1875 = vpop.permute.xlu0 %1874
  %v1876 = vsel %vm279, %v1869, 0
  %v1878 = vsel %vm279, %v1871, 0
  %v1880 = vsel %vm279, %v1873, 0
  %v1882 = vsel %vm279, %v1875, 0
  %1884 = vmatpush.xpose.msra.mxu0 0.0
  %1885 = vmatpush.xpose.msra.mxu0 0.0
  %1886 = vmatpush.xpose.msra.mxu0 0.0
  %1887 = vmatpush.xpose.msra.mxu0 0.0
  %1888 = vmatpush.xpose.msra.mxu0 0.0
  %1889 = vmatpush.xpose.msra.mxu0 0.0
  %1890 = vmatpush.xpose.msra.mxu0 0.0
  %1891 = vmatpush.xpose.msra.mxu0 0.0
  %1892 = vmatpush.xpose.msra.mxu0 0.0
  %1893 = vmatpush.xpose.msra.mxu0 0.0
  %1894 = vmatpush.xpose.msra.mxu0 0.0
  %1895 = vmatpush.xpose.msra.mxu0 0.0
  %1896 = vmatpush.xpose.msra.mxu0 0.0
  %1897 = vmatpush.xpose.msra.mxu0 0.0
  %1898 = vmatpush.xpose.msra.mxu0 %v1882
  %1899 = vmatpush.xpose.msra.mxu0 %v1880
  %1900 = vmatmul.f32.gmra.mxu0 %v1876
  %v1901 = vpop.f32.mrf.mxu0
  %v1902 = vadd.f32 0.0, %v1901
  %1903 = vmatmul.f32.gmra.mxu0 %v1878
  %v1904 = vpop.f32.mrf.mxu0
  %v1905 = vadd.f32 0.0, %v1904
  %1906 = vdwg.mxu0
  %1907 = vrot.lane.b32.xlu0 %v232, 112
  %v1908 = vpop.permute.xlu0 %1907
  %1909 = vrot.lane.b32.xlu0 %v235, 112
  %v1910 = vpop.permute.xlu0 %1909
  %1911 = vrot.lane.b32.xlu0 %v232, 80
  %v1912 = vpop.permute.xlu0 %1911
  %1913 = vrot.lane.b32.xlu0 %v235, 80
  %v1914 = vpop.permute.xlu0 %1913
  %v1915 = vsel %vm279, %v1908, 0
  %v1917 = vsel %vm279, %v1910, 0
  %v1919 = vsel %vm279, %v1912, 0
  %v1921 = vsel %vm279, %v1914, 0
  %1923 = vmatpush.xpose.msra.mxu0 0.0
  %1924 = vmatpush.xpose.msra.mxu0 0.0
  %1925 = vmatpush.xpose.msra.mxu0 0.0
  %1926 = vmatpush.xpose.msra.mxu0 0.0
  %1927 = vmatpush.xpose.msra.mxu0 0.0
  %1928 = vmatpush.xpose.msra.mxu0 0.0
  %1929 = vmatpush.xpose.msra.mxu0 0.0
  %1930 = vmatpush.xpose.msra.mxu0 0.0
  %1931 = vmatpush.xpose.msra.mxu0 0.0
  %1932 = vmatpush.xpose.msra.mxu0 0.0
  %1933 = vmatpush.xpose.msra.mxu0 0.0
  %1934 = vmatpush.xpose.msra.mxu0 0.0
  %1935 = vmatpush.xpose.msra.mxu0 0.0
  %1936 = vmatpush.xpose.msra.mxu0 0.0
  %1937 = vmatpush.xpose.msra.mxu0 %v1921
  %1938 = vmatpush.xpose.msra.mxu0 %v1919
  %1939 = vmatmul.f32.gmra.mxu0 %v1915
  %v1940 = vpop.f32.mrf.mxu0
  %v1941 = vadd.f32 0.0, %v1940
  %1942 = vmatmul.f32.gmra.mxu0 %v1917
  %v1943 = vpop.f32.mrf.mxu0
  %v1944 = vadd.f32 0.0, %v1943
  %1945 = vdwg.mxu0
  %1946 = vrot.lane.b32.xlu0 %v238, 112
  %v1947 = vpop.permute.xlu0 %1946
  %1948 = vrot.lane.b32.xlu0 %v241, 112
  %v1949 = vpop.permute.xlu0 %1948
  %1950 = vrot.lane.b32.xlu0 %v238, 80
  %v1951 = vpop.permute.xlu0 %1950
  %1952 = vrot.lane.b32.xlu0 %v241, 80
  %v1953 = vpop.permute.xlu0 %1952
  %v1954 = vsel %vm279, %v1947, 0
  %v1956 = vsel %vm279, %v1949, 0
  %v1958 = vsel %vm279, %v1951, 0
  %v1960 = vsel %vm279, %v1953, 0
  %1962 = vmatpush.xpose.msra.mxu0 0.0
  %1963 = vmatpush.xpose.msra.mxu0 0.0
  %1964 = vmatpush.xpose.msra.mxu0 0.0
  %1965 = vmatpush.xpose.msra.mxu0 0.0
  %1966 = vmatpush.xpose.msra.mxu0 0.0
  %1967 = vmatpush.xpose.msra.mxu0 0.0
  %1968 = vmatpush.xpose.msra.mxu0 0.0
  %1969 = vmatpush.xpose.msra.mxu0 0.0
  %1970 = vmatpush.xpose.msra.mxu0 0.0
  %1971 = vmatpush.xpose.msra.mxu0 0.0
  %1972 = vmatpush.xpose.msra.mxu0 0.0
  %1973 = vmatpush.xpose.msra.mxu0 0.0
  %1974 = vmatpush.xpose.msra.mxu0 0.0
  %1975 = vmatpush.xpose.msra.mxu0 0.0
  %1976 = vmatpush.xpose.msra.mxu0 %v1960
  %1977 = vmatpush.xpose.msra.mxu0 %v1958
  %1978 = vmatmul.f32.gmra.mxu0 %v1954
  %v1979 = vpop.f32.mrf.mxu0
  %v1980 = vadd.f32 0.0, %v1979
  %1981 = vmatmul.f32.gmra.mxu0 %v1956
  %v1982 = vpop.f32.mrf.mxu0
  %v1983 = vadd.f32 0.0, %v1982
  %1984 = vdwg.mxu0
  %1985 = vrot.lane.b32.xlu0 %v244, 112
  %v1986 = vpop.permute.xlu0 %1985
  %1987 = vrot.lane.b32.xlu0 %v247, 112
  %v1988 = vpop.permute.xlu0 %1987
  %1989 = vrot.lane.b32.xlu0 %v244, 80
  %v1990 = vpop.permute.xlu0 %1989
  %1991 = vrot.lane.b32.xlu0 %v247, 80
  %v1992 = vpop.permute.xlu0 %1991
  %v1993 = vsel %vm279, %v1986, 0
  %v1995 = vsel %vm279, %v1988, 0
  %v1997 = vsel %vm279, %v1990, 0
  %v1999 = vsel %vm279, %v1992, 0
  %2001 = vmatpush.xpose.msra.mxu0 0.0
  %2002 = vmatpush.xpose.msra.mxu0 0.0
  %2003 = vmatpush.xpose.msra.mxu0 0.0
  %2004 = vmatpush.xpose.msra.mxu0 0.0
  %2005 = vmatpush.xpose.msra.mxu0 0.0
  %2006 = vmatpush.xpose.msra.mxu0 0.0
  %2007 = vmatpush.xpose.msra.mxu0 0.0
  %2008 = vmatpush.xpose.msra.mxu0 0.0
  %2009 = vmatpush.xpose.msra.mxu0 0.0
  %2010 = vmatpush.xpose.msra.mxu0 0.0
  %2011 = vmatpush.xpose.msra.mxu0 0.0
  %2012 = vmatpush.xpose.msra.mxu0 0.0
  %2013 = vmatpush.xpose.msra.mxu0 0.0
  %2014 = vmatpush.xpose.msra.mxu0 0.0
  %2015 = vmatpush.xpose.msra.mxu0 %v1999
  %2016 = vmatpush.xpose.msra.mxu0 %v1997
  %2017 = vmatmul.f32.gmra.mxu0 %v1993
  %v2018 = vpop.f32.mrf.mxu0
  %v2019 = vadd.f32 0.0, %v2018
  %2020 = vmatmul.f32.gmra.mxu0 %v1995
  %v2021 = vpop.f32.mrf.mxu0
  %v2022 = vadd.f32 0.0, %v2021
  %2023 = vdwg.mxu0
  %2024 = vrot.lane.b32.xlu0 %v250, 112
  %v2025 = vpop.permute.xlu0 %2024
  %2026 = vrot.lane.b32.xlu0 %v253, 112
  %v2027 = vpop.permute.xlu0 %2026
  %2028 = vrot.lane.b32.xlu0 %v250, 80
  %v2029 = vpop.permute.xlu0 %2028
  %2030 = vrot.lane.b32.xlu0 %v253, 80
  %v2031 = vpop.permute.xlu0 %2030
  %v2032 = vsel %vm279, %v2025, 0
  %v2034 = vsel %vm279, %v2027, 0
  %v2036 = vsel %vm279, %v2029, 0
  %v2038 = vsel %vm279, %v2031, 0
  %2040 = vmatpush.xpose.msra.mxu0 0.0
  %2041 = vmatpush.xpose.msra.mxu0 0.0
  %2042 = vmatpush.xpose.msra.mxu0 0.0
  %2043 = vmatpush.xpose.msra.mxu0 0.0
  %2044 = vmatpush.xpose.msra.mxu0 0.0
  %2045 = vmatpush.xpose.msra.mxu0 0.0
  %2046 = vmatpush.xpose.msra.mxu0 0.0
  %2047 = vmatpush.xpose.msra.mxu0 0.0
  %2048 = vmatpush.xpose.msra.mxu0 0.0
  %2049 = vmatpush.xpose.msra.mxu0 0.0
  %2050 = vmatpush.xpose.msra.mxu0 0.0
  %2051 = vmatpush.xpose.msra.mxu0 0.0
  %2052 = vmatpush.xpose.msra.mxu0 0.0
  %2053 = vmatpush.xpose.msra.mxu0 0.0
  %2054 = vmatpush.xpose.msra.mxu0 %v2038
  %2055 = vmatpush.xpose.msra.mxu0 %v2036
  %2056 = vmatmul.f32.gmra.mxu0 %v2032
  %v2057 = vpop.f32.mrf.mxu0
  %v2058 = vadd.f32 0.0, %v2057
  %2059 = vmatmul.f32.gmra.mxu0 %v2034
  %v2060 = vpop.f32.mrf.mxu0
  %v2061 = vadd.f32 0.0, %v2060
  %2062 = vdwg.mxu0
  %2063 = vrot.lane.b32.xlu0 %v256, 112
  %v2064 = vpop.permute.xlu0 %2063
  %2065 = vrot.lane.b32.xlu0 %v259, 112
  %v2066 = vpop.permute.xlu0 %2065
  %2067 = vrot.lane.b32.xlu0 %v256, 80
  %v2068 = vpop.permute.xlu0 %2067
  %2069 = vrot.lane.b32.xlu0 %v259, 80
  %v2070 = vpop.permute.xlu0 %2069
  %v2071 = vsel %vm279, %v2064, 0
  %v2073 = vsel %vm279, %v2066, 0
  %v2075 = vsel %vm279, %v2068, 0
  %v2077 = vsel %vm279, %v2070, 0
  %2079 = vmatpush.xpose.msra.mxu0 0.0
  %2080 = vmatpush.xpose.msra.mxu0 0.0
  %2081 = vmatpush.xpose.msra.mxu0 0.0
  %2082 = vmatpush.xpose.msra.mxu0 0.0
  %2083 = vmatpush.xpose.msra.mxu0 0.0
  %2084 = vmatpush.xpose.msra.mxu0 0.0
  %2085 = vmatpush.xpose.msra.mxu0 0.0
  %2086 = vmatpush.xpose.msra.mxu0 0.0
  %2087 = vmatpush.xpose.msra.mxu0 0.0
  %2088 = vmatpush.xpose.msra.mxu0 0.0
  %2089 = vmatpush.xpose.msra.mxu0 0.0
  %2090 = vmatpush.xpose.msra.mxu0 0.0
  %2091 = vmatpush.xpose.msra.mxu0 0.0
  %2092 = vmatpush.xpose.msra.mxu0 0.0
  %2093 = vmatpush.xpose.msra.mxu0 %v2077
  %2094 = vmatpush.xpose.msra.mxu0 %v2075
  %2095 = vmatmul.f32.gmra.mxu0 %v2071
  %v2096 = vpop.f32.mrf.mxu0
  %v2097 = vadd.f32 0.0, %v2096
  %2098 = vmatmul.f32.gmra.mxu0 %v2073
  %v2099 = vpop.f32.mrf.mxu0
  %v2100 = vadd.f32 0.0, %v2099
  %2101 = vdwg.mxu0
  %2102 = vrot.lane.b32.xlu0 %v262, 112
  %v2103 = vpop.permute.xlu0 %2102
  %2104 = vrot.lane.b32.xlu0 %v265, 112
  %v2105 = vpop.permute.xlu0 %2104
  %2106 = vrot.lane.b32.xlu0 %v262, 80
  %v2107 = vpop.permute.xlu0 %2106
  %2108 = vrot.lane.b32.xlu0 %v265, 80
  %v2109 = vpop.permute.xlu0 %2108
  %v2110 = vsel %vm279, %v2103, 0
  %v2112 = vsel %vm279, %v2105, 0
  %v2114 = vsel %vm279, %v2107, 0
  %v2116 = vsel %vm279, %v2109, 0
  %2118 = vmatpush.xpose.msra.mxu0 0.0
  %2119 = vmatpush.xpose.msra.mxu0 0.0
  %2120 = vmatpush.xpose.msra.mxu0 0.0
  %2121 = vmatpush.xpose.msra.mxu0 0.0
  %2122 = vmatpush.xpose.msra.mxu0 0.0
  %2123 = vmatpush.xpose.msra.mxu0 0.0
  %2124 = vmatpush.xpose.msra.mxu0 0.0
  %2125 = vmatpush.xpose.msra.mxu0 0.0
  %2126 = vmatpush.xpose.msra.mxu0 0.0
  %2127 = vmatpush.xpose.msra.mxu0 0.0
  %2128 = vmatpush.xpose.msra.mxu0 0.0
  %2129 = vmatpush.xpose.msra.mxu0 0.0
  %2130 = vmatpush.xpose.msra.mxu0 0.0
  %2131 = vmatpush.xpose.msra.mxu0 0.0
  %2132 = vmatpush.xpose.msra.mxu0 %v2116
  %2133 = vmatpush.xpose.msra.mxu0 %v2114
  %2134 = vmatmul.f32.gmra.mxu0 %v2110
  %v2135 = vpop.f32.mrf.mxu0
  %v2136 = vadd.f32 0.0, %v2135
  %2137 = vmatmul.f32.gmra.mxu0 %v2112
  %v2138 = vpop.f32.mrf.mxu0
  %v2139 = vadd.f32 0.0, %v2138
  %2140 = vdwg.mxu0
  %2141 = vrot.lane.b32.xlu0 %v268, 112
  %v2142 = vpop.permute.xlu0 %2141
  %2143 = vrot.lane.b32.xlu0 %v271, 112
  %v2144 = vpop.permute.xlu0 %2143
  %2145 = vrot.lane.b32.xlu0 %v268, 80
  %v2146 = vpop.permute.xlu0 %2145
  %2147 = vrot.lane.b32.xlu0 %v271, 80
  %v2148 = vpop.permute.xlu0 %2147
  %v2149 = vsel %vm279, %v2142, 0
  %v2151 = vsel %vm279, %v2144, 0
  %v2153 = vsel %vm279, %v2146, 0
  %v2155 = vsel %vm279, %v2148, 0
  %2157 = vmatpush.xpose.msra.mxu0 0.0
  %2158 = vmatpush.xpose.msra.mxu0 0.0
  %2159 = vmatpush.xpose.msra.mxu0 0.0
  %2160 = vmatpush.xpose.msra.mxu0 0.0
  %2161 = vmatpush.xpose.msra.mxu0 0.0
  %2162 = vmatpush.xpose.msra.mxu0 0.0
  %2163 = vmatpush.xpose.msra.mxu0 0.0
  %2164 = vmatpush.xpose.msra.mxu0 0.0
  %2165 = vmatpush.xpose.msra.mxu0 0.0
  %2166 = vmatpush.xpose.msra.mxu0 0.0
  %2167 = vmatpush.xpose.msra.mxu0 0.0
  %2168 = vmatpush.xpose.msra.mxu0 0.0
  %2169 = vmatpush.xpose.msra.mxu0 0.0
  %2170 = vmatpush.xpose.msra.mxu0 0.0
  %2171 = vmatpush.xpose.msra.mxu0 %v2155
  %2172 = vmatpush.xpose.msra.mxu0 %v2153
  %2173 = vmatmul.f32.gmra.mxu0 %v2149
  %v2174 = vpop.f32.mrf.mxu0
  %v2175 = vadd.f32 0.0, %v2174
  %2176 = vmatmul.f32.gmra.mxu0 %v2151
  %v2177 = vpop.f32.mrf.mxu0
  %v2178 = vadd.f32 0.0, %v2177
  %2179 = vdwg.mxu0
  %s2180 = scalar_lea.vmem [#allocation2], 512
  %2181 = vst.msk [vmem:[%s2180] sm:$0xff] %vm866, %v1590
  %2182 = vst.msk [vmem:[%s2180 + $0x8] sm:$0xff] %vm866, %v1593
  %2183 = vst.msk [vmem:[%s2180 + $0x10] sm:$0xff] %vm866, %v1629
  %2184 = vst.msk [vmem:[%s2180 + $0x18] sm:$0xff] %vm866, %v1632
  %2185 = vst.msk [vmem:[%s2180 + $0x20] sm:$0xff] %vm866, %v1668
  %2186 = vst.msk [vmem:[%s2180 + $0x28] sm:$0xff] %vm866, %v1671
  %2187 = vst.msk [vmem:[%s2180 + $0x30] sm:$0xff] %vm866, %v1707
  %2188 = vst.msk [vmem:[%s2180 + $0x38] sm:$0xff] %vm866, %v1710
  %2189 = vst.msk [vmem:[%s2180 + $0x40] sm:$0xff] %vm866, %v1746
  %2190 = vst.msk [vmem:[%s2180 + $0x48] sm:$0xff] %vm866, %v1749
  %2191 = vst.msk [vmem:[%s2180 + $0x50] sm:$0xff] %vm866, %v1785
  %2192 = vst.msk [vmem:[%s2180 + $0x58] sm:$0xff] %vm866, %v1788
  %2193 = vst.msk [vmem:[%s2180 + $0x60] sm:$0xff] %vm866, %v1824
  %2194 = vst.msk [vmem:[%s2180 + $0x68] sm:$0xff] %vm866, %v1827
  %2195 = vst.msk [vmem:[%s2180 + $0x70] sm:$0xff] %vm866, %v1863
  %2196 = vst.msk [vmem:[%s2180 + $0x78] sm:$0xff] %vm866, %v1866
  %2197 = vst.msk [vmem:[%s2180 + $0x80] sm:$0xff] %vm866, %v1902
  %2198 = vst.msk [vmem:[%s2180 + $0x88] sm:$0xff] %vm866, %v1905
  %2199 = vst.msk [vmem:[%s2180 + $0x90] sm:$0xff] %vm866, %v1941
  %2200 = vst.msk [vmem:[%s2180 + $0x98] sm:$0xff] %vm866, %v1944
  %2201 = vst.msk [vmem:[%s2180 + $0xa0] sm:$0xff] %vm866, %v1980
  %2202 = vst.msk [vmem:[%s2180 + $0xa8] sm:$0xff] %vm866, %v1983
  %2203 = vst.msk [vmem:[%s2180 + $0xb0] sm:$0xff] %vm866, %v2019
  %2204 = vst.msk [vmem:[%s2180 + $0xb8] sm:$0xff] %vm866, %v2022
  %2205 = vst.msk [vmem:[%s2180 + $0xc0] sm:$0xff] %vm866, %v2058
  %2206 = vst.msk [vmem:[%s2180 + $0xc8] sm:$0xff] %vm866, %v2061
  %2207 = vst.msk [vmem:[%s2180 + $0xd0] sm:$0xff] %vm866, %v2097
  %2208 = vst.msk [vmem:[%s2180 + $0xd8] sm:$0xff] %vm866, %v2100
  %2209 = vst.msk [vmem:[%s2180 + $0xe0] sm:$0xff] %vm866, %v2136
  %2210 = vst.msk [vmem:[%s2180 + $0xe8] sm:$0xff] %vm866, %v2139
  %2211 = vst.msk [vmem:[%s2180 + $0xf0] sm:$0xff] %vm866, %v2175
  %2212 = vst.msk [vmem:[%s2180 + $0xf8] sm:$0xff] %vm866, %v2178
  %2213 = vrot.lane.b32.xlu0 %v178, 104
  %v2214 = vpop.permute.xlu0 %2213
  %2215 = vrot.lane.b32.xlu0 %v181, 104
  %v2216 = vpop.permute.xlu0 %2215
  %2217 = vrot.lane.b32.xlu0 %v178, 72
  %v2218 = vpop.permute.xlu0 %2217
  %2219 = vrot.lane.b32.xlu0 %v181, 72
  %v2220 = vpop.permute.xlu0 %2219
  %v2221 = vsel %vm279, %v2214, 0
  %v2223 = vsel %vm279, %v2216, 0
  %v2225 = vsel %vm279, %v2218, 0
  %v2227 = vsel %vm279, %v2220, 0
  %2229 = vmatpush.xpose.msra.mxu0 0.0
  %2230 = vmatpush.xpose.msra.mxu0 0.0
  %2231 = vmatpush.xpose.msra.mxu0 0.0
  %2232 = vmatpush.xpose.msra.mxu0 0.0
  %2233 = vmatpush.xpose.msra.mxu0 0.0
  %2234 = vmatpush.xpose.msra.mxu0 0.0
  %2235 = vmatpush.xpose.msra.mxu0 0.0
  %2236 = vmatpush.xpose.msra.mxu0 0.0
  %2237 = vmatpush.xpose.msra.mxu0 0.0
  %2238 = vmatpush.xpose.msra.mxu0 0.0
  %2239 = vmatpush.xpose.msra.mxu0 0.0
  %2240 = vmatpush.xpose.msra.mxu0 0.0
  %2241 = vmatpush.xpose.msra.mxu0 0.0
  %2242 = vmatpush.xpose.msra.mxu0 0.0
  %2243 = vmatpush.xpose.msra.mxu0 %v2227
  %2244 = vmatpush.xpose.msra.mxu0 %v2225
  %2245 = vmatmul.f32.gmra.mxu0 %v2221
  %v2246 = vpop.f32.mrf.mxu0
  %v2247 = vadd.f32 0.0, %v2246
  %2248 = vmatmul.f32.gmra.mxu0 %v2223
  %v2249 = vpop.f32.mrf.mxu0
  %v2250 = vadd.f32 0.0, %v2249
  %2251 = vdwg.mxu0
  %2252 = vrot.lane.b32.xlu0 %v184, 104
  %v2253 = vpop.permute.xlu0 %2252
  %2254 = vrot.lane.b32.xlu0 %v187, 104
  %v2255 = vpop.permute.xlu0 %2254
  %2256 = vrot.lane.b32.xlu0 %v184, 72
  %v2257 = vpop.permute.xlu0 %2256
  %2258 = vrot.lane.b32.xlu0 %v187, 72
  %v2259 = vpop.permute.xlu0 %2258
  %v2260 = vsel %vm279, %v2253, 0
  %v2262 = vsel %vm279, %v2255, 0
  %v2264 = vsel %vm279, %v2257, 0
  %v2266 = vsel %vm279, %v2259, 0
  %2268 = vmatpush.xpose.msra.mxu0 0.0
  %2269 = vmatpush.xpose.msra.mxu0 0.0
  %2270 = vmatpush.xpose.msra.mxu0 0.0
  %2271 = vmatpush.xpose.msra.mxu0 0.0
  %2272 = vmatpush.xpose.msra.mxu0 0.0
  %2273 = vmatpush.xpose.msra.mxu0 0.0
  %2274 = vmatpush.xpose.msra.mxu0 0.0
  %2275 = vmatpush.xpose.msra.mxu0 0.0
  %2276 = vmatpush.xpose.msra.mxu0 0.0
  %2277 = vmatpush.xpose.msra.mxu0 0.0
  %2278 = vmatpush.xpose.msra.mxu0 0.0
  %2279 = vmatpush.xpose.msra.mxu0 0.0
  %2280 = vmatpush.xpose.msra.mxu0 0.0
  %2281 = vmatpush.xpose.msra.mxu0 0.0
  %2282 = vmatpush.xpose.msra.mxu0 %v2266
  %2283 = vmatpush.xpose.msra.mxu0 %v2264
  %2284 = vmatmul.f32.gmra.mxu0 %v2260
  %v2285 = vpop.f32.mrf.mxu0
  %v2286 = vadd.f32 0.0, %v2285
  %2287 = vmatmul.f32.gmra.mxu0 %v2262
  %v2288 = vpop.f32.mrf.mxu0
  %v2289 = vadd.f32 0.0, %v2288
  %2290 = vdwg.mxu0
  %2291 = vrot.lane.b32.xlu0 %v190, 104
  %v2292 = vpop.permute.xlu0 %2291
  %2293 = vrot.lane.b32.xlu0 %v193, 104
  %v2294 = vpop.permute.xlu0 %2293
  %2295 = vrot.lane.b32.xlu0 %v190, 72
  %v2296 = vpop.permute.xlu0 %2295
  %2297 = vrot.lane.b32.xlu0 %v193, 72
  %v2298 = vpop.permute.xlu0 %2297
  %v2299 = vsel %vm279, %v2292, 0
  %v2301 = vsel %vm279, %v2294, 0
  %v2303 = vsel %vm279, %v2296, 0
  %v2305 = vsel %vm279, %v2298, 0
  %2307 = vmatpush.xpose.msra.mxu0 0.0
  %2308 = vmatpush.xpose.msra.mxu0 0.0
  %2309 = vmatpush.xpose.msra.mxu0 0.0
  %2310 = vmatpush.xpose.msra.mxu0 0.0
  %2311 = vmatpush.xpose.msra.mxu0 0.0
  %2312 = vmatpush.xpose.msra.mxu0 0.0
  %2313 = vmatpush.xpose.msra.mxu0 0.0
  %2314 = vmatpush.xpose.msra.mxu0 0.0
  %2315 = vmatpush.xpose.msra.mxu0 0.0
  %2316 = vmatpush.xpose.msra.mxu0 0.0
  %2317 = vmatpush.xpose.msra.mxu0 0.0
  %2318 = vmatpush.xpose.msra.mxu0 0.0
  %2319 = vmatpush.xpose.msra.mxu0 0.0
  %2320 = vmatpush.xpose.msra.mxu0 0.0
  %2321 = vmatpush.xpose.msra.mxu0 %v2305
  %2322 = vmatpush.xpose.msra.mxu0 %v2303
  %2323 = vmatmul.f32.gmra.mxu0 %v2299
  %v2324 = vpop.f32.mrf.mxu0
  %v2325 = vadd.f32 0.0, %v2324
  %2326 = vmatmul.f32.gmra.mxu0 %v2301
  %v2327 = vpop.f32.mrf.mxu0
  %v2328 = vadd.f32 0.0, %v2327
  %2329 = vdwg.mxu0
  %2330 = vrot.lane.b32.xlu0 %v196, 104
  %v2331 = vpop.permute.xlu0 %2330
  %2332 = vrot.lane.b32.xlu0 %v199, 104
  %v2333 = vpop.permute.xlu0 %2332
  %2334 = vrot.lane.b32.xlu0 %v196, 72
  %v2335 = vpop.permute.xlu0 %2334
  %2336 = vrot.lane.b32.xlu0 %v199, 72
  %v2337 = vpop.permute.xlu0 %2336
  %v2338 = vsel %vm279, %v2331, 0
  %v2340 = vsel %vm279, %v2333, 0
  %v2342 = vsel %vm279, %v2335, 0
  %v2344 = vsel %vm279, %v2337, 0
  %2346 = vmatpush.xpose.msra.mxu0 0.0
  %2347 = vmatpush.xpose.msra.mxu0 0.0
  %2348 = vmatpush.xpose.msra.mxu0 0.0
  %2349 = vmatpush.xpose.msra.mxu0 0.0
  %2350 = vmatpush.xpose.msra.mxu0 0.0
  %2351 = vmatpush.xpose.msra.mxu0 0.0
  %2352 = vmatpush.xpose.msra.mxu0 0.0
  %2353 = vmatpush.xpose.msra.mxu0 0.0
  %2354 = vmatpush.xpose.msra.mxu0 0.0
  %2355 = vmatpush.xpose.msra.mxu0 0.0
  %2356 = vmatpush.xpose.msra.mxu0 0.0
  %2357 = vmatpush.xpose.msra.mxu0 0.0
  %2358 = vmatpush.xpose.msra.mxu0 0.0
  %2359 = vmatpush.xpose.msra.mxu0 0.0
  %2360 = vmatpush.xpose.msra.mxu0 %v2344
  %2361 = vmatpush.xpose.msra.mxu0 %v2342
  %2362 = vmatmul.f32.gmra.mxu0 %v2338
  %v2363 = vpop.f32.mrf.mxu0
  %v2364 = vadd.f32 0.0, %v2363
  %2365 = vmatmul.f32.gmra.mxu0 %v2340
  %v2366 = vpop.f32.mrf.mxu0
  %v2367 = vadd.f32 0.0, %v2366
  %2368 = vdwg.mxu0
  %2369 = vrot.lane.b32.xlu0 %v202, 104
  %v2370 = vpop.permute.xlu0 %2369
  %2371 = vrot.lane.b32.xlu0 %v205, 104
  %v2372 = vpop.permute.xlu0 %2371
  %2373 = vrot.lane.b32.xlu0 %v202, 72
  %v2374 = vpop.permute.xlu0 %2373
  %2375 = vrot.lane.b32.xlu0 %v205, 72
  %v2376 = vpop.permute.xlu0 %2375
  %v2377 = vsel %vm279, %v2370, 0
  %v2379 = vsel %vm279, %v2372, 0
  %v2381 = vsel %vm279, %v2374, 0
  %v2383 = vsel %vm279, %v2376, 0
  %2385 = vmatpush.xpose.msra.mxu0 0.0
  %2386 = vmatpush.xpose.msra.mxu0 0.0
  %2387 = vmatpush.xpose.msra.mxu0 0.0
  %2388 = vmatpush.xpose.msra.mxu0 0.0
  %2389 = vmatpush.xpose.msra.mxu0 0.0
  %2390 = vmatpush.xpose.msra.mxu0 0.0
  %2391 = vmatpush.xpose.msra.mxu0 0.0
  %2392 = vmatpush.xpose.msra.mxu0 0.0
  %2393 = vmatpush.xpose.msra.mxu0 0.0
  %2394 = vmatpush.xpose.msra.mxu0 0.0
  %2395 = vmatpush.xpose.msra.mxu0 0.0
  %2396 = vmatpush.xpose.msra.mxu0 0.0
  %2397 = vmatpush.xpose.msra.mxu0 0.0
  %2398 = vmatpush.xpose.msra.mxu0 0.0
  %2399 = vmatpush.xpose.msra.mxu0 %v2383
  %2400 = vmatpush.xpose.msra.mxu0 %v2381
  %2401 = vmatmul.f32.gmra.mxu0 %v2377
  %v2402 = vpop.f32.mrf.mxu0
  %v2403 = vadd.f32 0.0, %v2402
  %2404 = vmatmul.f32.gmra.mxu0 %v2379
  %v2405 = vpop.f32.mrf.mxu0
  %v2406 = vadd.f32 0.0, %v2405
  %2407 = vdwg.mxu0
  %2408 = vrot.lane.b32.xlu0 %v208, 104
  %v2409 = vpop.permute.xlu0 %2408
  %2410 = vrot.lane.b32.xlu0 %v211, 104
  %v2411 = vpop.permute.xlu0 %2410
  %2412 = vrot.lane.b32.xlu0 %v208, 72
  %v2413 = vpop.permute.xlu0 %2412
  %2414 = vrot.lane.b32.xlu0 %v211, 72
  %v2415 = vpop.permute.xlu0 %2414
  %v2416 = vsel %vm279, %v2409, 0
  %v2418 = vsel %vm279, %v2411, 0
  %v2420 = vsel %vm279, %v2413, 0
  %v2422 = vsel %vm279, %v2415, 0
  %2424 = vmatpush.xpose.msra.mxu0 0.0
  %2425 = vmatpush.xpose.msra.mxu0 0.0
  %2426 = vmatpush.xpose.msra.mxu0 0.0
  %2427 = vmatpush.xpose.msra.mxu0 0.0
  %2428 = vmatpush.xpose.msra.mxu0 0.0
  %2429 = vmatpush.xpose.msra.mxu0 0.0
  %2430 = vmatpush.xpose.msra.mxu0 0.0
  %2431 = vmatpush.xpose.msra.mxu0 0.0
  %2432 = vmatpush.xpose.msra.mxu0 0.0
  %2433 = vmatpush.xpose.msra.mxu0 0.0
  %2434 = vmatpush.xpose.msra.mxu0 0.0
  %2435 = vmatpush.xpose.msra.mxu0 0.0
  %2436 = vmatpush.xpose.msra.mxu0 0.0
  %2437 = vmatpush.xpose.msra.mxu0 0.0
  %2438 = vmatpush.xpose.msra.mxu0 %v2422
  %2439 = vmatpush.xpose.msra.mxu0 %v2420
  %2440 = vmatmul.f32.gmra.mxu0 %v2416
  %v2441 = vpop.f32.mrf.mxu0
  %v2442 = vadd.f32 0.0, %v2441
  %2443 = vmatmul.f32.gmra.mxu0 %v2418
  %v2444 = vpop.f32.mrf.mxu0
  %v2445 = vadd.f32 0.0, %v2444
  %2446 = vdwg.mxu0
  %2447 = vrot.lane.b32.xlu0 %v214, 104
  %v2448 = vpop.permute.xlu0 %2447
  %2449 = vrot.lane.b32.xlu0 %v217, 104
  %v2450 = vpop.permute.xlu0 %2449
  %2451 = vrot.lane.b32.xlu0 %v214, 72
  %v2452 = vpop.permute.xlu0 %2451
  %2453 = vrot.lane.b32.xlu0 %v217, 72
  %v2454 = vpop.permute.xlu0 %2453
  %v2455 = vsel %vm279, %v2448, 0
  %v2457 = vsel %vm279, %v2450, 0
  %v2459 = vsel %vm279, %v2452, 0
  %v2461 = vsel %vm279, %v2454, 0
  %2463 = vmatpush.xpose.msra.mxu0 0.0
  %2464 = vmatpush.xpose.msra.mxu0 0.0
  %2465 = vmatpush.xpose.msra.mxu0 0.0
  %2466 = vmatpush.xpose.msra.mxu0 0.0
  %2467 = vmatpush.xpose.msra.mxu0 0.0
  %2468 = vmatpush.xpose.msra.mxu0 0.0
  %2469 = vmatpush.xpose.msra.mxu0 0.0
  %2470 = vmatpush.xpose.msra.mxu0 0.0
  %2471 = vmatpush.xpose.msra.mxu0 0.0
  %2472 = vmatpush.xpose.msra.mxu0 0.0
  %2473 = vmatpush.xpose.msra.mxu0 0.0
  %2474 = vmatpush.xpose.msra.mxu0 0.0
  %2475 = vmatpush.xpose.msra.mxu0 0.0
  %2476 = vmatpush.xpose.msra.mxu0 0.0
  %2477 = vmatpush.xpose.msra.mxu0 %v2461
  %2478 = vmatpush.xpose.msra.mxu0 %v2459
  %2479 = vmatmul.f32.gmra.mxu0 %v2455
  %v2480 = vpop.f32.mrf.mxu0
  %v2481 = vadd.f32 0.0, %v2480
  %2482 = vmatmul.f32.gmra.mxu0 %v2457
  %v2483 = vpop.f32.mrf.mxu0
  %v2484 = vadd.f32 0.0, %v2483
  %2485 = vdwg.mxu0
  %2486 = vrot.lane.b32.xlu0 %v220, 104
  %v2487 = vpop.permute.xlu0 %2486
  %2488 = vrot.lane.b32.xlu0 %v223, 104
  %v2489 = vpop.permute.xlu0 %2488
  %2490 = vrot.lane.b32.xlu0 %v220, 72
  %v2491 = vpop.permute.xlu0 %2490
  %2492 = vrot.lane.b32.xlu0 %v223, 72
  %v2493 = vpop.permute.xlu0 %2492
  %v2494 = vsel %vm279, %v2487, 0
  %v2496 = vsel %vm279, %v2489, 0
  %v2498 = vsel %vm279, %v2491, 0
  %v2500 = vsel %vm279, %v2493, 0
  %2502 = vmatpush.xpose.msra.mxu0 0.0
  %2503 = vmatpush.xpose.msra.mxu0 0.0
  %2504 = vmatpush.xpose.msra.mxu0 0.0
  %2505 = vmatpush.xpose.msra.mxu0 0.0
  %2506 = vmatpush.xpose.msra.mxu0 0.0
  %2507 = vmatpush.xpose.msra.mxu0 0.0
  %2508 = vmatpush.xpose.msra.mxu0 0.0
  %2509 = vmatpush.xpose.msra.mxu0 0.0
  %2510 = vmatpush.xpose.msra.mxu0 0.0
  %2511 = vmatpush.xpose.msra.mxu0 0.0
  %2512 = vmatpush.xpose.msra.mxu0 0.0
  %2513 = vmatpush.xpose.msra.mxu0 0.0
  %2514 = vmatpush.xpose.msra.mxu0 0.0
  %2515 = vmatpush.xpose.msra.mxu0 0.0
  %2516 = vmatpush.xpose.msra.mxu0 %v2500
  %2517 = vmatpush.xpose.msra.mxu0 %v2498
  %2518 = vmatmul.f32.gmra.mxu0 %v2494
  %v2519 = vpop.f32.mrf.mxu0
  %v2520 = vadd.f32 0.0, %v2519
  %2521 = vmatmul.f32.gmra.mxu0 %v2496
  %v2522 = vpop.f32.mrf.mxu0
  %v2523 = vadd.f32 0.0, %v2522
  %2524 = vdwg.mxu0
  %2525 = vrot.lane.b32.xlu0 %v226, 104
  %v2526 = vpop.permute.xlu0 %2525
  %2527 = vrot.lane.b32.xlu0 %v229, 104
  %v2528 = vpop.permute.xlu0 %2527
  %2529 = vrot.lane.b32.xlu0 %v226, 72
  %v2530 = vpop.permute.xlu0 %2529
  %2531 = vrot.lane.b32.xlu0 %v229, 72
  %v2532 = vpop.permute.xlu0 %2531
  %v2533 = vsel %vm279, %v2526, 0
  %v2535 = vsel %vm279, %v2528, 0
  %v2537 = vsel %vm279, %v2530, 0
  %v2539 = vsel %vm279, %v2532, 0
  %2541 = vmatpush.xpose.msra.mxu0 0.0
  %2542 = vmatpush.xpose.msra.mxu0 0.0
  %2543 = vmatpush.xpose.msra.mxu0 0.0
  %2544 = vmatpush.xpose.msra.mxu0 0.0
  %2545 = vmatpush.xpose.msra.mxu0 0.0
  %2546 = vmatpush.xpose.msra.mxu0 0.0
  %2547 = vmatpush.xpose.msra.mxu0 0.0
  %2548 = vmatpush.xpose.msra.mxu0 0.0
  %2549 = vmatpush.xpose.msra.mxu0 0.0
  %2550 = vmatpush.xpose.msra.mxu0 0.0
  %2551 = vmatpush.xpose.msra.mxu0 0.0
  %2552 = vmatpush.xpose.msra.mxu0 0.0
  %2553 = vmatpush.xpose.msra.mxu0 0.0
  %2554 = vmatpush.xpose.msra.mxu0 0.0
  %2555 = vmatpush.xpose.msra.mxu0 %v2539
  %2556 = vmatpush.xpose.msra.mxu0 %v2537
  %2557 = vmatmul.f32.gmra.mxu0 %v2533
  %v2558 = vpop.f32.mrf.mxu0
  %v2559 = vadd.f32 0.0, %v2558
  %2560 = vmatmul.f32.gmra.mxu0 %v2535
  %v2561 = vpop.f32.mrf.mxu0
  %v2562 = vadd.f32 0.0, %v2561
  %2563 = vdwg.mxu0
  %2564 = vrot.lane.b32.xlu0 %v232, 104
  %v2565 = vpop.permute.xlu0 %2564
  %2566 = vrot.lane.b32.xlu0 %v235, 104
  %v2567 = vpop.permute.xlu0 %2566
  %2568 = vrot.lane.b32.xlu0 %v232, 72
  %v2569 = vpop.permute.xlu0 %2568
  %2570 = vrot.lane.b32.xlu0 %v235, 72
  %v2571 = vpop.permute.xlu0 %2570
  %v2572 = vsel %vm279, %v2565, 0
  %v2574 = vsel %vm279, %v2567, 0
  %v2576 = vsel %vm279, %v2569, 0
  %v2578 = vsel %vm279, %v2571, 0
  %2580 = vmatpush.xpose.msra.mxu0 0.0
  %2581 = vmatpush.xpose.msra.mxu0 0.0
  %2582 = vmatpush.xpose.msra.mxu0 0.0
  %2583 = vmatpush.xpose.msra.mxu0 0.0
  %2584 = vmatpush.xpose.msra.mxu0 0.0
  %2585 = vmatpush.xpose.msra.mxu0 0.0
  %2586 = vmatpush.xpose.msra.mxu0 0.0
  %2587 = vmatpush.xpose.msra.mxu0 0.0
  %2588 = vmatpush.xpose.msra.mxu0 0.0
  %2589 = vmatpush.xpose.msra.mxu0 0.0
  %2590 = vmatpush.xpose.msra.mxu0 0.0
  %2591 = vmatpush.xpose.msra.mxu0 0.0
  %2592 = vmatpush.xpose.msra.mxu0 0.0
  %2593 = vmatpush.xpose.msra.mxu0 0.0
  %2594 = vmatpush.xpose.msra.mxu0 %v2578
  %2595 = vmatpush.xpose.msra.mxu0 %v2576
  %2596 = vmatmul.f32.gmra.mxu0 %v2572
  %v2597 = vpop.f32.mrf.mxu0
  %v2598 = vadd.f32 0.0, %v2597
  %2599 = vmatmul.f32.gmra.mxu0 %v2574
  %v2600 = vpop.f32.mrf.mxu0
  %v2601 = vadd.f32 0.0, %v2600
  %2602 = vdwg.mxu0
  %2603 = vrot.lane.b32.xlu0 %v238, 104
  %v2604 = vpop.permute.xlu0 %2603
  %2605 = vrot.lane.b32.xlu0 %v241, 104
  %v2606 = vpop.permute.xlu0 %2605
  %2607 = vrot.lane.b32.xlu0 %v238, 72
  %v2608 = vpop.permute.xlu0 %2607
  %2609 = vrot.lane.b32.xlu0 %v241, 72
  %v2610 = vpop.permute.xlu0 %2609
  %v2611 = vsel %vm279, %v2604, 0
  %v2613 = vsel %vm279, %v2606, 0
  %v2615 = vsel %vm279, %v2608, 0
  %v2617 = vsel %vm279, %v2610, 0
  %2619 = vmatpush.xpose.msra.mxu0 0.0
  %2620 = vmatpush.xpose.msra.mxu0 0.0
  %2621 = vmatpush.xpose.msra.mxu0 0.0
  %2622 = vmatpush.xpose.msra.mxu0 0.0
  %2623 = vmatpush.xpose.msra.mxu0 0.0
  %2624 = vmatpush.xpose.msra.mxu0 0.0
  %2625 = vmatpush.xpose.msra.mxu0 0.0
  %2626 = vmatpush.xpose.msra.mxu0 0.0
  %2627 = vmatpush.xpose.msra.mxu0 0.0
  %2628 = vmatpush.xpose.msra.mxu0 0.0
  %2629 = vmatpush.xpose.msra.mxu0 0.0
  %2630 = vmatpush.xpose.msra.mxu0 0.0
  %2631 = vmatpush.xpose.msra.mxu0 0.0
  %2632 = vmatpush.xpose.msra.mxu0 0.0
  %2633 = vmatpush.xpose.msra.mxu0 %v2617
  %2634 = vmatpush.xpose.msra.mxu0 %v2615
  %2635 = vmatmul.f32.gmra.mxu0 %v2611
  %v2636 = vpop.f32.mrf.mxu0
  %v2637 = vadd.f32 0.0, %v2636
  %2638 = vmatmul.f32.gmra.mxu0 %v2613
  %v2639 = vpop.f32.mrf.mxu0
  %v2640 = vadd.f32 0.0, %v2639
  %2641 = vdwg.mxu0
  %2642 = vrot.lane.b32.xlu0 %v244, 104
  %v2643 = vpop.permute.xlu0 %2642
  %2644 = vrot.lane.b32.xlu0 %v247, 104
  %v2645 = vpop.permute.xlu0 %2644
  %2646 = vrot.lane.b32.xlu0 %v244, 72
  %v2647 = vpop.permute.xlu0 %2646
  %2648 = vrot.lane.b32.xlu0 %v247, 72
  %v2649 = vpop.permute.xlu0 %2648
  %v2650 = vsel %vm279, %v2643, 0
  %v2652 = vsel %vm279, %v2645, 0
  %v2654 = vsel %vm279, %v2647, 0
  %v2656 = vsel %vm279, %v2649, 0
  %2658 = vmatpush.xpose.msra.mxu0 0.0
  %2659 = vmatpush.xpose.msra.mxu0 0.0
  %2660 = vmatpush.xpose.msra.mxu0 0.0
  %2661 = vmatpush.xpose.msra.mxu0 0.0
  %2662 = vmatpush.xpose.msra.mxu0 0.0
  %2663 = vmatpush.xpose.msra.mxu0 0.0
  %2664 = vmatpush.xpose.msra.mxu0 0.0
  %2665 = vmatpush.xpose.msra.mxu0 0.0
  %2666 = vmatpush.xpose.msra.mxu0 0.0
  %2667 = vmatpush.xpose.msra.mxu0 0.0
  %2668 = vmatpush.xpose.msra.mxu0 0.0
  %2669 = vmatpush.xpose.msra.mxu0 0.0
  %2670 = vmatpush.xpose.msra.mxu0 0.0
  %2671 = vmatpush.xpose.msra.mxu0 0.0
  %2672 = vmatpush.xpose.msra.mxu0 %v2656
  %2673 = vmatpush.xpose.msra.mxu0 %v2654
  %2674 = vmatmul.f32.gmra.mxu0 %v2650
  %v2675 = vpop.f32.mrf.mxu0
  %v2676 = vadd.f32 0.0, %v2675
  %2677 = vmatmul.f32.gmra.mxu0 %v2652
  %v2678 = vpop.f32.mrf.mxu0
  %v2679 = vadd.f32 0.0, %v2678
  %2680 = vdwg.mxu0
  %2681 = vrot.lane.b32.xlu0 %v250, 104
  %v2682 = vpop.permute.xlu0 %2681
  %2683 = vrot.lane.b32.xlu0 %v253, 104
  %v2684 = vpop.permute.xlu0 %2683
  %2685 = vrot.lane.b32.xlu0 %v250, 72
  %v2686 = vpop.permute.xlu0 %2685
  %2687 = vrot.lane.b32.xlu0 %v253, 72
  %v2688 = vpop.permute.xlu0 %2687
  %v2689 = vsel %vm279, %v2682, 0
  %v2691 = vsel %vm279, %v2684, 0
  %v2693 = vsel %vm279, %v2686, 0
  %v2695 = vsel %vm279, %v2688, 0
  %2697 = vmatpush.xpose.msra.mxu0 0.0
  %2698 = vmatpush.xpose.msra.mxu0 0.0
  %2699 = vmatpush.xpose.msra.mxu0 0.0
  %2700 = vmatpush.xpose.msra.mxu0 0.0
  %2701 = vmatpush.xpose.msra.mxu0 0.0
  %2702 = vmatpush.xpose.msra.mxu0 0.0
  %2703 = vmatpush.xpose.msra.mxu0 0.0
  %2704 = vmatpush.xpose.msra.mxu0 0.0
  %2705 = vmatpush.xpose.msra.mxu0 0.0
  %2706 = vmatpush.xpose.msra.mxu0 0.0
  %2707 = vmatpush.xpose.msra.mxu0 0.0
  %2708 = vmatpush.xpose.msra.mxu0 0.0
  %2709 = vmatpush.xpose.msra.mxu0 0.0
  %2710 = vmatpush.xpose.msra.mxu0 0.0
  %2711 = vmatpush.xpose.msra.mxu0 %v2695
  %2712 = vmatpush.xpose.msra.mxu0 %v2693
  %2713 = vmatmul.f32.gmra.mxu0 %v2689
  %v2714 = vpop.f32.mrf.mxu0
  %v2715 = vadd.f32 0.0, %v2714
  %2716 = vmatmul.f32.gmra.mxu0 %v2691
  %v2717 = vpop.f32.mrf.mxu0
  %v2718 = vadd.f32 0.0, %v2717
  %2719 = vdwg.mxu0
  %2720 = vrot.lane.b32.xlu0 %v256, 104
  %v2721 = vpop.permute.xlu0 %2720
  %2722 = vrot.lane.b32.xlu0 %v259, 104
  %v2723 = vpop.permute.xlu0 %2722
  %2724 = vrot.lane.b32.xlu0 %v256, 72
  %v2725 = vpop.permute.xlu0 %2724
  %2726 = vrot.lane.b32.xlu0 %v259, 72
  %v2727 = vpop.permute.xlu0 %2726
  %v2728 = vsel %vm279, %v2721, 0
  %v2730 = vsel %vm279, %v2723, 0
  %v2732 = vsel %vm279, %v2725, 0
  %v2734 = vsel %vm279, %v2727, 0
  %2736 = vmatpush.xpose.msra.mxu0 0.0
  %2737 = vmatpush.xpose.msra.mxu0 0.0
  %2738 = vmatpush.xpose.msra.mxu0 0.0
  %2739 = vmatpush.xpose.msra.mxu0 0.0
  %2740 = vmatpush.xpose.msra.mxu0 0.0
  %2741 = vmatpush.xpose.msra.mxu0 0.0
  %2742 = vmatpush.xpose.msra.mxu0 0.0
  %2743 = vmatpush.xpose.msra.mxu0 0.0
  %2744 = vmatpush.xpose.msra.mxu0 0.0
  %2745 = vmatpush.xpose.msra.mxu0 0.0
  %2746 = vmatpush.xpose.msra.mxu0 0.0
  %2747 = vmatpush.xpose.msra.mxu0 0.0
  %2748 = vmatpush.xpose.msra.mxu0 0.0
  %2749 = vmatpush.xpose.msra.mxu0 0.0
  %2750 = vmatpush.xpose.msra.mxu0 %v2734
  %2751 = vmatpush.xpose.msra.mxu0 %v2732
  %2752 = vmatmul.f32.gmra.mxu0 %v2728
  %v2753 = vpop.f32.mrf.mxu0
  %v2754 = vadd.f32 0.0, %v2753
  %2755 = vmatmul.f32.gmra.mxu0 %v2730
  %v2756 = vpop.f32.mrf.mxu0
  %v2757 = vadd.f32 0.0, %v2756
  %2758 = vdwg.mxu0
  %2759 = vrot.lane.b32.xlu0 %v262, 104
  %v2760 = vpop.permute.xlu0 %2759
  %2761 = vrot.lane.b32.xlu0 %v265, 104
  %v2762 = vpop.permute.xlu0 %2761
  %2763 = vrot.lane.b32.xlu0 %v262, 72
  %v2764 = vpop.permute.xlu0 %2763
  %2765 = vrot.lane.b32.xlu0 %v265, 72
  %v2766 = vpop.permute.xlu0 %2765
  %v2767 = vsel %vm279, %v2760, 0
  %v2769 = vsel %vm279, %v2762, 0
  %v2771 = vsel %vm279, %v2764, 0
  %v2773 = vsel %vm279, %v2766, 0
  %2775 = vmatpush.xpose.msra.mxu0 0.0
  %2776 = vmatpush.xpose.msra.mxu0 0.0
  %2777 = vmatpush.xpose.msra.mxu0 0.0
  %2778 = vmatpush.xpose.msra.mxu0 0.0
  %2779 = vmatpush.xpose.msra.mxu0 0.0
  %2780 = vmatpush.xpose.msra.mxu0 0.0
  %2781 = vmatpush.xpose.msra.mxu0 0.0
  %2782 = vmatpush.xpose.msra.mxu0 0.0
  %2783 = vmatpush.xpose.msra.mxu0 0.0
  %2784 = vmatpush.xpose.msra.mxu0 0.0
  %2785 = vmatpush.xpose.msra.mxu0 0.0
  %2786 = vmatpush.xpose.msra.mxu0 0.0
  %2787 = vmatpush.xpose.msra.mxu0 0.0
  %2788 = vmatpush.xpose.msra.mxu0 0.0
  %2789 = vmatpush.xpose.msra.mxu0 %v2773
  %2790 = vmatpush.xpose.msra.mxu0 %v2771
  %2791 = vmatmul.f32.gmra.mxu0 %v2767
  %v2792 = vpop.f32.mrf.mxu0
  %v2793 = vadd.f32 0.0, %v2792
  %2794 = vmatmul.f32.gmra.mxu0 %v2769
  %v2795 = vpop.f32.mrf.mxu0
  %v2796 = vadd.f32 0.0, %v2795
  %2797 = vdwg.mxu0
  %2798 = vrot.lane.b32.xlu0 %v268, 104
  %v2799 = vpop.permute.xlu0 %2798
  %2800 = vrot.lane.b32.xlu0 %v271, 104
  %v2801 = vpop.permute.xlu0 %2800
  %2802 = vrot.lane.b32.xlu0 %v268, 72
  %v2803 = vpop.permute.xlu0 %2802
  %2804 = vrot.lane.b32.xlu0 %v271, 72
  %v2805 = vpop.permute.xlu0 %2804
  %v2806 = vsel %vm279, %v2799, 0
  %v2808 = vsel %vm279, %v2801, 0
  %v2810 = vsel %vm279, %v2803, 0
  %v2812 = vsel %vm279, %v2805, 0
  %2814 = vmatpush.xpose.msra.mxu0 0.0
  %2815 = vmatpush.xpose.msra.mxu0 0.0
  %2816 = vmatpush.xpose.msra.mxu0 0.0
  %2817 = vmatpush.xpose.msra.mxu0 0.0
  %2818 = vmatpush.xpose.msra.mxu0 0.0
  %2819 = vmatpush.xpose.msra.mxu0 0.0
  %2820 = vmatpush.xpose.msra.mxu0 0.0
  %2821 = vmatpush.xpose.msra.mxu0 0.0
  %2822 = vmatpush.xpose.msra.mxu0 0.0
  %2823 = vmatpush.xpose.msra.mxu0 0.0
  %2824 = vmatpush.xpose.msra.mxu0 0.0
  %2825 = vmatpush.xpose.msra.mxu0 0.0
  %2826 = vmatpush.xpose.msra.mxu0 0.0
  %2827 = vmatpush.xpose.msra.mxu0 0.0
  %2828 = vmatpush.xpose.msra.mxu0 %v2812
  %2829 = vmatpush.xpose.msra.mxu0 %v2810
  %2830 = vmatmul.f32.gmra.mxu0 %v2806
  %v2831 = vpop.f32.mrf.mxu0
  %v2832 = vadd.f32 0.0, %v2831
  %2833 = vmatmul.f32.gmra.mxu0 %v2808
  %v2834 = vpop.f32.mrf.mxu0
  %v2835 = vadd.f32 0.0, %v2834
  %2836 = vdwg.mxu0
  %s2837 = scalar_lea.vmem [#allocation2], 768
  %2838 = vst.msk [vmem:[%s2837] sm:$0xff] %vm866, %v2247
  %2839 = vst.msk [vmem:[%s2837 + $0x8] sm:$0xff] %vm866, %v2250
  %2840 = vst.msk [vmem:[%s2837 + $0x10] sm:$0xff] %vm866, %v2286
  %2841 = vst.msk [vmem:[%s2837 + $0x18] sm:$0xff] %vm866, %v2289
  %2842 = vst.msk [vmem:[%s2837 + $0x20] sm:$0xff] %vm866, %v2325
  %2843 = vst.msk [vmem:[%s2837 + $0x28] sm:$0xff] %vm866, %v2328
  %2844 = vst.msk [vmem:[%s2837 + $0x30] sm:$0xff] %vm866, %v2364
  %2845 = vst.msk [vmem:[%s2837 + $0x38] sm:$0xff] %vm866, %v2367
  %2846 = vst.msk [vmem:[%s2837 + $0x40] sm:$0xff] %vm866, %v2403
  %2847 = vst.msk [vmem:[%s2837 + $0x48] sm:$0xff] %vm866, %v2406
  %2848 = vst.msk [vmem:[%s2837 + $0x50] sm:$0xff] %vm866, %v2442
  %2849 = vst.msk [vmem:[%s2837 + $0x58] sm:$0xff] %vm866, %v2445
  %2850 = vst.msk [vmem:[%s2837 + $0x60] sm:$0xff] %vm866, %v2481
  %2851 = vst.msk [vmem:[%s2837 + $0x68] sm:$0xff] %vm866, %v2484
  %2852 = vst.msk [vmem:[%s2837 + $0x70] sm:$0xff] %vm866, %v2520
  %2853 = vst.msk [vmem:[%s2837 + $0x78] sm:$0xff] %vm866, %v2523
  %2854 = vst.msk [vmem:[%s2837 + $0x80] sm:$0xff] %vm866, %v2559
  %2855 = vst.msk [vmem:[%s2837 + $0x88] sm:$0xff] %vm866, %v2562
  %2856 = vst.msk [vmem:[%s2837 + $0x90] sm:$0xff] %vm866, %v2598
  %2857 = vst.msk [vmem:[%s2837 + $0x98] sm:$0xff] %vm866, %v2601
  %2858 = vst.msk [vmem:[%s2837 + $0xa0] sm:$0xff] %vm866, %v2637
  %2859 = vst.msk [vmem:[%s2837 + $0xa8] sm:$0xff] %vm866, %v2640
  %2860 = vst.msk [vmem:[%s2837 + $0xb0] sm:$0xff] %vm866, %v2676
  %2861 = vst.msk [vmem:[%s2837 + $0xb8] sm:$0xff] %vm866, %v2679
  %2862 = vst.msk [vmem:[%s2837 + $0xc0] sm:$0xff] %vm866, %v2715
  %2863 = vst.msk [vmem:[%s2837 + $0xc8] sm:$0xff] %vm866, %v2718
  %2864 = vst.msk [vmem:[%s2837 + $0xd0] sm:$0xff] %vm866, %v2754
  %2865 = vst.msk [vmem:[%s2837 + $0xd8] sm:$0xff] %vm866, %v2757
  %2866 = vst.msk [vmem:[%s2837 + $0xe0] sm:$0xff] %vm866, %v2793
  %2867 = vst.msk [vmem:[%s2837 + $0xe8] sm:$0xff] %vm866, %v2796
  %2868 = vst.msk [vmem:[%s2837 + $0xf0] sm:$0xff] %vm866, %v2832
  %2869 = vst.msk [vmem:[%s2837 + $0xf8] sm:$0xff] %vm866, %v2835
  %v2870 = vld [vmem:[#allocation2] sm:$0xff]
  %v2871 = vld [vmem:[#allocation2 + $0x8] sm:$0xff]
  %v2872 = vld [vmem:[#allocation2 + $0x10] sm:$0xff]
  %v2873 = vld [vmem:[#allocation2 + $0x18] sm:$0xff]
  %v2874 = vld [vmem:[#allocation2 + $0x20] sm:$0xff]
  %v2875 = vld [vmem:[#allocation2 + $0x28] sm:$0xff]
  %v2876 = vld [vmem:[#allocation2 + $0x30] sm:$0xff]
  %v2877 = vld [vmem:[#allocation2 + $0x38] sm:$0xff]
  %v2878 = vld [vmem:[#allocation2 + $0x40] sm:$0xff]
  %v2879 = vld [vmem:[#allocation2 + $0x48] sm:$0xff]
  %v2880 = vld [vmem:[#allocation2 + $0x50] sm:$0xff]
  %v2881 = vld [vmem:[#allocation2 + $0x58] sm:$0xff]
  %v2882 = vld [vmem:[#allocation2 + $0x60] sm:$0xff]
  %v2883 = vld [vmem:[#allocation2 + $0x68] sm:$0xff]
  %v2884 = vld [vmem:[#allocation2 + $0x70] sm:$0xff]
  %v2885 = vld [vmem:[#allocation2 + $0x78] sm:$0xff]
  %v2886 = vld [vmem:[#allocation2 + $0x80] sm:$0xff]
  %v2887 = vld [vmem:[#allocation2 + $0x88] sm:$0xff]
  %v2888 = vld [vmem:[#allocation2 + $0x90] sm:$0xff]
  %v2889 = vld [vmem:[#allocation2 + $0x98] sm:$0xff]
  %v2890 = vld [vmem:[#allocation2 + $0xa0] sm:$0xff]
  %v2891 = vld [vmem:[#allocation2 + $0xa8] sm:$0xff]
  %v2892 = vld [vmem:[#allocation2 + $0xb0] sm:$0xff]
  %v2893 = vld [vmem:[#allocation2 + $0xb8] sm:$0xff]
  %v2894 = vld [vmem:[#allocation2 + $0xc0] sm:$0xff]
  %v2895 = vld [vmem:[#allocation2 + $0xc8] sm:$0xff]
  %v2896 = vld [vmem:[#allocation2 + $0xd0] sm:$0xff]
  %v2897 = vld [vmem:[#allocation2 + $0xd8] sm:$0xff]
  %v2898 = vld [vmem:[#allocation2 + $0xe0] sm:$0xff]
  %v2899 = vld [vmem:[#allocation2 + $0xe8] sm:$0xff]
  %v2900 = vld [vmem:[#allocation2 + $0xf0] sm:$0xff]
  %v2901 = vld [vmem:[#allocation2 + $0xf8] sm:$0xff]
  %v2902 = vld [vmem:[#allocation2 + $0x100] sm:$0xff]
  %v2903 = vld [vmem:[#allocation2 + $0x108] sm:$0xff]
  %v2904 = vld [vmem:[#allocation2 + $0x110] sm:$0xff]
  %v2905 = vld [vmem:[#allocation2 + $0x118] sm:$0xff]
  %v2906 = vld [vmem:[#allocation2 + $0x120] sm:$0xff]
  %v2907 = vld [vmem:[#allocation2 + $0x128] sm:$0xff]
  %v2908 = vld [vmem:[#allocation2 + $0x130] sm:$0xff]
  %v2909 = vld [vmem:[#allocation2 + $0x138] sm:$0xff]
  %v2910 = vld [vmem:[#allocation2 + $0x140] sm:$0xff]
  %v2911 = vld [vmem:[#allocation2 + $0x148] sm:$0xff]
  %v2912 = vld [vmem:[#allocation2 + $0x150] sm:$0xff]
  %v2913 = vld [vmem:[#allocation2 + $0x158] sm:$0xff]
  %v2914 = vld [vmem:[#allocation2 + $0x160] sm:$0xff]
  %v2915 = vld [vmem:[#allocation2 + $0x168] sm:$0xff]
  %v2916 = vld [vmem:[#allocation2 + $0x170] sm:$0xff]
  %v2917 = vld [vmem:[#allocation2 + $0x178] sm:$0xff]
  %v2918 = vld [vmem:[#allocation2 + $0x180] sm:$0xff]
  %v2919 = vld [vmem:[#allocation2 + $0x188] sm:$0xff]
  %v2920 = vld [vmem:[#allocation2 + $0x190] sm:$0xff]
  %v2921 = vld [vmem:[#allocation2 + $0x198] sm:$0xff]
  %v2922 = vld [vmem:[#allocation2 + $0x1a0] sm:$0xff]
  %v2923 = vld [vmem:[#allocation2 + $0x1a8] sm:$0xff]
  %v2924 = vld [vmem:[#allocation2 + $0x1b0] sm:$0xff]
  %v2925 = vld [vmem:[#allocation2 + $0x1b8] sm:$0xff]
  %v2926 = vld [vmem:[#allocation2 + $0x1c0] sm:$0xff]
  %v2927 = vld [vmem:[#allocation2 + $0x1c8] sm:$0xff]
  %v2928 = vld [vmem:[#allocation2 + $0x1d0] sm:$0xff]
  %v2929 = vld [vmem:[#allocation2 + $0x1d8] sm:$0xff]
  %v2930 = vld [vmem:[#allocation2 + $0x1e0] sm:$0xff]
  %v2931 = vld [vmem:[#allocation2 + $0x1e8] sm:$0xff]
  %v2932 = vld [vmem:[#allocation2 + $0x1f0] sm:$0xff]
  %v2933 = vld [vmem:[#allocation2 + $0x1f8] sm:$0xff]
  %v2934 = vld [vmem:[#allocation2 + $0x200] sm:$0xff]
  %v2935 = vld [vmem:[#allocation2 + $0x208] sm:$0xff]
  %v2936 = vld [vmem:[#allocation2 + $0x210] sm:$0xff]
  %v2937 = vld [vmem:[#allocation2 + $0x218] sm:$0xff]
  %v2938 = vld [vmem:[#allocation2 + $0x220] sm:$0xff]
  %v2939 = vld [vmem:[#allocation2 + $0x228] sm:$0xff]
  %v2940 = vld [vmem:[#allocation2 + $0x230] sm:$0xff]
  %v2941 = vld [vmem:[#allocation2 + $0x238] sm:$0xff]
  %v2942 = vld [vmem:[#allocation2 + $0x240] sm:$0xff]
  %v2943 = vld [vmem:[#allocation2 + $0x248] sm:$0xff]
  %v2944 = vld [vmem:[#allocation2 + $0x250] sm:$0xff]
  %v2945 = vld [vmem:[#allocation2 + $0x258] sm:$0xff]
  %v2946 = vld [vmem:[#allocation2 + $0x260] sm:$0xff]
  %v2947 = vld [vmem:[#allocation2 + $0x268] sm:$0xff]
  %v2948 = vld [vmem:[#allocation2 + $0x270] sm:$0xff]
  %v2949 = vld [vmem:[#allocation2 + $0x278] sm:$0xff]
  %v2950 = vld [vmem:[#allocation2 + $0x280] sm:$0xff]
  %v2951 = vld [vmem:[#allocation2 + $0x288] sm:$0xff]
  %v2952 = vld [vmem:[#allocation2 + $0x290] sm:$0xff]
  %v2953 = vld [vmem:[#allocation2 + $0x298] sm:$0xff]
  %v2954 = vld [vmem:[#allocation2 + $0x2a0] sm:$0xff]
  %v2955 = vld [vmem:[#allocation2 + $0x2a8] sm:$0xff]
  %v2956 = vld [vmem:[#allocation2 + $0x2b0] sm:$0xff]
  %v2957 = vld [vmem:[#allocation2 + $0x2b8] sm:$0xff]
  %v2958 = vld [vmem:[#allocation2 + $0x2c0] sm:$0xff]
  %v2959 = vld [vmem:[#allocation2 + $0x2c8] sm:$0xff]
  %v2960 = vld [vmem:[#allocation2 + $0x2d0] sm:$0xff]
  %v2961 = vld [vmem:[#allocation2 + $0x2d8] sm:$0xff]
  %v2962 = vld [vmem:[#allocation2 + $0x2e0] sm:$0xff]
  %v2963 = vld [vmem:[#allocation2 + $0x2e8] sm:$0xff]
  %v2964 = vld [vmem:[#allocation2 + $0x2f0] sm:$0xff]
  %v2965 = vld [vmem:[#allocation2 + $0x2f8] sm:$0xff]
  %v2966 = vld [vmem:[#allocation2 + $0x300] sm:$0xff]
  %v2967 = vld [vmem:[#allocation2 + $0x308] sm:$0xff]
  %v2968 = vld [vmem:[#allocation2 + $0x310] sm:$0xff]
  %v2969 = vld [vmem:[#allocation2 + $0x318] sm:$0xff]
  %v2970 = vld [vmem:[#allocation2 + $0x320] sm:$0xff]
  %v2971 = vld [vmem:[#allocation2 + $0x328] sm:$0xff]
  %v2972 = vld [vmem:[#allocation2 + $0x330] sm:$0xff]
  %v2973 = vld [vmem:[#allocation2 + $0x338] sm:$0xff]
  %v2974 = vld [vmem:[#allocation2 + $0x340] sm:$0xff]
  %v2975 = vld [vmem:[#allocation2 + $0x348] sm:$0xff]
  %v2976 = vld [vmem:[#allocation2 + $0x350] sm:$0xff]
  %v2977 = vld [vmem:[#allocation2 + $0x358] sm:$0xff]
  %v2978 = vld [vmem:[#allocation2 + $0x360] sm:$0xff]
  %v2979 = vld [vmem:[#allocation2 + $0x368] sm:$0xff]
  %v2980 = vld [vmem:[#allocation2 + $0x370] sm:$0xff]
  %v2981 = vld [vmem:[#allocation2 + $0x378] sm:$0xff]
  %v2982 = vld [vmem:[#allocation2 + $0x380] sm:$0xff]
  %v2983 = vld [vmem:[#allocation2 + $0x388] sm:$0xff]
  %v2984 = vld [vmem:[#allocation2 + $0x390] sm:$0xff]
  %v2985 = vld [vmem:[#allocation2 + $0x398] sm:$0xff]
  %v2986 = vld [vmem:[#allocation2 + $0x3a0] sm:$0xff]
  %v2987 = vld [vmem:[#allocation2 + $0x3a8] sm:$0xff]
  %v2988 = vld [vmem:[#allocation2 + $0x3b0] sm:$0xff]
  %v2989 = vld [vmem:[#allocation2 + $0x3b8] sm:$0xff]
  %v2990 = vld [vmem:[#allocation2 + $0x3c0] sm:$0xff]
  %v2991 = vld [vmem:[#allocation2 + $0x3c8] sm:$0xff]
  %v2992 = vld [vmem:[#allocation2 + $0x3d0] sm:$0xff]
  %v2993 = vld [vmem:[#allocation2 + $0x3d8] sm:$0xff]
  %v2994 = vld [vmem:[#allocation2 + $0x3e0] sm:$0xff]
  %v2995 = vld [vmem:[#allocation2 + $0x3e8] sm:$0xff]
  %v2996 = vld [vmem:[#allocation2 + $0x3f0] sm:$0xff]
  %v2997 = vld [vmem:[#allocation2 + $0x3f8] sm:$0xff]
  %v2998 = vld [vmem:[%s1] sm:$0xff]
  %v2999 = vld [vmem:[%s1 + $0x8] sm:$0xff]
  %v3000 = vld [vmem:[%s1 + $0x10] sm:$0xff]
  %v3001 = vld [vmem:[%s1 + $0x18] sm:$0xff]
  %v3002 = vld [vmem:[%s1 + $0x20] sm:$0xff]
  %v3003 = vld [vmem:[%s1 + $0x28] sm:$0xff]
  %v3004 = vld [vmem:[%s1 + $0x30] sm:$0xff]
  %v3005 = vld [vmem:[%s1 + $0x38] sm:$0xff]
  %v3006 = vld [vmem:[%s1 + $0x40] sm:$0xff]
  %v3007 = vld [vmem:[%s1 + $0x48] sm:$0xff]
  %v3008 = vld [vmem:[%s1 + $0x50] sm:$0xff]
  %v3009 = vld [vmem:[%s1 + $0x58] sm:$0xff]
  %v3010 = vld [vmem:[%s1 + $0x60] sm:$0xff]
  %v3011 = vld [vmem:[%s1 + $0x68] sm:$0xff]
  %v3012 = vld [vmem:[%s1 + $0x70] sm:$0xff]
  %v3013 = vld [vmem:[%s1 + $0x78] sm:$0xff]
  %v3014 = vld [vmem:[%s1 + $0x80] sm:$0xff]
  %v3015 = vld [vmem:[%s1 + $0x88] sm:$0xff]
  %v3016 = vld [vmem:[%s1 + $0x90] sm:$0xff]
  %v3017 = vld [vmem:[%s1 + $0x98] sm:$0xff]
  %v3018 = vld [vmem:[%s1 + $0xa0] sm:$0xff]
  %v3019 = vld [vmem:[%s1 + $0xa8] sm:$0xff]
  %v3020 = vld [vmem:[%s1 + $0xb0] sm:$0xff]
  %v3021 = vld [vmem:[%s1 + $0xb8] sm:$0xff]
  %v3022 = vld [vmem:[%s1 + $0xc0] sm:$0xff]
  %v3023 = vld [vmem:[%s1 + $0xc8] sm:$0xff]
  %v3024 = vld [vmem:[%s1 + $0xd0] sm:$0xff]
  %v3025 = vld [vmem:[%s1 + $0xd8] sm:$0xff]
  %v3026 = vld [vmem:[%s1 + $0xe0] sm:$0xff]
  %v3027 = vld [vmem:[%s1 + $0xe8] sm:$0xff]
  %v3028 = vld [vmem:[%s1 + $0xf0] sm:$0xff]
  %v3029 = vld [vmem:[%s1 + $0xf8] sm:$0xff]
  %v3030 = vadd.f32 %v2870, %v2998
  %v3031 = vadd.f32 %v2871, %v2999
  %v3032 = vadd.f32 %v2872, %v3000
  %v3033 = vadd.f32 %v2873, %v3001
  %v3034 = vadd.f32 %v2874, %v3002
  %v3035 = vadd.f32 %v2875, %v3003
  %v3036 = vadd.f32 %v2876, %v3004
  %v3037 = vadd.f32 %v2877, %v3005
  %v3038 = vadd.f32 %v2878, %v2998
  %v3039 = vadd.f32 %v2879, %v2999
  %v3040 = vadd.f32 %v2880, %v3000
  %v3041 = vadd.f32 %v2881, %v3001
  %v3042 = vadd.f32 %v2882, %v3002
  %v3043 = vadd.f32 %v2883, %v3003
  %v3044 = vadd.f32 %v2884, %v3004
  %v3045 = vadd.f32 %v2885, %v3005
  %v3046 = vadd.f32 %v2886, %v2998
  %v3047 = vadd.f32 %v2887, %v2999
  %v3048 = vadd.f32 %v2888, %v3000
  %v3049 = vadd.f32 %v2889, %v3001
  %v3050 = vadd.f32 %v2890, %v3002
  %v3051 = vadd.f32 %v2891, %v3003
  %v3052 = vadd.f32 %v2892, %v3004
  %v3053 = vadd.f32 %v2893, %v3005
  %v3054 = vadd.f32 %v2894, %v2998
  %v3055 = vadd.f32 %v2895, %v2999
  %v3056 = vadd.f32 %v2896, %v3000
  %v3057 = vadd.f32 %v2897, %v3001
  %v3058 = vadd.f32 %v2898, %v3002
  %v3059 = vadd.f32 %v2899, %v3003
  %v3060 = vadd.f32 %v2900, %v3004
  %v3061 = vadd.f32 %v2901, %v3005
  %v3062 = vadd.f32 %v2902, %v3006
  %v3063 = vadd.f32 %v2903, %v3007
  %v3064 = vadd.f32 %v2904, %v3008
  %v3065 = vadd.f32 %v2905, %v3009
  %v3066 = vadd.f32 %v2906, %v3010
  %v3067 = vadd.f32 %v2907, %v3011
  %v3068 = vadd.f32 %v2908, %v3012
  %v3069 = vadd.f32 %v2909, %v3013
  %v3070 = vadd.f32 %v2910, %v3006
  %v3071 = vadd.f32 %v2911, %v3007
  %v3072 = vadd.f32 %v2912, %v3008
  %v3073 = vadd.f32 %v2913, %v3009
  %v3074 = vadd.f32 %v2914, %v3010
  %v3075 = vadd.f32 %v2915, %v3011
  %v3076 = vadd.f32 %v2916, %v3012
  %v3077 = vadd.f32 %v2917, %v3013
  %v3078 = vadd.f32 %v2918, %v3006
  %v3079 = vadd.f32 %v2919, %v3007
  %v3080 = vadd.f32 %v2920, %v3008
  %v3081 = vadd.f32 %v2921, %v3009
  %v3082 = vadd.f32 %v2922, %v3010
  %v3083 = vadd.f32 %v2923, %v3011
  %v3084 = vadd.f32 %v2924, %v3012
  %v3085 = vadd.f32 %v2925, %v3013
  %v3086 = vadd.f32 %v2926, %v3006
  %v3087 = vadd.f32 %v2927, %v3007
  %v3088 = vadd.f32 %v2928, %v3008
  %v3089 = vadd.f32 %v2929, %v3009
  %v3090 = vadd.f32 %v2930, %v3010
  %v3091 = vadd.f32 %v2931, %v3011
  %v3092 = vadd.f32 %v2932, %v3012
  %v3093 = vadd.f32 %v2933, %v3013
  %v3094 = vadd.f32 %v2934, %v3014
  %v3095 = vadd.f32 %v2935, %v3015
  %v3096 = vadd.f32 %v2936, %v3016
  %v3097 = vadd.f32 %v2937, %v3017
  %v3098 = vadd.f32 %v2938, %v3018
  %v3099 = vadd.f32 %v2939, %v3019
  %v3100 = vadd.f32 %v2940, %v3020
  %v3101 = vadd.f32 %v2941, %v3021
  %v3102 = vadd.f32 %v2942, %v3014
  %v3103 = vadd.f32 %v2943, %v3015
  %v3104 = vadd.f32 %v2944, %v3016
  %v3105 = vadd.f32 %v2945, %v3017
  %v3106 = vadd.f32 %v2946, %v3018
  %v3107 = vadd.f32 %v2947, %v3019
  %v3108 = vadd.f32 %v2948, %v3020
  %v3109 = vadd.f32 %v2949, %v3021
  %v3110 = vadd.f32 %v2950, %v3014
  %v3111 = vadd.f32 %v2951, %v3015
  %v3112 = vadd.f32 %v2952, %v3016
  %v3113 = vadd.f32 %v2953, %v3017
  %v3114 = vadd.f32 %v2954, %v3018
  %v3115 = vadd.f32 %v2955, %v3019
  %v3116 = vadd.f32 %v2956, %v3020
  %v3117 = vadd.f32 %v2957, %v3021
  %v3118 = vadd.f32 %v2958, %v3014
  %v3119 = vadd.f32 %v2959, %v3015
  %v3120 = vadd.f32 %v2960, %v3016
  %v3121 = vadd.f32 %v2961, %v3017
  %v3122 = vadd.f32 %v2962, %v3018
  %v3123 = vadd.f32 %v2963, %v3019
  %v3124 = vadd.f32 %v2964, %v3020
  %v3125 = vadd.f32 %v2965, %v3021
  %v3126 = vadd.f32 %v2966, %v3022
  %v3127 = vadd.f32 %v2967, %v3023
  %v3128 = vadd.f32 %v2968, %v3024
  %v3129 = vadd.f32 %v2969, %v3025
  %v3130 = vadd.f32 %v2970, %v3026
  %v3131 = vadd.f32 %v2971, %v3027
  %v3132 = vadd.f32 %v2972, %v3028
  %v3133 = vadd.f32 %v2973, %v3029
  %v3134 = vadd.f32 %v2974, %v3022
  %v3135 = vadd.f32 %v2975, %v3023
  %v3136 = vadd.f32 %v2976, %v3024
  %v3137 = vadd.f32 %v2977, %v3025
  %v3138 = vadd.f32 %v2978, %v3026
  %v3139 = vadd.f32 %v2979, %v3027
  %v3140 = vadd.f32 %v2980, %v3028
  %v3141 = vadd.f32 %v2981, %v3029
  %v3142 = vadd.f32 %v2982, %v3022
  %v3143 = vadd.f32 %v2983, %v3023
  %v3144 = vadd.f32 %v2984, %v3024
  %v3145 = vadd.f32 %v2985, %v3025
  %v3146 = vadd.f32 %v2986, %v3026
  %v3147 = vadd.f32 %v2987, %v3027
  %v3148 = vadd.f32 %v2988, %v3028
  %v3149 = vadd.f32 %v2989, %v3029
  %v3150 = vadd.f32 %v2990, %v3022
  %v3151 = vadd.f32 %v2991, %v3023
  %v3152 = vadd.f32 %v2992, %v3024
  %v3153 = vadd.f32 %v2993, %v3025
  %v3154 = vadd.f32 %v2994, %v3026
  %v3155 = vadd.f32 %v2995, %v3027
  %v3156 = vadd.f32 %v2996, %v3028
  %v3157 = vadd.f32 %v2997, %v3029
  %v3158 = vsel %vm866, %v3030, -inf
  %3159 = vmax.xlane.f32.xlu0 %v3158
  %v3160 = vpop.xlane.xlu0 %3159
  %v3161 = vsel %vm866, %v3031, -inf
  %3162 = vmax.xlane.f32.xlu0 %v3161
  %v3163 = vpop.xlane.xlu0 %3162
  %v3164 = vsel %vm866, %v3032, -inf
  %3165 = vmax.xlane.f32.xlu0 %v3164
  %v3166 = vpop.xlane.xlu0 %3165
  %v3167 = vsel %vm866, %v3033, -inf
  %3168 = vmax.xlane.f32.xlu0 %v3167
  %v3169 = vpop.xlane.xlu0 %3168
  %v3170 = vsel %vm866, %v3034, -inf
  %3171 = vmax.xlane.f32.xlu0 %v3170
  %v3172 = vpop.xlane.xlu0 %3171
  %v3173 = vsel %vm866, %v3035, -inf
  %3174 = vmax.xlane.f32.xlu0 %v3173
  %v3175 = vpop.xlane.xlu0 %3174
  %v3176 = vsel %vm866, %v3036, -inf
  %3177 = vmax.xlane.f32.xlu0 %v3176
  %v3178 = vpop.xlane.xlu0 %3177
  %v3179 = vsel %vm866, %v3037, -inf
  %3180 = vmax.xlane.f32.xlu0 %v3179
  %v3181 = vpop.xlane.xlu0 %3180
  %v3182 = vsel %vm866, %v3038, -inf
  %3183 = vmax.xlane.f32.xlu0 %v3182
  %v3184 = vpop.xlane.xlu0 %3183
  %v3185 = vsel %vm866, %v3039, -inf
  %3186 = vmax.xlane.f32.xlu0 %v3185
  %v3187 = vpop.xlane.xlu0 %3186
  %v3188 = vsel %vm866, %v3040, -inf
  %3189 = vmax.xlane.f32.xlu0 %v3188
  %v3190 = vpop.xlane.xlu0 %3189
  %v3191 = vsel %vm866, %v3041, -inf
  %3192 = vmax.xlane.f32.xlu0 %v3191
  %v3193 = vpop.xlane.xlu0 %3192
  %v3194 = vsel %vm866, %v3042, -inf
  %3195 = vmax.xlane.f32.xlu0 %v3194
  %v3196 = vpop.xlane.xlu0 %3195
  %v3197 = vsel %vm866, %v3043, -inf
  %3198 = vmax.xlane.f32.xlu0 %v3197
  %v3199 = vpop.xlane.xlu0 %3198
  %v3200 = vsel %vm866, %v3044, -inf
  %3201 = vmax.xlane.f32.xlu0 %v3200
  %v3202 = vpop.xlane.xlu0 %3201
  %v3203 = vsel %vm866, %v3045, -inf
  %3204 = vmax.xlane.f32.xlu0 %v3203
  %v3205 = vpop.xlane.xlu0 %3204
  %v3206 = vsel %vm866, %v3046, -inf
  %3207 = vmax.xlane.f32.xlu0 %v3206
  %v3208 = vpop.xlane.xlu0 %3207
  %v3209 = vsel %vm866, %v3047, -inf
  %3210 = vmax.xlane.f32.xlu0 %v3209
  %v3211 = vpop.xlane.xlu0 %3210
  %v3212 = vsel %vm866, %v3048, -inf
  %3213 = vmax.xlane.f32.xlu0 %v3212
  %v3214 = vpop.xlane.xlu0 %3213
  %v3215 = vsel %vm866, %v3049, -inf
  %3216 = vmax.xlane.f32.xlu0 %v3215
  %v3217 = vpop.xlane.xlu0 %3216
  %v3218 = vsel %vm866, %v3050, -inf
  %3219 = vmax.xlane.f32.xlu0 %v3218
  %v3220 = vpop.xlane.xlu0 %3219
  %v3221 = vsel %vm866, %v3051, -inf
  %3222 = vmax.xlane.f32.xlu0 %v3221
  %v3223 = vpop.xlane.xlu0 %3222
  %v3224 = vsel %vm866, %v3052, -inf
  %3225 = vmax.xlane.f32.xlu0 %v3224
  %v3226 = vpop.xlane.xlu0 %3225
  %v3227 = vsel %vm866, %v3053, -inf
  %3228 = vmax.xlane.f32.xlu0 %v3227
  %v3229 = vpop.xlane.xlu0 %3228
  %v3230 = vsel %vm866, %v3054, -inf
  %3231 = vmax.xlane.f32.xlu0 %v3230
  %v3232 = vpop.xlane.xlu0 %3231
  %v3233 = vsel %vm866, %v3055, -inf
  %3234 = vmax.xlane.f32.xlu0 %v3233
  %v3235 = vpop.xlane.xlu0 %3234
  %v3236 = vsel %vm866, %v3056, -inf
  %3237 = vmax.xlane.f32.xlu0 %v3236
  %v3238 = vpop.xlane.xlu0 %3237
  %v3239 = vsel %vm866, %v3057, -inf
  %3240 = vmax.xlane.f32.xlu0 %v3239
  %v3241 = vpop.xlane.xlu0 %3240
  %v3242 = vsel %vm866, %v3058, -inf
  %3243 = vmax.xlane.f32.xlu0 %v3242
  %v3244 = vpop.xlane.xlu0 %3243
  %v3245 = vsel %vm866, %v3059, -inf
  %3246 = vmax.xlane.f32.xlu0 %v3245
  %v3247 = vpop.xlane.xlu0 %3246
  %v3248 = vsel %vm866, %v3060, -inf
  %3249 = vmax.xlane.f32.xlu0 %v3248
  %v3250 = vpop.xlane.xlu0 %3249
  %v3251 = vsel %vm866, %v3061, -inf
  %3252 = vmax.xlane.f32.xlu0 %v3251
  %v3253 = vpop.xlane.xlu0 %3252
  %v3254 = vsel %vm866, %v3062, -inf
  %3255 = vmax.xlane.f32.xlu0 %v3254
  %v3256 = vpop.xlane.xlu0 %3255
  %v3257 = vsel %vm866, %v3063, -inf
  %3258 = vmax.xlane.f32.xlu0 %v3257
  %v3259 = vpop.xlane.xlu0 %3258
  %v3260 = vsel %vm866, %v3064, -inf
  %3261 = vmax.xlane.f32.xlu0 %v3260
  %v3262 = vpop.xlane.xlu0 %3261
  %v3263 = vsel %vm866, %v3065, -inf
  %3264 = vmax.xlane.f32.xlu0 %v3263
  %v3265 = vpop.xlane.xlu0 %3264
  %v3266 = vsel %vm866, %v3066, -inf
  %3267 = vmax.xlane.f32.xlu0 %v3266
  %v3268 = vpop.xlane.xlu0 %3267
  %v3269 = vsel %vm866, %v3067, -inf
  %3270 = vmax.xlane.f32.xlu0 %v3269
  %v3271 = vpop.xlane.xlu0 %3270
  %v3272 = vsel %vm866, %v3068, -inf
  %3273 = vmax.xlane.f32.xlu0 %v3272
  %v3274 = vpop.xlane.xlu0 %3273
  %v3275 = vsel %vm866, %v3069, -inf
  %3276 = vmax.xlane.f32.xlu0 %v3275
  %v3277 = vpop.xlane.xlu0 %3276
  %v3278 = vsel %vm866, %v3070, -inf
  %3279 = vmax.xlane.f32.xlu0 %v3278
  %v3280 = vpop.xlane.xlu0 %3279
  %v3281 = vsel %vm866, %v3071, -inf
  %3282 = vmax.xlane.f32.xlu0 %v3281
  %v3283 = vpop.xlane.xlu0 %3282
  %v3284 = vsel %vm866, %v3072, -inf
  %3285 = vmax.xlane.f32.xlu0 %v3284
  %v3286 = vpop.xlane.xlu0 %3285
  %v3287 = vsel %vm866, %v3073, -inf
  %3288 = vmax.xlane.f32.xlu0 %v3287
  %v3289 = vpop.xlane.xlu0 %3288
  %v3290 = vsel %vm866, %v3074, -inf
  %3291 = vmax.xlane.f32.xlu0 %v3290
  %v3292 = vpop.xlane.xlu0 %3291
  %v3293 = vsel %vm866, %v3075, -inf
  %3294 = vmax.xlane.f32.xlu0 %v3293
  %v3295 = vpop.xlane.xlu0 %3294
  %v3296 = vsel %vm866, %v3076, -inf
  %3297 = vmax.xlane.f32.xlu0 %v3296
  %v3298 = vpop.xlane.xlu0 %3297
  %v3299 = vsel %vm866, %v3077, -inf
  %3300 = vmax.xlane.f32.xlu0 %v3299
  %v3301 = vpop.xlane.xlu0 %3300
  %v3302 = vsel %vm866, %v3078, -inf
  %3303 = vmax.xlane.f32.xlu0 %v3302
  %v3304 = vpop.xlane.xlu0 %3303
  %v3305 = vsel %vm866, %v3079, -inf
  %3306 = vmax.xlane.f32.xlu0 %v3305
  %v3307 = vpop.xlane.xlu0 %3306
  %v3308 = vsel %vm866, %v3080, -inf
  %3309 = vmax.xlane.f32.xlu0 %v3308
  %v3310 = vpop.xlane.xlu0 %3309
  %v3311 = vsel %vm866, %v3081, -inf
  %3312 = vmax.xlane.f32.xlu0 %v3311
  %v3313 = vpop.xlane.xlu0 %3312
  %v3314 = vsel %vm866, %v3082, -inf
  %3315 = vmax.xlane.f32.xlu0 %v3314
  %v3316 = vpop.xlane.xlu0 %3315
  %v3317 = vsel %vm866, %v3083, -inf
  %3318 = vmax.xlane.f32.xlu0 %v3317
  %v3319 = vpop.xlane.xlu0 %3318
  %v3320 = vsel %vm866, %v3084, -inf
  %3321 = vmax.xlane.f32.xlu0 %v3320
  %v3322 = vpop.xlane.xlu0 %3321
  %v3323 = vsel %vm866, %v3085, -inf
  %3324 = vmax.xlane.f32.xlu0 %v3323
  %v3325 = vpop.xlane.xlu0 %3324
  %v3326 = vsel %vm866, %v3086, -inf
  %3327 = vmax.xlane.f32.xlu0 %v3326
  %v3328 = vpop.xlane.xlu0 %3327
  %v3329 = vsel %vm866, %v3087, -inf
  %3330 = vmax.xlane.f32.xlu0 %v3329
  %v3331 = vpop.xlane.xlu0 %3330
  %v3332 = vsel %vm866, %v3088, -inf
  %3333 = vmax.xlane.f32.xlu0 %v3332
  %v3334 = vpop.xlane.xlu0 %3333
  %v3335 = vsel %vm866, %v3089, -inf
  %3336 = vmax.xlane.f32.xlu0 %v3335
  %v3337 = vpop.xlane.xlu0 %3336
  %v3338 = vsel %vm866, %v3090, -inf
  %3339 = vmax.xlane.f32.xlu0 %v3338
  %v3340 = vpop.xlane.xlu0 %3339
  %v3341 = vsel %vm866, %v3091, -inf
  %3342 = vmax.xlane.f32.xlu0 %v3341
  %v3343 = vpop.xlane.xlu0 %3342
  %v3344 = vsel %vm866, %v3092, -inf
  %3345 = vmax.xlane.f32.xlu0 %v3344
  %v3346 = vpop.xlane.xlu0 %3345
  %v3347 = vsel %vm866, %v3093, -inf
  %3348 = vmax.xlane.f32.xlu0 %v3347
  %v3349 = vpop.xlane.xlu0 %3348
  %v3350 = vsel %vm866, %v3094, -inf
  %3351 = vmax.xlane.f32.xlu0 %v3350
  %v3352 = vpop.xlane.xlu0 %3351
  %v3353 = vsel %vm866, %v3095, -inf
  %3354 = vmax.xlane.f32.xlu0 %v3353
  %v3355 = vpop.xlane.xlu0 %3354
  %v3356 = vsel %vm866, %v3096, -inf
  %3357 = vmax.xlane.f32.xlu0 %v3356
  %v3358 = vpop.xlane.xlu0 %3357
  %v3359 = vsel %vm866, %v3097, -inf
  %3360 = vmax.xlane.f32.xlu0 %v3359
  %v3361 = vpop.xlane.xlu0 %3360
  %v3362 = vsel %vm866, %v3098, -inf
  %3363 = vmax.xlane.f32.xlu0 %v3362
  %v3364 = vpop.xlane.xlu0 %3363
  %v3365 = vsel %vm866, %v3099, -inf
  %3366 = vmax.xlane.f32.xlu0 %v3365
  %v3367 = vpop.xlane.xlu0 %3366
  %v3368 = vsel %vm866, %v3100, -inf
  %3369 = vmax.xlane.f32.xlu0 %v3368
  %v3370 = vpop.xlane.xlu0 %3369
  %v3371 = vsel %vm866, %v3101, -inf
  %3372 = vmax.xlane.f32.xlu0 %v3371
  %v3373 = vpop.xlane.xlu0 %3372
  %v3374 = vsel %vm866, %v3102, -inf
  %3375 = vmax.xlane.f32.xlu0 %v3374
  %v3376 = vpop.xlane.xlu0 %3375
  %v3377 = vsel %vm866, %v3103, -inf
  %3378 = vmax.xlane.f32.xlu0 %v3377
  %v3379 = vpop.xlane.xlu0 %3378
  %v3380 = vsel %vm866, %v3104, -inf
  %3381 = vmax.xlane.f32.xlu0 %v3380
  %v3382 = vpop.xlane.xlu0 %3381
  %v3383 = vsel %vm866, %v3105, -inf
  %3384 = vmax.xlane.f32.xlu0 %v3383
  %v3385 = vpop.xlane.xlu0 %3384
  %v3386 = vsel %vm866, %v3106, -inf
  %3387 = vmax.xlane.f32.xlu0 %v3386
  %v3388 = vpop.xlane.xlu0 %3387
  %v3389 = vsel %vm866, %v3107, -inf
  %3390 = vmax.xlane.f32.xlu0 %v3389
  %v3391 = vpop.xlane.xlu0 %3390
  %v3392 = vsel %vm866, %v3108, -inf
  %3393 = vmax.xlane.f32.xlu0 %v3392
  %v3394 = vpop.xlane.xlu0 %3393
  %v3395 = vsel %vm866, %v3109, -inf
  %3396 = vmax.xlane.f32.xlu0 %v3395
  %v3397 = vpop.xlane.xlu0 %3396
  %v3398 = vsel %vm866, %v3110, -inf
  %3399 = vmax.xlane.f32.xlu0 %v3398
  %v3400 = vpop.xlane.xlu0 %3399
  %v3401 = vsel %vm866, %v3111, -inf
  %3402 = vmax.xlane.f32.xlu0 %v3401
  %v3403 = vpop.xlane.xlu0 %3402
  %v3404 = vsel %vm866, %v3112, -inf
  %3405 = vmax.xlane.f32.xlu0 %v3404
  %v3406 = vpop.xlane.xlu0 %3405
  %v3407 = vsel %vm866, %v3113, -inf
  %3408 = vmax.xlane.f32.xlu0 %v3407
  %v3409 = vpop.xlane.xlu0 %3408
  %v3410 = vsel %vm866, %v3114, -inf
  %3411 = vmax.xlane.f32.xlu0 %v3410
  %v3412 = vpop.xlane.xlu0 %3411
  %v3413 = vsel %vm866, %v3115, -inf
  %3414 = vmax.xlane.f32.xlu0 %v3413
  %v3415 = vpop.xlane.xlu0 %3414
  %v3416 = vsel %vm866, %v3116, -inf
  %3417 = vmax.xlane.f32.xlu0 %v3416
  %v3418 = vpop.xlane.xlu0 %3417
  %v3419 = vsel %vm866, %v3117, -inf
  %3420 = vmax.xlane.f32.xlu0 %v3419
  %v3421 = vpop.xlane.xlu0 %3420
  %v3422 = vsel %vm866, %v3118, -inf
  %3423 = vmax.xlane.f32.xlu0 %v3422
  %v3424 = vpop.xlane.xlu0 %3423
  %v3425 = vsel %vm866, %v3119, -inf
  %3426 = vmax.xlane.f32.xlu0 %v3425
  %v3427 = vpop.xlane.xlu0 %3426
  %v3428 = vsel %vm866, %v3120, -inf
  %3429 = vmax.xlane.f32.xlu0 %v3428
  %v3430 = vpop.xlane.xlu0 %3429
  %v3431 = vsel %vm866, %v3121, -inf
  %3432 = vmax.xlane.f32.xlu0 %v3431
  %v3433 = vpop.xlane.xlu0 %3432
  %v3434 = vsel %vm866, %v3122, -inf
  %3435 = vmax.xlane.f32.xlu0 %v3434
  %v3436 = vpop.xlane.xlu0 %3435
  %v3437 = vsel %vm866, %v3123, -inf
  %3438 = vmax.xlane.f32.xlu0 %v3437
  %v3439 = vpop.xlane.xlu0 %3438
  %v3440 = vsel %vm866, %v3124, -inf
  %3441 = vmax.xlane.f32.xlu0 %v3440
  %v3442 = vpop.xlane.xlu0 %3441
  %v3443 = vsel %vm866, %v3125, -inf
  %3444 = vmax.xlane.f32.xlu0 %v3443
  %v3445 = vpop.xlane.xlu0 %3444
  %v3446 = vsel %vm866, %v3126, -inf
  %3447 = vmax.xlane.f32.xlu0 %v3446
  %v3448 = vpop.xlane.xlu0 %3447
  %v3449 = vsel %vm866, %v3127, -inf
  %3450 = vmax.xlane.f32.xlu0 %v3449
  %v3451 = vpop.xlane.xlu0 %3450
  %v3452 = vsel %vm866, %v3128, -inf
  %3453 = vmax.xlane.f32.xlu0 %v3452
  %v3454 = vpop.xlane.xlu0 %3453
  %v3455 = vsel %vm866, %v3129, -inf
  %3456 = vmax.xlane.f32.xlu0 %v3455
  %v3457 = vpop.xlane.xlu0 %3456
  %v3458 = vsel %vm866, %v3130, -inf
  %3459 = vmax.xlane.f32.xlu0 %v3458
  %v3460 = vpop.xlane.xlu0 %3459
  %v3461 = vsel %vm866, %v3131, -inf
  %3462 = vmax.xlane.f32.xlu0 %v3461
  %v3463 = vpop.xlane.xlu0 %3462
  %v3464 = vsel %vm866, %v3132, -inf
  %3465 = vmax.xlane.f32.xlu0 %v3464
  %v3466 = vpop.xlane.xlu0 %3465
  %v3467 = vsel %vm866, %v3133, -inf
  %3468 = vmax.xlane.f32.xlu0 %v3467
  %v3469 = vpop.xlane.xlu0 %3468
  %v3470 = vsel %vm866, %v3134, -inf
  %3471 = vmax.xlane.f32.xlu0 %v3470
  %v3472 = vpop.xlane.xlu0 %3471
  %v3473 = vsel %vm866, %v3135, -inf
  %3474 = vmax.xlane.f32.xlu0 %v3473
  %v3475 = vpop.xlane.xlu0 %3474
  %v3476 = vsel %vm866, %v3136, -inf
  %3477 = vmax.xlane.f32.xlu0 %v3476
  %v3478 = vpop.xlane.xlu0 %3477
  %v3479 = vsel %vm866, %v3137, -inf
  %3480 = vmax.xlane.f32.xlu0 %v3479
  %v3481 = vpop.xlane.xlu0 %3480
  %v3482 = vsel %vm866, %v3138, -inf
  %3483 = vmax.xlane.f32.xlu0 %v3482
  %v3484 = vpop.xlane.xlu0 %3483
  %v3485 = vsel %vm866, %v3139, -inf
  %3486 = vmax.xlane.f32.xlu0 %v3485
  %v3487 = vpop.xlane.xlu0 %3486
  %v3488 = vsel %vm866, %v3140, -inf
  %3489 = vmax.xlane.f32.xlu0 %v3488
  %v3490 = vpop.xlane.xlu0 %3489
  %v3491 = vsel %vm866, %v3141, -inf
  %3492 = vmax.xlane.f32.xlu0 %v3491
  %v3493 = vpop.xlane.xlu0 %3492
  %v3494 = vsel %vm866, %v3142, -inf
  %3495 = vmax.xlane.f32.xlu0 %v3494
  %v3496 = vpop.xlane.xlu0 %3495
  %v3497 = vsel %vm866, %v3143, -inf
  %3498 = vmax.xlane.f32.xlu0 %v3497
  %v3499 = vpop.xlane.xlu0 %3498
  %v3500 = vsel %vm866, %v3144, -inf
  %3501 = vmax.xlane.f32.xlu0 %v3500
  %v3502 = vpop.xlane.xlu0 %3501
  %v3503 = vsel %vm866, %v3145, -inf
  %3504 = vmax.xlane.f32.xlu0 %v3503
  %v3505 = vpop.xlane.xlu0 %3504
  %v3506 = vsel %vm866, %v3146, -inf
  %3507 = vmax.xlane.f32.xlu0 %v3506
  %v3508 = vpop.xlane.xlu0 %3507
  %v3509 = vsel %vm866, %v3147, -inf
  %3510 = vmax.xlane.f32.xlu0 %v3509
  %v3511 = vpop.xlane.xlu0 %3510
  %v3512 = vsel %vm866, %v3148, -inf
  %3513 = vmax.xlane.f32.xlu0 %v3512
  %v3514 = vpop.xlane.xlu0 %3513
  %v3515 = vsel %vm866, %v3149, -inf
  %3516 = vmax.xlane.f32.xlu0 %v3515
  %v3517 = vpop.xlane.xlu0 %3516
  %v3518 = vsel %vm866, %v3150, -inf
  %3519 = vmax.xlane.f32.xlu0 %v3518
  %v3520 = vpop.xlane.xlu0 %3519
  %v3521 = vsel %vm866, %v3151, -inf
  %3522 = vmax.xlane.f32.xlu0 %v3521
  %v3523 = vpop.xlane.xlu0 %3522
  %v3524 = vsel %vm866, %v3152, -inf
  %3525 = vmax.xlane.f32.xlu0 %v3524
  %v3526 = vpop.xlane.xlu0 %3525
  %v3527 = vsel %vm866, %v3153, -inf
  %3528 = vmax.xlane.f32.xlu0 %v3527
  %v3529 = vpop.xlane.xlu0 %3528
  %v3530 = vsel %vm866, %v3154, -inf
  %3531 = vmax.xlane.f32.xlu0 %v3530
  %v3532 = vpop.xlane.xlu0 %3531
  %v3533 = vsel %vm866, %v3155, -inf
  %3534 = vmax.xlane.f32.xlu0 %v3533
  %v3535 = vpop.xlane.xlu0 %3534
  %v3536 = vsel %vm866, %v3156, -inf
  %3537 = vmax.xlane.f32.xlu0 %v3536
  %v3538 = vpop.xlane.xlu0 %3537
  %v3539 = vsel %vm866, %v3157, -inf
  %3540 = vmax.xlane.f32.xlu0 %v3539
  %v3541 = vpop.xlane.xlu0 %3540
  %v3542 = vsub.f32 %v3030, %v3160
  %v3543 = vsub.f32 %v3031, %v3163
  %v3544 = vsub.f32 %v3032, %v3166
  %v3545 = vsub.f32 %v3033, %v3169
  %v3546 = vsub.f32 %v3034, %v3172
  %v3547 = vsub.f32 %v3035, %v3175
  %v3548 = vsub.f32 %v3036, %v3178
  %v3549 = vsub.f32 %v3037, %v3181
  %v3550 = vsub.f32 %v3038, %v3184
  %v3551 = vsub.f32 %v3039, %v3187
  %v3552 = vsub.f32 %v3040, %v3190
  %v3553 = vsub.f32 %v3041, %v3193
  %v3554 = vsub.f32 %v3042, %v3196
  %v3555 = vsub.f32 %v3043, %v3199
  %v3556 = vsub.f32 %v3044, %v3202
  %v3557 = vsub.f32 %v3045, %v3205
  %v3558 = vsub.f32 %v3046, %v3208
  %v3559 = vsub.f32 %v3047, %v3211
  %v3560 = vsub.f32 %v3048, %v3214
  %v3561 = vsub.f32 %v3049, %v3217
  %v3562 = vsub.f32 %v3050, %v3220
  %v3563 = vsub.f32 %v3051, %v3223
  %v3564 = vsub.f32 %v3052, %v3226
  %v3565 = vsub.f32 %v3053, %v3229
  %v3566 = vsub.f32 %v3054, %v3232
  %v3567 = vsub.f32 %v3055, %v3235
  %v3568 = vsub.f32 %v3056, %v3238
  %v3569 = vsub.f32 %v3057, %v3241
  %v3570 = vsub.f32 %v3058, %v3244
  %v3571 = vsub.f32 %v3059, %v3247
  %v3572 = vsub.f32 %v3060, %v3250
  %v3573 = vsub.f32 %v3061, %v3253
  %v3574 = vsub.f32 %v3062, %v3256
  %v3575 = vsub.f32 %v3063, %v3259
  %v3576 = vsub.f32 %v3064, %v3262
  %v3577 = vsub.f32 %v3065, %v3265
  %v3578 = vsub.f32 %v3066, %v3268
  %v3579 = vsub.f32 %v3067, %v3271
  %v3580 = vsub.f32 %v3068, %v3274
  %v3581 = vsub.f32 %v3069, %v3277
  %v3582 = vsub.f32 %v3070, %v3280
  %v3583 = vsub.f32 %v3071, %v3283
  %v3584 = vsub.f32 %v3072, %v3286
  %v3585 = vsub.f32 %v3073, %v3289
  %v3586 = vsub.f32 %v3074, %v3292
  %v3587 = vsub.f32 %v3075, %v3295
  %v3588 = vsub.f32 %v3076, %v3298
  %v3589 = vsub.f32 %v3077, %v3301
  %v3590 = vsub.f32 %v3078, %v3304
  %v3591 = vsub.f32 %v3079, %v3307
  %v3592 = vsub.f32 %v3080, %v3310
  %v3593 = vsub.f32 %v3081, %v3313
  %v3594 = vsub.f32 %v3082, %v3316
  %v3595 = vsub.f32 %v3083, %v3319
  %v3596 = vsub.f32 %v3084, %v3322
  %v3597 = vsub.f32 %v3085, %v3325
  %v3598 = vsub.f32 %v3086, %v3328
  %v3599 = vsub.f32 %v3087, %v3331
  %v3600 = vsub.f32 %v3088, %v3334
  %v3601 = vsub.f32 %v3089, %v3337
  %v3602 = vsub.f32 %v3090, %v3340
  %v3603 = vsub.f32 %v3091, %v3343
  %v3604 = vsub.f32 %v3092, %v3346
  %v3605 = vsub.f32 %v3093, %v3349
  %v3606 = vsub.f32 %v3094, %v3352
  %v3607 = vsub.f32 %v3095, %v3355
  %v3608 = vsub.f32 %v3096, %v3358
  %v3609 = vsub.f32 %v3097, %v3361
  %v3610 = vsub.f32 %v3098, %v3364
  %v3611 = vsub.f32 %v3099, %v3367
  %v3612 = vsub.f32 %v3100, %v3370
  %v3613 = vsub.f32 %v3101, %v3373
  %v3614 = vsub.f32 %v3102, %v3376
  %v3615 = vsub.f32 %v3103, %v3379
  %v3616 = vsub.f32 %v3104, %v3382
  %v3617 = vsub.f32 %v3105, %v3385
  %v3618 = vsub.f32 %v3106, %v3388
  %v3619 = vsub.f32 %v3107, %v3391
  %v3620 = vsub.f32 %v3108, %v3394
  %v3621 = vsub.f32 %v3109, %v3397
  %v3622 = vsub.f32 %v3110, %v3400
  %v3623 = vsub.f32 %v3111, %v3403
  %v3624 = vsub.f32 %v3112, %v3406
  %v3625 = vsub.f32 %v3113, %v3409
  %v3626 = vsub.f32 %v3114, %v3412
  %v3627 = vsub.f32 %v3115, %v3415
  %v3628 = vsub.f32 %v3116, %v3418
  %v3629 = vsub.f32 %v3117, %v3421
  %v3630 = vsub.f32 %v3118, %v3424
  %v3631 = vsub.f32 %v3119, %v3427
  %v3632 = vsub.f32 %v3120, %v3430
  %v3633 = vsub.f32 %v3121, %v3433
  %v3634 = vsub.f32 %v3122, %v3436
  %v3635 = vsub.f32 %v3123, %v3439
  %v3636 = vsub.f32 %v3124, %v3442
  %v3637 = vsub.f32 %v3125, %v3445
  %v3638 = vsub.f32 %v3126, %v3448
  %v3639 = vsub.f32 %v3127, %v3451
  %v3640 = vsub.f32 %v3128, %v3454
  %v3641 = vsub.f32 %v3129, %v3457
  %v3642 = vsub.f32 %v3130, %v3460
  %v3643 = vsub.f32 %v3131, %v3463
  %v3644 = vsub.f32 %v3132, %v3466
  %v3645 = vsub.f32 %v3133, %v3469
  %v3646 = vsub.f32 %v3134, %v3472
  %v3647 = vsub.f32 %v3135, %v3475
  %v3648 = vsub.f32 %v3136, %v3478
  %v3649 = vsub.f32 %v3137, %v3481
  %v3650 = vsub.f32 %v3138, %v3484
  %v3651 = vsub.f32 %v3139, %v3487
  %v3652 = vsub.f32 %v3140, %v3490
  %v3653 = vsub.f32 %v3141, %v3493
  %v3654 = vsub.f32 %v3142, %v3496
  %v3655 = vsub.f32 %v3143, %v3499
  %v3656 = vsub.f32 %v3144, %v3502
  %v3657 = vsub.f32 %v3145, %v3505
  %v3658 = vsub.f32 %v3146, %v3508
  %v3659 = vsub.f32 %v3147, %v3511
  %v3660 = vsub.f32 %v3148, %v3514
  %v3661 = vsub.f32 %v3149, %v3517
  %v3662 = vsub.f32 %v3150, %v3520
  %v3663 = vsub.f32 %v3151, %v3523
  %v3664 = vsub.f32 %v3152, %v3526
  %v3665 = vsub.f32 %v3153, %v3529
  %v3666 = vsub.f32 %v3154, %v3532
  %v3667 = vsub.f32 %v3155, %v3535
  %v3668 = vsub.f32 %v3156, %v3538
  %v3669 = vsub.f32 %v3157, %v3541
  %v3670 = vmul.f32 %v3542, 1.442695
  %v3671 = vpow.pop %v3670
  %v3672 = vmul.f32 %v3543, 1.442695
  %v3673 = vpow.pop %v3672
  %v3674 = vmul.f32 %v3544, 1.442695
  %v3675 = vpow.pop %v3674
  %v3676 = vmul.f32 %v3545, 1.442695
  %v3677 = vpow.pop %v3676
  %v3678 = vmul.f32 %v3546, 1.442695
  %v3679 = vpow.pop %v3678
  %v3680 = vmul.f32 %v3547, 1.442695
  %v3681 = vpow.pop %v3680
  %v3682 = vmul.f32 %v3548, 1.442695
  %v3683 = vpow.pop %v3682
  %v3684 = vmul.f32 %v3549, 1.442695
  %v3685 = vpow.pop %v3684
  %v3686 = vmul.f32 %v3550, 1.442695
  %v3687 = vpow.pop %v3686
  %v3688 = vmul.f32 %v3551, 1.442695
  %v3689 = vpow.pop %v3688
  %v3690 = vmul.f32 %v3552, 1.442695
  %v3691 = vpow.pop %v3690
  %v3692 = vmul.f32 %v3553, 1.442695
  %v3693 = vpow.pop %v3692
  %v3694 = vmul.f32 %v3554, 1.442695
  %v3695 = vpow.pop %v3694
  %v3696 = vmul.f32 %v3555, 1.442695
  %v3697 = vpow.pop %v3696
  %v3698 = vmul.f32 %v3556, 1.442695
  %v3699 = vpow.pop %v3698
  %v3700 = vmul.f32 %v3557, 1.442695
  %v3701 = vpow.pop %v3700
  %v3702 = vmul.f32 %v3558, 1.442695
  %v3703 = vpow.pop %v3702
  %v3704 = vmul.f32 %v3559, 1.442695
  %v3705 = vpow.pop %v3704
  %v3706 = vmul.f32 %v3560, 1.442695
  %v3707 = vpow.pop %v3706
  %v3708 = vmul.f32 %v3561, 1.442695
  %v3709 = vpow.pop %v3708
  %v3710 = vmul.f32 %v3562, 1.442695
  %v3711 = vpow.pop %v3710
  %v3712 = vmul.f32 %v3563, 1.442695
  %v3713 = vpow.pop %v3712
  %v3714 = vmul.f32 %v3564, 1.442695
  %v3715 = vpow.pop %v3714
  %v3716 = vmul.f32 %v3565, 1.442695
  %v3717 = vpow.pop %v3716
  %v3718 = vmul.f32 %v3566, 1.442695
  %v3719 = vpow.pop %v3718
  %v3720 = vmul.f32 %v3567, 1.442695
  %v3721 = vpow.pop %v3720
  %v3722 = vmul.f32 %v3568, 1.442695
  %v3723 = vpow.pop %v3722
  %v3724 = vmul.f32 %v3569, 1.442695
  %v3725 = vpow.pop %v3724
  %v3726 = vmul.f32 %v3570, 1.442695
  %v3727 = vpow.pop %v3726
  %v3728 = vmul.f32 %v3571, 1.442695
  %v3729 = vpow.pop %v3728
  %v3730 = vmul.f32 %v3572, 1.442695
  %v3731 = vpow.pop %v3730
  %v3732 = vmul.f32 %v3573, 1.442695
  %v3733 = vpow.pop %v3732
  %v3734 = vmul.f32 %v3574, 1.442695
  %v3735 = vpow.pop %v3734
  %v3736 = vmul.f32 %v3575, 1.442695
  %v3737 = vpow.pop %v3736
  %v3738 = vmul.f32 %v3576, 1.442695
  %v3739 = vpow.pop %v3738
  %v3740 = vmul.f32 %v3577, 1.442695
  %v3741 = vpow.pop %v3740
  %v3742 = vmul.f32 %v3578, 1.442695
  %v3743 = vpow.pop %v3742
  %v3744 = vmul.f32 %v3579, 1.442695
  %v3745 = vpow.pop %v3744
  %v3746 = vmul.f32 %v3580, 1.442695
  %v3747 = vpow.pop %v3746
  %v3748 = vmul.f32 %v3581, 1.442695
  %v3749 = vpow.pop %v3748
  %v3750 = vmul.f32 %v3582, 1.442695
  %v3751 = vpow.pop %v3750
  %v3752 = vmul.f32 %v3583, 1.442695
  %v3753 = vpow.pop %v3752
  %v3754 = vmul.f32 %v3584, 1.442695
  %v3755 = vpow.pop %v3754
  %v3756 = vmul.f32 %v3585, 1.442695
  %v3757 = vpow.pop %v3756
  %v3758 = vmul.f32 %v3586, 1.442695
  %v3759 = vpow.pop %v3758
  %v3760 = vmul.f32 %v3587, 1.442695
  %v3761 = vpow.pop %v3760
  %v3762 = vmul.f32 %v3588, 1.442695
  %v3763 = vpow.pop %v3762
  %v3764 = vmul.f32 %v3589, 1.442695
  %v3765 = vpow.pop %v3764
  %v3766 = vmul.f32 %v3590, 1.442695
  %v3767 = vpow.pop %v3766
  %v3768 = vmul.f32 %v3591, 1.442695
  %v3769 = vpow.pop %v3768
  %v3770 = vmul.f32 %v3592, 1.442695
  %v3771 = vpow.pop %v3770
  %v3772 = vmul.f32 %v3593, 1.442695
  %v3773 = vpow.pop %v3772
  %v3774 = vmul.f32 %v3594, 1.442695
  %v3775 = vpow.pop %v3774
  %v3776 = vmul.f32 %v3595, 1.442695
  %v3777 = vpow.pop %v3776
  %v3778 = vmul.f32 %v3596, 1.442695
  %v3779 = vpow.pop %v3778
  %v3780 = vmul.f32 %v3597, 1.442695
  %v3781 = vpow.pop %v3780
  %v3782 = vmul.f32 %v3598, 1.442695
  %v3783 = vpow.pop %v3782
  %v3784 = vmul.f32 %v3599, 1.442695
  %v3785 = vpow.pop %v3784
  %v3786 = vmul.f32 %v3600, 1.442695
  %v3787 = vpow.pop %v3786
  %v3788 = vmul.f32 %v3601, 1.442695
  %v3789 = vpow.pop %v3788
  %v3790 = vmul.f32 %v3602, 1.442695
  %v3791 = vpow.pop %v3790
  %v3792 = vmul.f32 %v3603, 1.442695
  %v3793 = vpow.pop %v3792
  %v3794 = vmul.f32 %v3604, 1.442695
  %v3795 = vpow.pop %v3794
  %v3796 = vmul.f32 %v3605, 1.442695
  %v3797 = vpow.pop %v3796
  %v3798 = vmul.f32 %v3606, 1.442695
  %v3799 = vpow.pop %v3798
  %v3800 = vmul.f32 %v3607, 1.442695
  %v3801 = vpow.pop %v3800
  %v3802 = vmul.f32 %v3608, 1.442695
  %v3803 = vpow.pop %v3802
  %v3804 = vmul.f32 %v3609, 1.442695
  %v3805 = vpow.pop %v3804
  %v3806 = vmul.f32 %v3610, 1.442695
  %v3807 = vpow.pop %v3806
  %v3808 = vmul.f32 %v3611, 1.442695
  %v3809 = vpow.pop %v3808
  %v3810 = vmul.f32 %v3612, 1.442695
  %v3811 = vpow.pop %v3810
  %v3812 = vmul.f32 %v3613, 1.442695
  %v3813 = vpow.pop %v3812
  %v3814 = vmul.f32 %v3614, 1.442695
  %v3815 = vpow.pop %v3814
  %v3816 = vmul.f32 %v3615, 1.442695
  %v3817 = vpow.pop %v3816
  %v3818 = vmul.f32 %v3616, 1.442695
  %v3819 = vpow.pop %v3818
  %v3820 = vmul.f32 %v3617, 1.442695
  %v3821 = vpow.pop %v3820
  %v3822 = vmul.f32 %v3618, 1.442695
  %v3823 = vpow.pop %v3822
  %v3824 = vmul.f32 %v3619, 1.442695
  %v3825 = vpow.pop %v3824
  %v3826 = vmul.f32 %v3620, 1.442695
  %v3827 = vpow.pop %v3826
  %v3828 = vmul.f32 %v3621, 1.442695
  %v3829 = vpow.pop %v3828
  %v3830 = vmul.f32 %v3622, 1.442695
  %v3831 = vpow.pop %v3830
  %v3832 = vmul.f32 %v3623, 1.442695
  %v3833 = vpow.pop %v3832
  %v3834 = vmul.f32 %v3624, 1.442695
  %v3835 = vpow.pop %v3834
  %v3836 = vmul.f32 %v3625, 1.442695
  %v3837 = vpow.pop %v3836
  %v3838 = vmul.f32 %v3626, 1.442695
  %v3839 = vpow.pop %v3838
  %v3840 = vmul.f32 %v3627, 1.442695
  %v3841 = vpow.pop %v3840
  %v3842 = vmul.f32 %v3628, 1.442695
  %v3843 = vpow.pop %v3842
  %v3844 = vmul.f32 %v3629, 1.442695
  %v3845 = vpow.pop %v3844
  %v3846 = vmul.f32 %v3630, 1.442695
  %v3847 = vpow.pop %v3846
  %v3848 = vmul.f32 %v3631, 1.442695
  %v3849 = vpow.pop %v3848
  %v3850 = vmul.f32 %v3632, 1.442695
  %v3851 = vpow.pop %v3850
  %v3852 = vmul.f32 %v3633, 1.442695
  %v3853 = vpow.pop %v3852
  %v3854 = vmul.f32 %v3634, 1.442695
  %v3855 = vpow.pop %v3854
  %v3856 = vmul.f32 %v3635, 1.442695
  %v3857 = vpow.pop %v3856
  %v3858 = vmul.f32 %v3636, 1.442695
  %v3859 = vpow.pop %v3858
  %v3860 = vmul.f32 %v3637, 1.442695
  %v3861 = vpow.pop %v3860
  %v3862 = vmul.f32 %v3638, 1.442695
  %v3863 = vpow.pop %v3862
  %v3864 = vmul.f32 %v3639, 1.442695
  %v3865 = vpow.pop %v3864
  %v3866 = vmul.f32 %v3640, 1.442695
  %v3867 = vpow.pop %v3866
  %v3868 = vmul.f32 %v3641, 1.442695
  %v3869 = vpow.pop %v3868
  %v3870 = vmul.f32 %v3642, 1.442695
  %v3871 = vpow.pop %v3870
  %v3872 = vmul.f32 %v3643, 1.442695
  %v3873 = vpow.pop %v3872
  %v3874 = vmul.f32 %v3644, 1.442695
  %v3875 = vpow.pop %v3874
  %v3876 = vmul.f32 %v3645, 1.442695
  %v3877 = vpow.pop %v3876
  %v3878 = vmul.f32 %v3646, 1.442695
  %v3879 = vpow.pop %v3878
  %v3880 = vmul.f32 %v3647, 1.442695
  %v3881 = vpow.pop %v3880
  %v3882 = vmul.f32 %v3648, 1.442695
  %v3883 = vpow.pop %v3882
  %v3884 = vmul.f32 %v3649, 1.442695
  %v3885 = vpow.pop %v3884
  %v3886 = vmul.f32 %v3650, 1.442695
  %v3887 = vpow.pop %v3886
  %v3888 = vmul.f32 %v3651, 1.442695
  %v3889 = vpow.pop %v3888
  %v3890 = vmul.f32 %v3652, 1.442695
  %v3891 = vpow.pop %v3890
  %v3892 = vmul.f32 %v3653, 1.442695
  %v3893 = vpow.pop %v3892
  %v3894 = vmul.f32 %v3654, 1.442695
  %v3895 = vpow.pop %v3894
  %v3896 = vmul.f32 %v3655, 1.442695
  %v3897 = vpow.pop %v3896
  %v3898 = vmul.f32 %v3656, 1.442695
  %v3899 = vpow.pop %v3898
  %v3900 = vmul.f32 %v3657, 1.442695
  %v3901 = vpow.pop %v3900
  %v3902 = vmul.f32 %v3658, 1.442695
  %v3903 = vpow.pop %v3902
  %v3904 = vmul.f32 %v3659, 1.442695
  %v3905 = vpow.pop %v3904
  %v3906 = vmul.f32 %v3660, 1.442695
  %v3907 = vpow.pop %v3906
  %v3908 = vmul.f32 %v3661, 1.442695
  %v3909 = vpow.pop %v3908
  %v3910 = vmul.f32 %v3662, 1.442695
  %v3911 = vpow.pop %v3910
  %v3912 = vmul.f32 %v3663, 1.442695
  %v3913 = vpow.pop %v3912
  %v3914 = vmul.f32 %v3664, 1.442695
  %v3915 = vpow.pop %v3914
  %v3916 = vmul.f32 %v3665, 1.442695
  %v3917 = vpow.pop %v3916
  %v3918 = vmul.f32 %v3666, 1.442695
  %v3919 = vpow.pop %v3918
  %v3920 = vmul.f32 %v3667, 1.442695
  %v3921 = vpow.pop %v3920
  %v3922 = vmul.f32 %v3668, 1.442695
  %v3923 = vpow.pop %v3922
  %v3924 = vmul.f32 %v3669, 1.442695
  %v3925 = vpow.pop %v3924
  %v3926 = vsel %vm866, %v3671, 0.0
  %3927 = vadd.xlane.f32.xlu0 %v3926
  %v3928 = vpop.xlane.xlu0 %3927
  %v3929 = vsel %vm866, %v3673, 0.0
  %3930 = vadd.xlane.f32.xlu0 %v3929
  %v3931 = vpop.xlane.xlu0 %3930
  %v3932 = vsel %vm866, %v3675, 0.0
  %3933 = vadd.xlane.f32.xlu0 %v3932
  %v3934 = vpop.xlane.xlu0 %3933
  %v3935 = vsel %vm866, %v3677, 0.0
  %3936 = vadd.xlane.f32.xlu0 %v3935
  %v3937 = vpop.xlane.xlu0 %3936
  %v3938 = vsel %vm866, %v3679, 0.0
  %3939 = vadd.xlane.f32.xlu0 %v3938
  %v3940 = vpop.xlane.xlu0 %3939
  %v3941 = vsel %vm866, %v3681, 0.0
  %3942 = vadd.xlane.f32.xlu0 %v3941
  %v3943 = vpop.xlane.xlu0 %3942
  %v3944 = vsel %vm866, %v3683, 0.0
  %3945 = vadd.xlane.f32.xlu0 %v3944
  %v3946 = vpop.xlane.xlu0 %3945
  %v3947 = vsel %vm866, %v3685, 0.0
  %3948 = vadd.xlane.f32.xlu0 %v3947
  %v3949 = vpop.xlane.xlu0 %3948
  %v3950 = vsel %vm866, %v3687, 0.0
  %3951 = vadd.xlane.f32.xlu0 %v3950
  %v3952 = vpop.xlane.xlu0 %3951
  %v3953 = vsel %vm866, %v3689, 0.0
  %3954 = vadd.xlane.f32.xlu0 %v3953
  %v3955 = vpop.xlane.xlu0 %3954
  %v3956 = vsel %vm866, %v3691, 0.0
  %3957 = vadd.xlane.f32.xlu0 %v3956
  %v3958 = vpop.xlane.xlu0 %3957
  %v3959 = vsel %vm866, %v3693, 0.0
  %3960 = vadd.xlane.f32.xlu0 %v3959
  %v3961 = vpop.xlane.xlu0 %3960
  %v3962 = vsel %vm866, %v3695, 0.0
  %3963 = vadd.xlane.f32.xlu0 %v3962
  %v3964 = vpop.xlane.xlu0 %3963
  %v3965 = vsel %vm866, %v3697, 0.0
  %3966 = vadd.xlane.f32.xlu0 %v3965
  %v3967 = vpop.xlane.xlu0 %3966
  %v3968 = vsel %vm866, %v3699, 0.0
  %3969 = vadd.xlane.f32.xlu0 %v3968
  %v3970 = vpop.xlane.xlu0 %3969
  %v3971 = vsel %vm866, %v3701, 0.0
  %3972 = vadd.xlane.f32.xlu0 %v3971
  %v3973 = vpop.xlane.xlu0 %3972
  %v3974 = vsel %vm866, %v3703, 0.0
  %3975 = vadd.xlane.f32.xlu0 %v3974
  %v3976 = vpop.xlane.xlu0 %3975
  %v3977 = vsel %vm866, %v3705, 0.0
  %3978 = vadd.xlane.f32.xlu0 %v3977
  %v3979 = vpop.xlane.xlu0 %3978
  %v3980 = vsel %vm866, %v3707, 0.0
  %3981 = vadd.xlane.f32.xlu0 %v3980
  %v3982 = vpop.xlane.xlu0 %3981
  %v3983 = vsel %vm866, %v3709, 0.0
  %3984 = vadd.xlane.f32.xlu0 %v3983
  %v3985 = vpop.xlane.xlu0 %3984
  %v3986 = vsel %vm866, %v3711, 0.0
  %3987 = vadd.xlane.f32.xlu0 %v3986
  %v3988 = vpop.xlane.xlu0 %3987
  %v3989 = vsel %vm866, %v3713, 0.0
  %3990 = vadd.xlane.f32.xlu0 %v3989
  %v3991 = vpop.xlane.xlu0 %3990
  %v3992 = vsel %vm866, %v3715, 0.0
  %3993 = vadd.xlane.f32.xlu0 %v3992
  %v3994 = vpop.xlane.xlu0 %3993
  %v3995 = vsel %vm866, %v3717, 0.0
  %3996 = vadd.xlane.f32.xlu0 %v3995
  %v3997 = vpop.xlane.xlu0 %3996
  %v3998 = vsel %vm866, %v3719, 0.0
  %3999 = vadd.xlane.f32.xlu0 %v3998
  %v4000 = vpop.xlane.xlu0 %3999
  %v4001 = vsel %vm866, %v3721, 0.0
  %4002 = vadd.xlane.f32.xlu0 %v4001
  %v4003 = vpop.xlane.xlu0 %4002
  %v4004 = vsel %vm866, %v3723, 0.0
  %4005 = vadd.xlane.f32.xlu0 %v4004
  %v4006 = vpop.xlane.xlu0 %4005
  %v4007 = vsel %vm866, %v3725, 0.0
  %4008 = vadd.xlane.f32.xlu0 %v4007
  %v4009 = vpop.xlane.xlu0 %4008
  %v4010 = vsel %vm866, %v3727, 0.0
  %4011 = vadd.xlane.f32.xlu0 %v4010
  %v4012 = vpop.xlane.xlu0 %4011
  %v4013 = vsel %vm866, %v3729, 0.0
  %4014 = vadd.xlane.f32.xlu0 %v4013
  %v4015 = vpop.xlane.xlu0 %4014
  %v4016 = vsel %vm866, %v3731, 0.0
  %4017 = vadd.xlane.f32.xlu0 %v4016
  %v4018 = vpop.xlane.xlu0 %4017
  %v4019 = vsel %vm866, %v3733, 0.0
  %4020 = vadd.xlane.f32.xlu0 %v4019
  %v4021 = vpop.xlane.xlu0 %4020
  %v4022 = vsel %vm866, %v3735, 0.0
  %4023 = vadd.xlane.f32.xlu0 %v4022
  %v4024 = vpop.xlane.xlu0 %4023
  %v4025 = vsel %vm866, %v3737, 0.0
  %4026 = vadd.xlane.f32.xlu0 %v4025
  %v4027 = vpop.xlane.xlu0 %4026
  %v4028 = vsel %vm866, %v3739, 0.0
  %4029 = vadd.xlane.f32.xlu0 %v4028
  %v4030 = vpop.xlane.xlu0 %4029
  %v4031 = vsel %vm866, %v3741, 0.0
  %4032 = vadd.xlane.f32.xlu0 %v4031
  %v4033 = vpop.xlane.xlu0 %4032
  %v4034 = vsel %vm866, %v3743, 0.0
  %4035 = vadd.xlane.f32.xlu0 %v4034
  %v4036 = vpop.xlane.xlu0 %4035
  %v4037 = vsel %vm866, %v3745, 0.0
  %4038 = vadd.xlane.f32.xlu0 %v4037
  %v4039 = vpop.xlane.xlu0 %4038
  %v4040 = vsel %vm866, %v3747, 0.0
  %4041 = vadd.xlane.f32.xlu0 %v4040
  %v4042 = vpop.xlane.xlu0 %4041
  %v4043 = vsel %vm866, %v3749, 0.0
  %4044 = vadd.xlane.f32.xlu0 %v4043
  %v4045 = vpop.xlane.xlu0 %4044
  %v4046 = vsel %vm866, %v3751, 0.0
  %4047 = vadd.xlane.f32.xlu0 %v4046
  %v4048 = vpop.xlane.xlu0 %4047
  %v4049 = vsel %vm866, %v3753, 0.0
  %4050 = vadd.xlane.f32.xlu0 %v4049
  %v4051 = vpop.xlane.xlu0 %4050
  %v4052 = vsel %vm866, %v3755, 0.0
  %4053 = vadd.xlane.f32.xlu0 %v4052
  %v4054 = vpop.xlane.xlu0 %4053
  %v4055 = vsel %vm866, %v3757, 0.0
  %4056 = vadd.xlane.f32.xlu0 %v4055
  %v4057 = vpop.xlane.xlu0 %4056
  %v4058 = vsel %vm866, %v3759, 0.0
  %4059 = vadd.xlane.f32.xlu0 %v4058
  %v4060 = vpop.xlane.xlu0 %4059
  %v4061 = vsel %vm866, %v3761, 0.0
  %4062 = vadd.xlane.f32.xlu0 %v4061
  %v4063 = vpop.xlane.xlu0 %4062
  %v4064 = vsel %vm866, %v3763, 0.0
  %4065 = vadd.xlane.f32.xlu0 %v4064
  %v4066 = vpop.xlane.xlu0 %4065
  %v4067 = vsel %vm866, %v3765, 0.0
  %4068 = vadd.xlane.f32.xlu0 %v4067
  %v4069 = vpop.xlane.xlu0 %4068
  %v4070 = vsel %vm866, %v3767, 0.0
  %4071 = vadd.xlane.f32.xlu0 %v4070
  %v4072 = vpop.xlane.xlu0 %4071
  %v4073 = vsel %vm866, %v3769, 0.0
  %4074 = vadd.xlane.f32.xlu0 %v4073
  %v4075 = vpop.xlane.xlu0 %4074
  %v4076 = vsel %vm866, %v3771, 0.0
  %4077 = vadd.xlane.f32.xlu0 %v4076
  %v4078 = vpop.xlane.xlu0 %4077
  %v4079 = vsel %vm866, %v3773, 0.0
  %4080 = vadd.xlane.f32.xlu0 %v4079
  %v4081 = vpop.xlane.xlu0 %4080
  %v4082 = vsel %vm866, %v3775, 0.0
  %4083 = vadd.xlane.f32.xlu0 %v4082
  %v4084 = vpop.xlane.xlu0 %4083
  %v4085 = vsel %vm866, %v3777, 0.0
  %4086 = vadd.xlane.f32.xlu0 %v4085
  %v4087 = vpop.xlane.xlu0 %4086
  %v4088 = vsel %vm866, %v3779, 0.0
  %4089 = vadd.xlane.f32.xlu0 %v4088
  %v4090 = vpop.xlane.xlu0 %4089
  %v4091 = vsel %vm866, %v3781, 0.0
  %4092 = vadd.xlane.f32.xlu0 %v4091
  %v4093 = vpop.xlane.xlu0 %4092
  %v4094 = vsel %vm866, %v3783, 0.0
  %4095 = vadd.xlane.f32.xlu0 %v4094
  %v4096 = vpop.xlane.xlu0 %4095
  %v4097 = vsel %vm866, %v3785, 0.0
  %4098 = vadd.xlane.f32.xlu0 %v4097
  %v4099 = vpop.xlane.xlu0 %4098
  %v4100 = vsel %vm866, %v3787, 0.0
  %4101 = vadd.xlane.f32.xlu0 %v4100
  %v4102 = vpop.xlane.xlu0 %4101
  %v4103 = vsel %vm866, %v3789, 0.0
  %4104 = vadd.xlane.f32.xlu0 %v4103
  %v4105 = vpop.xlane.xlu0 %4104
  %v4106 = vsel %vm866, %v3791, 0.0
  %4107 = vadd.xlane.f32.xlu0 %v4106
  %v4108 = vpop.xlane.xlu0 %4107
  %v4109 = vsel %vm866, %v3793, 0.0
  %4110 = vadd.xlane.f32.xlu0 %v4109
  %v4111 = vpop.xlane.xlu0 %4110
  %v4112 = vsel %vm866, %v3795, 0.0
  %4113 = vadd.xlane.f32.xlu0 %v4112
  %v4114 = vpop.xlane.xlu0 %4113
  %v4115 = vsel %vm866, %v3797, 0.0
  %4116 = vadd.xlane.f32.xlu0 %v4115
  %v4117 = vpop.xlane.xlu0 %4116
  %v4118 = vsel %vm866, %v3799, 0.0
  %4119 = vadd.xlane.f32.xlu0 %v4118
  %v4120 = vpop.xlane.xlu0 %4119
  %v4121 = vsel %vm866, %v3801, 0.0
  %4122 = vadd.xlane.f32.xlu0 %v4121
  %v4123 = vpop.xlane.xlu0 %4122
  %v4124 = vsel %vm866, %v3803, 0.0
  %4125 = vadd.xlane.f32.xlu0 %v4124
  %v4126 = vpop.xlane.xlu0 %4125
  %v4127 = vsel %vm866, %v3805, 0.0
  %4128 = vadd.xlane.f32.xlu0 %v4127
  %v4129 = vpop.xlane.xlu0 %4128
  %v4130 = vsel %vm866, %v3807, 0.0
  %4131 = vadd.xlane.f32.xlu0 %v4130
  %v4132 = vpop.xlane.xlu0 %4131
  %v4133 = vsel %vm866, %v3809, 0.0
  %4134 = vadd.xlane.f32.xlu0 %v4133
  %v4135 = vpop.xlane.xlu0 %4134
  %v4136 = vsel %vm866, %v3811, 0.0
  %4137 = vadd.xlane.f32.xlu0 %v4136
  %v4138 = vpop.xlane.xlu0 %4137
  %v4139 = vsel %vm866, %v3813, 0.0
  %4140 = vadd.xlane.f32.xlu0 %v4139
  %v4141 = vpop.xlane.xlu0 %4140
  %v4142 = vsel %vm866, %v3815, 0.0
  %4143 = vadd.xlane.f32.xlu0 %v4142
  %v4144 = vpop.xlane.xlu0 %4143
  %v4145 = vsel %vm866, %v3817, 0.0
  %4146 = vadd.xlane.f32.xlu0 %v4145
  %v4147 = vpop.xlane.xlu0 %4146
  %v4148 = vsel %vm866, %v3819, 0.0
  %4149 = vadd.xlane.f32.xlu0 %v4148
  %v4150 = vpop.xlane.xlu0 %4149
  %v4151 = vsel %vm866, %v3821, 0.0
  %4152 = vadd.xlane.f32.xlu0 %v4151
  %v4153 = vpop.xlane.xlu0 %4152
  %v4154 = vsel %vm866, %v3823, 0.0
  %4155 = vadd.xlane.f32.xlu0 %v4154
  %v4156 = vpop.xlane.xlu0 %4155
  %v4157 = vsel %vm866, %v3825, 0.0
  %4158 = vadd.xlane.f32.xlu0 %v4157
  %v4159 = vpop.xlane.xlu0 %4158
  %v4160 = vsel %vm866, %v3827, 0.0
  %4161 = vadd.xlane.f32.xlu0 %v4160
  %v4162 = vpop.xlane.xlu0 %4161
  %v4163 = vsel %vm866, %v3829, 0.0
  %4164 = vadd.xlane.f32.xlu0 %v4163
  %v4165 = vpop.xlane.xlu0 %4164
  %v4166 = vsel %vm866, %v3831, 0.0
  %4167 = vadd.xlane.f32.xlu0 %v4166
  %v4168 = vpop.xlane.xlu0 %4167
  %v4169 = vsel %vm866, %v3833, 0.0
  %4170 = vadd.xlane.f32.xlu0 %v4169
  %v4171 = vpop.xlane.xlu0 %4170
  %v4172 = vsel %vm866, %v3835, 0.0
  %4173 = vadd.xlane.f32.xlu0 %v4172
  %v4174 = vpop.xlane.xlu0 %4173
  %v4175 = vsel %vm866, %v3837, 0.0
  %4176 = vadd.xlane.f32.xlu0 %v4175
  %v4177 = vpop.xlane.xlu0 %4176
  %v4178 = vsel %vm866, %v3839, 0.0
  %4179 = vadd.xlane.f32.xlu0 %v4178
  %v4180 = vpop.xlane.xlu0 %4179
  %v4181 = vsel %vm866, %v3841, 0.0
  %4182 = vadd.xlane.f32.xlu0 %v4181
  %v4183 = vpop.xlane.xlu0 %4182
  %v4184 = vsel %vm866, %v3843, 0.0
  %4185 = vadd.xlane.f32.xlu0 %v4184
  %v4186 = vpop.xlane.xlu0 %4185
  %v4187 = vsel %vm866, %v3845, 0.0
  %4188 = vadd.xlane.f32.xlu0 %v4187
  %v4189 = vpop.xlane.xlu0 %4188
  %v4190 = vsel %vm866, %v3847, 0.0
  %4191 = vadd.xlane.f32.xlu0 %v4190
  %v4192 = vpop.xlane.xlu0 %4191
  %v4193 = vsel %vm866, %v3849, 0.0
  %4194 = vadd.xlane.f32.xlu0 %v4193
  %v4195 = vpop.xlane.xlu0 %4194
  %v4196 = vsel %vm866, %v3851, 0.0
  %4197 = vadd.xlane.f32.xlu0 %v4196
  %v4198 = vpop.xlane.xlu0 %4197
  %v4199 = vsel %vm866, %v3853, 0.0
  %4200 = vadd.xlane.f32.xlu0 %v4199
  %v4201 = vpop.xlane.xlu0 %4200
  %v4202 = vsel %vm866, %v3855, 0.0
  %4203 = vadd.xlane.f32.xlu0 %v4202
  %v4204 = vpop.xlane.xlu0 %4203
  %v4205 = vsel %vm866, %v3857, 0.0
  %4206 = vadd.xlane.f32.xlu0 %v4205
  %v4207 = vpop.xlane.xlu0 %4206
  %v4208 = vsel %vm866, %v3859, 0.0
  %4209 = vadd.xlane.f32.xlu0 %v4208
  %v4210 = vpop.xlane.xlu0 %4209
  %v4211 = vsel %vm866, %v3861, 0.0
  %4212 = vadd.xlane.f32.xlu0 %v4211
  %v4213 = vpop.xlane.xlu0 %4212
  %v4214 = vsel %vm866, %v3863, 0.0
  %4215 = vadd.xlane.f32.xlu0 %v4214
  %v4216 = vpop.xlane.xlu0 %4215
  %v4217 = vsel %vm866, %v3865, 0.0
  %4218 = vadd.xlane.f32.xlu0 %v4217
  %v4219 = vpop.xlane.xlu0 %4218
  %v4220 = vsel %vm866, %v3867, 0.0
  %4221 = vadd.xlane.f32.xlu0 %v4220
  %v4222 = vpop.xlane.xlu0 %4221
  %v4223 = vsel %vm866, %v3869, 0.0
  %4224 = vadd.xlane.f32.xlu0 %v4223
  %v4225 = vpop.xlane.xlu0 %4224
  %v4226 = vsel %vm866, %v3871, 0.0
  %4227 = vadd.xlane.f32.xlu0 %v4226
  %v4228 = vpop.xlane.xlu0 %4227
  %v4229 = vsel %vm866, %v3873, 0.0
  %4230 = vadd.xlane.f32.xlu0 %v4229
  %v4231 = vpop.xlane.xlu0 %4230
  %v4232 = vsel %vm866, %v3875, 0.0
  %4233 = vadd.xlane.f32.xlu0 %v4232
  %v4234 = vpop.xlane.xlu0 %4233
  %v4235 = vsel %vm866, %v3877, 0.0
  %4236 = vadd.xlane.f32.xlu0 %v4235
  %v4237 = vpop.xlane.xlu0 %4236
  %v4238 = vsel %vm866, %v3879, 0.0
  %4239 = vadd.xlane.f32.xlu0 %v4238
  %v4240 = vpop.xlane.xlu0 %4239
  %v4241 = vsel %vm866, %v3881, 0.0
  %4242 = vadd.xlane.f32.xlu0 %v4241
  %v4243 = vpop.xlane.xlu0 %4242
  %v4244 = vsel %vm866, %v3883, 0.0
  %4245 = vadd.xlane.f32.xlu0 %v4244
  %v4246 = vpop.xlane.xlu0 %4245
  %v4247 = vsel %vm866, %v3885, 0.0
  %4248 = vadd.xlane.f32.xlu0 %v4247
  %v4249 = vpop.xlane.xlu0 %4248
  %v4250 = vsel %vm866, %v3887, 0.0
  %4251 = vadd.xlane.f32.xlu0 %v4250
  %v4252 = vpop.xlane.xlu0 %4251
  %v4253 = vsel %vm866, %v3889, 0.0
  %4254 = vadd.xlane.f32.xlu0 %v4253
  %v4255 = vpop.xlane.xlu0 %4254
  %v4256 = vsel %vm866, %v3891, 0.0
  %4257 = vadd.xlane.f32.xlu0 %v4256
  %v4258 = vpop.xlane.xlu0 %4257
  %v4259 = vsel %vm866, %v3893, 0.0
  %4260 = vadd.xlane.f32.xlu0 %v4259
  %v4261 = vpop.xlane.xlu0 %4260
  %v4262 = vsel %vm866, %v3895, 0.0
  %4263 = vadd.xlane.f32.xlu0 %v4262
  %v4264 = vpop.xlane.xlu0 %4263
  %v4265 = vsel %vm866, %v3897, 0.0
  %4266 = vadd.xlane.f32.xlu0 %v4265
  %v4267 = vpop.xlane.xlu0 %4266
  %v4268 = vsel %vm866, %v3899, 0.0
  %4269 = vadd.xlane.f32.xlu0 %v4268
  %v4270 = vpop.xlane.xlu0 %4269
  %v4271 = vsel %vm866, %v3901, 0.0
  %4272 = vadd.xlane.f32.xlu0 %v4271
  %v4273 = vpop.xlane.xlu0 %4272
  %v4274 = vsel %vm866, %v3903, 0.0
  %4275 = vadd.xlane.f32.xlu0 %v4274
  %v4276 = vpop.xlane.xlu0 %4275
  %v4277 = vsel %vm866, %v3905, 0.0
  %4278 = vadd.xlane.f32.xlu0 %v4277
  %v4279 = vpop.xlane.xlu0 %4278
  %v4280 = vsel %vm866, %v3907, 0.0
  %4281 = vadd.xlane.f32.xlu0 %v4280
  %v4282 = vpop.xlane.xlu0 %4281
  %v4283 = vsel %vm866, %v3909, 0.0
  %4284 = vadd.xlane.f32.xlu0 %v4283
  %v4285 = vpop.xlane.xlu0 %4284
  %v4286 = vsel %vm866, %v3911, 0.0
  %4287 = vadd.xlane.f32.xlu0 %v4286
  %v4288 = vpop.xlane.xlu0 %4287
  %v4289 = vsel %vm866, %v3913, 0.0
  %4290 = vadd.xlane.f32.xlu0 %v4289
  %v4291 = vpop.xlane.xlu0 %4290
  %v4292 = vsel %vm866, %v3915, 0.0
  %4293 = vadd.xlane.f32.xlu0 %v4292
  %v4294 = vpop.xlane.xlu0 %4293
  %v4295 = vsel %vm866, %v3917, 0.0
  %4296 = vadd.xlane.f32.xlu0 %v4295
  %v4297 = vpop.xlane.xlu0 %4296
  %v4298 = vsel %vm866, %v3919, 0.0
  %4299 = vadd.xlane.f32.xlu0 %v4298
  %v4300 = vpop.xlane.xlu0 %4299
  %v4301 = vsel %vm866, %v3921, 0.0
  %4302 = vadd.xlane.f32.xlu0 %v4301
  %v4303 = vpop.xlane.xlu0 %4302
  %v4304 = vsel %vm866, %v3923, 0.0
  %4305 = vadd.xlane.f32.xlu0 %v4304
  %v4306 = vpop.xlane.xlu0 %4305
  %v4307 = vsel %vm866, %v3925, 0.0
  %4308 = vadd.xlane.f32.xlu0 %v4307
  %v4309 = vpop.xlane.xlu0 %4308
  %v4310 = vrcp.pop %v3928
  %v4311 = vrcp.pop %v3931
  %v4312 = vrcp.pop %v3934
  %v4313 = vrcp.pop %v3937
  %v4314 = vrcp.pop %v3940
  %v4315 = vrcp.pop %v3943
  %v4316 = vrcp.pop %v3946
  %v4317 = vrcp.pop %v3949
  %v4318 = vrcp.pop %v3952
  %v4319 = vrcp.pop %v3955
  %v4320 = vrcp.pop %v3958
  %v4321 = vrcp.pop %v3961
  %v4322 = vrcp.pop %v3964
  %v4323 = vrcp.pop %v3967
  %v4324 = vrcp.pop %v3970
  %v4325 = vrcp.pop %v3973
  %v4326 = vrcp.pop %v3976
  %v4327 = vrcp.pop %v3979
  %v4328 = vrcp.pop %v3982
  %v4329 = vrcp.pop %v3985
  %v4330 = vrcp.pop %v3988
  %v4331 = vrcp.pop %v3991
  %v4332 = vrcp.pop %v3994
  %v4333 = vrcp.pop %v3997
  %v4334 = vrcp.pop %v4000
  %v4335 = vrcp.pop %v4003
  %v4336 = vrcp.pop %v4006
  %v4337 = vrcp.pop %v4009
  %v4338 = vrcp.pop %v4012
  %v4339 = vrcp.pop %v4015
  %v4340 = vrcp.pop %v4018
  %v4341 = vrcp.pop %v4021
  %v4342 = vrcp.pop %v4024
  %v4343 = vrcp.pop %v4027
  %v4344 = vrcp.pop %v4030
  %v4345 = vrcp.pop %v4033
  %v4346 = vrcp.pop %v4036
  %v4347 = vrcp.pop %v4039
  %v4348 = vrcp.pop %v4042
  %v4349 = vrcp.pop %v4045
  %v4350 = vrcp.pop %v4048
  %v4351 = vrcp.pop %v4051
  %v4352 = vrcp.pop %v4054
  %v4353 = vrcp.pop %v4057
  %v4354 = vrcp.pop %v4060
  %v4355 = vrcp.pop %v4063
  %v4356 = vrcp.pop %v4066
  %v4357 = vrcp.pop %v4069
  %v4358 = vrcp.pop %v4072
  %v4359 = vrcp.pop %v4075
  %v4360 = vrcp.pop %v4078
  %v4361 = vrcp.pop %v4081
  %v4362 = vrcp.pop %v4084
  %v4363 = vrcp.pop %v4087
  %v4364 = vrcp.pop %v4090
  %v4365 = vrcp.pop %v4093
  %v4366 = vrcp.pop %v4096
  %v4367 = vrcp.pop %v4099
  %v4368 = vrcp.pop %v4102
  %v4369 = vrcp.pop %v4105
  %v4370 = vrcp.pop %v4108
  %v4371 = vrcp.pop %v4111
  %v4372 = vrcp.pop %v4114
  %v4373 = vrcp.pop %v4117
  %v4374 = vrcp.pop %v4120
  %v4375 = vrcp.pop %v4123
  %v4376 = vrcp.pop %v4126
  %v4377 = vrcp.pop %v4129
  %v4378 = vrcp.pop %v4132
  %v4379 = vrcp.pop %v4135
  %v4380 = vrcp.pop %v4138
  %v4381 = vrcp.pop %v4141
  %v4382 = vrcp.pop %v4144
  %v4383 = vrcp.pop %v4147
  %v4384 = vrcp.pop %v4150
  %v4385 = vrcp.pop %v4153
  %v4386 = vrcp.pop %v4156
  %v4387 = vrcp.pop %v4159
  %v4388 = vrcp.pop %v4162
  %v4389 = vrcp.pop %v4165
  %v4390 = vrcp.pop %v4168
  %v4391 = vrcp.pop %v4171
  %v4392 = vrcp.pop %v4174
  %v4393 = vrcp.pop %v4177
  %v4394 = vrcp.pop %v4180
  %v4395 = vrcp.pop %v4183
  %v4396 = vrcp.pop %v4186
  %v4397 = vrcp.pop %v4189
  %v4398 = vrcp.pop %v4192
  %v4399 = vrcp.pop %v4195
  %v4400 = vrcp.pop %v4198
  %v4401 = vrcp.pop %v4201
  %v4402 = vrcp.pop %v4204
  %v4403 = vrcp.pop %v4207
  %v4404 = vrcp.pop %v4210
  %v4405 = vrcp.pop %v4213
  %v4406 = vrcp.pop %v4216
  %v4407 = vrcp.pop %v4219
  %v4408 = vrcp.pop %v4222
  %v4409 = vrcp.pop %v4225
  %v4410 = vrcp.pop %v4228
  %v4411 = vrcp.pop %v4231
  %v4412 = vrcp.pop %v4234
  %v4413 = vrcp.pop %v4237
  %v4414 = vrcp.pop %v4240
  %v4415 = vrcp.pop %v4243
  %v4416 = vrcp.pop %v4246
  %v4417 = vrcp.pop %v4249
  %v4418 = vrcp.pop %v4252
  %v4419 = vrcp.pop %v4255
  %v4420 = vrcp.pop %v4258
  %v4421 = vrcp.pop %v4261
  %v4422 = vrcp.pop %v4264
  %v4423 = vrcp.pop %v4267
  %v4424 = vrcp.pop %v4270
  %v4425 = vrcp.pop %v4273
  %v4426 = vrcp.pop %v4276
  %v4427 = vrcp.pop %v4279
  %v4428 = vrcp.pop %v4282
  %v4429 = vrcp.pop %v4285
  %v4430 = vrcp.pop %v4288
  %v4431 = vrcp.pop %v4291
  %v4432 = vrcp.pop %v4294
  %v4433 = vrcp.pop %v4297
  %v4434 = vrcp.pop %v4300
  %v4435 = vrcp.pop %v4303
  %v4436 = vrcp.pop %v4306
  %v4437 = vrcp.pop %v4309
  %v4438 = vmul.f32 %v3671, %v4310
  %v4439 = vmul.f32 %v3673, %v4311
  %v4440 = vmul.f32 %v3675, %v4312
  %v4441 = vmul.f32 %v3677, %v4313
  %v4442 = vmul.f32 %v3679, %v4314
  %v4443 = vmul.f32 %v3681, %v4315
  %v4444 = vmul.f32 %v3683, %v4316
  %v4445 = vmul.f32 %v3685, %v4317
  %v4446 = vmul.f32 %v3687, %v4318
  %v4447 = vmul.f32 %v3689, %v4319
  %v4448 = vmul.f32 %v3691, %v4320
  %v4449 = vmul.f32 %v3693, %v4321
  %v4450 = vmul.f32 %v3695, %v4322
  %v4451 = vmul.f32 %v3697, %v4323
  %v4452 = vmul.f32 %v3699, %v4324
  %v4453 = vmul.f32 %v3701, %v4325
  %v4454 = vmul.f32 %v3703, %v4326
  %v4455 = vmul.f32 %v3705, %v4327
  %v4456 = vmul.f32 %v3707, %v4328
  %v4457 = vmul.f32 %v3709, %v4329
  %v4458 = vmul.f32 %v3711, %v4330
  %v4459 = vmul.f32 %v3713, %v4331
  %v4460 = vmul.f32 %v3715, %v4332
  %v4461 = vmul.f32 %v3717, %v4333
  %v4462 = vmul.f32 %v3719, %v4334
  %v4463 = vmul.f32 %v3721, %v4335
  %v4464 = vmul.f32 %v3723, %v4336
  %v4465 = vmul.f32 %v3725, %v4337
  %v4466 = vmul.f32 %v3727, %v4338
  %v4467 = vmul.f32 %v3729, %v4339
  %v4468 = vmul.f32 %v3731, %v4340
  %v4469 = vmul.f32 %v3733, %v4341
  %v4470 = vmul.f32 %v3735, %v4342
  %v4471 = vmul.f32 %v3737, %v4343
  %v4472 = vmul.f32 %v3739, %v4344
  %v4473 = vmul.f32 %v3741, %v4345
  %v4474 = vmul.f32 %v3743, %v4346
  %v4475 = vmul.f32 %v3745, %v4347
  %v4476 = vmul.f32 %v3747, %v4348
  %v4477 = vmul.f32 %v3749, %v4349
  %v4478 = vmul.f32 %v3751, %v4350
  %v4479 = vmul.f32 %v3753, %v4351
  %v4480 = vmul.f32 %v3755, %v4352
  %v4481 = vmul.f32 %v3757, %v4353
  %v4482 = vmul.f32 %v3759, %v4354
  %v4483 = vmul.f32 %v3761, %v4355
  %v4484 = vmul.f32 %v3763, %v4356
  %v4485 = vmul.f32 %v3765, %v4357
  %v4486 = vmul.f32 %v3767, %v4358
  %v4487 = vmul.f32 %v3769, %v4359
  %v4488 = vmul.f32 %v3771, %v4360
  %v4489 = vmul.f32 %v3773, %v4361
  %v4490 = vmul.f32 %v3775, %v4362
  %v4491 = vmul.f32 %v3777, %v4363
  %v4492 = vmul.f32 %v3779, %v4364
  %v4493 = vmul.f32 %v3781, %v4365
  %v4494 = vmul.f32 %v3783, %v4366
  %v4495 = vmul.f32 %v3785, %v4367
  %v4496 = vmul.f32 %v3787, %v4368
  %v4497 = vmul.f32 %v3789, %v4369
  %v4498 = vmul.f32 %v3791, %v4370
  %v4499 = vmul.f32 %v3793, %v4371
  %v4500 = vmul.f32 %v3795, %v4372
  %v4501 = vmul.f32 %v3797, %v4373
  %v4502 = vmul.f32 %v3799, %v4374
  %v4503 = vmul.f32 %v3801, %v4375
  %v4504 = vmul.f32 %v3803, %v4376
  %v4505 = vmul.f32 %v3805, %v4377
  %v4506 = vmul.f32 %v3807, %v4378
  %v4507 = vmul.f32 %v3809, %v4379
  %v4508 = vmul.f32 %v3811, %v4380
  %v4509 = vmul.f32 %v3813, %v4381
  %v4510 = vmul.f32 %v3815, %v4382
  %v4511 = vmul.f32 %v3817, %v4383
  %v4512 = vmul.f32 %v3819, %v4384
  %v4513 = vmul.f32 %v3821, %v4385
  %v4514 = vmul.f32 %v3823, %v4386
  %v4515 = vmul.f32 %v3825, %v4387
  %v4516 = vmul.f32 %v3827, %v4388
  %v4517 = vmul.f32 %v3829, %v4389
  %v4518 = vmul.f32 %v3831, %v4390
  %v4519 = vmul.f32 %v3833, %v4391
  %v4520 = vmul.f32 %v3835, %v4392
  %v4521 = vmul.f32 %v3837, %v4393
  %v4522 = vmul.f32 %v3839, %v4394
  %v4523 = vmul.f32 %v3841, %v4395
  %v4524 = vmul.f32 %v3843, %v4396
  %v4525 = vmul.f32 %v3845, %v4397
  %v4526 = vmul.f32 %v3847, %v4398
  %v4527 = vmul.f32 %v3849, %v4399
  %v4528 = vmul.f32 %v3851, %v4400
  %v4529 = vmul.f32 %v3853, %v4401
  %v4530 = vmul.f32 %v3855, %v4402
  %v4531 = vmul.f32 %v3857, %v4403
  %v4532 = vmul.f32 %v3859, %v4404
  %v4533 = vmul.f32 %v3861, %v4405
  %v4534 = vmul.f32 %v3863, %v4406
  %v4535 = vmul.f32 %v3865, %v4407
  %v4536 = vmul.f32 %v3867, %v4408
  %v4537 = vmul.f32 %v3869, %v4409
  %v4538 = vmul.f32 %v3871, %v4410
  %v4539 = vmul.f32 %v3873, %v4411
  %v4540 = vmul.f32 %v3875, %v4412
  %v4541 = vmul.f32 %v3877, %v4413
  %v4542 = vmul.f32 %v3879, %v4414
  %v4543 = vmul.f32 %v3881, %v4415
  %v4544 = vmul.f32 %v3883, %v4416
  %v4545 = vmul.f32 %v3885, %v4417
  %v4546 = vmul.f32 %v3887, %v4418
  %v4547 = vmul.f32 %v3889, %v4419
  %v4548 = vmul.f32 %v3891, %v4420
  %v4549 = vmul.f32 %v3893, %v4421
  %v4550 = vmul.f32 %v3895, %v4422
  %v4551 = vmul.f32 %v3897, %v4423
  %v4552 = vmul.f32 %v3899, %v4424
  %v4553 = vmul.f32 %v3901, %v4425
  %v4554 = vmul.f32 %v3903, %v4426
  %v4555 = vmul.f32 %v3905, %v4427
  %v4556 = vmul.f32 %v3907, %v4428
  %v4557 = vmul.f32 %v3909, %v4429
  %v4558 = vmul.f32 %v3911, %v4430
  %v4559 = vmul.f32 %v3913, %v4431
  %v4560 = vmul.f32 %v3915, %v4432
  %v4561 = vmul.f32 %v3917, %v4433
  %v4562 = vmul.f32 %v3919, %v4434
  %v4563 = vmul.f32 %v3921, %v4435
  %v4564 = vmul.f32 %v3923, %v4436
  %v4565 = vmul.f32 %v3925, %v4437
  %4566 = vrot.lane.b32.xlu0 %v178, 64
  %v4567 = vpop.permute.xlu0 %4566
  %4568 = vrot.lane.b32.xlu0 %v181, 64
  %v4569 = vpop.permute.xlu0 %4568
  %v4573 = vsel %vm866, %v4438, 0
  %v4576 = vsel %vm866, %v4439, 0
  %4578 = vmatpush.msra.mxu0 0.0
  %4579 = vmatpush.msra.mxu0 0.0
  %4580 = vmatpush.msra.mxu0 0.0
  %4581 = vmatpush.msra.mxu0 0.0
  %4582 = vmatpush.msra.mxu0 0.0
  %4583 = vmatpush.msra.mxu0 0.0
  %4584 = vmatpush.msra.mxu0 0.0
  %4585 = vmatpush.msra.mxu0 0.0
  %4586 = vmatpush.msra.mxu0 0.0
  %4587 = vmatpush.msra.mxu0 0.0
  %4588 = vmatpush.msra.mxu0 0.0
  %4589 = vmatpush.msra.mxu0 0.0
  %4590 = vmatpush.msra.mxu0 0.0
  %4591 = vmatpush.msra.mxu0 0.0
  %4592 = vmatpush.msra.mxu0 %v4569
  %4593 = vmatpush.msra.mxu0 %v4567
  %4594 = vmatmul.f32.gmra.mxu0 %v4573
  %v4595 = vpop.f32.mrf.mxu0
  %v4596 = vadd.f32 0.0, %v4595
  %4597 = vmatmul.f32.gmra.mxu0 %v4576
  %v4598 = vpop.f32.mrf.mxu0
  %v4599 = vadd.f32 0.0, %v4598
  %4600 = vdwg.mxu0
  %4601 = vrot.lane.b32.xlu0 %v184, 64
  %v4602 = vpop.permute.xlu0 %4601
  %4603 = vrot.lane.b32.xlu0 %v187, 64
  %v4604 = vpop.permute.xlu0 %4603
  %v4608 = vsel %vm866, %v4440, 0
  %v4611 = vsel %vm866, %v4441, 0
  %4613 = vmatpush.msra.mxu0 0.0
  %4614 = vmatpush.msra.mxu0 0.0
  %4615 = vmatpush.msra.mxu0 0.0
  %4616 = vmatpush.msra.mxu0 0.0
  %4617 = vmatpush.msra.mxu0 0.0
  %4618 = vmatpush.msra.mxu0 0.0
  %4619 = vmatpush.msra.mxu0 0.0
  %4620 = vmatpush.msra.mxu0 0.0
  %4621 = vmatpush.msra.mxu0 0.0
  %4622 = vmatpush.msra.mxu0 0.0
  %4623 = vmatpush.msra.mxu0 0.0
  %4624 = vmatpush.msra.mxu0 0.0
  %4625 = vmatpush.msra.mxu0 0.0
  %4626 = vmatpush.msra.mxu0 0.0
  %4627 = vmatpush.msra.mxu0 %v4604
  %4628 = vmatpush.msra.mxu0 %v4602
  %4629 = vmatmul.f32.gmra.mxu0 %v4608
  %v4630 = vpop.f32.mrf.mxu0
  %v4631 = vadd.f32 0.0, %v4630
  %4632 = vmatmul.f32.gmra.mxu0 %v4611
  %v4633 = vpop.f32.mrf.mxu0
  %v4634 = vadd.f32 0.0, %v4633
  %4635 = vdwg.mxu0
  %4636 = vrot.lane.b32.xlu0 %v190, 64
  %v4637 = vpop.permute.xlu0 %4636
  %4638 = vrot.lane.b32.xlu0 %v193, 64
  %v4639 = vpop.permute.xlu0 %4638
  %v4643 = vsel %vm866, %v4442, 0
  %v4646 = vsel %vm866, %v4443, 0
  %4648 = vmatpush.msra.mxu0 0.0
  %4649 = vmatpush.msra.mxu0 0.0
  %4650 = vmatpush.msra.mxu0 0.0
  %4651 = vmatpush.msra.mxu0 0.0
  %4652 = vmatpush.msra.mxu0 0.0
  %4653 = vmatpush.msra.mxu0 0.0
  %4654 = vmatpush.msra.mxu0 0.0
  %4655 = vmatpush.msra.mxu0 0.0
  %4656 = vmatpush.msra.mxu0 0.0
  %4657 = vmatpush.msra.mxu0 0.0
  %4658 = vmatpush.msra.mxu0 0.0
  %4659 = vmatpush.msra.mxu0 0.0
  %4660 = vmatpush.msra.mxu0 0.0
  %4661 = vmatpush.msra.mxu0 0.0
  %4662 = vmatpush.msra.mxu0 %v4639
  %4663 = vmatpush.msra.mxu0 %v4637
  %4664 = vmatmul.f32.gmra.mxu0 %v4643
  %v4665 = vpop.f32.mrf.mxu0
  %v4666 = vadd.f32 0.0, %v4665
  %4667 = vmatmul.f32.gmra.mxu0 %v4646
  %v4668 = vpop.f32.mrf.mxu0
  %v4669 = vadd.f32 0.0, %v4668
  %4670 = vdwg.mxu0
  %4671 = vrot.lane.b32.xlu0 %v196, 64
  %v4672 = vpop.permute.xlu0 %4671
  %4673 = vrot.lane.b32.xlu0 %v199, 64
  %v4674 = vpop.permute.xlu0 %4673
  %v4678 = vsel %vm866, %v4444, 0
  %v4681 = vsel %vm866, %v4445, 0
  %4683 = vmatpush.msra.mxu0 0.0
  %4684 = vmatpush.msra.mxu0 0.0
  %4685 = vmatpush.msra.mxu0 0.0
  %4686 = vmatpush.msra.mxu0 0.0
  %4687 = vmatpush.msra.mxu0 0.0
  %4688 = vmatpush.msra.mxu0 0.0
  %4689 = vmatpush.msra.mxu0 0.0
  %4690 = vmatpush.msra.mxu0 0.0
  %4691 = vmatpush.msra.mxu0 0.0
  %4692 = vmatpush.msra.mxu0 0.0
  %4693 = vmatpush.msra.mxu0 0.0
  %4694 = vmatpush.msra.mxu0 0.0
  %4695 = vmatpush.msra.mxu0 0.0
  %4696 = vmatpush.msra.mxu0 0.0
  %4697 = vmatpush.msra.mxu0 %v4674
  %4698 = vmatpush.msra.mxu0 %v4672
  %4699 = vmatmul.f32.gmra.mxu0 %v4678
  %v4700 = vpop.f32.mrf.mxu0
  %v4701 = vadd.f32 0.0, %v4700
  %4702 = vmatmul.f32.gmra.mxu0 %v4681
  %v4703 = vpop.f32.mrf.mxu0
  %v4704 = vadd.f32 0.0, %v4703
  %4705 = vdwg.mxu0
  %4706 = vrot.lane.b32.xlu0 %v202, 64
  %v4707 = vpop.permute.xlu0 %4706
  %4708 = vrot.lane.b32.xlu0 %v205, 64
  %v4709 = vpop.permute.xlu0 %4708
  %v4713 = vsel %vm866, %v4446, 0
  %v4716 = vsel %vm866, %v4447, 0
  %4718 = vmatpush.msra.mxu0 0.0
  %4719 = vmatpush.msra.mxu0 0.0
  %4720 = vmatpush.msra.mxu0 0.0
  %4721 = vmatpush.msra.mxu0 0.0
  %4722 = vmatpush.msra.mxu0 0.0
  %4723 = vmatpush.msra.mxu0 0.0
  %4724 = vmatpush.msra.mxu0 0.0
  %4725 = vmatpush.msra.mxu0 0.0
  %4726 = vmatpush.msra.mxu0 0.0
  %4727 = vmatpush.msra.mxu0 0.0
  %4728 = vmatpush.msra.mxu0 0.0
  %4729 = vmatpush.msra.mxu0 0.0
  %4730 = vmatpush.msra.mxu0 0.0
  %4731 = vmatpush.msra.mxu0 0.0
  %4732 = vmatpush.msra.mxu0 %v4709
  %4733 = vmatpush.msra.mxu0 %v4707
  %4734 = vmatmul.f32.gmra.mxu0 %v4713
  %v4735 = vpop.f32.mrf.mxu0
  %v4736 = vadd.f32 0.0, %v4735
  %4737 = vmatmul.f32.gmra.mxu0 %v4716
  %v4738 = vpop.f32.mrf.mxu0
  %v4739 = vadd.f32 0.0, %v4738
  %4740 = vdwg.mxu0
  %4741 = vrot.lane.b32.xlu0 %v208, 64
  %v4742 = vpop.permute.xlu0 %4741
  %4743 = vrot.lane.b32.xlu0 %v211, 64
  %v4744 = vpop.permute.xlu0 %4743
  %v4748 = vsel %vm866, %v4448, 0
  %v4751 = vsel %vm866, %v4449, 0
  %4753 = vmatpush.msra.mxu0 0.0
  %4754 = vmatpush.msra.mxu0 0.0
  %4755 = vmatpush.msra.mxu0 0.0
  %4756 = vmatpush.msra.mxu0 0.0
  %4757 = vmatpush.msra.mxu0 0.0
  %4758 = vmatpush.msra.mxu0 0.0
  %4759 = vmatpush.msra.mxu0 0.0
  %4760 = vmatpush.msra.mxu0 0.0
  %4761 = vmatpush.msra.mxu0 0.0
  %4762 = vmatpush.msra.mxu0 0.0
  %4763 = vmatpush.msra.mxu0 0.0
  %4764 = vmatpush.msra.mxu0 0.0
  %4765 = vmatpush.msra.mxu0 0.0
  %4766 = vmatpush.msra.mxu0 0.0
  %4767 = vmatpush.msra.mxu0 %v4744
  %4768 = vmatpush.msra.mxu0 %v4742
  %4769 = vmatmul.f32.gmra.mxu0 %v4748
  %v4770 = vpop.f32.mrf.mxu0
  %v4771 = vadd.f32 0.0, %v4770
  %4772 = vmatmul.f32.gmra.mxu0 %v4751
  %v4773 = vpop.f32.mrf.mxu0
  %v4774 = vadd.f32 0.0, %v4773
  %4775 = vdwg.mxu0
  %4776 = vrot.lane.b32.xlu0 %v214, 64
  %v4777 = vpop.permute.xlu0 %4776
  %4778 = vrot.lane.b32.xlu0 %v217, 64
  %v4779 = vpop.permute.xlu0 %4778
  %v4783 = vsel %vm866, %v4450, 0
  %v4786 = vsel %vm866, %v4451, 0
  %4788 = vmatpush.msra.mxu0 0.0
  %4789 = vmatpush.msra.mxu0 0.0
  %4790 = vmatpush.msra.mxu0 0.0
  %4791 = vmatpush.msra.mxu0 0.0
  %4792 = vmatpush.msra.mxu0 0.0
  %4793 = vmatpush.msra.mxu0 0.0
  %4794 = vmatpush.msra.mxu0 0.0
  %4795 = vmatpush.msra.mxu0 0.0
  %4796 = vmatpush.msra.mxu0 0.0
  %4797 = vmatpush.msra.mxu0 0.0
  %4798 = vmatpush.msra.mxu0 0.0
  %4799 = vmatpush.msra.mxu0 0.0
  %4800 = vmatpush.msra.mxu0 0.0
  %4801 = vmatpush.msra.mxu0 0.0
  %4802 = vmatpush.msra.mxu0 %v4779
  %4803 = vmatpush.msra.mxu0 %v4777
  %4804 = vmatmul.f32.gmra.mxu0 %v4783
  %v4805 = vpop.f32.mrf.mxu0
  %v4806 = vadd.f32 0.0, %v4805
  %4807 = vmatmul.f32.gmra.mxu0 %v4786
  %v4808 = vpop.f32.mrf.mxu0
  %v4809 = vadd.f32 0.0, %v4808
  %4810 = vdwg.mxu0
  %4811 = vrot.lane.b32.xlu0 %v220, 64
  %v4812 = vpop.permute.xlu0 %4811
  %4813 = vrot.lane.b32.xlu0 %v223, 64
  %v4814 = vpop.permute.xlu0 %4813
  %v4818 = vsel %vm866, %v4452, 0
  %v4821 = vsel %vm866, %v4453, 0
  %4823 = vmatpush.msra.mxu0 0.0
  %4824 = vmatpush.msra.mxu0 0.0
  %4825 = vmatpush.msra.mxu0 0.0
  %4826 = vmatpush.msra.mxu0 0.0
  %4827 = vmatpush.msra.mxu0 0.0
  %4828 = vmatpush.msra.mxu0 0.0
  %4829 = vmatpush.msra.mxu0 0.0
  %4830 = vmatpush.msra.mxu0 0.0
  %4831 = vmatpush.msra.mxu0 0.0
  %4832 = vmatpush.msra.mxu0 0.0
  %4833 = vmatpush.msra.mxu0 0.0
  %4834 = vmatpush.msra.mxu0 0.0
  %4835 = vmatpush.msra.mxu0 0.0
  %4836 = vmatpush.msra.mxu0 0.0
  %4837 = vmatpush.msra.mxu0 %v4814
  %4838 = vmatpush.msra.mxu0 %v4812
  %4839 = vmatmul.f32.gmra.mxu0 %v4818
  %v4840 = vpop.f32.mrf.mxu0
  %v4841 = vadd.f32 0.0, %v4840
  %4842 = vmatmul.f32.gmra.mxu0 %v4821
  %v4843 = vpop.f32.mrf.mxu0
  %v4844 = vadd.f32 0.0, %v4843
  %4845 = vdwg.mxu0
  %4846 = vrot.lane.b32.xlu0 %v226, 64
  %v4847 = vpop.permute.xlu0 %4846
  %4848 = vrot.lane.b32.xlu0 %v229, 64
  %v4849 = vpop.permute.xlu0 %4848
  %v4853 = vsel %vm866, %v4454, 0
  %v4856 = vsel %vm866, %v4455, 0
  %4858 = vmatpush.msra.mxu0 0.0
  %4859 = vmatpush.msra.mxu0 0.0
  %4860 = vmatpush.msra.mxu0 0.0
  %4861 = vmatpush.msra.mxu0 0.0
  %4862 = vmatpush.msra.mxu0 0.0
  %4863 = vmatpush.msra.mxu0 0.0
  %4864 = vmatpush.msra.mxu0 0.0
  %4865 = vmatpush.msra.mxu0 0.0
  %4866 = vmatpush.msra.mxu0 0.0
  %4867 = vmatpush.msra.mxu0 0.0
  %4868 = vmatpush.msra.mxu0 0.0
  %4869 = vmatpush.msra.mxu0 0.0
  %4870 = vmatpush.msra.mxu0 0.0
  %4871 = vmatpush.msra.mxu0 0.0
  %4872 = vmatpush.msra.mxu0 %v4849
  %4873 = vmatpush.msra.mxu0 %v4847
  %4874 = vmatmul.f32.gmra.mxu0 %v4853
  %v4875 = vpop.f32.mrf.mxu0
  %v4876 = vadd.f32 0.0, %v4875
  %4877 = vmatmul.f32.gmra.mxu0 %v4856
  %v4878 = vpop.f32.mrf.mxu0
  %v4879 = vadd.f32 0.0, %v4878
  %4880 = vdwg.mxu0
  %4881 = vrot.lane.b32.xlu0 %v232, 64
  %v4882 = vpop.permute.xlu0 %4881
  %4883 = vrot.lane.b32.xlu0 %v235, 64
  %v4884 = vpop.permute.xlu0 %4883
  %v4888 = vsel %vm866, %v4456, 0
  %v4891 = vsel %vm866, %v4457, 0
  %4893 = vmatpush.msra.mxu0 0.0
  %4894 = vmatpush.msra.mxu0 0.0
  %4895 = vmatpush.msra.mxu0 0.0
  %4896 = vmatpush.msra.mxu0 0.0
  %4897 = vmatpush.msra.mxu0 0.0
  %4898 = vmatpush.msra.mxu0 0.0
  %4899 = vmatpush.msra.mxu0 0.0
  %4900 = vmatpush.msra.mxu0 0.0
  %4901 = vmatpush.msra.mxu0 0.0
  %4902 = vmatpush.msra.mxu0 0.0
  %4903 = vmatpush.msra.mxu0 0.0
  %4904 = vmatpush.msra.mxu0 0.0
  %4905 = vmatpush.msra.mxu0 0.0
  %4906 = vmatpush.msra.mxu0 0.0
  %4907 = vmatpush.msra.mxu0 %v4884
  %4908 = vmatpush.msra.mxu0 %v4882
  %4909 = vmatmul.f32.gmra.mxu0 %v4888
  %v4910 = vpop.f32.mrf.mxu0
  %v4911 = vadd.f32 0.0, %v4910
  %4912 = vmatmul.f32.gmra.mxu0 %v4891
  %v4913 = vpop.f32.mrf.mxu0
  %v4914 = vadd.f32 0.0, %v4913
  %4915 = vdwg.mxu0
  %4916 = vrot.lane.b32.xlu0 %v238, 64
  %v4917 = vpop.permute.xlu0 %4916
  %4918 = vrot.lane.b32.xlu0 %v241, 64
  %v4919 = vpop.permute.xlu0 %4918
  %v4923 = vsel %vm866, %v4458, 0
  %v4926 = vsel %vm866, %v4459, 0
  %4928 = vmatpush.msra.mxu0 0.0
  %4929 = vmatpush.msra.mxu0 0.0
  %4930 = vmatpush.msra.mxu0 0.0
  %4931 = vmatpush.msra.mxu0 0.0
  %4932 = vmatpush.msra.mxu0 0.0
  %4933 = vmatpush.msra.mxu0 0.0
  %4934 = vmatpush.msra.mxu0 0.0
  %4935 = vmatpush.msra.mxu0 0.0
  %4936 = vmatpush.msra.mxu0 0.0
  %4937 = vmatpush.msra.mxu0 0.0
  %4938 = vmatpush.msra.mxu0 0.0
  %4939 = vmatpush.msra.mxu0 0.0
  %4940 = vmatpush.msra.mxu0 0.0
  %4941 = vmatpush.msra.mxu0 0.0
  %4942 = vmatpush.msra.mxu0 %v4919
  %4943 = vmatpush.msra.mxu0 %v4917
  %4944 = vmatmul.f32.gmra.mxu0 %v4923
  %v4945 = vpop.f32.mrf.mxu0
  %v4946 = vadd.f32 0.0, %v4945
  %4947 = vmatmul.f32.gmra.mxu0 %v4926
  %v4948 = vpop.f32.mrf.mxu0
  %v4949 = vadd.f32 0.0, %v4948
  %4950 = vdwg.mxu0
  %4951 = vrot.lane.b32.xlu0 %v244, 64
  %v4952 = vpop.permute.xlu0 %4951
  %4953 = vrot.lane.b32.xlu0 %v247, 64
  %v4954 = vpop.permute.xlu0 %4953
  %v4958 = vsel %vm866, %v4460, 0
  %v4961 = vsel %vm866, %v4461, 0
  %4963 = vmatpush.msra.mxu0 0.0
  %4964 = vmatpush.msra.mxu0 0.0
  %4965 = vmatpush.msra.mxu0 0.0
  %4966 = vmatpush.msra.mxu0 0.0
  %4967 = vmatpush.msra.mxu0 0.0
  %4968 = vmatpush.msra.mxu0 0.0
  %4969 = vmatpush.msra.mxu0 0.0
  %4970 = vmatpush.msra.mxu0 0.0
  %4971 = vmatpush.msra.mxu0 0.0
  %4972 = vmatpush.msra.mxu0 0.0
  %4973 = vmatpush.msra.mxu0 0.0
  %4974 = vmatpush.msra.mxu0 0.0
  %4975 = vmatpush.msra.mxu0 0.0
  %4976 = vmatpush.msra.mxu0 0.0
  %4977 = vmatpush.msra.mxu0 %v4954
  %4978 = vmatpush.msra.mxu0 %v4952
  %4979 = vmatmul.f32.gmra.mxu0 %v4958
  %v4980 = vpop.f32.mrf.mxu0
  %v4981 = vadd.f32 0.0, %v4980
  %4982 = vmatmul.f32.gmra.mxu0 %v4961
  %v4983 = vpop.f32.mrf.mxu0
  %v4984 = vadd.f32 0.0, %v4983
  %4985 = vdwg.mxu0
  %4986 = vrot.lane.b32.xlu0 %v250, 64
  %v4987 = vpop.permute.xlu0 %4986
  %4988 = vrot.lane.b32.xlu0 %v253, 64
  %v4989 = vpop.permute.xlu0 %4988
  %v4993 = vsel %vm866, %v4462, 0
  %v4996 = vsel %vm866, %v4463, 0
  %4998 = vmatpush.msra.mxu0 0.0
  %4999 = vmatpush.msra.mxu0 0.0
  %5000 = vmatpush.msra.mxu0 0.0
  %5001 = vmatpush.msra.mxu0 0.0
  %5002 = vmatpush.msra.mxu0 0.0
  %5003 = vmatpush.msra.mxu0 0.0
  %5004 = vmatpush.msra.mxu0 0.0
  %5005 = vmatpush.msra.mxu0 0.0
  %5006 = vmatpush.msra.mxu0 0.0
  %5007 = vmatpush.msra.mxu0 0.0
  %5008 = vmatpush.msra.mxu0 0.0
  %5009 = vmatpush.msra.mxu0 0.0
  %5010 = vmatpush.msra.mxu0 0.0
  %5011 = vmatpush.msra.mxu0 0.0
  %5012 = vmatpush.msra.mxu0 %v4989
  %5013 = vmatpush.msra.mxu0 %v4987
  %5014 = vmatmul.f32.gmra.mxu0 %v4993
  %v5015 = vpop.f32.mrf.mxu0
  %v5016 = vadd.f32 0.0, %v5015
  %5017 = vmatmul.f32.gmra.mxu0 %v4996
  %v5018 = vpop.f32.mrf.mxu0
  %v5019 = vadd.f32 0.0, %v5018
  %5020 = vdwg.mxu0
  %5021 = vrot.lane.b32.xlu0 %v256, 64
  %v5022 = vpop.permute.xlu0 %5021
  %5023 = vrot.lane.b32.xlu0 %v259, 64
  %v5024 = vpop.permute.xlu0 %5023
  %v5028 = vsel %vm866, %v4464, 0
  %v5031 = vsel %vm866, %v4465, 0
  %5033 = vmatpush.msra.mxu0 0.0
  %5034 = vmatpush.msra.mxu0 0.0
  %5035 = vmatpush.msra.mxu0 0.0
  %5036 = vmatpush.msra.mxu0 0.0
  %5037 = vmatpush.msra.mxu0 0.0
  %5038 = vmatpush.msra.mxu0 0.0
  %5039 = vmatpush.msra.mxu0 0.0
  %5040 = vmatpush.msra.mxu0 0.0
  %5041 = vmatpush.msra.mxu0 0.0
  %5042 = vmatpush.msra.mxu0 0.0
  %5043 = vmatpush.msra.mxu0 0.0
  %5044 = vmatpush.msra.mxu0 0.0
  %5045 = vmatpush.msra.mxu0 0.0
  %5046 = vmatpush.msra.mxu0 0.0
  %5047 = vmatpush.msra.mxu0 %v5024
  %5048 = vmatpush.msra.mxu0 %v5022
  %5049 = vmatmul.f32.gmra.mxu0 %v5028
  %v5050 = vpop.f32.mrf.mxu0
  %v5051 = vadd.f32 0.0, %v5050
  %5052 = vmatmul.f32.gmra.mxu0 %v5031
  %v5053 = vpop.f32.mrf.mxu0
  %v5054 = vadd.f32 0.0, %v5053
  %5055 = vdwg.mxu0
  %5056 = vrot.lane.b32.xlu0 %v262, 64
  %v5057 = vpop.permute.xlu0 %5056
  %5058 = vrot.lane.b32.xlu0 %v265, 64
  %v5059 = vpop.permute.xlu0 %5058
  %v5063 = vsel %vm866, %v4466, 0
  %v5066 = vsel %vm866, %v4467, 0
  %5068 = vmatpush.msra.mxu0 0.0
  %5069 = vmatpush.msra.mxu0 0.0
  %5070 = vmatpush.msra.mxu0 0.0
  %5071 = vmatpush.msra.mxu0 0.0
  %5072 = vmatpush.msra.mxu0 0.0
  %5073 = vmatpush.msra.mxu0 0.0
  %5074 = vmatpush.msra.mxu0 0.0
  %5075 = vmatpush.msra.mxu0 0.0
  %5076 = vmatpush.msra.mxu0 0.0
  %5077 = vmatpush.msra.mxu0 0.0
  %5078 = vmatpush.msra.mxu0 0.0
  %5079 = vmatpush.msra.mxu0 0.0
  %5080 = vmatpush.msra.mxu0 0.0
  %5081 = vmatpush.msra.mxu0 0.0
  %5082 = vmatpush.msra.mxu0 %v5059
  %5083 = vmatpush.msra.mxu0 %v5057
  %5084 = vmatmul.f32.gmra.mxu0 %v5063
  %v5085 = vpop.f32.mrf.mxu0
  %v5086 = vadd.f32 0.0, %v5085
  %5087 = vmatmul.f32.gmra.mxu0 %v5066
  %v5088 = vpop.f32.mrf.mxu0
  %v5089 = vadd.f32 0.0, %v5088
  %5090 = vdwg.mxu0
  %5091 = vrot.lane.b32.xlu0 %v268, 64
  %v5092 = vpop.permute.xlu0 %5091
  %5093 = vrot.lane.b32.xlu0 %v271, 64
  %v5094 = vpop.permute.xlu0 %5093
  %v5098 = vsel %vm866, %v4468, 0
  %v5101 = vsel %vm866, %v4469, 0
  %5103 = vmatpush.msra.mxu0 0.0
  %5104 = vmatpush.msra.mxu0 0.0
  %5105 = vmatpush.msra.mxu0 0.0
  %5106 = vmatpush.msra.mxu0 0.0
  %5107 = vmatpush.msra.mxu0 0.0
  %5108 = vmatpush.msra.mxu0 0.0
  %5109 = vmatpush.msra.mxu0 0.0
  %5110 = vmatpush.msra.mxu0 0.0
  %5111 = vmatpush.msra.mxu0 0.0
  %5112 = vmatpush.msra.mxu0 0.0
  %5113 = vmatpush.msra.mxu0 0.0
  %5114 = vmatpush.msra.mxu0 0.0
  %5115 = vmatpush.msra.mxu0 0.0
  %5116 = vmatpush.msra.mxu0 0.0
  %5117 = vmatpush.msra.mxu0 %v5094
  %5118 = vmatpush.msra.mxu0 %v5092
  %5119 = vmatmul.f32.gmra.mxu0 %v5098
  %v5120 = vpop.f32.mrf.mxu0
  %v5121 = vadd.f32 0.0, %v5120
  %5122 = vmatmul.f32.gmra.mxu0 %v5101
  %v5123 = vpop.f32.mrf.mxu0
  %v5124 = vadd.f32 0.0, %v5123
  %5125 = vdwg.mxu0
  %5126 = vst.msk [vmem:[#allocation3] sm:$0xff] %vm279, %v4596
  %5127 = vst.msk [vmem:[#allocation3 + $0x8] sm:$0xff] %vm279, %v4599
  %5128 = vst.msk [vmem:[#allocation3 + $0x10] sm:$0xff] %vm279, %v4631
  %5129 = vst.msk [vmem:[#allocation3 + $0x18] sm:$0xff] %vm279, %v4634
  %5130 = vst.msk [vmem:[#allocation3 + $0x20] sm:$0xff] %vm279, %v4666
  %5131 = vst.msk [vmem:[#allocation3 + $0x28] sm:$0xff] %vm279, %v4669
  %5132 = vst.msk [vmem:[#allocation3 + $0x30] sm:$0xff] %vm279, %v4701
  %5133 = vst.msk [vmem:[#allocation3 + $0x38] sm:$0xff] %vm279, %v4704
  %5134 = vst.msk [vmem:[#allocation3 + $0x40] sm:$0xff] %vm279, %v4736
  %5135 = vst.msk [vmem:[#allocation3 + $0x48] sm:$0xff] %vm279, %v4739
  %5136 = vst.msk [vmem:[#allocation3 + $0x50] sm:$0xff] %vm279, %v4771
  %5137 = vst.msk [vmem:[#allocation3 + $0x58] sm:$0xff] %vm279, %v4774
  %5138 = vst.msk [vmem:[#allocation3 + $0x60] sm:$0xff] %vm279, %v4806
  %5139 = vst.msk [vmem:[#allocation3 + $0x68] sm:$0xff] %vm279, %v4809
  %5140 = vst.msk [vmem:[#allocation3 + $0x70] sm:$0xff] %vm279, %v4841
  %5141 = vst.msk [vmem:[#allocation3 + $0x78] sm:$0xff] %vm279, %v4844
  %5142 = vst.msk [vmem:[#allocation3 + $0x80] sm:$0xff] %vm279, %v4876
  %5143 = vst.msk [vmem:[#allocation3 + $0x88] sm:$0xff] %vm279, %v4879
  %5144 = vst.msk [vmem:[#allocation3 + $0x90] sm:$0xff] %vm279, %v4911
  %5145 = vst.msk [vmem:[#allocation3 + $0x98] sm:$0xff] %vm279, %v4914
  %5146 = vst.msk [vmem:[#allocation3 + $0xa0] sm:$0xff] %vm279, %v4946
  %5147 = vst.msk [vmem:[#allocation3 + $0xa8] sm:$0xff] %vm279, %v4949
  %5148 = vst.msk [vmem:[#allocation3 + $0xb0] sm:$0xff] %vm279, %v4981
  %5149 = vst.msk [vmem:[#allocation3 + $0xb8] sm:$0xff] %vm279, %v4984
  %5150 = vst.msk [vmem:[#allocation3 + $0xc0] sm:$0xff] %vm279, %v5016
  %5151 = vst.msk [vmem:[#allocation3 + $0xc8] sm:$0xff] %vm279, %v5019
  %5152 = vst.msk [vmem:[#allocation3 + $0xd0] sm:$0xff] %vm279, %v5051
  %5153 = vst.msk [vmem:[#allocation3 + $0xd8] sm:$0xff] %vm279, %v5054
  %5154 = vst.msk [vmem:[#allocation3 + $0xe0] sm:$0xff] %vm279, %v5086
  %5155 = vst.msk [vmem:[#allocation3 + $0xe8] sm:$0xff] %vm279, %v5089
  %5156 = vst.msk [vmem:[#allocation3 + $0xf0] sm:$0xff] %vm279, %v5121
  %5157 = vst.msk [vmem:[#allocation3 + $0xf8] sm:$0xff] %vm279, %v5124
  %5158 = vrot.lane.b32.xlu0 %v178, 56
  %v5159 = vpop.permute.xlu0 %5158
  %5160 = vrot.lane.b32.xlu0 %v181, 56
  %v5161 = vpop.permute.xlu0 %5160
  %v5165 = vsel %vm866, %v4470, 0
  %v5168 = vsel %vm866, %v4471, 0
  %5170 = vmatpush.msra.mxu0 0.0
  %5171 = vmatpush.msra.mxu0 0.0
  %5172 = vmatpush.msra.mxu0 0.0
  %5173 = vmatpush.msra.mxu0 0.0
  %5174 = vmatpush.msra.mxu0 0.0
  %5175 = vmatpush.msra.mxu0 0.0
  %5176 = vmatpush.msra.mxu0 0.0
  %5177 = vmatpush.msra.mxu0 0.0
  %5178 = vmatpush.msra.mxu0 0.0
  %5179 = vmatpush.msra.mxu0 0.0
  %5180 = vmatpush.msra.mxu0 0.0
  %5181 = vmatpush.msra.mxu0 0.0
  %5182 = vmatpush.msra.mxu0 0.0
  %5183 = vmatpush.msra.mxu0 0.0
  %5184 = vmatpush.msra.mxu0 %v5161
  %5185 = vmatpush.msra.mxu0 %v5159
  %5186 = vmatmul.f32.gmra.mxu0 %v5165
  %v5187 = vpop.f32.mrf.mxu0
  %v5188 = vadd.f32 0.0, %v5187
  %5189 = vmatmul.f32.gmra.mxu0 %v5168
  %v5190 = vpop.f32.mrf.mxu0
  %v5191 = vadd.f32 0.0, %v5190
  %5192 = vdwg.mxu0
  %5193 = vrot.lane.b32.xlu0 %v184, 56
  %v5194 = vpop.permute.xlu0 %5193
  %5195 = vrot.lane.b32.xlu0 %v187, 56
  %v5196 = vpop.permute.xlu0 %5195
  %v5200 = vsel %vm866, %v4472, 0
  %v5203 = vsel %vm866, %v4473, 0
  %5205 = vmatpush.msra.mxu0 0.0
  %5206 = vmatpush.msra.mxu0 0.0
  %5207 = vmatpush.msra.mxu0 0.0
  %5208 = vmatpush.msra.mxu0 0.0
  %5209 = vmatpush.msra.mxu0 0.0
  %5210 = vmatpush.msra.mxu0 0.0
  %5211 = vmatpush.msra.mxu0 0.0
  %5212 = vmatpush.msra.mxu0 0.0
  %5213 = vmatpush.msra.mxu0 0.0
  %5214 = vmatpush.msra.mxu0 0.0
  %5215 = vmatpush.msra.mxu0 0.0
  %5216 = vmatpush.msra.mxu0 0.0
  %5217 = vmatpush.msra.mxu0 0.0
  %5218 = vmatpush.msra.mxu0 0.0
  %5219 = vmatpush.msra.mxu0 %v5196
  %5220 = vmatpush.msra.mxu0 %v5194
  %5221 = vmatmul.f32.gmra.mxu0 %v5200
  %v5222 = vpop.f32.mrf.mxu0
  %v5223 = vadd.f32 0.0, %v5222
  %5224 = vmatmul.f32.gmra.mxu0 %v5203
  %v5225 = vpop.f32.mrf.mxu0
  %v5226 = vadd.f32 0.0, %v5225
  %5227 = vdwg.mxu0
  %5228 = vrot.lane.b32.xlu0 %v190, 56
  %v5229 = vpop.permute.xlu0 %5228
  %5230 = vrot.lane.b32.xlu0 %v193, 56
  %v5231 = vpop.permute.xlu0 %5230
  %v5235 = vsel %vm866, %v4474, 0
  %v5238 = vsel %vm866, %v4475, 0
  %5240 = vmatpush.msra.mxu0 0.0
  %5241 = vmatpush.msra.mxu0 0.0
  %5242 = vmatpush.msra.mxu0 0.0
  %5243 = vmatpush.msra.mxu0 0.0
  %5244 = vmatpush.msra.mxu0 0.0
  %5245 = vmatpush.msra.mxu0 0.0
  %5246 = vmatpush.msra.mxu0 0.0
  %5247 = vmatpush.msra.mxu0 0.0
  %5248 = vmatpush.msra.mxu0 0.0
  %5249 = vmatpush.msra.mxu0 0.0
  %5250 = vmatpush.msra.mxu0 0.0
  %5251 = vmatpush.msra.mxu0 0.0
  %5252 = vmatpush.msra.mxu0 0.0
  %5253 = vmatpush.msra.mxu0 0.0
  %5254 = vmatpush.msra.mxu0 %v5231
  %5255 = vmatpush.msra.mxu0 %v5229
  %5256 = vmatmul.f32.gmra.mxu0 %v5235
  %v5257 = vpop.f32.mrf.mxu0
  %v5258 = vadd.f32 0.0, %v5257
  %5259 = vmatmul.f32.gmra.mxu0 %v5238
  %v5260 = vpop.f32.mrf.mxu0
  %v5261 = vadd.f32 0.0, %v5260
  %5262 = vdwg.mxu0
  %5263 = vrot.lane.b32.xlu0 %v196, 56
  %v5264 = vpop.permute.xlu0 %5263
  %5265 = vrot.lane.b32.xlu0 %v199, 56
  %v5266 = vpop.permute.xlu0 %5265
  %v5270 = vsel %vm866, %v4476, 0
  %v5273 = vsel %vm866, %v4477, 0
  %5275 = vmatpush.msra.mxu0 0.0
  %5276 = vmatpush.msra.mxu0 0.0
  %5277 = vmatpush.msra.mxu0 0.0
  %5278 = vmatpush.msra.mxu0 0.0
  %5279 = vmatpush.msra.mxu0 0.0
  %5280 = vmatpush.msra.mxu0 0.0
  %5281 = vmatpush.msra.mxu0 0.0
  %5282 = vmatpush.msra.mxu0 0.0
  %5283 = vmatpush.msra.mxu0 0.0
  %5284 = vmatpush.msra.mxu0 0.0
  %5285 = vmatpush.msra.mxu0 0.0
  %5286 = vmatpush.msra.mxu0 0.0
  %5287 = vmatpush.msra.mxu0 0.0
  %5288 = vmatpush.msra.mxu0 0.0
  %5289 = vmatpush.msra.mxu0 %v5266
  %5290 = vmatpush.msra.mxu0 %v5264
  %5291 = vmatmul.f32.gmra.mxu0 %v5270
  %v5292 = vpop.f32.mrf.mxu0
  %v5293 = vadd.f32 0.0, %v5292
  %5294 = vmatmul.f32.gmra.mxu0 %v5273
  %v5295 = vpop.f32.mrf.mxu0
  %v5296 = vadd.f32 0.0, %v5295
  %5297 = vdwg.mxu0
  %5298 = vrot.lane.b32.xlu0 %v202, 56
  %v5299 = vpop.permute.xlu0 %5298
  %5300 = vrot.lane.b32.xlu0 %v205, 56
  %v5301 = vpop.permute.xlu0 %5300
  %v5305 = vsel %vm866, %v4478, 0
  %v5308 = vsel %vm866, %v4479, 0
  %5310 = vmatpush.msra.mxu0 0.0
  %5311 = vmatpush.msra.mxu0 0.0
  %5312 = vmatpush.msra.mxu0 0.0
  %5313 = vmatpush.msra.mxu0 0.0
  %5314 = vmatpush.msra.mxu0 0.0
  %5315 = vmatpush.msra.mxu0 0.0
  %5316 = vmatpush.msra.mxu0 0.0
  %5317 = vmatpush.msra.mxu0 0.0
  %5318 = vmatpush.msra.mxu0 0.0
  %5319 = vmatpush.msra.mxu0 0.0
  %5320 = vmatpush.msra.mxu0 0.0
  %5321 = vmatpush.msra.mxu0 0.0
  %5322 = vmatpush.msra.mxu0 0.0
  %5323 = vmatpush.msra.mxu0 0.0
  %5324 = vmatpush.msra.mxu0 %v5301
  %5325 = vmatpush.msra.mxu0 %v5299
  %5326 = vmatmul.f32.gmra.mxu0 %v5305
  %v5327 = vpop.f32.mrf.mxu0
  %v5328 = vadd.f32 0.0, %v5327
  %5329 = vmatmul.f32.gmra.mxu0 %v5308
  %v5330 = vpop.f32.mrf.mxu0
  %v5331 = vadd.f32 0.0, %v5330
  %5332 = vdwg.mxu0
  %5333 = vrot.lane.b32.xlu0 %v208, 56
  %v5334 = vpop.permute.xlu0 %5333
  %5335 = vrot.lane.b32.xlu0 %v211, 56
  %v5336 = vpop.permute.xlu0 %5335
  %v5340 = vsel %vm866, %v4480, 0
  %v5343 = vsel %vm866, %v4481, 0
  %5345 = vmatpush.msra.mxu0 0.0
  %5346 = vmatpush.msra.mxu0 0.0
  %5347 = vmatpush.msra.mxu0 0.0
  %5348 = vmatpush.msra.mxu0 0.0
  %5349 = vmatpush.msra.mxu0 0.0
  %5350 = vmatpush.msra.mxu0 0.0
  %5351 = vmatpush.msra.mxu0 0.0
  %5352 = vmatpush.msra.mxu0 0.0
  %5353 = vmatpush.msra.mxu0 0.0
  %5354 = vmatpush.msra.mxu0 0.0
  %5355 = vmatpush.msra.mxu0 0.0
  %5356 = vmatpush.msra.mxu0 0.0
  %5357 = vmatpush.msra.mxu0 0.0
  %5358 = vmatpush.msra.mxu0 0.0
  %5359 = vmatpush.msra.mxu0 %v5336
  %5360 = vmatpush.msra.mxu0 %v5334
  %5361 = vmatmul.f32.gmra.mxu0 %v5340
  %v5362 = vpop.f32.mrf.mxu0
  %v5363 = vadd.f32 0.0, %v5362
  %5364 = vmatmul.f32.gmra.mxu0 %v5343
  %v5365 = vpop.f32.mrf.mxu0
  %v5366 = vadd.f32 0.0, %v5365
  %5367 = vdwg.mxu0
  %5368 = vrot.lane.b32.xlu0 %v214, 56
  %v5369 = vpop.permute.xlu0 %5368
  %5370 = vrot.lane.b32.xlu0 %v217, 56
  %v5371 = vpop.permute.xlu0 %5370
  %v5375 = vsel %vm866, %v4482, 0
  %v5378 = vsel %vm866, %v4483, 0
  %5380 = vmatpush.msra.mxu0 0.0
  %5381 = vmatpush.msra.mxu0 0.0
  %5382 = vmatpush.msra.mxu0 0.0
  %5383 = vmatpush.msra.mxu0 0.0
  %5384 = vmatpush.msra.mxu0 0.0
  %5385 = vmatpush.msra.mxu0 0.0
  %5386 = vmatpush.msra.mxu0 0.0
  %5387 = vmatpush.msra.mxu0 0.0
  %5388 = vmatpush.msra.mxu0 0.0
  %5389 = vmatpush.msra.mxu0 0.0
  %5390 = vmatpush.msra.mxu0 0.0
  %5391 = vmatpush.msra.mxu0 0.0
  %5392 = vmatpush.msra.mxu0 0.0
  %5393 = vmatpush.msra.mxu0 0.0
  %5394 = vmatpush.msra.mxu0 %v5371
  %5395 = vmatpush.msra.mxu0 %v5369
  %5396 = vmatmul.f32.gmra.mxu0 %v5375
  %v5397 = vpop.f32.mrf.mxu0
  %v5398 = vadd.f32 0.0, %v5397
  %5399 = vmatmul.f32.gmra.mxu0 %v5378
  %v5400 = vpop.f32.mrf.mxu0
  %v5401 = vadd.f32 0.0, %v5400
  %5402 = vdwg.mxu0
  %5403 = vrot.lane.b32.xlu0 %v220, 56
  %v5404 = vpop.permute.xlu0 %5403
  %5405 = vrot.lane.b32.xlu0 %v223, 56
  %v5406 = vpop.permute.xlu0 %5405
  %v5410 = vsel %vm866, %v4484, 0
  %v5413 = vsel %vm866, %v4485, 0
  %5415 = vmatpush.msra.mxu0 0.0
  %5416 = vmatpush.msra.mxu0 0.0
  %5417 = vmatpush.msra.mxu0 0.0
  %5418 = vmatpush.msra.mxu0 0.0
  %5419 = vmatpush.msra.mxu0 0.0
  %5420 = vmatpush.msra.mxu0 0.0
  %5421 = vmatpush.msra.mxu0 0.0
  %5422 = vmatpush.msra.mxu0 0.0
  %5423 = vmatpush.msra.mxu0 0.0
  %5424 = vmatpush.msra.mxu0 0.0
  %5425 = vmatpush.msra.mxu0 0.0
  %5426 = vmatpush.msra.mxu0 0.0
  %5427 = vmatpush.msra.mxu0 0.0
  %5428 = vmatpush.msra.mxu0 0.0
  %5429 = vmatpush.msra.mxu0 %v5406
  %5430 = vmatpush.msra.mxu0 %v5404
  %5431 = vmatmul.f32.gmra.mxu0 %v5410
  %v5432 = vpop.f32.mrf.mxu0
  %v5433 = vadd.f32 0.0, %v5432
  %5434 = vmatmul.f32.gmra.mxu0 %v5413
  %v5435 = vpop.f32.mrf.mxu0
  %v5436 = vadd.f32 0.0, %v5435
  %5437 = vdwg.mxu0
  %5438 = vrot.lane.b32.xlu0 %v226, 56
  %v5439 = vpop.permute.xlu0 %5438
  %5440 = vrot.lane.b32.xlu0 %v229, 56
  %v5441 = vpop.permute.xlu0 %5440
  %v5445 = vsel %vm866, %v4486, 0
  %v5448 = vsel %vm866, %v4487, 0
  %5450 = vmatpush.msra.mxu0 0.0
  %5451 = vmatpush.msra.mxu0 0.0
  %5452 = vmatpush.msra.mxu0 0.0
  %5453 = vmatpush.msra.mxu0 0.0
  %5454 = vmatpush.msra.mxu0 0.0
  %5455 = vmatpush.msra.mxu0 0.0
  %5456 = vmatpush.msra.mxu0 0.0
  %5457 = vmatpush.msra.mxu0 0.0
  %5458 = vmatpush.msra.mxu0 0.0
  %5459 = vmatpush.msra.mxu0 0.0
  %5460 = vmatpush.msra.mxu0 0.0
  %5461 = vmatpush.msra.mxu0 0.0
  %5462 = vmatpush.msra.mxu0 0.0
  %5463 = vmatpush.msra.mxu0 0.0
  %5464 = vmatpush.msra.mxu0 %v5441
  %5465 = vmatpush.msra.mxu0 %v5439
  %5466 = vmatmul.f32.gmra.mxu0 %v5445
  %v5467 = vpop.f32.mrf.mxu0
  %v5468 = vadd.f32 0.0, %v5467
  %5469 = vmatmul.f32.gmra.mxu0 %v5448
  %v5470 = vpop.f32.mrf.mxu0
  %v5471 = vadd.f32 0.0, %v5470
  %5472 = vdwg.mxu0
  %5473 = vrot.lane.b32.xlu0 %v232, 56
  %v5474 = vpop.permute.xlu0 %5473
  %5475 = vrot.lane.b32.xlu0 %v235, 56
  %v5476 = vpop.permute.xlu0 %5475
  %v5480 = vsel %vm866, %v4488, 0
  %v5483 = vsel %vm866, %v4489, 0
  %5485 = vmatpush.msra.mxu0 0.0
  %5486 = vmatpush.msra.mxu0 0.0
  %5487 = vmatpush.msra.mxu0 0.0
  %5488 = vmatpush.msra.mxu0 0.0
  %5489 = vmatpush.msra.mxu0 0.0
  %5490 = vmatpush.msra.mxu0 0.0
  %5491 = vmatpush.msra.mxu0 0.0
  %5492 = vmatpush.msra.mxu0 0.0
  %5493 = vmatpush.msra.mxu0 0.0
  %5494 = vmatpush.msra.mxu0 0.0
  %5495 = vmatpush.msra.mxu0 0.0
  %5496 = vmatpush.msra.mxu0 0.0
  %5497 = vmatpush.msra.mxu0 0.0
  %5498 = vmatpush.msra.mxu0 0.0
  %5499 = vmatpush.msra.mxu0 %v5476
  %5500 = vmatpush.msra.mxu0 %v5474
  %5501 = vmatmul.f32.gmra.mxu0 %v5480
  %v5502 = vpop.f32.mrf.mxu0
  %v5503 = vadd.f32 0.0, %v5502
  %5504 = vmatmul.f32.gmra.mxu0 %v5483
  %v5505 = vpop.f32.mrf.mxu0
  %v5506 = vadd.f32 0.0, %v5505
  %5507 = vdwg.mxu0
  %5508 = vrot.lane.b32.xlu0 %v238, 56
  %v5509 = vpop.permute.xlu0 %5508
  %5510 = vrot.lane.b32.xlu0 %v241, 56
  %v5511 = vpop.permute.xlu0 %5510
  %v5515 = vsel %vm866, %v4490, 0
  %v5518 = vsel %vm866, %v4491, 0
  %5520 = vmatpush.msra.mxu0 0.0
  %5521 = vmatpush.msra.mxu0 0.0
  %5522 = vmatpush.msra.mxu0 0.0
  %5523 = vmatpush.msra.mxu0 0.0
  %5524 = vmatpush.msra.mxu0 0.0
  %5525 = vmatpush.msra.mxu0 0.0
  %5526 = vmatpush.msra.mxu0 0.0
  %5527 = vmatpush.msra.mxu0 0.0
  %5528 = vmatpush.msra.mxu0 0.0
  %5529 = vmatpush.msra.mxu0 0.0
  %5530 = vmatpush.msra.mxu0 0.0
  %5531 = vmatpush.msra.mxu0 0.0
  %5532 = vmatpush.msra.mxu0 0.0
  %5533 = vmatpush.msra.mxu0 0.0
  %5534 = vmatpush.msra.mxu0 %v5511
  %5535 = vmatpush.msra.mxu0 %v5509
  %5536 = vmatmul.f32.gmra.mxu0 %v5515
  %v5537 = vpop.f32.mrf.mxu0
  %v5538 = vadd.f32 0.0, %v5537
  %5539 = vmatmul.f32.gmra.mxu0 %v5518
  %v5540 = vpop.f32.mrf.mxu0
  %v5541 = vadd.f32 0.0, %v5540
  %5542 = vdwg.mxu0
  %5543 = vrot.lane.b32.xlu0 %v244, 56
  %v5544 = vpop.permute.xlu0 %5543
  %5545 = vrot.lane.b32.xlu0 %v247, 56
  %v5546 = vpop.permute.xlu0 %5545
  %v5550 = vsel %vm866, %v4492, 0
  %v5553 = vsel %vm866, %v4493, 0
  %5555 = vmatpush.msra.mxu0 0.0
  %5556 = vmatpush.msra.mxu0 0.0
  %5557 = vmatpush.msra.mxu0 0.0
  %5558 = vmatpush.msra.mxu0 0.0
  %5559 = vmatpush.msra.mxu0 0.0
  %5560 = vmatpush.msra.mxu0 0.0
  %5561 = vmatpush.msra.mxu0 0.0
  %5562 = vmatpush.msra.mxu0 0.0
  %5563 = vmatpush.msra.mxu0 0.0
  %5564 = vmatpush.msra.mxu0 0.0
  %5565 = vmatpush.msra.mxu0 0.0
  %5566 = vmatpush.msra.mxu0 0.0
  %5567 = vmatpush.msra.mxu0 0.0
  %5568 = vmatpush.msra.mxu0 0.0
  %5569 = vmatpush.msra.mxu0 %v5546
  %5570 = vmatpush.msra.mxu0 %v5544
  %5571 = vmatmul.f32.gmra.mxu0 %v5550
  %v5572 = vpop.f32.mrf.mxu0
  %v5573 = vadd.f32 0.0, %v5572
  %5574 = vmatmul.f32.gmra.mxu0 %v5553
  %v5575 = vpop.f32.mrf.mxu0
  %v5576 = vadd.f32 0.0, %v5575
  %5577 = vdwg.mxu0
  %5578 = vrot.lane.b32.xlu0 %v250, 56
  %v5579 = vpop.permute.xlu0 %5578
  %5580 = vrot.lane.b32.xlu0 %v253, 56
  %v5581 = vpop.permute.xlu0 %5580
  %v5585 = vsel %vm866, %v4494, 0
  %v5588 = vsel %vm866, %v4495, 0
  %5590 = vmatpush.msra.mxu0 0.0
  %5591 = vmatpush.msra.mxu0 0.0
  %5592 = vmatpush.msra.mxu0 0.0
  %5593 = vmatpush.msra.mxu0 0.0
  %5594 = vmatpush.msra.mxu0 0.0
  %5595 = vmatpush.msra.mxu0 0.0
  %5596 = vmatpush.msra.mxu0 0.0
  %5597 = vmatpush.msra.mxu0 0.0
  %5598 = vmatpush.msra.mxu0 0.0
  %5599 = vmatpush.msra.mxu0 0.0
  %5600 = vmatpush.msra.mxu0 0.0
  %5601 = vmatpush.msra.mxu0 0.0
  %5602 = vmatpush.msra.mxu0 0.0
  %5603 = vmatpush.msra.mxu0 0.0
  %5604 = vmatpush.msra.mxu0 %v5581
  %5605 = vmatpush.msra.mxu0 %v5579
  %5606 = vmatmul.f32.gmra.mxu0 %v5585
  %v5607 = vpop.f32.mrf.mxu0
  %v5608 = vadd.f32 0.0, %v5607
  %5609 = vmatmul.f32.gmra.mxu0 %v5588
  %v5610 = vpop.f32.mrf.mxu0
  %v5611 = vadd.f32 0.0, %v5610
  %5612 = vdwg.mxu0
  %5613 = vrot.lane.b32.xlu0 %v256, 56
  %v5614 = vpop.permute.xlu0 %5613
  %5615 = vrot.lane.b32.xlu0 %v259, 56
  %v5616 = vpop.permute.xlu0 %5615
  %v5620 = vsel %vm866, %v4496, 0
  %v5623 = vsel %vm866, %v4497, 0
  %5625 = vmatpush.msra.mxu0 0.0
  %5626 = vmatpush.msra.mxu0 0.0
  %5627 = vmatpush.msra.mxu0 0.0
  %5628 = vmatpush.msra.mxu0 0.0
  %5629 = vmatpush.msra.mxu0 0.0
  %5630 = vmatpush.msra.mxu0 0.0
  %5631 = vmatpush.msra.mxu0 0.0
  %5632 = vmatpush.msra.mxu0 0.0
  %5633 = vmatpush.msra.mxu0 0.0
  %5634 = vmatpush.msra.mxu0 0.0
  %5635 = vmatpush.msra.mxu0 0.0
  %5636 = vmatpush.msra.mxu0 0.0
  %5637 = vmatpush.msra.mxu0 0.0
  %5638 = vmatpush.msra.mxu0 0.0
  %5639 = vmatpush.msra.mxu0 %v5616
  %5640 = vmatpush.msra.mxu0 %v5614
  %5641 = vmatmul.f32.gmra.mxu0 %v5620
  %v5642 = vpop.f32.mrf.mxu0
  %v5643 = vadd.f32 0.0, %v5642
  %5644 = vmatmul.f32.gmra.mxu0 %v5623
  %v5645 = vpop.f32.mrf.mxu0
  %v5646 = vadd.f32 0.0, %v5645
  %5647 = vdwg.mxu0
  %5648 = vrot.lane.b32.xlu0 %v262, 56
  %v5649 = vpop.permute.xlu0 %5648
  %5650 = vrot.lane.b32.xlu0 %v265, 56
  %v5651 = vpop.permute.xlu0 %5650
  %v5655 = vsel %vm866, %v4498, 0
  %v5658 = vsel %vm866, %v4499, 0
  %5660 = vmatpush.msra.mxu0 0.0
  %5661 = vmatpush.msra.mxu0 0.0
  %5662 = vmatpush.msra.mxu0 0.0
  %5663 = vmatpush.msra.mxu0 0.0
  %5664 = vmatpush.msra.mxu0 0.0
  %5665 = vmatpush.msra.mxu0 0.0
  %5666 = vmatpush.msra.mxu0 0.0
  %5667 = vmatpush.msra.mxu0 0.0
  %5668 = vmatpush.msra.mxu0 0.0
  %5669 = vmatpush.msra.mxu0 0.0
  %5670 = vmatpush.msra.mxu0 0.0
  %5671 = vmatpush.msra.mxu0 0.0
  %5672 = vmatpush.msra.mxu0 0.0
  %5673 = vmatpush.msra.mxu0 0.0
  %5674 = vmatpush.msra.mxu0 %v5651
  %5675 = vmatpush.msra.mxu0 %v5649
  %5676 = vmatmul.f32.gmra.mxu0 %v5655
  %v5677 = vpop.f32.mrf.mxu0
  %v5678 = vadd.f32 0.0, %v5677
  %5679 = vmatmul.f32.gmra.mxu0 %v5658
  %v5680 = vpop.f32.mrf.mxu0
  %v5681 = vadd.f32 0.0, %v5680
  %5682 = vdwg.mxu0
  %5683 = vrot.lane.b32.xlu0 %v268, 56
  %v5684 = vpop.permute.xlu0 %5683
  %5685 = vrot.lane.b32.xlu0 %v271, 56
  %v5686 = vpop.permute.xlu0 %5685
  %v5690 = vsel %vm866, %v4500, 0
  %v5693 = vsel %vm866, %v4501, 0
  %5695 = vmatpush.msra.mxu0 0.0
  %5696 = vmatpush.msra.mxu0 0.0
  %5697 = vmatpush.msra.mxu0 0.0
  %5698 = vmatpush.msra.mxu0 0.0
  %5699 = vmatpush.msra.mxu0 0.0
  %5700 = vmatpush.msra.mxu0 0.0
  %5701 = vmatpush.msra.mxu0 0.0
  %5702 = vmatpush.msra.mxu0 0.0
  %5703 = vmatpush.msra.mxu0 0.0
  %5704 = vmatpush.msra.mxu0 0.0
  %5705 = vmatpush.msra.mxu0 0.0
  %5706 = vmatpush.msra.mxu0 0.0
  %5707 = vmatpush.msra.mxu0 0.0
  %5708 = vmatpush.msra.mxu0 0.0
  %5709 = vmatpush.msra.mxu0 %v5686
  %5710 = vmatpush.msra.mxu0 %v5684
  %5711 = vmatmul.f32.gmra.mxu0 %v5690
  %v5712 = vpop.f32.mrf.mxu0
  %v5713 = vadd.f32 0.0, %v5712
  %5714 = vmatmul.f32.gmra.mxu0 %v5693
  %v5715 = vpop.f32.mrf.mxu0
  %v5716 = vadd.f32 0.0, %v5715
  %5717 = vdwg.mxu0
  %5750 = vrot.lane.b32.xlu0 %v5188, 8
  %v5751 = vpop.permute.xlu0 %5750
  %5752 = vrot.lane.b32.xlu0 %v5191, 8
  %v5753 = vpop.permute.xlu0 %5752
  %5754 = vrot.lane.b32.xlu0 %v5223, 8
  %v5755 = vpop.permute.xlu0 %5754
  %5756 = vrot.lane.b32.xlu0 %v5226, 8
  %v5757 = vpop.permute.xlu0 %5756
  %5758 = vrot.lane.b32.xlu0 %v5258, 8
  %v5759 = vpop.permute.xlu0 %5758
  %5760 = vrot.lane.b32.xlu0 %v5261, 8
  %v5761 = vpop.permute.xlu0 %5760
  %5762 = vrot.lane.b32.xlu0 %v5293, 8
  %v5763 = vpop.permute.xlu0 %5762
  %5764 = vrot.lane.b32.xlu0 %v5296, 8
  %v5765 = vpop.permute.xlu0 %5764
  %5766 = vrot.lane.b32.xlu0 %v5328, 8
  %v5767 = vpop.permute.xlu0 %5766
  %5768 = vrot.lane.b32.xlu0 %v5331, 8
  %v5769 = vpop.permute.xlu0 %5768
  %5770 = vrot.lane.b32.xlu0 %v5363, 8
  %v5771 = vpop.permute.xlu0 %5770
  %5772 = vrot.lane.b32.xlu0 %v5366, 8
  %v5773 = vpop.permute.xlu0 %5772
  %5774 = vrot.lane.b32.xlu0 %v5398, 8
  %v5775 = vpop.permute.xlu0 %5774
  %5776 = vrot.lane.b32.xlu0 %v5401, 8
  %v5777 = vpop.permute.xlu0 %5776
  %5778 = vrot.lane.b32.xlu0 %v5433, 8
  %v5779 = vpop.permute.xlu0 %5778
  %5780 = vrot.lane.b32.xlu0 %v5436, 8
  %v5781 = vpop.permute.xlu0 %5780
  %5782 = vrot.lane.b32.xlu0 %v5468, 8
  %v5783 = vpop.permute.xlu0 %5782
  %5784 = vrot.lane.b32.xlu0 %v5471, 8
  %v5785 = vpop.permute.xlu0 %5784
  %5786 = vrot.lane.b32.xlu0 %v5503, 8
  %v5787 = vpop.permute.xlu0 %5786
  %5788 = vrot.lane.b32.xlu0 %v5506, 8
  %v5789 = vpop.permute.xlu0 %5788
  %5790 = vrot.lane.b32.xlu0 %v5538, 8
  %v5791 = vpop.permute.xlu0 %5790
  %5792 = vrot.lane.b32.xlu0 %v5541, 8
  %v5793 = vpop.permute.xlu0 %5792
  %5794 = vrot.lane.b32.xlu0 %v5573, 8
  %v5795 = vpop.permute.xlu0 %5794
  %5796 = vrot.lane.b32.xlu0 %v5576, 8
  %v5797 = vpop.permute.xlu0 %5796
  %5798 = vrot.lane.b32.xlu0 %v5608, 8
  %v5799 = vpop.permute.xlu0 %5798
  %5800 = vrot.lane.b32.xlu0 %v5611, 8
  %v5801 = vpop.permute.xlu0 %5800
  %5802 = vrot.lane.b32.xlu0 %v5643, 8
  %v5803 = vpop.permute.xlu0 %5802
  %5804 = vrot.lane.b32.xlu0 %v5646, 8
  %v5805 = vpop.permute.xlu0 %5804
  %5806 = vrot.lane.b32.xlu0 %v5678, 8
  %v5807 = vpop.permute.xlu0 %5806
  %5808 = vrot.lane.b32.xlu0 %v5681, 8
  %v5809 = vpop.permute.xlu0 %5808
  %5810 = vrot.lane.b32.xlu0 %v5713, 8
  %v5811 = vpop.permute.xlu0 %5810
  %5812 = vrot.lane.b32.xlu0 %v5716, 8
  %v5813 = vpop.permute.xlu0 %5812
  %vm5846 = vcmask 130112
  %5847 = vst.msk [vmem:[#allocation3] sm:$0xff] %vm5846, %v5751
  %5848 = vst.msk [vmem:[#allocation3 + $0x8] sm:$0xff] %vm5846, %v5753
  %5849 = vst.msk [vmem:[#allocation3 + $0x10] sm:$0xff] %vm5846, %v5755
  %5850 = vst.msk [vmem:[#allocation3 + $0x18] sm:$0xff] %vm5846, %v5757
  %5851 = vst.msk [vmem:[#allocation3 + $0x20] sm:$0xff] %vm5846, %v5759
  %5852 = vst.msk [vmem:[#allocation3 + $0x28] sm:$0xff] %vm5846, %v5761
  %5853 = vst.msk [vmem:[#allocation3 + $0x30] sm:$0xff] %vm5846, %v5763
  %5854 = vst.msk [vmem:[#allocation3 + $0x38] sm:$0xff] %vm5846, %v5765
  %5855 = vst.msk [vmem:[#allocation3 + $0x40] sm:$0xff] %vm5846, %v5767
  %5856 = vst.msk [vmem:[#allocation3 + $0x48] sm:$0xff] %vm5846, %v5769
  %5857 = vst.msk [vmem:[#allocation3 + $0x50] sm:$0xff] %vm5846, %v5771
  %5858 = vst.msk [vmem:[#allocation3 + $0x58] sm:$0xff] %vm5846, %v5773
  %5859 = vst.msk [vmem:[#allocation3 + $0x60] sm:$0xff] %vm5846, %v5775
  %5860 = vst.msk [vmem:[#allocation3 + $0x68] sm:$0xff] %vm5846, %v5777
  %5861 = vst.msk [vmem:[#allocation3 + $0x70] sm:$0xff] %vm5846, %v5779
  %5862 = vst.msk [vmem:[#allocation3 + $0x78] sm:$0xff] %vm5846, %v5781
  %5863 = vst.msk [vmem:[#allocation3 + $0x80] sm:$0xff] %vm5846, %v5783
  %5864 = vst.msk [vmem:[#allocation3 + $0x88] sm:$0xff] %vm5846, %v5785
  %5865 = vst.msk [vmem:[#allocation3 + $0x90] sm:$0xff] %vm5846, %v5787
  %5866 = vst.msk [vmem:[#allocation3 + $0x98] sm:$0xff] %vm5846, %v5789
  %5867 = vst.msk [vmem:[#allocation3 + $0xa0] sm:$0xff] %vm5846, %v5791
  %5868 = vst.msk [vmem:[#allocation3 + $0xa8] sm:$0xff] %vm5846, %v5793
  %5869 = vst.msk [vmem:[#allocation3 + $0xb0] sm:$0xff] %vm5846, %v5795
  %5870 = vst.msk [vmem:[#allocation3 + $0xb8] sm:$0xff] %vm5846, %v5797
  %5871 = vst.msk [vmem:[#allocation3 + $0xc0] sm:$0xff] %vm5846, %v5799
  %5872 = vst.msk [vmem:[#allocation3 + $0xc8] sm:$0xff] %vm5846, %v5801
  %5873 = vst.msk [vmem:[#allocation3 + $0xd0] sm:$0xff] %vm5846, %v5803
  %5874 = vst.msk [vmem:[#allocation3 + $0xd8] sm:$0xff] %vm5846, %v5805
  %5875 = vst.msk [vmem:[#allocation3 + $0xe0] sm:$0xff] %vm5846, %v5807
  %5876 = vst.msk [vmem:[#allocation3 + $0xe8] sm:$0xff] %vm5846, %v5809
  %5877 = vst.msk [vmem:[#allocation3 + $0xf0] sm:$0xff] %vm5846, %v5811
  %5878 = vst.msk [vmem:[#allocation3 + $0xf8] sm:$0xff] %vm5846, %v5813
  %5879 = vrot.lane.b32.xlu0 %v178, 48
  %v5880 = vpop.permute.xlu0 %5879
  %5881 = vrot.lane.b32.xlu0 %v181, 48
  %v5882 = vpop.permute.xlu0 %5881
  %v5886 = vsel %vm866, %v4502, 0
  %v5889 = vsel %vm866, %v4503, 0
  %5891 = vmatpush.msra.mxu0 0.0
  %5892 = vmatpush.msra.mxu0 0.0
  %5893 = vmatpush.msra.mxu0 0.0
  %5894 = vmatpush.msra.mxu0 0.0
  %5895 = vmatpush.msra.mxu0 0.0
  %5896 = vmatpush.msra.mxu0 0.0
  %5897 = vmatpush.msra.mxu0 0.0
  %5898 = vmatpush.msra.mxu0 0.0
  %5899 = vmatpush.msra.mxu0 0.0
  %5900 = vmatpush.msra.mxu0 0.0
  %5901 = vmatpush.msra.mxu0 0.0
  %5902 = vmatpush.msra.mxu0 0.0
  %5903 = vmatpush.msra.mxu0 0.0
  %5904 = vmatpush.msra.mxu0 0.0
  %5905 = vmatpush.msra.mxu0 %v5882
  %5906 = vmatpush.msra.mxu0 %v5880
  %5907 = vmatmul.f32.gmra.mxu0 %v5886
  %v5908 = vpop.f32.mrf.mxu0
  %v5909 = vadd.f32 0.0, %v5908
  %5910 = vmatmul.f32.gmra.mxu0 %v5889
  %v5911 = vpop.f32.mrf.mxu0
  %v5912 = vadd.f32 0.0, %v5911
  %5913 = vdwg.mxu0
  %5914 = vrot.lane.b32.xlu0 %v184, 48
  %v5915 = vpop.permute.xlu0 %5914
  %5916 = vrot.lane.b32.xlu0 %v187, 48
  %v5917 = vpop.permute.xlu0 %5916
  %v5921 = vsel %vm866, %v4504, 0
  %v5924 = vsel %vm866, %v4505, 0
  %5926 = vmatpush.msra.mxu0 0.0
  %5927 = vmatpush.msra.mxu0 0.0
  %5928 = vmatpush.msra.mxu0 0.0
  %5929 = vmatpush.msra.mxu0 0.0
  %5930 = vmatpush.msra.mxu0 0.0
  %5931 = vmatpush.msra.mxu0 0.0
  %5932 = vmatpush.msra.mxu0 0.0
  %5933 = vmatpush.msra.mxu0 0.0
  %5934 = vmatpush.msra.mxu0 0.0
  %5935 = vmatpush.msra.mxu0 0.0
  %5936 = vmatpush.msra.mxu0 0.0
  %5937 = vmatpush.msra.mxu0 0.0
  %5938 = vmatpush.msra.mxu0 0.0
  %5939 = vmatpush.msra.mxu0 0.0
  %5940 = vmatpush.msra.mxu0 %v5917
  %5941 = vmatpush.msra.mxu0 %v5915
  %5942 = vmatmul.f32.gmra.mxu0 %v5921
  %v5943 = vpop.f32.mrf.mxu0
  %v5944 = vadd.f32 0.0, %v5943
  %5945 = vmatmul.f32.gmra.mxu0 %v5924
  %v5946 = vpop.f32.mrf.mxu0
  %v5947 = vadd.f32 0.0, %v5946
  %5948 = vdwg.mxu0
  %5949 = vrot.lane.b32.xlu0 %v190, 48
  %v5950 = vpop.permute.xlu0 %5949
  %5951 = vrot.lane.b32.xlu0 %v193, 48
  %v5952 = vpop.permute.xlu0 %5951
  %v5956 = vsel %vm866, %v4506, 0
  %v5959 = vsel %vm866, %v4507, 0
  %5961 = vmatpush.msra.mxu0 0.0
  %5962 = vmatpush.msra.mxu0 0.0
  %5963 = vmatpush.msra.mxu0 0.0
  %5964 = vmatpush.msra.mxu0 0.0
  %5965 = vmatpush.msra.mxu0 0.0
  %5966 = vmatpush.msra.mxu0 0.0
  %5967 = vmatpush.msra.mxu0 0.0
  %5968 = vmatpush.msra.mxu0 0.0
  %5969 = vmatpush.msra.mxu0 0.0
  %5970 = vmatpush.msra.mxu0 0.0
  %5971 = vmatpush.msra.mxu0 0.0
  %5972 = vmatpush.msra.mxu0 0.0
  %5973 = vmatpush.msra.mxu0 0.0
  %5974 = vmatpush.msra.mxu0 0.0
  %5975 = vmatpush.msra.mxu0 %v5952
  %5976 = vmatpush.msra.mxu0 %v5950
  %5977 = vmatmul.f32.gmra.mxu0 %v5956
  %v5978 = vpop.f32.mrf.mxu0
  %v5979 = vadd.f32 0.0, %v5978
  %5980 = vmatmul.f32.gmra.mxu0 %v5959
  %v5981 = vpop.f32.mrf.mxu0
  %v5982 = vadd.f32 0.0, %v5981
  %5983 = vdwg.mxu0
  %5984 = vrot.lane.b32.xlu0 %v196, 48
  %v5985 = vpop.permute.xlu0 %5984
  %5986 = vrot.lane.b32.xlu0 %v199, 48
  %v5987 = vpop.permute.xlu0 %5986
  %v5991 = vsel %vm866, %v4508, 0
  %v5994 = vsel %vm866, %v4509, 0
  %5996 = vmatpush.msra.mxu0 0.0
  %5997 = vmatpush.msra.mxu0 0.0
  %5998 = vmatpush.msra.mxu0 0.0
  %5999 = vmatpush.msra.mxu0 0.0
  %6000 = vmatpush.msra.mxu0 0.0
  %6001 = vmatpush.msra.mxu0 0.0
  %6002 = vmatpush.msra.mxu0 0.0
  %6003 = vmatpush.msra.mxu0 0.0
  %6004 = vmatpush.msra.mxu0 0.0
  %6005 = vmatpush.msra.mxu0 0.0
  %6006 = vmatpush.msra.mxu0 0.0
  %6007 = vmatpush.msra.mxu0 0.0
  %6008 = vmatpush.msra.mxu0 0.0
  %6009 = vmatpush.msra.mxu0 0.0
  %6010 = vmatpush.msra.mxu0 %v5987
  %6011 = vmatpush.msra.mxu0 %v5985
  %6012 = vmatmul.f32.gmra.mxu0 %v5991
  %v6013 = vpop.f32.mrf.mxu0
  %v6014 = vadd.f32 0.0, %v6013
  %6015 = vmatmul.f32.gmra.mxu0 %v5994
  %v6016 = vpop.f32.mrf.mxu0
  %v6017 = vadd.f32 0.0, %v6016
  %6018 = vdwg.mxu0
  %6019 = vrot.lane.b32.xlu0 %v202, 48
  %v6020 = vpop.permute.xlu0 %6019
  %6021 = vrot.lane.b32.xlu0 %v205, 48
  %v6022 = vpop.permute.xlu0 %6021
  %v6026 = vsel %vm866, %v4510, 0
  %v6029 = vsel %vm866, %v4511, 0
  %6031 = vmatpush.msra.mxu0 0.0
  %6032 = vmatpush.msra.mxu0 0.0
  %6033 = vmatpush.msra.mxu0 0.0
  %6034 = vmatpush.msra.mxu0 0.0
  %6035 = vmatpush.msra.mxu0 0.0
  %6036 = vmatpush.msra.mxu0 0.0
  %6037 = vmatpush.msra.mxu0 0.0
  %6038 = vmatpush.msra.mxu0 0.0
  %6039 = vmatpush.msra.mxu0 0.0
  %6040 = vmatpush.msra.mxu0 0.0
  %6041 = vmatpush.msra.mxu0 0.0
  %6042 = vmatpush.msra.mxu0 0.0
  %6043 = vmatpush.msra.mxu0 0.0
  %6044 = vmatpush.msra.mxu0 0.0
  %6045 = vmatpush.msra.mxu0 %v6022
  %6046 = vmatpush.msra.mxu0 %v6020
  %6047 = vmatmul.f32.gmra.mxu0 %v6026
  %v6048 = vpop.f32.mrf.mxu0
  %v6049 = vadd.f32 0.0, %v6048
  %6050 = vmatmul.f32.gmra.mxu0 %v6029
  %v6051 = vpop.f32.mrf.mxu0
  %v6052 = vadd.f32 0.0, %v6051
  %6053 = vdwg.mxu0
  %6054 = vrot.lane.b32.xlu0 %v208, 48
  %v6055 = vpop.permute.xlu0 %6054
  %6056 = vrot.lane.b32.xlu0 %v211, 48
  %v6057 = vpop.permute.xlu0 %6056
  %v6061 = vsel %vm866, %v4512, 0
  %v6064 = vsel %vm866, %v4513, 0
  %6066 = vmatpush.msra.mxu0 0.0
  %6067 = vmatpush.msra.mxu0 0.0
  %6068 = vmatpush.msra.mxu0 0.0
  %6069 = vmatpush.msra.mxu0 0.0
  %6070 = vmatpush.msra.mxu0 0.0
  %6071 = vmatpush.msra.mxu0 0.0
  %6072 = vmatpush.msra.mxu0 0.0
  %6073 = vmatpush.msra.mxu0 0.0
  %6074 = vmatpush.msra.mxu0 0.0
  %6075 = vmatpush.msra.mxu0 0.0
  %6076 = vmatpush.msra.mxu0 0.0
  %6077 = vmatpush.msra.mxu0 0.0
  %6078 = vmatpush.msra.mxu0 0.0
  %6079 = vmatpush.msra.mxu0 0.0
  %6080 = vmatpush.msra.mxu0 %v6057
  %6081 = vmatpush.msra.mxu0 %v6055
  %6082 = vmatmul.f32.gmra.mxu0 %v6061
  %v6083 = vpop.f32.mrf.mxu0
  %v6084 = vadd.f32 0.0, %v6083
  %6085 = vmatmul.f32.gmra.mxu0 %v6064
  %v6086 = vpop.f32.mrf.mxu0
  %v6087 = vadd.f32 0.0, %v6086
  %6088 = vdwg.mxu0
  %6089 = vrot.lane.b32.xlu0 %v214, 48
  %v6090 = vpop.permute.xlu0 %6089
  %6091 = vrot.lane.b32.xlu0 %v217, 48
  %v6092 = vpop.permute.xlu0 %6091
  %v6096 = vsel %vm866, %v4514, 0
  %v6099 = vsel %vm866, %v4515, 0
  %6101 = vmatpush.msra.mxu0 0.0
  %6102 = vmatpush.msra.mxu0 0.0
  %6103 = vmatpush.msra.mxu0 0.0
  %6104 = vmatpush.msra.mxu0 0.0
  %6105 = vmatpush.msra.mxu0 0.0
  %6106 = vmatpush.msra.mxu0 0.0
  %6107 = vmatpush.msra.mxu0 0.0
  %6108 = vmatpush.msra.mxu0 0.0
  %6109 = vmatpush.msra.mxu0 0.0
  %6110 = vmatpush.msra.mxu0 0.0
  %6111 = vmatpush.msra.mxu0 0.0
  %6112 = vmatpush.msra.mxu0 0.0
  %6113 = vmatpush.msra.mxu0 0.0
  %6114 = vmatpush.msra.mxu0 0.0
  %6115 = vmatpush.msra.mxu0 %v6092
  %6116 = vmatpush.msra.mxu0 %v6090
  %6117 = vmatmul.f32.gmra.mxu0 %v6096
  %v6118 = vpop.f32.mrf.mxu0
  %v6119 = vadd.f32 0.0, %v6118
  %6120 = vmatmul.f32.gmra.mxu0 %v6099
  %v6121 = vpop.f32.mrf.mxu0
  %v6122 = vadd.f32 0.0, %v6121
  %6123 = vdwg.mxu0
  %6124 = vrot.lane.b32.xlu0 %v220, 48
  %v6125 = vpop.permute.xlu0 %6124
  %6126 = vrot.lane.b32.xlu0 %v223, 48
  %v6127 = vpop.permute.xlu0 %6126
  %v6131 = vsel %vm866, %v4516, 0
  %v6134 = vsel %vm866, %v4517, 0
  %6136 = vmatpush.msra.mxu0 0.0
  %6137 = vmatpush.msra.mxu0 0.0
  %6138 = vmatpush.msra.mxu0 0.0
  %6139 = vmatpush.msra.mxu0 0.0
  %6140 = vmatpush.msra.mxu0 0.0
  %6141 = vmatpush.msra.mxu0 0.0
  %6142 = vmatpush.msra.mxu0 0.0
  %6143 = vmatpush.msra.mxu0 0.0
  %6144 = vmatpush.msra.mxu0 0.0
  %6145 = vmatpush.msra.mxu0 0.0
  %6146 = vmatpush.msra.mxu0 0.0
  %6147 = vmatpush.msra.mxu0 0.0
  %6148 = vmatpush.msra.mxu0 0.0
  %6149 = vmatpush.msra.mxu0 0.0
  %6150 = vmatpush.msra.mxu0 %v6127
  %6151 = vmatpush.msra.mxu0 %v6125
  %6152 = vmatmul.f32.gmra.mxu0 %v6131
  %v6153 = vpop.f32.mrf.mxu0
  %v6154 = vadd.f32 0.0, %v6153
  %6155 = vmatmul.f32.gmra.mxu0 %v6134
  %v6156 = vpop.f32.mrf.mxu0
  %v6157 = vadd.f32 0.0, %v6156
  %6158 = vdwg.mxu0
  %6159 = vrot.lane.b32.xlu0 %v226, 48
  %v6160 = vpop.permute.xlu0 %6159
  %6161 = vrot.lane.b32.xlu0 %v229, 48
  %v6162 = vpop.permute.xlu0 %6161
  %v6166 = vsel %vm866, %v4518, 0
  %v6169 = vsel %vm866, %v4519, 0
  %6171 = vmatpush.msra.mxu0 0.0
  %6172 = vmatpush.msra.mxu0 0.0
  %6173 = vmatpush.msra.mxu0 0.0
  %6174 = vmatpush.msra.mxu0 0.0
  %6175 = vmatpush.msra.mxu0 0.0
  %6176 = vmatpush.msra.mxu0 0.0
  %6177 = vmatpush.msra.mxu0 0.0
  %6178 = vmatpush.msra.mxu0 0.0
  %6179 = vmatpush.msra.mxu0 0.0
  %6180 = vmatpush.msra.mxu0 0.0
  %6181 = vmatpush.msra.mxu0 0.0
  %6182 = vmatpush.msra.mxu0 0.0
  %6183 = vmatpush.msra.mxu0 0.0
  %6184 = vmatpush.msra.mxu0 0.0
  %6185 = vmatpush.msra.mxu0 %v6162
  %6186 = vmatpush.msra.mxu0 %v6160
  %6187 = vmatmul.f32.gmra.mxu0 %v6166
  %v6188 = vpop.f32.mrf.mxu0
  %v6189 = vadd.f32 0.0, %v6188
  %6190 = vmatmul.f32.gmra.mxu0 %v6169
  %v6191 = vpop.f32.mrf.mxu0
  %v6192 = vadd.f32 0.0, %v6191
  %6193 = vdwg.mxu0
  %6194 = vrot.lane.b32.xlu0 %v232, 48
  %v6195 = vpop.permute.xlu0 %6194
  %6196 = vrot.lane.b32.xlu0 %v235, 48
  %v6197 = vpop.permute.xlu0 %6196
  %v6201 = vsel %vm866, %v4520, 0
  %v6204 = vsel %vm866, %v4521, 0
  %6206 = vmatpush.msra.mxu0 0.0
  %6207 = vmatpush.msra.mxu0 0.0
  %6208 = vmatpush.msra.mxu0 0.0
  %6209 = vmatpush.msra.mxu0 0.0
  %6210 = vmatpush.msra.mxu0 0.0
  %6211 = vmatpush.msra.mxu0 0.0
  %6212 = vmatpush.msra.mxu0 0.0
  %6213 = vmatpush.msra.mxu0 0.0
  %6214 = vmatpush.msra.mxu0 0.0
  %6215 = vmatpush.msra.mxu0 0.0
  %6216 = vmatpush.msra.mxu0 0.0
  %6217 = vmatpush.msra.mxu0 0.0
  %6218 = vmatpush.msra.mxu0 0.0
  %6219 = vmatpush.msra.mxu0 0.0
  %6220 = vmatpush.msra.mxu0 %v6197
  %6221 = vmatpush.msra.mxu0 %v6195
  %6222 = vmatmul.f32.gmra.mxu0 %v6201
  %v6223 = vpop.f32.mrf.mxu0
  %v6224 = vadd.f32 0.0, %v6223
  %6225 = vmatmul.f32.gmra.mxu0 %v6204
  %v6226 = vpop.f32.mrf.mxu0
  %v6227 = vadd.f32 0.0, %v6226
  %6228 = vdwg.mxu0
  %6229 = vrot.lane.b32.xlu0 %v238, 48
  %v6230 = vpop.permute.xlu0 %6229
  %6231 = vrot.lane.b32.xlu0 %v241, 48
  %v6232 = vpop.permute.xlu0 %6231
  %v6236 = vsel %vm866, %v4522, 0
  %v6239 = vsel %vm866, %v4523, 0
  %6241 = vmatpush.msra.mxu0 0.0
  %6242 = vmatpush.msra.mxu0 0.0
  %6243 = vmatpush.msra.mxu0 0.0
  %6244 = vmatpush.msra.mxu0 0.0
  %6245 = vmatpush.msra.mxu0 0.0
  %6246 = vmatpush.msra.mxu0 0.0
  %6247 = vmatpush.msra.mxu0 0.0
  %6248 = vmatpush.msra.mxu0 0.0
  %6249 = vmatpush.msra.mxu0 0.0
  %6250 = vmatpush.msra.mxu0 0.0
  %6251 = vmatpush.msra.mxu0 0.0
  %6252 = vmatpush.msra.mxu0 0.0
  %6253 = vmatpush.msra.mxu0 0.0
  %6254 = vmatpush.msra.mxu0 0.0
  %6255 = vmatpush.msra.mxu0 %v6232
  %6256 = vmatpush.msra.mxu0 %v6230
  %6257 = vmatmul.f32.gmra.mxu0 %v6236
  %v6258 = vpop.f32.mrf.mxu0
  %v6259 = vadd.f32 0.0, %v6258
  %6260 = vmatmul.f32.gmra.mxu0 %v6239
  %v6261 = vpop.f32.mrf.mxu0
  %v6262 = vadd.f32 0.0, %v6261
  %6263 = vdwg.mxu0
  %6264 = vrot.lane.b32.xlu0 %v244, 48
  %v6265 = vpop.permute.xlu0 %6264
  %6266 = vrot.lane.b32.xlu0 %v247, 48
  %v6267 = vpop.permute.xlu0 %6266
  %v6271 = vsel %vm866, %v4524, 0
  %v6274 = vsel %vm866, %v4525, 0
  %6276 = vmatpush.msra.mxu0 0.0
  %6277 = vmatpush.msra.mxu0 0.0
  %6278 = vmatpush.msra.mxu0 0.0
  %6279 = vmatpush.msra.mxu0 0.0
  %6280 = vmatpush.msra.mxu0 0.0
  %6281 = vmatpush.msra.mxu0 0.0
  %6282 = vmatpush.msra.mxu0 0.0
  %6283 = vmatpush.msra.mxu0 0.0
  %6284 = vmatpush.msra.mxu0 0.0
  %6285 = vmatpush.msra.mxu0 0.0
  %6286 = vmatpush.msra.mxu0 0.0
  %6287 = vmatpush.msra.mxu0 0.0
  %6288 = vmatpush.msra.mxu0 0.0
  %6289 = vmatpush.msra.mxu0 0.0
  %6290 = vmatpush.msra.mxu0 %v6267
  %6291 = vmatpush.msra.mxu0 %v6265
  %6292 = vmatmul.f32.gmra.mxu0 %v6271
  %v6293 = vpop.f32.mrf.mxu0
  %v6294 = vadd.f32 0.0, %v6293
  %6295 = vmatmul.f32.gmra.mxu0 %v6274
  %v6296 = vpop.f32.mrf.mxu0
  %v6297 = vadd.f32 0.0, %v6296
  %6298 = vdwg.mxu0
  %6299 = vrot.lane.b32.xlu0 %v250, 48
  %v6300 = vpop.permute.xlu0 %6299
  %6301 = vrot.lane.b32.xlu0 %v253, 48
  %v6302 = vpop.permute.xlu0 %6301
  %v6306 = vsel %vm866, %v4526, 0
  %v6309 = vsel %vm866, %v4527, 0
  %6311 = vmatpush.msra.mxu0 0.0
  %6312 = vmatpush.msra.mxu0 0.0
  %6313 = vmatpush.msra.mxu0 0.0
  %6314 = vmatpush.msra.mxu0 0.0
  %6315 = vmatpush.msra.mxu0 0.0
  %6316 = vmatpush.msra.mxu0 0.0
  %6317 = vmatpush.msra.mxu0 0.0
  %6318 = vmatpush.msra.mxu0 0.0
  %6319 = vmatpush.msra.mxu0 0.0
  %6320 = vmatpush.msra.mxu0 0.0
  %6321 = vmatpush.msra.mxu0 0.0
  %6322 = vmatpush.msra.mxu0 0.0
  %6323 = vmatpush.msra.mxu0 0.0
  %6324 = vmatpush.msra.mxu0 0.0
  %6325 = vmatpush.msra.mxu0 %v6302
  %6326 = vmatpush.msra.mxu0 %v6300
  %6327 = vmatmul.f32.gmra.mxu0 %v6306
  %v6328 = vpop.f32.mrf.mxu0
  %v6329 = vadd.f32 0.0, %v6328
  %6330 = vmatmul.f32.gmra.mxu0 %v6309
  %v6331 = vpop.f32.mrf.mxu0
  %v6332 = vadd.f32 0.0, %v6331
  %6333 = vdwg.mxu0
  %6334 = vrot.lane.b32.xlu0 %v256, 48
  %v6335 = vpop.permute.xlu0 %6334
  %6336 = vrot.lane.b32.xlu0 %v259, 48
  %v6337 = vpop.permute.xlu0 %6336
  %v6341 = vsel %vm866, %v4528, 0
  %v6344 = vsel %vm866, %v4529, 0
  %6346 = vmatpush.msra.mxu0 0.0
  %6347 = vmatpush.msra.mxu0 0.0
  %6348 = vmatpush.msra.mxu0 0.0
  %6349 = vmatpush.msra.mxu0 0.0
  %6350 = vmatpush.msra.mxu0 0.0
  %6351 = vmatpush.msra.mxu0 0.0
  %6352 = vmatpush.msra.mxu0 0.0
  %6353 = vmatpush.msra.mxu0 0.0
  %6354 = vmatpush.msra.mxu0 0.0
  %6355 = vmatpush.msra.mxu0 0.0
  %6356 = vmatpush.msra.mxu0 0.0
  %6357 = vmatpush.msra.mxu0 0.0
  %6358 = vmatpush.msra.mxu0 0.0
  %6359 = vmatpush.msra.mxu0 0.0
  %6360 = vmatpush.msra.mxu0 %v6337
  %6361 = vmatpush.msra.mxu0 %v6335
  %6362 = vmatmul.f32.gmra.mxu0 %v6341
  %v6363 = vpop.f32.mrf.mxu0
  %v6364 = vadd.f32 0.0, %v6363
  %6365 = vmatmul.f32.gmra.mxu0 %v6344
  %v6366 = vpop.f32.mrf.mxu0
  %v6367 = vadd.f32 0.0, %v6366
  %6368 = vdwg.mxu0
  %6369 = vrot.lane.b32.xlu0 %v262, 48
  %v6370 = vpop.permute.xlu0 %6369
  %6371 = vrot.lane.b32.xlu0 %v265, 48
  %v6372 = vpop.permute.xlu0 %6371
  %v6376 = vsel %vm866, %v4530, 0
  %v6379 = vsel %vm866, %v4531, 0
  %6381 = vmatpush.msra.mxu0 0.0
  %6382 = vmatpush.msra.mxu0 0.0
  %6383 = vmatpush.msra.mxu0 0.0
  %6384 = vmatpush.msra.mxu0 0.0
  %6385 = vmatpush.msra.mxu0 0.0
  %6386 = vmatpush.msra.mxu0 0.0
  %6387 = vmatpush.msra.mxu0 0.0
  %6388 = vmatpush.msra.mxu0 0.0
  %6389 = vmatpush.msra.mxu0 0.0
  %6390 = vmatpush.msra.mxu0 0.0
  %6391 = vmatpush.msra.mxu0 0.0
  %6392 = vmatpush.msra.mxu0 0.0
  %6393 = vmatpush.msra.mxu0 0.0
  %6394 = vmatpush.msra.mxu0 0.0
  %6395 = vmatpush.msra.mxu0 %v6372
  %6396 = vmatpush.msra.mxu0 %v6370
  %6397 = vmatmul.f32.gmra.mxu0 %v6376
  %v6398 = vpop.f32.mrf.mxu0
  %v6399 = vadd.f32 0.0, %v6398
  %6400 = vmatmul.f32.gmra.mxu0 %v6379
  %v6401 = vpop.f32.mrf.mxu0
  %v6402 = vadd.f32 0.0, %v6401
  %6403 = vdwg.mxu0
  %6404 = vrot.lane.b32.xlu0 %v268, 48
  %v6405 = vpop.permute.xlu0 %6404
  %6406 = vrot.lane.b32.xlu0 %v271, 48
  %v6407 = vpop.permute.xlu0 %6406
  %v6411 = vsel %vm866, %v4532, 0
  %v6414 = vsel %vm866, %v4533, 0
  %6416 = vmatpush.msra.mxu0 0.0
  %6417 = vmatpush.msra.mxu0 0.0
  %6418 = vmatpush.msra.mxu0 0.0
  %6419 = vmatpush.msra.mxu0 0.0
  %6420 = vmatpush.msra.mxu0 0.0
  %6421 = vmatpush.msra.mxu0 0.0
  %6422 = vmatpush.msra.mxu0 0.0
  %6423 = vmatpush.msra.mxu0 0.0
  %6424 = vmatpush.msra.mxu0 0.0
  %6425 = vmatpush.msra.mxu0 0.0
  %6426 = vmatpush.msra.mxu0 0.0
  %6427 = vmatpush.msra.mxu0 0.0
  %6428 = vmatpush.msra.mxu0 0.0
  %6429 = vmatpush.msra.mxu0 0.0
  %6430 = vmatpush.msra.mxu0 %v6407
  %6431 = vmatpush.msra.mxu0 %v6405
  %6432 = vmatmul.f32.gmra.mxu0 %v6411
  %v6433 = vpop.f32.mrf.mxu0
  %v6434 = vadd.f32 0.0, %v6433
  %6435 = vmatmul.f32.gmra.mxu0 %v6414
  %v6436 = vpop.f32.mrf.mxu0
  %v6437 = vadd.f32 0.0, %v6436
  %6438 = vdwg.mxu0
  %6471 = vrot.lane.b32.xlu0 %v5909, 16
  %v6472 = vpop.permute.xlu0 %6471
  %6473 = vrot.lane.b32.xlu0 %v5912, 16
  %v6474 = vpop.permute.xlu0 %6473
  %6475 = vrot.lane.b32.xlu0 %v5944, 16
  %v6476 = vpop.permute.xlu0 %6475
  %6477 = vrot.lane.b32.xlu0 %v5947, 16
  %v6478 = vpop.permute.xlu0 %6477
  %6479 = vrot.lane.b32.xlu0 %v5979, 16
  %v6480 = vpop.permute.xlu0 %6479
  %6481 = vrot.lane.b32.xlu0 %v5982, 16
  %v6482 = vpop.permute.xlu0 %6481
  %6483 = vrot.lane.b32.xlu0 %v6014, 16
  %v6484 = vpop.permute.xlu0 %6483
  %6485 = vrot.lane.b32.xlu0 %v6017, 16
  %v6486 = vpop.permute.xlu0 %6485
  %6487 = vrot.lane.b32.xlu0 %v6049, 16
  %v6488 = vpop.permute.xlu0 %6487
  %6489 = vrot.lane.b32.xlu0 %v6052, 16
  %v6490 = vpop.permute.xlu0 %6489
  %6491 = vrot.lane.b32.xlu0 %v6084, 16
  %v6492 = vpop.permute.xlu0 %6491
  %6493 = vrot.lane.b32.xlu0 %v6087, 16
  %v6494 = vpop.permute.xlu0 %6493
  %6495 = vrot.lane.b32.xlu0 %v6119, 16
  %v6496 = vpop.permute.xlu0 %6495
  %6497 = vrot.lane.b32.xlu0 %v6122, 16
  %v6498 = vpop.permute.xlu0 %6497
  %6499 = vrot.lane.b32.xlu0 %v6154, 16
  %v6500 = vpop.permute.xlu0 %6499
  %6501 = vrot.lane.b32.xlu0 %v6157, 16
  %v6502 = vpop.permute.xlu0 %6501
  %6503 = vrot.lane.b32.xlu0 %v6189, 16
  %v6504 = vpop.permute.xlu0 %6503
  %6505 = vrot.lane.b32.xlu0 %v6192, 16
  %v6506 = vpop.permute.xlu0 %6505
  %6507 = vrot.lane.b32.xlu0 %v6224, 16
  %v6508 = vpop.permute.xlu0 %6507
  %6509 = vrot.lane.b32.xlu0 %v6227, 16
  %v6510 = vpop.permute.xlu0 %6509
  %6511 = vrot.lane.b32.xlu0 %v6259, 16
  %v6512 = vpop.permute.xlu0 %6511
  %6513 = vrot.lane.b32.xlu0 %v6262, 16
  %v6514 = vpop.permute.xlu0 %6513
  %6515 = vrot.lane.b32.xlu0 %v6294, 16
  %v6516 = vpop.permute.xlu0 %6515
  %6517 = vrot.lane.b32.xlu0 %v6297, 16
  %v6518 = vpop.permute.xlu0 %6517
  %6519 = vrot.lane.b32.xlu0 %v6329, 16
  %v6520 = vpop.permute.xlu0 %6519
  %6521 = vrot.lane.b32.xlu0 %v6332, 16
  %v6522 = vpop.permute.xlu0 %6521
  %6523 = vrot.lane.b32.xlu0 %v6364, 16
  %v6524 = vpop.permute.xlu0 %6523
  %6525 = vrot.lane.b32.xlu0 %v6367, 16
  %v6526 = vpop.permute.xlu0 %6525
  %6527 = vrot.lane.b32.xlu0 %v6399, 16
  %v6528 = vpop.permute.xlu0 %6527
  %6529 = vrot.lane.b32.xlu0 %v6402, 16
  %v6530 = vpop.permute.xlu0 %6529
  %6531 = vrot.lane.b32.xlu0 %v6434, 16
  %v6532 = vpop.permute.xlu0 %6531
  %6533 = vrot.lane.b32.xlu0 %v6437, 16
  %v6534 = vpop.permute.xlu0 %6533
  %vm6567 = vcmask 195712
  %6568 = vst.msk [vmem:[#allocation3] sm:$0xff] %vm6567, %v6472
  %6569 = vst.msk [vmem:[#allocation3 + $0x8] sm:$0xff] %vm6567, %v6474
  %6570 = vst.msk [vmem:[#allocation3 + $0x10] sm:$0xff] %vm6567, %v6476
  %6571 = vst.msk [vmem:[#allocation3 + $0x18] sm:$0xff] %vm6567, %v6478
  %6572 = vst.msk [vmem:[#allocation3 + $0x20] sm:$0xff] %vm6567, %v6480
  %6573 = vst.msk [vmem:[#allocation3 + $0x28] sm:$0xff] %vm6567, %v6482
  %6574 = vst.msk [vmem:[#allocation3 + $0x30] sm:$0xff] %vm6567, %v6484
  %6575 = vst.msk [vmem:[#allocation3 + $0x38] sm:$0xff] %vm6567, %v6486
  %6576 = vst.msk [vmem:[#allocation3 + $0x40] sm:$0xff] %vm6567, %v6488
  %6577 = vst.msk [vmem:[#allocation3 + $0x48] sm:$0xff] %vm6567, %v6490
  %6578 = vst.msk [vmem:[#allocation3 + $0x50] sm:$0xff] %vm6567, %v6492
  %6579 = vst.msk [vmem:[#allocation3 + $0x58] sm:$0xff] %vm6567, %v6494
  %6580 = vst.msk [vmem:[#allocation3 + $0x60] sm:$0xff] %vm6567, %v6496
  %6581 = vst.msk [vmem:[#allocation3 + $0x68] sm:$0xff] %vm6567, %v6498
  %6582 = vst.msk [vmem:[#allocation3 + $0x70] sm:$0xff] %vm6567, %v6500
  %6583 = vst.msk [vmem:[#allocation3 + $0x78] sm:$0xff] %vm6567, %v6502
  %6584 = vst.msk [vmem:[#allocation3 + $0x80] sm:$0xff] %vm6567, %v6504
  %6585 = vst.msk [vmem:[#allocation3 + $0x88] sm:$0xff] %vm6567, %v6506
  %6586 = vst.msk [vmem:[#allocation3 + $0x90] sm:$0xff] %vm6567, %v6508
  %6587 = vst.msk [vmem:[#allocation3 + $0x98] sm:$0xff] %vm6567, %v6510
  %6588 = vst.msk [vmem:[#allocation3 + $0xa0] sm:$0xff] %vm6567, %v6512
  %6589 = vst.msk [vmem:[#allocation3 + $0xa8] sm:$0xff] %vm6567, %v6514
  %6590 = vst.msk [vmem:[#allocation3 + $0xb0] sm:$0xff] %vm6567, %v6516
  %6591 = vst.msk [vmem:[#allocation3 + $0xb8] sm:$0xff] %vm6567, %v6518
  %6592 = vst.msk [vmem:[#allocation3 + $0xc0] sm:$0xff] %vm6567, %v6520
  %6593 = vst.msk [vmem:[#allocation3 + $0xc8] sm:$0xff] %vm6567, %v6522
  %6594 = vst.msk [vmem:[#allocation3 + $0xd0] sm:$0xff] %vm6567, %v6524
  %6595 = vst.msk [vmem:[#allocation3 + $0xd8] sm:$0xff] %vm6567, %v6526
  %6596 = vst.msk [vmem:[#allocation3 + $0xe0] sm:$0xff] %vm6567, %v6528
  %6597 = vst.msk [vmem:[#allocation3 + $0xe8] sm:$0xff] %vm6567, %v6530
  %6598 = vst.msk [vmem:[#allocation3 + $0xf0] sm:$0xff] %vm6567, %v6532
  %6599 = vst.msk [vmem:[#allocation3 + $0xf8] sm:$0xff] %vm6567, %v6534
  %6600 = vrot.lane.b32.xlu0 %v178, 40
  %v6601 = vpop.permute.xlu0 %6600
  %6602 = vrot.lane.b32.xlu0 %v181, 40
  %v6603 = vpop.permute.xlu0 %6602
  %v6607 = vsel %vm866, %v4534, 0
  %v6610 = vsel %vm866, %v4535, 0
  %6612 = vmatpush.msra.mxu0 0.0
  %6613 = vmatpush.msra.mxu0 0.0
  %6614 = vmatpush.msra.mxu0 0.0
  %6615 = vmatpush.msra.mxu0 0.0
  %6616 = vmatpush.msra.mxu0 0.0
  %6617 = vmatpush.msra.mxu0 0.0
  %6618 = vmatpush.msra.mxu0 0.0
  %6619 = vmatpush.msra.mxu0 0.0
  %6620 = vmatpush.msra.mxu0 0.0
  %6621 = vmatpush.msra.mxu0 0.0
  %6622 = vmatpush.msra.mxu0 0.0
  %6623 = vmatpush.msra.mxu0 0.0
  %6624 = vmatpush.msra.mxu0 0.0
  %6625 = vmatpush.msra.mxu0 0.0
  %6626 = vmatpush.msra.mxu0 %v6603
  %6627 = vmatpush.msra.mxu0 %v6601
  %6628 = vmatmul.f32.gmra.mxu0 %v6607
  %v6629 = vpop.f32.mrf.mxu0
  %v6630 = vadd.f32 0.0, %v6629
  %6631 = vmatmul.f32.gmra.mxu0 %v6610
  %v6632 = vpop.f32.mrf.mxu0
  %v6633 = vadd.f32 0.0, %v6632
  %6634 = vdwg.mxu0
  %6635 = vrot.lane.b32.xlu0 %v184, 40
  %v6636 = vpop.permute.xlu0 %6635
  %6637 = vrot.lane.b32.xlu0 %v187, 40
  %v6638 = vpop.permute.xlu0 %6637
  %v6642 = vsel %vm866, %v4536, 0
  %v6645 = vsel %vm866, %v4537, 0
  %6647 = vmatpush.msra.mxu0 0.0
  %6648 = vmatpush.msra.mxu0 0.0
  %6649 = vmatpush.msra.mxu0 0.0
  %6650 = vmatpush.msra.mxu0 0.0
  %6651 = vmatpush.msra.mxu0 0.0
  %6652 = vmatpush.msra.mxu0 0.0
  %6653 = vmatpush.msra.mxu0 0.0
  %6654 = vmatpush.msra.mxu0 0.0
  %6655 = vmatpush.msra.mxu0 0.0
  %6656 = vmatpush.msra.mxu0 0.0
  %6657 = vmatpush.msra.mxu0 0.0
  %6658 = vmatpush.msra.mxu0 0.0
  %6659 = vmatpush.msra.mxu0 0.0
  %6660 = vmatpush.msra.mxu0 0.0
  %6661 = vmatpush.msra.mxu0 %v6638
  %6662 = vmatpush.msra.mxu0 %v6636
  %6663 = vmatmul.f32.gmra.mxu0 %v6642
  %v6664 = vpop.f32.mrf.mxu0
  %v6665 = vadd.f32 0.0, %v6664
  %6666 = vmatmul.f32.gmra.mxu0 %v6645
  %v6667 = vpop.f32.mrf.mxu0
  %v6668 = vadd.f32 0.0, %v6667
  %6669 = vdwg.mxu0
  %6670 = vrot.lane.b32.xlu0 %v190, 40
  %v6671 = vpop.permute.xlu0 %6670
  %6672 = vrot.lane.b32.xlu0 %v193, 40
  %v6673 = vpop.permute.xlu0 %6672
  %v6677 = vsel %vm866, %v4538, 0
  %v6680 = vsel %vm866, %v4539, 0
  %6682 = vmatpush.msra.mxu0 0.0
  %6683 = vmatpush.msra.mxu0 0.0
  %6684 = vmatpush.msra.mxu0 0.0
  %6685 = vmatpush.msra.mxu0 0.0
  %6686 = vmatpush.msra.mxu0 0.0
  %6687 = vmatpush.msra.mxu0 0.0
  %6688 = vmatpush.msra.mxu0 0.0
  %6689 = vmatpush.msra.mxu0 0.0
  %6690 = vmatpush.msra.mxu0 0.0
  %6691 = vmatpush.msra.mxu0 0.0
  %6692 = vmatpush.msra.mxu0 0.0
  %6693 = vmatpush.msra.mxu0 0.0
  %6694 = vmatpush.msra.mxu0 0.0
  %6695 = vmatpush.msra.mxu0 0.0
  %6696 = vmatpush.msra.mxu0 %v6673
  %6697 = vmatpush.msra.mxu0 %v6671
  %6698 = vmatmul.f32.gmra.mxu0 %v6677
  %v6699 = vpop.f32.mrf.mxu0
  %v6700 = vadd.f32 0.0, %v6699
  %6701 = vmatmul.f32.gmra.mxu0 %v6680
  %v6702 = vpop.f32.mrf.mxu0
  %v6703 = vadd.f32 0.0, %v6702
  %6704 = vdwg.mxu0
  %6705 = vrot.lane.b32.xlu0 %v196, 40
  %v6706 = vpop.permute.xlu0 %6705
  %6707 = vrot.lane.b32.xlu0 %v199, 40
  %v6708 = vpop.permute.xlu0 %6707
  %v6712 = vsel %vm866, %v4540, 0
  %v6715 = vsel %vm866, %v4541, 0
  %6717 = vmatpush.msra.mxu0 0.0
  %6718 = vmatpush.msra.mxu0 0.0
  %6719 = vmatpush.msra.mxu0 0.0
  %6720 = vmatpush.msra.mxu0 0.0
  %6721 = vmatpush.msra.mxu0 0.0
  %6722 = vmatpush.msra.mxu0 0.0
  %6723 = vmatpush.msra.mxu0 0.0
  %6724 = vmatpush.msra.mxu0 0.0
  %6725 = vmatpush.msra.mxu0 0.0
  %6726 = vmatpush.msra.mxu0 0.0
  %6727 = vmatpush.msra.mxu0 0.0
  %6728 = vmatpush.msra.mxu0 0.0
  %6729 = vmatpush.msra.mxu0 0.0
  %6730 = vmatpush.msra.mxu0 0.0
  %6731 = vmatpush.msra.mxu0 %v6708
  %6732 = vmatpush.msra.mxu0 %v6706
  %6733 = vmatmul.f32.gmra.mxu0 %v6712
  %v6734 = vpop.f32.mrf.mxu0
  %v6735 = vadd.f32 0.0, %v6734
  %6736 = vmatmul.f32.gmra.mxu0 %v6715
  %v6737 = vpop.f32.mrf.mxu0
  %v6738 = vadd.f32 0.0, %v6737
  %6739 = vdwg.mxu0
  %6740 = vrot.lane.b32.xlu0 %v202, 40
  %v6741 = vpop.permute.xlu0 %6740
  %6742 = vrot.lane.b32.xlu0 %v205, 40
  %v6743 = vpop.permute.xlu0 %6742
  %v6747 = vsel %vm866, %v4542, 0
  %v6750 = vsel %vm866, %v4543, 0
  %6752 = vmatpush.msra.mxu0 0.0
  %6753 = vmatpush.msra.mxu0 0.0
  %6754 = vmatpush.msra.mxu0 0.0
  %6755 = vmatpush.msra.mxu0 0.0
  %6756 = vmatpush.msra.mxu0 0.0
  %6757 = vmatpush.msra.mxu0 0.0
  %6758 = vmatpush.msra.mxu0 0.0
  %6759 = vmatpush.msra.mxu0 0.0
  %6760 = vmatpush.msra.mxu0 0.0
  %6761 = vmatpush.msra.mxu0 0.0
  %6762 = vmatpush.msra.mxu0 0.0
  %6763 = vmatpush.msra.mxu0 0.0
  %6764 = vmatpush.msra.mxu0 0.0
  %6765 = vmatpush.msra.mxu0 0.0
  %6766 = vmatpush.msra.mxu0 %v6743
  %6767 = vmatpush.msra.mxu0 %v6741
  %6768 = vmatmul.f32.gmra.mxu0 %v6747
  %v6769 = vpop.f32.mrf.mxu0
  %v6770 = vadd.f32 0.0, %v6769
  %6771 = vmatmul.f32.gmra.mxu0 %v6750
  %v6772 = vpop.f32.mrf.mxu0
  %v6773 = vadd.f32 0.0, %v6772
  %6774 = vdwg.mxu0
  %6775 = vrot.lane.b32.xlu0 %v208, 40
  %v6776 = vpop.permute.xlu0 %6775
  %6777 = vrot.lane.b32.xlu0 %v211, 40
  %v6778 = vpop.permute.xlu0 %6777
  %v6782 = vsel %vm866, %v4544, 0
  %v6785 = vsel %vm866, %v4545, 0
  %6787 = vmatpush.msra.mxu0 0.0
  %6788 = vmatpush.msra.mxu0 0.0
  %6789 = vmatpush.msra.mxu0 0.0
  %6790 = vmatpush.msra.mxu0 0.0
  %6791 = vmatpush.msra.mxu0 0.0
  %6792 = vmatpush.msra.mxu0 0.0
  %6793 = vmatpush.msra.mxu0 0.0
  %6794 = vmatpush.msra.mxu0 0.0
  %6795 = vmatpush.msra.mxu0 0.0
  %6796 = vmatpush.msra.mxu0 0.0
  %6797 = vmatpush.msra.mxu0 0.0
  %6798 = vmatpush.msra.mxu0 0.0
  %6799 = vmatpush.msra.mxu0 0.0
  %6800 = vmatpush.msra.mxu0 0.0
  %6801 = vmatpush.msra.mxu0 %v6778
  %6802 = vmatpush.msra.mxu0 %v6776
  %6803 = vmatmul.f32.gmra.mxu0 %v6782
  %v6804 = vpop.f32.mrf.mxu0
  %v6805 = vadd.f32 0.0, %v6804
  %6806 = vmatmul.f32.gmra.mxu0 %v6785
  %v6807 = vpop.f32.mrf.mxu0
  %v6808 = vadd.f32 0.0, %v6807
  %6809 = vdwg.mxu0
  %6810 = vrot.lane.b32.xlu0 %v214, 40
  %v6811 = vpop.permute.xlu0 %6810
  %6812 = vrot.lane.b32.xlu0 %v217, 40
  %v6813 = vpop.permute.xlu0 %6812
  %v6817 = vsel %vm866, %v4546, 0
  %v6820 = vsel %vm866, %v4547, 0
  %6822 = vmatpush.msra.mxu0 0.0
  %6823 = vmatpush.msra.mxu0 0.0
  %6824 = vmatpush.msra.mxu0 0.0
  %6825 = vmatpush.msra.mxu0 0.0
  %6826 = vmatpush.msra.mxu0 0.0
  %6827 = vmatpush.msra.mxu0 0.0
  %6828 = vmatpush.msra.mxu0 0.0
  %6829 = vmatpush.msra.mxu0 0.0
  %6830 = vmatpush.msra.mxu0 0.0
  %6831 = vmatpush.msra.mxu0 0.0
  %6832 = vmatpush.msra.mxu0 0.0
  %6833 = vmatpush.msra.mxu0 0.0
  %6834 = vmatpush.msra.mxu0 0.0
  %6835 = vmatpush.msra.mxu0 0.0
  %6836 = vmatpush.msra.mxu0 %v6813
  %6837 = vmatpush.msra.mxu0 %v6811
  %6838 = vmatmul.f32.gmra.mxu0 %v6817
  %v6839 = vpop.f32.mrf.mxu0
  %v6840 = vadd.f32 0.0, %v6839
  %6841 = vmatmul.f32.gmra.mxu0 %v6820
  %v6842 = vpop.f32.mrf.mxu0
  %v6843 = vadd.f32 0.0, %v6842
  %6844 = vdwg.mxu0
  %6845 = vrot.lane.b32.xlu0 %v220, 40
  %v6846 = vpop.permute.xlu0 %6845
  %6847 = vrot.lane.b32.xlu0 %v223, 40
  %v6848 = vpop.permute.xlu0 %6847
  %v6852 = vsel %vm866, %v4548, 0
  %v6855 = vsel %vm866, %v4549, 0
  %6857 = vmatpush.msra.mxu0 0.0
  %6858 = vmatpush.msra.mxu0 0.0
  %6859 = vmatpush.msra.mxu0 0.0
  %6860 = vmatpush.msra.mxu0 0.0
  %6861 = vmatpush.msra.mxu0 0.0
  %6862 = vmatpush.msra.mxu0 0.0
  %6863 = vmatpush.msra.mxu0 0.0
  %6864 = vmatpush.msra.mxu0 0.0
  %6865 = vmatpush.msra.mxu0 0.0
  %6866 = vmatpush.msra.mxu0 0.0
  %6867 = vmatpush.msra.mxu0 0.0
  %6868 = vmatpush.msra.mxu0 0.0
  %6869 = vmatpush.msra.mxu0 0.0
  %6870 = vmatpush.msra.mxu0 0.0
  %6871 = vmatpush.msra.mxu0 %v6848
  %6872 = vmatpush.msra.mxu0 %v6846
  %6873 = vmatmul.f32.gmra.mxu0 %v6852
  %v6874 = vpop.f32.mrf.mxu0
  %v6875 = vadd.f32 0.0, %v6874
  %6876 = vmatmul.f32.gmra.mxu0 %v6855
  %v6877 = vpop.f32.mrf.mxu0
  %v6878 = vadd.f32 0.0, %v6877
  %6879 = vdwg.mxu0
  %6880 = vrot.lane.b32.xlu0 %v226, 40
  %v6881 = vpop.permute.xlu0 %6880
  %6882 = vrot.lane.b32.xlu0 %v229, 40
  %v6883 = vpop.permute.xlu0 %6882
  %v6887 = vsel %vm866, %v4550, 0
  %v6890 = vsel %vm866, %v4551, 0
  %6892 = vmatpush.msra.mxu0 0.0
  %6893 = vmatpush.msra.mxu0 0.0
  %6894 = vmatpush.msra.mxu0 0.0
  %6895 = vmatpush.msra.mxu0 0.0
  %6896 = vmatpush.msra.mxu0 0.0
  %6897 = vmatpush.msra.mxu0 0.0
  %6898 = vmatpush.msra.mxu0 0.0
  %6899 = vmatpush.msra.mxu0 0.0
  %6900 = vmatpush.msra.mxu0 0.0
  %6901 = vmatpush.msra.mxu0 0.0
  %6902 = vmatpush.msra.mxu0 0.0
  %6903 = vmatpush.msra.mxu0 0.0
  %6904 = vmatpush.msra.mxu0 0.0
  %6905 = vmatpush.msra.mxu0 0.0
  %6906 = vmatpush.msra.mxu0 %v6883
  %6907 = vmatpush.msra.mxu0 %v6881
  %6908 = vmatmul.f32.gmra.mxu0 %v6887
  %v6909 = vpop.f32.mrf.mxu0
  %v6910 = vadd.f32 0.0, %v6909
  %6911 = vmatmul.f32.gmra.mxu0 %v6890
  %v6912 = vpop.f32.mrf.mxu0
  %v6913 = vadd.f32 0.0, %v6912
  %6914 = vdwg.mxu0
  %6915 = vrot.lane.b32.xlu0 %v232, 40
  %v6916 = vpop.permute.xlu0 %6915
  %6917 = vrot.lane.b32.xlu0 %v235, 40
  %v6918 = vpop.permute.xlu0 %6917
  %v6922 = vsel %vm866, %v4552, 0
  %v6925 = vsel %vm866, %v4553, 0
  %6927 = vmatpush.msra.mxu0 0.0
  %6928 = vmatpush.msra.mxu0 0.0
  %6929 = vmatpush.msra.mxu0 0.0
  %6930 = vmatpush.msra.mxu0 0.0
  %6931 = vmatpush.msra.mxu0 0.0
  %6932 = vmatpush.msra.mxu0 0.0
  %6933 = vmatpush.msra.mxu0 0.0
  %6934 = vmatpush.msra.mxu0 0.0
  %6935 = vmatpush.msra.mxu0 0.0
  %6936 = vmatpush.msra.mxu0 0.0
  %6937 = vmatpush.msra.mxu0 0.0
  %6938 = vmatpush.msra.mxu0 0.0
  %6939 = vmatpush.msra.mxu0 0.0
  %6940 = vmatpush.msra.mxu0 0.0
  %6941 = vmatpush.msra.mxu0 %v6918
  %6942 = vmatpush.msra.mxu0 %v6916
  %6943 = vmatmul.f32.gmra.mxu0 %v6922
  %v6944 = vpop.f32.mrf.mxu0
  %v6945 = vadd.f32 0.0, %v6944
  %6946 = vmatmul.f32.gmra.mxu0 %v6925
  %v6947 = vpop.f32.mrf.mxu0
  %v6948 = vadd.f32 0.0, %v6947
  %6949 = vdwg.mxu0
  %6950 = vrot.lane.b32.xlu0 %v238, 40
  %v6951 = vpop.permute.xlu0 %6950
  %6952 = vrot.lane.b32.xlu0 %v241, 40
  %v6953 = vpop.permute.xlu0 %6952
  %v6957 = vsel %vm866, %v4554, 0
  %v6960 = vsel %vm866, %v4555, 0
  %6962 = vmatpush.msra.mxu0 0.0
  %6963 = vmatpush.msra.mxu0 0.0
  %6964 = vmatpush.msra.mxu0 0.0
  %6965 = vmatpush.msra.mxu0 0.0
  %6966 = vmatpush.msra.mxu0 0.0
  %6967 = vmatpush.msra.mxu0 0.0
  %6968 = vmatpush.msra.mxu0 0.0
  %6969 = vmatpush.msra.mxu0 0.0
  %6970 = vmatpush.msra.mxu0 0.0
  %6971 = vmatpush.msra.mxu0 0.0
  %6972 = vmatpush.msra.mxu0 0.0
  %6973 = vmatpush.msra.mxu0 0.0
  %6974 = vmatpush.msra.mxu0 0.0
  %6975 = vmatpush.msra.mxu0 0.0
  %6976 = vmatpush.msra.mxu0 %v6953
  %6977 = vmatpush.msra.mxu0 %v6951
  %6978 = vmatmul.f32.gmra.mxu0 %v6957
  %v6979 = vpop.f32.mrf.mxu0
  %v6980 = vadd.f32 0.0, %v6979
  %6981 = vmatmul.f32.gmra.mxu0 %v6960
  %v6982 = vpop.f32.mrf.mxu0
  %v6983 = vadd.f32 0.0, %v6982
  %6984 = vdwg.mxu0
  %6985 = vrot.lane.b32.xlu0 %v244, 40
  %v6986 = vpop.permute.xlu0 %6985
  %6987 = vrot.lane.b32.xlu0 %v247, 40
  %v6988 = vpop.permute.xlu0 %6987
  %v6992 = vsel %vm866, %v4556, 0
  %v6995 = vsel %vm866, %v4557, 0
  %6997 = vmatpush.msra.mxu0 0.0
  %6998 = vmatpush.msra.mxu0 0.0
  %6999 = vmatpush.msra.mxu0 0.0
  %7000 = vmatpush.msra.mxu0 0.0
  %7001 = vmatpush.msra.mxu0 0.0
  %7002 = vmatpush.msra.mxu0 0.0
  %7003 = vmatpush.msra.mxu0 0.0
  %7004 = vmatpush.msra.mxu0 0.0
  %7005 = vmatpush.msra.mxu0 0.0
  %7006 = vmatpush.msra.mxu0 0.0
  %7007 = vmatpush.msra.mxu0 0.0
  %7008 = vmatpush.msra.mxu0 0.0
  %7009 = vmatpush.msra.mxu0 0.0
  %7010 = vmatpush.msra.mxu0 0.0
  %7011 = vmatpush.msra.mxu0 %v6988
  %7012 = vmatpush.msra.mxu0 %v6986
  %7013 = vmatmul.f32.gmra.mxu0 %v6992
  %v7014 = vpop.f32.mrf.mxu0
  %v7015 = vadd.f32 0.0, %v7014
  %7016 = vmatmul.f32.gmra.mxu0 %v6995
  %v7017 = vpop.f32.mrf.mxu0
  %v7018 = vadd.f32 0.0, %v7017
  %7019 = vdwg.mxu0
  %7020 = vrot.lane.b32.xlu0 %v250, 40
  %v7021 = vpop.permute.xlu0 %7020
  %7022 = vrot.lane.b32.xlu0 %v253, 40
  %v7023 = vpop.permute.xlu0 %7022
  %v7027 = vsel %vm866, %v4558, 0
  %v7030 = vsel %vm866, %v4559, 0
  %7032 = vmatpush.msra.mxu0 0.0
  %7033 = vmatpush.msra.mxu0 0.0
  %7034 = vmatpush.msra.mxu0 0.0
  %7035 = vmatpush.msra.mxu0 0.0
  %7036 = vmatpush.msra.mxu0 0.0
  %7037 = vmatpush.msra.mxu0 0.0
  %7038 = vmatpush.msra.mxu0 0.0
  %7039 = vmatpush.msra.mxu0 0.0
  %7040 = vmatpush.msra.mxu0 0.0
  %7041 = vmatpush.msra.mxu0 0.0
  %7042 = vmatpush.msra.mxu0 0.0
  %7043 = vmatpush.msra.mxu0 0.0
  %7044 = vmatpush.msra.mxu0 0.0
  %7045 = vmatpush.msra.mxu0 0.0
  %7046 = vmatpush.msra.mxu0 %v7023
  %7047 = vmatpush.msra.mxu0 %v7021
  %7048 = vmatmul.f32.gmra.mxu0 %v7027
  %v7049 = vpop.f32.mrf.mxu0
  %v7050 = vadd.f32 0.0, %v7049
  %7051 = vmatmul.f32.gmra.mxu0 %v7030
  %v7052 = vpop.f32.mrf.mxu0
  %v7053 = vadd.f32 0.0, %v7052
  %7054 = vdwg.mxu0
  %7055 = vrot.lane.b32.xlu0 %v256, 40
  %v7056 = vpop.permute.xlu0 %7055
  %7057 = vrot.lane.b32.xlu0 %v259, 40
  %v7058 = vpop.permute.xlu0 %7057
  %v7062 = vsel %vm866, %v4560, 0
  %v7065 = vsel %vm866, %v4561, 0
  %7067 = vmatpush.msra.mxu0 0.0
  %7068 = vmatpush.msra.mxu0 0.0
  %7069 = vmatpush.msra.mxu0 0.0
  %7070 = vmatpush.msra.mxu0 0.0
  %7071 = vmatpush.msra.mxu0 0.0
  %7072 = vmatpush.msra.mxu0 0.0
  %7073 = vmatpush.msra.mxu0 0.0
  %7074 = vmatpush.msra.mxu0 0.0
  %7075 = vmatpush.msra.mxu0 0.0
  %7076 = vmatpush.msra.mxu0 0.0
  %7077 = vmatpush.msra.mxu0 0.0
  %7078 = vmatpush.msra.mxu0 0.0
  %7079 = vmatpush.msra.mxu0 0.0
  %7080 = vmatpush.msra.mxu0 0.0
  %7081 = vmatpush.msra.mxu0 %v7058
  %7082 = vmatpush.msra.mxu0 %v7056
  %7083 = vmatmul.f32.gmra.mxu0 %v7062
  %v7084 = vpop.f32.mrf.mxu0
  %v7085 = vadd.f32 0.0, %v7084
  %7086 = vmatmul.f32.gmra.mxu0 %v7065
  %v7087 = vpop.f32.mrf.mxu0
  %v7088 = vadd.f32 0.0, %v7087
  %7089 = vdwg.mxu0
  %7090 = vrot.lane.b32.xlu0 %v262, 40
  %v7091 = vpop.permute.xlu0 %7090
  %7092 = vrot.lane.b32.xlu0 %v265, 40
  %v7093 = vpop.permute.xlu0 %7092
  %v7097 = vsel %vm866, %v4562, 0
  %v7100 = vsel %vm866, %v4563, 0
  %7102 = vmatpush.msra.mxu0 0.0
  %7103 = vmatpush.msra.mxu0 0.0
  %7104 = vmatpush.msra.mxu0 0.0
  %7105 = vmatpush.msra.mxu0 0.0
  %7106 = vmatpush.msra.mxu0 0.0
  %7107 = vmatpush.msra.mxu0 0.0
  %7108 = vmatpush.msra.mxu0 0.0
  %7109 = vmatpush.msra.mxu0 0.0
  %7110 = vmatpush.msra.mxu0 0.0
  %7111 = vmatpush.msra.mxu0 0.0
  %7112 = vmatpush.msra.mxu0 0.0
  %7113 = vmatpush.msra.mxu0 0.0
  %7114 = vmatpush.msra.mxu0 0.0
  %7115 = vmatpush.msra.mxu0 0.0
  %7116 = vmatpush.msra.mxu0 %v7093
  %7117 = vmatpush.msra.mxu0 %v7091
  %7118 = vmatmul.f32.gmra.mxu0 %v7097
  %v7119 = vpop.f32.mrf.mxu0
  %v7120 = vadd.f32 0.0, %v7119
  %7121 = vmatmul.f32.gmra.mxu0 %v7100
  %v7122 = vpop.f32.mrf.mxu0
  %v7123 = vadd.f32 0.0, %v7122
  %7124 = vdwg.mxu0
  %7125 = vrot.lane.b32.xlu0 %v268, 40
  %v7126 = vpop.permute.xlu0 %7125
  %7127 = vrot.lane.b32.xlu0 %v271, 40
  %v7128 = vpop.permute.xlu0 %7127
  %v7132 = vsel %vm866, %v4564, 0
  %v7135 = vsel %vm866, %v4565, 0
  %7137 = vmatpush.msra.mxu0 0.0
  %7138 = vmatpush.msra.mxu0 0.0
  %7139 = vmatpush.msra.mxu0 0.0
  %7140 = vmatpush.msra.mxu0 0.0
  %7141 = vmatpush.msra.mxu0 0.0
  %7142 = vmatpush.msra.mxu0 0.0
  %7143 = vmatpush.msra.mxu0 0.0
  %7144 = vmatpush.msra.mxu0 0.0
  %7145 = vmatpush.msra.mxu0 0.0
  %7146 = vmatpush.msra.mxu0 0.0
  %7147 = vmatpush.msra.mxu0 0.0
  %7148 = vmatpush.msra.mxu0 0.0
  %7149 = vmatpush.msra.mxu0 0.0
  %7150 = vmatpush.msra.mxu0 0.0
  %7151 = vmatpush.msra.mxu0 %v7128
  %7152 = vmatpush.msra.mxu0 %v7126
  %7153 = vmatmul.f32.gmra.mxu0 %v7132
  %v7154 = vpop.f32.mrf.mxu0
  %v7155 = vadd.f32 0.0, %v7154
  %7156 = vmatmul.f32.gmra.mxu0 %v7135
  %v7157 = vpop.f32.mrf.mxu0
  %v7158 = vadd.f32 0.0, %v7157
  %7159 = vdwg.mxu0
  %7192 = vrot.lane.b32.xlu0 %v6630, 24
  %v7193 = vpop.permute.xlu0 %7192
  %7194 = vrot.lane.b32.xlu0 %v6633, 24
  %v7195 = vpop.permute.xlu0 %7194
  %7196 = vrot.lane.b32.xlu0 %v6665, 24
  %v7197 = vpop.permute.xlu0 %7196
  %7198 = vrot.lane.b32.xlu0 %v6668, 24
  %v7199 = vpop.permute.xlu0 %7198
  %7200 = vrot.lane.b32.xlu0 %v6700, 24
  %v7201 = vpop.permute.xlu0 %7200
  %7202 = vrot.lane.b32.xlu0 %v6703, 24
  %v7203 = vpop.permute.xlu0 %7202
  %7204 = vrot.lane.b32.xlu0 %v6735, 24
  %v7205 = vpop.permute.xlu0 %7204
  %7206 = vrot.lane.b32.xlu0 %v6738, 24
  %v7207 = vpop.permute.xlu0 %7206
  %7208 = vrot.lane.b32.xlu0 %v6770, 24
  %v7209 = vpop.permute.xlu0 %7208
  %7210 = vrot.lane.b32.xlu0 %v6773, 24
  %v7211 = vpop.permute.xlu0 %7210
  %7212 = vrot.lane.b32.xlu0 %v6805, 24
  %v7213 = vpop.permute.xlu0 %7212
  %7214 = vrot.lane.b32.xlu0 %v6808, 24
  %v7215 = vpop.permute.xlu0 %7214
  %7216 = vrot.lane.b32.xlu0 %v6840, 24
  %v7217 = vpop.permute.xlu0 %7216
  %7218 = vrot.lane.b32.xlu0 %v6843, 24
  %v7219 = vpop.permute.xlu0 %7218
  %7220 = vrot.lane.b32.xlu0 %v6875, 24
  %v7221 = vpop.permute.xlu0 %7220
  %7222 = vrot.lane.b32.xlu0 %v6878, 24
  %v7223 = vpop.permute.xlu0 %7222
  %7224 = vrot.lane.b32.xlu0 %v6910, 24
  %v7225 = vpop.permute.xlu0 %7224
  %7226 = vrot.lane.b32.xlu0 %v6913, 24
  %v7227 = vpop.permute.xlu0 %7226
  %7228 = vrot.lane.b32.xlu0 %v6945, 24
  %v7229 = vpop.permute.xlu0 %7228
  %7230 = vrot.lane.b32.xlu0 %v6948, 24
  %v7231 = vpop.permute.xlu0 %7230
  %7232 = vrot.lane.b32.xlu0 %v6980, 24
  %v7233 = vpop.permute.xlu0 %7232
  %7234 = vrot.lane.b32.xlu0 %v6983, 24
  %v7235 = vpop.permute.xlu0 %7234
  %7236 = vrot.lane.b32.xlu0 %v7015, 24
  %v7237 = vpop.permute.xlu0 %7236
  %7238 = vrot.lane.b32.xlu0 %v7018, 24
  %v7239 = vpop.permute.xlu0 %7238
  %7240 = vrot.lane.b32.xlu0 %v7050, 24
  %v7241 = vpop.permute.xlu0 %7240
  %7242 = vrot.lane.b32.xlu0 %v7053, 24
  %v7243 = vpop.permute.xlu0 %7242
  %7244 = vrot.lane.b32.xlu0 %v7085, 24
  %v7245 = vpop.permute.xlu0 %7244
  %7246 = vrot.lane.b32.xlu0 %v7088, 24
  %v7247 = vpop.permute.xlu0 %7246
  %7248 = vrot.lane.b32.xlu0 %v7120, 24
  %v7249 = vpop.permute.xlu0 %7248
  %7250 = vrot.lane.b32.xlu0 %v7123, 24
  %v7251 = vpop.permute.xlu0 %7250
  %7252 = vrot.lane.b32.xlu0 %v7155, 24
  %v7253 = vpop.permute.xlu0 %7252
  %7254 = vrot.lane.b32.xlu0 %v7158, 24
  %v7255 = vpop.permute.xlu0 %7254
  %vm7288 = vcmask 261312
  %7289 = vst.msk [vmem:[#allocation3] sm:$0xff] %vm7288, %v7193
  %7290 = vst.msk [vmem:[#allocation3 + $0x8] sm:$0xff] %vm7288, %v7195
  %7291 = vst.msk [vmem:[#allocation3 + $0x10] sm:$0xff] %vm7288, %v7197
  %7292 = vst.msk [vmem:[#allocation3 + $0x18] sm:$0xff] %vm7288, %v7199
  %7293 = vst.msk [vmem:[#allocation3 + $0x20] sm:$0xff] %vm7288, %v7201
  %7294 = vst.msk [vmem:[#allocation3 + $0x28] sm:$0xff] %vm7288, %v7203
  %7295 = vst.msk [vmem:[#allocation3 + $0x30] sm:$0xff] %vm7288, %v7205
  %7296 = vst.msk [vmem:[#allocation3 + $0x38] sm:$0xff] %vm7288, %v7207
  %7297 = vst.msk [vmem:[#allocation3 + $0x40] sm:$0xff] %vm7288, %v7209
  %7298 = vst.msk [vmem:[#allocation3 + $0x48] sm:$0xff] %vm7288, %v7211
  %7299 = vst.msk [vmem:[#allocation3 + $0x50] sm:$0xff] %vm7288, %v7213
  %7300 = vst.msk [vmem:[#allocation3 + $0x58] sm:$0xff] %vm7288, %v7215
  %7301 = vst.msk [vmem:[#allocation3 + $0x60] sm:$0xff] %vm7288, %v7217
  %7302 = vst.msk [vmem:[#allocation3 + $0x68] sm:$0xff] %vm7288, %v7219
  %7303 = vst.msk [vmem:[#allocation3 + $0x70] sm:$0xff] %vm7288, %v7221
  %7304 = vst.msk [vmem:[#allocation3 + $0x78] sm:$0xff] %vm7288, %v7223
  %7305 = vst.msk [vmem:[#allocation3 + $0x80] sm:$0xff] %vm7288, %v7225
  %7306 = vst.msk [vmem:[#allocation3 + $0x88] sm:$0xff] %vm7288, %v7227
  %7307 = vst.msk [vmem:[#allocation3 + $0x90] sm:$0xff] %vm7288, %v7229
  %7308 = vst.msk [vmem:[#allocation3 + $0x98] sm:$0xff] %vm7288, %v7231
  %7309 = vst.msk [vmem:[#allocation3 + $0xa0] sm:$0xff] %vm7288, %v7233
  %7310 = vst.msk [vmem:[#allocation3 + $0xa8] sm:$0xff] %vm7288, %v7235
  %7311 = vst.msk [vmem:[#allocation3 + $0xb0] sm:$0xff] %vm7288, %v7237
  %7312 = vst.msk [vmem:[#allocation3 + $0xb8] sm:$0xff] %vm7288, %v7239
  %7313 = vst.msk [vmem:[#allocation3 + $0xc0] sm:$0xff] %vm7288, %v7241
  %7314 = vst.msk [vmem:[#allocation3 + $0xc8] sm:$0xff] %vm7288, %v7243
  %7315 = vst.msk [vmem:[#allocation3 + $0xd0] sm:$0xff] %vm7288, %v7245
  %7316 = vst.msk [vmem:[#allocation3 + $0xd8] sm:$0xff] %vm7288, %v7247
  %7317 = vst.msk [vmem:[#allocation3 + $0xe0] sm:$0xff] %vm7288, %v7249
  %7318 = vst.msk [vmem:[#allocation3 + $0xe8] sm:$0xff] %vm7288, %v7251
  %7319 = vst.msk [vmem:[#allocation3 + $0xf0] sm:$0xff] %vm7288, %v7253
  %7320 = vst.msk [vmem:[#allocation3 + $0xf8] sm:$0xff] %vm7288, %v7255
  %v7321 = vld [vmem:[#allocation3] sm:$0xff]
  %v7322 = vld [vmem:[#allocation3 + $0x8] sm:$0xff]
  %v7323 = vld [vmem:[#allocation3 + $0x10] sm:$0xff]
  %v7324 = vld [vmem:[#allocation3 + $0x18] sm:$0xff]
  %v7325 = vld [vmem:[#allocation3 + $0x20] sm:$0xff]
  %v7326 = vld [vmem:[#allocation3 + $0x28] sm:$0xff]
  %v7327 = vld [vmem:[#allocation3 + $0x30] sm:$0xff]
  %v7328 = vld [vmem:[#allocation3 + $0x38] sm:$0xff]
  %v7329 = vld [vmem:[#allocation3 + $0x40] sm:$0xff]
  %v7330 = vld [vmem:[#allocation3 + $0x48] sm:$0xff]
  %v7331 = vld [vmem:[#allocation3 + $0x50] sm:$0xff]
  %v7332 = vld [vmem:[#allocation3 + $0x58] sm:$0xff]
  %v7333 = vld [vmem:[#allocation3 + $0x60] sm:$0xff]
  %v7334 = vld [vmem:[#allocation3 + $0x68] sm:$0xff]
  %v7335 = vld [vmem:[#allocation3 + $0x70] sm:$0xff]
  %v7336 = vld [vmem:[#allocation3 + $0x78] sm:$0xff]
  %v7337 = vld [vmem:[#allocation3 + $0x80] sm:$0xff]
  %v7338 = vld [vmem:[#allocation3 + $0x88] sm:$0xff]
  %v7339 = vld [vmem:[#allocation3 + $0x90] sm:$0xff]
  %v7340 = vld [vmem:[#allocation3 + $0x98] sm:$0xff]
  %v7341 = vld [vmem:[#allocation3 + $0xa0] sm:$0xff]
  %v7342 = vld [vmem:[#allocation3 + $0xa8] sm:$0xff]
  %v7343 = vld [vmem:[#allocation3 + $0xb0] sm:$0xff]
  %v7344 = vld [vmem:[#allocation3 + $0xb8] sm:$0xff]
  %v7345 = vld [vmem:[#allocation3 + $0xc0] sm:$0xff]
  %v7346 = vld [vmem:[#allocation3 + $0xc8] sm:$0xff]
  %v7347 = vld [vmem:[#allocation3 + $0xd0] sm:$0xff]
  %v7348 = vld [vmem:[#allocation3 + $0xd8] sm:$0xff]
  %v7349 = vld [vmem:[#allocation3 + $0xe0] sm:$0xff]
  %v7350 = vld [vmem:[#allocation3 + $0xe8] sm:$0xff]
  %v7351 = vld [vmem:[#allocation3 + $0xf0] sm:$0xff]
  %v7352 = vld [vmem:[#allocation3 + $0xf8] sm:$0xff]
  %v7353 = vld [vmem:[%s4] sm:$0xff]
  %v7354 = vld [vmem:[%s4 + $0x8] sm:$0xff]
  %v7355 = vld [vmem:[%s4 + $0x10] sm:$0xff]
  %v7356 = vld [vmem:[%s4 + $0x18] sm:$0xff]
  %v7357 = vld [vmem:[%s5] sm:$0x1]
  %v7359 = vperm.slane %v7357, 0
  %v7362 = vsel %vm63, %v7321, 0
  %v7365 = vsel %vm63, %v7322, 0
  %v7368 = vsel %vm63, %v7323, 0
  %v7371 = vsel %vm63, %v7324, 0
  %v7374 = vsel %vm63, %v7325, 0
  %v7377 = vsel %vm63, %v7326, 0
  %v7380 = vsel %vm63, %v7327, 0
  %v7383 = vsel %vm63, %v7328, 0
  %v7386 = vsel %vm63, %v7329, 0
  %v7389 = vsel %vm63, %v7330, 0
  %v7392 = vsel %vm63, %v7331, 0
  %v7395 = vsel %vm63, %v7332, 0
  %v7398 = vsel %vm63, %v7333, 0
  %v7401 = vsel %vm63, %v7334, 0
  %v7404 = vsel %vm63, %v7335, 0
  %v7407 = vsel %vm63, %v7336, 0
  %v7410 = vsel %vm63, %v7337, 0
  %v7413 = vsel %vm63, %v7338, 0
  %v7416 = vsel %vm63, %v7339, 0
  %v7419 = vsel %vm63, %v7340, 0
  %v7422 = vsel %vm63, %v7341, 0
  %v7425 = vsel %vm63, %v7342, 0
  %v7428 = vsel %vm63, %v7343, 0
  %v7431 = vsel %vm63, %v7344, 0
  %v7434 = vsel %vm63, %v7345, 0
  %v7437 = vsel %vm63, %v7346, 0
  %v7440 = vsel %vm63, %v7347, 0
  %v7443 = vsel %vm63, %v7348, 0
  %v7446 = vsel %vm63, %v7349, 0
  %v7449 = vsel %vm63, %v7350, 0
  %v7452 = vsel %vm63, %v7351, 0
  %v7455 = vsel %vm63, %v7352, 0
  %7457 = vmatpush.msra.mxu0 0.0
  %7458 = vmatpush.msra.mxu0 0.0
  %7459 = vmatpush.msra.mxu0 0.0
  %7460 = vmatpush.msra.mxu0 0.0
  %7461 = vmatpush.msra.mxu0 0.0
  %7462 = vmatpush.msra.mxu0 0.0
  %7463 = vmatpush.msra.mxu0 0.0
  %7464 = vmatpush.msra.mxu0 0.0
  %7465 = vmatpush.msra.mxu0 0.0
  %7466 = vmatpush.msra.mxu0 0.0
  %7467 = vmatpush.msra.mxu0 0.0
  %7468 = vmatpush.msra.mxu0 0.0
  %7469 = vmatpush.msra.mxu0 %v7356
  %7470 = vmatpush.msra.mxu0 %v7355
  %7471 = vmatpush.msra.mxu0 %v7354
  %7472 = vmatpush.msra.mxu0 %v7353
  %7473 = vmatmul.f32.gmra.mxu0 %v7362
  %v7474 = vpop.f32.mrf.mxu0
  %v7475 = vadd.f32 %v7359, %v7474
  %7476 = vmatmul.f32.gmra.mxu0 %v7365
  %v7477 = vpop.f32.mrf.mxu0
  %v7478 = vadd.f32 %v7359, %v7477
  %7479 = vmatmul.f32.gmra.mxu0 %v7368
  %v7480 = vpop.f32.mrf.mxu0
  %v7481 = vadd.f32 %v7359, %v7480
  %7482 = vmatmul.f32.gmra.mxu0 %v7371
  %v7483 = vpop.f32.mrf.mxu0
  %v7484 = vadd.f32 %v7359, %v7483
  %7485 = vmatmul.f32.gmra.mxu0 %v7374
  %v7486 = vpop.f32.mrf.mxu0
  %v7487 = vadd.f32 %v7359, %v7486
  %7488 = vmatmul.f32.gmra.mxu0 %v7377
  %v7489 = vpop.f32.mrf.mxu0
  %v7490 = vadd.f32 %v7359, %v7489
  %7491 = vmatmul.f32.gmra.mxu0 %v7380
  %v7492 = vpop.f32.mrf.mxu0
  %v7493 = vadd.f32 %v7359, %v7492
  %7494 = vmatmul.f32.gmra.mxu0 %v7383
  %v7495 = vpop.f32.mrf.mxu0
  %v7496 = vadd.f32 %v7359, %v7495
  %7497 = vmatmul.f32.gmra.mxu0 %v7386
  %v7498 = vpop.f32.mrf.mxu0
  %v7499 = vadd.f32 %v7359, %v7498
  %7500 = vmatmul.f32.gmra.mxu0 %v7389
  %v7501 = vpop.f32.mrf.mxu0
  %v7502 = vadd.f32 %v7359, %v7501
  %7503 = vmatmul.f32.gmra.mxu0 %v7392
  %v7504 = vpop.f32.mrf.mxu0
  %v7505 = vadd.f32 %v7359, %v7504
  %7506 = vmatmul.f32.gmra.mxu0 %v7395
  %v7507 = vpop.f32.mrf.mxu0
  %v7508 = vadd.f32 %v7359, %v7507
  %7509 = vmatmul.f32.gmra.mxu0 %v7398
  %v7510 = vpop.f32.mrf.mxu0
  %v7511 = vadd.f32 %v7359, %v7510
  %7512 = vmatmul.f32.gmra.mxu0 %v7401
  %v7513 = vpop.f32.mrf.mxu0
  %v7514 = vadd.f32 %v7359, %v7513
  %7515 = vmatmul.f32.gmra.mxu0 %v7404
  %v7516 = vpop.f32.mrf.mxu0
  %v7517 = vadd.f32 %v7359, %v7516
  %7518 = vmatmul.f32.gmra.mxu0 %v7407
  %v7519 = vpop.f32.mrf.mxu0
  %v7520 = vadd.f32 %v7359, %v7519
  %7521 = vmatmul.f32.gmra.mxu0 %v7410
  %v7522 = vpop.f32.mrf.mxu0
  %v7523 = vadd.f32 %v7359, %v7522
  %7524 = vmatmul.f32.gmra.mxu0 %v7413
  %v7525 = vpop.f32.mrf.mxu0
  %v7526 = vadd.f32 %v7359, %v7525
  %7527 = vmatmul.f32.gmra.mxu0 %v7416
  %v7528 = vpop.f32.mrf.mxu0
  %v7529 = vadd.f32 %v7359, %v7528
  %7530 = vmatmul.f32.gmra.mxu0 %v7419
  %v7531 = vpop.f32.mrf.mxu0
  %v7532 = vadd.f32 %v7359, %v7531
  %7533 = vmatmul.f32.gmra.mxu0 %v7422
  %v7534 = vpop.f32.mrf.mxu0
  %v7535 = vadd.f32 %v7359, %v7534
  %7536 = vmatmul.f32.gmra.mxu0 %v7425
  %v7537 = vpop.f32.mrf.mxu0
  %v7538 = vadd.f32 %v7359, %v7537
  %7539 = vmatmul.f32.gmra.mxu0 %v7428
  %v7540 = vpop.f32.mrf.mxu0
  %v7541 = vadd.f32 %v7359, %v7540
  %7542 = vmatmul.f32.gmra.mxu0 %v7431
  %v7543 = vpop.f32.mrf.mxu0
  %v7544 = vadd.f32 %v7359, %v7543
  %7545 = vmatmul.f32.gmra.mxu0 %v7434
  %v7546 = vpop.f32.mrf.mxu0
  %v7547 = vadd.f32 %v7359, %v7546
  %7548 = vmatmul.f32.gmra.mxu0 %v7437
  %v7549 = vpop.f32.mrf.mxu0
  %v7550 = vadd.f32 %v7359, %v7549
  %7551 = vmatmul.f32.gmra.mxu0 %v7440
  %v7552 = vpop.f32.mrf.mxu0
  %v7553 = vadd.f32 %v7359, %v7552
  %7554 = vmatmul.f32.gmra.mxu0 %v7443
  %v7555 = vpop.f32.mrf.mxu0
  %v7556 = vadd.f32 %v7359, %v7555
  %7557 = vmatmul.f32.gmra.mxu0 %v7446
  %v7558 = vpop.f32.mrf.mxu0
  %v7559 = vadd.f32 %v7359, %v7558
  %7560 = vmatmul.f32.gmra.mxu0 %v7449
  %v7561 = vpop.f32.mrf.mxu0
  %v7562 = vadd.f32 %v7359, %v7561
  %7563 = vmatmul.f32.gmra.mxu0 %v7452
  %v7564 = vpop.f32.mrf.mxu0
  %v7565 = vadd.f32 %v7359, %v7564
  %7566 = vmatmul.f32.gmra.mxu0 %v7455
  %v7567 = vpop.f32.mrf.mxu0
  %v7568 = vadd.f32 %v7359, %v7567
  %7569 = vdwg.mxu0
  %7570 = vst.msk [vmem:[%s6] sm:$0xff] %vm63, %v7475
  %7571 = vst.msk [vmem:[%s6 + $0x8] sm:$0xff] %vm63, %v7478
  %7572 = vst.msk [vmem:[%s6 + $0x10] sm:$0xff] %vm63, %v7481
  %7573 = vst.msk [vmem:[%s6 + $0x18] sm:$0xff] %vm63, %v7484
  %7574 = vst.msk [vmem:[%s6 + $0x20] sm:$0xff] %vm63, %v7487
  %7575 = vst.msk [vmem:[%s6 + $0x28] sm:$0xff] %vm63, %v7490
  %7576 = vst.msk [vmem:[%s6 + $0x30] sm:$0xff] %vm63, %v7493
  %7577 = vst.msk [vmem:[%s6 + $0x38] sm:$0xff] %vm63, %v7496
  %7578 = vst.msk [vmem:[%s6 + $0x40] sm:$0xff] %vm63, %v7499
  %7579 = vst.msk [vmem:[%s6 + $0x48] sm:$0xff] %vm63, %v7502
  %7580 = vst.msk [vmem:[%s6 + $0x50] sm:$0xff] %vm63, %v7505
  %7581 = vst.msk [vmem:[%s6 + $0x58] sm:$0xff] %vm63, %v7508
  %7582 = vst.msk [vmem:[%s6 + $0x60] sm:$0xff] %vm63, %v7511
  %7583 = vst.msk [vmem:[%s6 + $0x68] sm:$0xff] %vm63, %v7514
  %7584 = vst.msk [vmem:[%s6 + $0x70] sm:$0xff] %vm63, %v7517
  %7585 = vst.msk [vmem:[%s6 + $0x78] sm:$0xff] %vm63, %v7520
  %7586 = vst.msk [vmem:[%s6 + $0x80] sm:$0xff] %vm63, %v7523
  %7587 = vst.msk [vmem:[%s6 + $0x88] sm:$0xff] %vm63, %v7526
  %7588 = vst.msk [vmem:[%s6 + $0x90] sm:$0xff] %vm63, %v7529
  %7589 = vst.msk [vmem:[%s6 + $0x98] sm:$0xff] %vm63, %v7532
  %7590 = vst.msk [vmem:[%s6 + $0xa0] sm:$0xff] %vm63, %v7535
  %7591 = vst.msk [vmem:[%s6 + $0xa8] sm:$0xff] %vm63, %v7538
  %7592 = vst.msk [vmem:[%s6 + $0xb0] sm:$0xff] %vm63, %v7541
  %7593 = vst.msk [vmem:[%s6 + $0xb8] sm:$0xff] %vm63, %v7544
  %7594 = vst.msk [vmem:[%s6 + $0xc0] sm:$0xff] %vm63, %v7547
  %7595 = vst.msk [vmem:[%s6 + $0xc8] sm:$0xff] %vm63, %v7550
  %7596 = vst.msk [vmem:[%s6 + $0xd0] sm:$0xff] %vm63, %v7553
  %7597 = vst.msk [vmem:[%s6 + $0xd8] sm:$0xff] %vm63, %v7556
  %7598 = vst.msk [vmem:[%s6 + $0xe0] sm:$0xff] %vm63, %v7559
  %7599 = vst.msk [vmem:[%s6 + $0xe8] sm:$0xff] %vm63, %v7562
  %7600 = vst.msk [vmem:[%s6 + $0xf0] sm:$0xff] %vm63, %v7565
  %7601 = vst.msk [vmem:[%s6 + $0xf8] sm:$0xff] %vm63, %v7568
  // Predicated region
  $region26: #{tpu_custom_call.1} parent=0 // pred_check
    _
  $region27: #{tpu_custom_call.1} parent=0 // pred_check_branch
    %7603 = sbr.rel (0) target = $region29
  $region28: #{tpu_custom_call.1} parent=0 // pred_region
    _
  $region29: #{tpu_custom_call.1} parent=0 // pred_fallthru
    _
  // Predicated region
  $region30: #{tpu_custom_call.1} parent=0 // pred_check
    _
  $region31: #{tpu_custom_call.1} parent=0 // pred_check_branch
    %7605 = sbr.rel (0) target = $region33
  $region32: #{tpu_custom_call.1} parent=0 // pred_region
    _
  $region33: #{tpu_custom_call.1} parent=0 // pred_fallthru
    _

</llo_original>
